<compile_context>
chip_gen: v7x
topology: tpu7x:2x2x1
jax: 0.10.0
libtpu: 0.0.40
codegen_flags: <defaults>
</compile_context>

<pallas_src>
import jax
import jax.numpy as jnp
from jax import lax
from jax.experimental import pallas as pl
from jax.experimental.pallas import tpu as pltpu
import numpy as np

C = 32                         # fixed by the module: Conv2d(32, 32, k)
KERNEL_SIZES = [2, 3, 4, 5, 6]


def _act(idx):
    """activations = [ReLU, ELU, LeakyReLU, SELU, SiLU] (PyTorch defaults)."""
    if idx == 0:
        return lambda x: jnp.maximum(x, 0.0)
    if idx == 1:
        return lambda x: jnp.where(x > 0, x, jnp.exp(x) - 1.0)
    if idx == 2:
        return lambda x: jnp.where(x > 0, x, 0.01 * x)
    if idx == 3:
        alpha = 1.6732632423543772848170429916717
        scale = 1.0507009873554804934193349852946
        return lambda x: scale * jnp.where(x > 0, x, alpha * (jnp.exp(x) - 1.0))
    return lambda x: x * (1.0 / (1.0 + jnp.exp(-x)))          # SiLU


def _pads(k):
    # nn.ZeroPad2d padding is (left, right, top, bottom); module uses (a,b,a,b)
    a = k // 2 + (k - 2 * (k // 2)) - 1     # left / top
    b = k // 2                              # right / bottom
    return a, b


def _round_up(v, m):
    return (v + m - 1) // m * m


def make_block_forward(config, H, W, group=4):
    k1 = KERNEL_SIZES[config[0]]
    k2 = KERNEL_SIZES[config[2]]
    act1 = _act(config[1])
    act2 = _act(config[3])

    pt1, pb1 = _pads(k1)
    pl1, pr1 = pt1, pb1
    pt2, pb2 = _pads(k2)
    pl2, pr2 = pt2, pb2

    G = group                      # images packed into the lane dimension
    LANES = G * C                  # 4*32 = 128 -> full vreg lane width

    # --- unified padded grid: margins cover both convs and the 3x3 pool ---
    T = max(pt1, pt2, 1)
    Bm = max(pb1, pb2, 1)
    L = max(pl1, pl2, 1)
    R = max(pr1, pr2, 1)
    Wp = _round_up(L + W + R, 8)   # multiple of 8 -> row shifts (dy*Wp) aligned
    Rr = Wp - L - W                # actual right margin (>= R >= 1)
    Hp = T + H + Bm
    ROWS = Hp * Wp                 # flat grid rows (multiple of 8)
    # slack rows so every shifted tap slice is a static in-bounds slice
    PADT = _round_up(T * Wp + L, 8)
    PADB = _round_up(Bm * Wp + Rr, 8)
    ROWS_EXT = PADT + ROWS + PADB

    def kernel(xe_ref, mask_ref, w1_ref, b1_ref, w2_ref, b2_ref, o_ref,
               h_scr, p_scr):
        # validity mask of the H x W region inside the unified padded grid
        valid = mask_ref[...] > 0.5                       # (ROWS, LANES) bool

        xe = xe_ref[0]                                    # (ROWS_EXT, LANES) f32

        # ---- conv1: per-tap row-shifted slab @ block-diagonal bf16 weight ----
        acc = None
        for dy in range(k1):
            for dx in range(k1):
                off = PADT + (dy - pt1) * Wp + (dx - pl1)
                tap = xe[off:off + ROWS, :].astype(jnp.bfloat16)
                d = jnp.dot(tap, w1_ref[dy * k1 + dx],
                            preferred_element_type=jnp.float32)
                acc = d if acc is None else acc + d
        h1 = act1(acc + b1_ref[...])

        # re-pad onto the same grid: three aligned, full-lane-width stores
        h_scr[0:PADT, :] = jnp.zeros((PADT, LANES), jnp.float32)
        h_scr[PADT + ROWS:ROWS_EXT, :] = jnp.zeros((PADB, LANES), jnp.float32)
        h_scr[PADT:PADT + ROWS, :] = jnp.where(valid, h1, 0.0)
        h1e = h_scr[...]

        # ---- conv2 ----
        acc2 = None
        for dy in range(k2):
            for dx in range(k2):
                off = PADT + (dy - pt2) * Wp + (dx - pl2)
                tap = h1e[off:off + ROWS, :].astype(jnp.bfloat16)
                d = jnp.dot(tap, w2_ref[dy * k2 + dx],
                            preferred_element_type=jnp.float32)
                acc2 = d if acc2 is None else acc2 + d
        h2 = act2(acc2 + b2_ref[...])

        # ---- maxpool 3x3, stride 1, padding 1 (-inf padding) ----
        p_scr[0:PADT, :] = jnp.full((PADT, LANES), -jnp.inf, jnp.float32)
        p_scr[PADT + ROWS:ROWS_EXT, :] = jnp.full((PADB, LANES), -jnp.inf,
                                                  jnp.float32)
        p_scr[PADT:PADT + ROWS, :] = jnp.where(valid, h2, -jnp.inf)
        p = p_scr[...]
        m = None
        for dy in range(3):
            for dx in range(3):
                off = PADT + (dy - 1) * Wp + (dx - 1)
                t = p[off:off + ROWS, :]
                m = t if m is None else jnp.maximum(m, t)

        # ---- residual add; lane-dense (128-wide), aligned full-grid store ----
        x_center = xe[PADT:PADT + ROWS, :]
        o_ref[0, :, :] = jnp.where(valid, m + x_center, 0.0)

    def forward_impl(x_nchw, w1, b1, w2, b2):
        # x_nchw: (N, 32, H, W) float32 (PyTorch layout)
        x = jnp.transpose(x_nchw, (0, 2, 3, 1)).astype(jnp.float32)   # NHWC
        N = x.shape[0]
        Npad = _round_up(N, G)
        if Npad != N:
            x = jnp.pad(x, ((0, Npad - N), (0, 0), (0, 0), (0, 0)))
        NG = Npad // G

        # pack G images along lanes: lane index = g*C + c
        xg = x.reshape(NG, G, H, W, C).transpose(0, 2, 3, 1, 4)
        xg = xg.reshape(NG, H, W, LANES)
        xg = jnp.pad(xg, ((0, 0), (T, Bm), (L, Rr), (0, 0)))   # unified grid
        xe = xg.reshape(NG, ROWS, LANES)
        xe = jnp.pad(xe, ((0, 0), (PADT, PADB), (0, 0)))       # + slack rows

        # validity mask of the H x W region on the unified grid (built once)
        ys = jnp.arange(Hp)[:, None]
        xs = jnp.arange(Wp)[None, :]
        valid2d = (ys >= T) & (ys < T + H) & (xs >= L) & (xs < L + W)
        mask = jnp.broadcast_to(valid2d.reshape(ROWS, 1),
                                (ROWS, LANES)).astype(jnp.float32)

        # block-diagonal bf16 weights (4 copies of the (32,32) tap weight)
        eye = jnp.eye(G, dtype=jnp.float32)
        w1_big = jnp.einsum('gh,kio->kgiho', eye, w1.astype(jnp.float32))
        w1_big = w1_big.reshape(k1 * k1, LANES, LANES).astype(jnp.bfloat16)
        w2_big = jnp.einsum('gh,kio->kgiho', eye, w2.astype(jnp.float32))
        w2_big = w2_big.reshape(k2 * k2, LANES, LANES).astype(jnp.bfloat16)
        b1_big = jnp.tile(b1.reshape(1, C).astype(jnp.float32), (1, G))
        b2_big = jnp.tile(b2.reshape(1, C).astype(jnp.float32), (1, G))

        out_ext = pl.pallas_call(
            kernel,
            out_shape=jax.ShapeDtypeStruct((NG, ROWS, LANES), jnp.float32),
            grid=(NG,),
            in_specs=[
                pl.BlockSpec((1, ROWS_EXT, LANES), lambda n: (n, 0, 0)),
                pl.BlockSpec((ROWS, LANES), lambda n: (0, 0)),
                pl.BlockSpec((k1 * k1, LANES, LANES), lambda n: (0, 0, 0)),
                pl.BlockSpec((1, LANES), lambda n: (0, 0)),
                pl.BlockSpec((k2 * k2, LANES, LANES), lambda n: (0, 0, 0)),
                pl.BlockSpec((1, LANES), lambda n: (0, 0)),
            ],
            out_specs=pl.BlockSpec((1, ROWS, LANES), lambda n: (n, 0, 0)),
            scratch_shapes=[
                pltpu.VMEM((ROWS_EXT, LANES), jnp.float32),   # h1 on padded grid
                pltpu.VMEM((ROWS_EXT, LANES), jnp.float32),   # pool input grid
            ],
            compiler_params=pltpu.CompilerParams(
                dimension_semantics=("parallel",)),
        )(xe, mask, w1_big, b1_big, w2_big, b2_big)

        # unpack: slice valid region, split lane groups back into the batch dim
        out = out_ext.reshape(NG, Hp, Wp, G, C)[:, T:T + H, L:L + W]
        out = out.transpose(0, 3, 1, 2, 4).reshape(Npad, H, W, C)[:N]
        return jnp.transpose(out, (0, 3, 1, 2))               # back to NCHW

    forward = jax.jit(forward_impl)
    meta = (k1, k2, (pt1, pb1, pl1, pr1), (pt2, pb2, pl2, pr2), act1, act2)
    return forward, meta


def ref_forward(x_nchw, w1, b1, w2, b2, meta, conv_dtype=jnp.float32):
    """Pure-JAX reference. conv_dtype=bfloat16 reproduces the kernel's
    bf16-operand / f32-accumulate matmul numerics exactly (operands are rounded
    to bf16 and the conv runs at HIGHEST precision in f32)."""
    k1, k2, p1, p2, act1, act2 = meta
    pt1, pb1, pl1, pr1 = p1
    pt2, pb2, pl2, pr2 = p2
    x = jnp.transpose(x_nchw, (0, 2, 3, 1)).astype(jnp.float32)
    w1_hwio = w1.reshape(k1, k1, C, C)
    w2_hwio = w2.reshape(k2, k2, C, C)
    dn = ('NHWC', 'HWIO', 'NHWC')

    def q(a):   # round operands to conv_dtype, compute in f32
        return a.astype(conv_dtype).astype(jnp.float32)

    h = jnp.pad(x, ((0, 0), (pt1, pb1), (pl1, pr1), (0, 0)))
    h = lax.conv_general_dilated(q(h), q(w1_hwio), (1, 1), 'VALID',
                                 dimension_numbers=dn,
                                 precision=lax.Precision.HIGHEST)
    h = act1(h + b1.reshape(1, 1, 1, C))
    h = jnp.pad(h, ((0, 0), (pt2, pb2), (pl2, pr2), (0, 0)))
    h = lax.conv_general_dilated(q(h), q(w2_hwio), (1, 1), 'VALID',
                                 dimension_numbers=dn,
                                 precision=lax.Precision.HIGHEST)
    h = act2(h + b2.reshape(1, 1, 1, C))
    h = jnp.pad(h, ((0, 0), (1, 1), (1, 1), (0, 0)), constant_values=-jnp.inf)
    m = lax.reduce_window(h, -jnp.inf, lax.max,
                          (1, 3, 3, 1), (1, 1, 1, 1), 'VALID')
    y = m + x
    return jnp.transpose(y, (0, 3, 1, 2))


if __name__ == "__main__":
    # deterministic config: k1=3, act1=ReLU, k2=4, act2=SiLU
    config = [1, 0, 2, 4]
    N, H, W = 8, 8, 8                      # 8 images -> 2 lane-groups -> grid=(2,)
    k1 = KERNEL_SIZES[config[0]]
    k2 = KERNEL_SIZES[config[2]]

    key = jax.random.PRNGKey(0)
    k_x, k_w1, k_b1, k_w2, k_b2 = jax.random.split(key, 5)
    x = jax.random.normal(k_x, (N, C, H, W), jnp.float32)              # NCHW
    # weights stored as (k*k, C_in, C_out); biases as (1, C_out)
    w1 = jax.random.normal(k_w1, (k1 * k1, C, C), jnp.float32) * 0.05
    b1 = jax.random.normal(k_b1, (1, C), jnp.float32) * 0.05
    w2 = jax.random.normal(k_w2, (k2 * k2, C, C), jnp.float32) * 0.05
    b2 = jax.random.normal(k_b2, (1, C), jnp.float32) * 0.05

    forward, meta = make_block_forward(config, H, W, group=4)
    y = jax.block_until_ready(forward(x, w1, b1, w2, b2))
    assert y.shape == (N, C, H, W)

    # tight check vs a reference that matches the kernel's bf16/f32 numerics
    y_ref_bf16 = ref_forward(x, w1, b1, w2, b2, meta, conv_dtype=jnp.bfloat16)
    np.testing.assert_allclose(np.asarray(y), np.asarray(y_ref_bf16),
                               rtol=2e-3, atol=2e-3)

    # loose sanity check vs the exact f32 reference (bf16 matmul rounding only)
    y_ref = ref_forward(x, w1, b1, w2, b2, meta, conv_dtype=jnp.float32)
    np.testing.assert_allclose(np.asarray(y), np.asarray(y_ref),
                               rtol=5e-2, atol=5e-2)

    print("KERNEL_OK")
</pallas_src>

<mosaic_0001>
module attributes {stable_mosaic.version = 11 : i64} {
  func.func @kernel(%arg0: i32, %arg1: memref<1x240x128xf32, #tpu.memory_space<vmem>>, %arg2: memref<176x128xf32, #tpu.memory_space<vmem>>, %arg3: memref<9x128x128xbf16, #tpu.memory_space<vmem>>, %arg4: memref<1x128xf32, #tpu.memory_space<vmem>>, %arg5: memref<16x128x128xbf16, #tpu.memory_space<vmem>>, %arg6: memref<1x128xf32, #tpu.memory_space<vmem>>, %arg7: memref<1x176x128xf32, #tpu.memory_space<vmem>>, %arg8: memref<240x128xf32, #tpu.memory_space<vmem>>, %arg9: memref<240x128xf32, #tpu.memory_space<vmem>>) attributes {dimension_semantics = [#tpu.dimension_semantics<parallel>], iteration_bounds = array<i64: 2>, scalar_prefetch = 0 : i64, scratch_operands = 2 : i64, tpu.core_type = #tpu.core_type<tc>, window_params = [{transform_indices = @transform_0, window_bounds = array<i64: 1, 240, 128>}, {pipeline_mode = #tpu.pipeline_mode<synchronous>, transform_indices = @transform_1, window_bounds = array<i64: 176, 128>}, {pipeline_mode = #tpu.pipeline_mode<synchronous>, transform_indices = @transform_2, window_bounds = array<i64: 9, 128, 128>}, {pipeline_mode = #tpu.pipeline_mode<synchronous>, transform_indices = @transform_3, window_bounds = array<i64: 1, 128>}, {pipeline_mode = #tpu.pipeline_mode<synchronous>, transform_indices = @transform_4, window_bounds = array<i64: 16, 128, 128>}, {pipeline_mode = #tpu.pipeline_mode<synchronous>, transform_indices = @transform_5, window_bounds = array<i64: 1, 128>}, {transform_indices = @transform_6, window_bounds = array<i64: 1, 176, 128>}]} {
    %c0 = arith.constant 0 : index
    %c0_0 = arith.constant 0 : index
    %0 = vector.load %arg2[%c0, %c0_0] : memref<176x128xf32, #tpu.memory_space<vmem>>, vector<176x128xf32>
    %cst = arith.constant 5.000000e-01 : f32
    %1 = vector.broadcast %cst : f32 to vector<176x128xf32>
    %2 = arith.cmpf ogt, %0, %1 : vector<176x128xf32>
    %c0_1 = arith.constant 0 : index
    %c0_2 = arith.constant 0 : index
    %c0_3 = arith.constant 0 : index
    %3 = vector.load %arg1[%c0_1, %c0_2, %c0_3] : memref<1x240x128xf32, #tpu.memory_space<vmem>>, vector<1x240x128xf32>
    %4 = vector.shape_cast %3 : vector<1x240x128xf32> to vector<240x128xf32>
    %5 = vector.extract_strided_slice %4 {offsets = [7, 0], sizes = [176, 128], strides = [1, 1]} : vector<240x128xf32> to vector<176x128xf32>
    %6 = arith.truncf %5 : vector<176x128xf32> to vector<176x128xbf16>
    %c0_4 = arith.constant 0 : index
    %c0_5 = arith.constant 0 : index
    %c0_6 = arith.constant 0 : index
    %7 = vector.load %arg3[%c0_4, %c0_5, %c0_6] : memref<9x128x128xbf16, #tpu.memory_space<vmem>>, vector<1x128x128xbf16>
    %8 = vector.shape_cast %7 : vector<1x128x128xbf16> to vector<128x128xbf16>
    %cst_7 = arith.constant dense<0.000000e+00> : vector<176x128xf32>
    %9 = tpu.matmul %6, %8, %cst_7 {dimension_numbers = #tpu.dot_dimension_numbers<[1], [0], [0], [1], [0, 0, 1, 1], [], []>} : vector<176x128xbf16>, vector<128x128xbf16>, vector<176x128xf32> -> vector<176x128xf32>
    %10 = vector.extract_strided_slice %4 {offsets = [8, 0], sizes = [176, 128], strides = [1, 1]} : vector<240x128xf32> to vector<176x128xf32>
    %11 = arith.truncf %10 : vector<176x128xf32> to vector<176x128xbf16>
    %c1 = arith.constant 1 : index
    %c0_8 = arith.constant 0 : index
    %c0_9 = arith.constant 0 : index
    %12 = vector.load %arg3[%c1, %c0_8, %c0_9] : memref<9x128x128xbf16, #tpu.memory_space<vmem>>, vector<1x128x128xbf16>
    %13 = vector.shape_cast %12 : vector<1x128x128xbf16> to vector<128x128xbf16>
    %cst_10 = arith.constant dense<0.000000e+00> : vector<176x128xf32>
    %14 = tpu.matmul %11, %13, %cst_10 {dimension_numbers = #tpu.dot_dimension_numbers<[1], [0], [0], [1], [0, 0, 1, 1], [], []>} : vector<176x128xbf16>, vector<128x128xbf16>, vector<176x128xf32> -> vector<176x128xf32>
    %15 = arith.addf %9, %14 : vector<176x128xf32>
    %16 = vector.extract_strided_slice %4 {offsets = [9, 0], sizes = [176, 128], strides = [1, 1]} : vector<240x128xf32> to vector<176x128xf32>
    %17 = arith.truncf %16 : vector<176x128xf32> to vector<176x128xbf16>
    %c2 = arith.constant 2 : index
    %c0_11 = arith.constant 0 : index
    %c0_12 = arith.constant 0 : index
    %18 = vector.load %arg3[%c2, %c0_11, %c0_12] : memref<9x128x128xbf16, #tpu.memory_space<vmem>>, vector<1x128x128xbf16>
    %19 = vector.shape_cast %18 : vector<1x128x128xbf16> to vector<128x128xbf16>
    %cst_13 = arith.constant dense<0.000000e+00> : vector<176x128xf32>
    %20 = tpu.matmul %17, %19, %cst_13 {dimension_numbers = #tpu.dot_dimension_numbers<[1], [0], [0], [1], [0, 0, 1, 1], [], []>} : vector<176x128xbf16>, vector<128x128xbf16>, vector<176x128xf32> -> vector<176x128xf32>
    %21 = arith.addf %15, %20 : vector<176x128xf32>
    %22 = vector.extract_strided_slice %4 {offsets = [23, 0], sizes = [176, 128], strides = [1, 1]} : vector<240x128xf32> to vector<176x128xf32>
    %23 = arith.truncf %22 : vector<176x128xf32> to vector<176x128xbf16>
    %c3 = arith.constant 3 : index
    %c0_14 = arith.constant 0 : index
    %c0_15 = arith.constant 0 : index
    %24 = vector.load %arg3[%c3, %c0_14, %c0_15] : memref<9x128x128xbf16, #tpu.memory_space<vmem>>, vector<1x128x128xbf16>
    %25 = vector.shape_cast %24 : vector<1x128x128xbf16> to vector<128x128xbf16>
    %cst_16 = arith.constant dense<0.000000e+00> : vector<176x128xf32>
    %26 = tpu.matmul %23, %25, %cst_16 {dimension_numbers = #tpu.dot_dimension_numbers<[1], [0], [0], [1], [0, 0, 1, 1], [], []>} : vector<176x128xbf16>, vector<128x128xbf16>, vector<176x128xf32> -> vector<176x128xf32>
    %27 = arith.addf %21, %26 : vector<176x128xf32>
    %28 = vector.extract_strided_slice %4 {offsets = [24, 0], sizes = [176, 128], strides = [1, 1]} : vector<240x128xf32> to vector<176x128xf32>
    %29 = arith.truncf %28 : vector<176x128xf32> to vector<176x128xbf16>
    %c4 = arith.constant 4 : index
    %c0_17 = arith.constant 0 : index
    %c0_18 = arith.constant 0 : index
    %30 = vector.load %arg3[%c4, %c0_17, %c0_18] : memref<9x128x128xbf16, #tpu.memory_space<vmem>>, vector<1x128x128xbf16>
    %31 = vector.shape_cast %30 : vector<1x128x128xbf16> to vector<128x128xbf16>
    %cst_19 = arith.constant dense<0.000000e+00> : vector<176x128xf32>
    %32 = tpu.matmul %29, %31, %cst_19 {dimension_numbers = #tpu.dot_dimension_numbers<[1], [0], [0], [1], [0, 0, 1, 1], [], []>} : vector<176x128xbf16>, vector<128x128xbf16>, vector<176x128xf32> -> vector<176x128xf32>
    %33 = arith.addf %27, %32 : vector<176x128xf32>
    %34 = vector.extract_strided_slice %4 {offsets = [25, 0], sizes = [176, 128], strides = [1, 1]} : vector<240x128xf32> to vector<176x128xf32>
    %35 = arith.truncf %34 : vector<176x128xf32> to vector<176x128xbf16>
    %c5 = arith.constant 5 : index
    %c0_20 = arith.constant 0 : index
    %c0_21 = arith.constant 0 : index
    %36 = vector.load %arg3[%c5, %c0_20, %c0_21] : memref<9x128x128xbf16, #tpu.memory_space<vmem>>, vector<1x128x128xbf16>
    %37 = vector.shape_cast %36 : vector<1x128x128xbf16> to vector<128x128xbf16>
    %cst_22 = arith.constant dense<0.000000e+00> : vector<176x128xf32>
    %38 = tpu.matmul %35, %37, %cst_22 {dimension_numbers = #tpu.dot_dimension_numbers<[1], [0], [0], [1], [0, 0, 1, 1], [], []>} : vector<176x128xbf16>, vector<128x128xbf16>, vector<176x128xf32> -> vector<176x128xf32>
    %39 = arith.addf %33, %38 : vector<176x128xf32>
    %40 = vector.extract_strided_slice %4 {offsets = [39, 0], sizes = [176, 128], strides = [1, 1]} : vector<240x128xf32> to vector<176x128xf32>
    %41 = arith.truncf %40 : vector<176x128xf32> to vector<176x128xbf16>
    %c6 = arith.constant 6 : index
    %c0_23 = arith.constant 0 : index
    %c0_24 = arith.constant 0 : index
    %42 = vector.load %arg3[%c6, %c0_23, %c0_24] : memref<9x128x128xbf16, #tpu.memory_space<vmem>>, vector<1x128x128xbf16>
    %43 = vector.shape_cast %42 : vector<1x128x128xbf16> to vector<128x128xbf16>
    %cst_25 = arith.constant dense<0.000000e+00> : vector<176x128xf32>
    %44 = tpu.matmul %41, %43, %cst_25 {dimension_numbers = #tpu.dot_dimension_numbers<[1], [0], [0], [1], [0, 0, 1, 1], [], []>} : vector<176x128xbf16>, vector<128x128xbf16>, vector<176x128xf32> -> vector<176x128xf32>
    %45 = arith.addf %39, %44 : vector<176x128xf32>
    %46 = vector.extract_strided_slice %4 {offsets = [40, 0], sizes = [176, 128], strides = [1, 1]} : vector<240x128xf32> to vector<176x128xf32>
    %47 = arith.truncf %46 : vector<176x128xf32> to vector<176x128xbf16>
    %c7 = arith.constant 7 : index
    %c0_26 = arith.constant 0 : index
    %c0_27 = arith.constant 0 : index
    %48 = vector.load %arg3[%c7, %c0_26, %c0_27] : memref<9x128x128xbf16, #tpu.memory_space<vmem>>, vector<1x128x128xbf16>
    %49 = vector.shape_cast %48 : vector<1x128x128xbf16> to vector<128x128xbf16>
    %cst_28 = arith.constant dense<0.000000e+00> : vector<176x128xf32>
    %50 = tpu.matmul %47, %49, %cst_28 {dimension_numbers = #tpu.dot_dimension_numbers<[1], [0], [0], [1], [0, 0, 1, 1], [], []>} : vector<176x128xbf16>, vector<128x128xbf16>, vector<176x128xf32> -> vector<176x128xf32>
    %51 = arith.addf %45, %50 : vector<176x128xf32>
    %52 = vector.extract_strided_slice %4 {offsets = [41, 0], sizes = [176, 128], strides = [1, 1]} : vector<240x128xf32> to vector<176x128xf32>
    %53 = arith.truncf %52 : vector<176x128xf32> to vector<176x128xbf16>
    %c8 = arith.constant 8 : index
    %c0_29 = arith.constant 0 : index
    %c0_30 = arith.constant 0 : index
    %54 = vector.load %arg3[%c8, %c0_29, %c0_30] : memref<9x128x128xbf16, #tpu.memory_space<vmem>>, vector<1x128x128xbf16>
    %55 = vector.shape_cast %54 : vector<1x128x128xbf16> to vector<128x128xbf16>
    %cst_31 = arith.constant dense<0.000000e+00> : vector<176x128xf32>
    %56 = tpu.matmul %53, %55, %cst_31 {dimension_numbers = #tpu.dot_dimension_numbers<[1], [0], [0], [1], [0, 0, 1, 1], [], []>} : vector<176x128xbf16>, vector<128x128xbf16>, vector<176x128xf32> -> vector<176x128xf32>
    %57 = arith.addf %51, %56 : vector<176x128xf32>
    %c0_32 = arith.constant 0 : index
    %c0_33 = arith.constant 0 : index
    %58 = vector.load %arg4[%c0_32, %c0_33] : memref<1x128xf32, #tpu.memory_space<vmem>>, vector<1x128xf32>
    %59 = vector.broadcast %58 : vector<1x128xf32> to vector<176x128xf32>
    %60 = arith.addf %57, %59 : vector<176x128xf32>
    %cst_34 = arith.constant 0.000000e+00 : f32
    %61 = vector.broadcast %cst_34 : f32 to vector<176x128xf32>
    %62 = arith.maximumf %60, %61 : vector<176x128xf32>
    %cst_35 = arith.constant 0.000000e+00 : f32
    %63 = vector.broadcast %cst_35 : f32 to vector<24x128xf32>
    %c0_36 = arith.constant 0 : index
    %c0_37 = arith.constant 0 : index
    %64 = vector.load %arg8[%c0_36, %c0_37] : memref<240x128xf32, #tpu.memory_space<vmem>>, vector<24x128xf32>
    tpu.vector_store %arg8[%c0_36, %c0_37], %63 {strides = array<i32>} : memref<240x128xf32, #tpu.memory_space<vmem>>, vector<24x128xf32>,
    %cst_38 = arith.constant 0.000000e+00 : f32
    %65 = vector.broadcast %cst_38 : f32 to vector<40x128xf32>
    %c200 = arith.constant 200 : index
    %c0_39 = arith.constant 0 : index
    %66 = vector.load %arg8[%c200, %c0_39] : memref<240x128xf32, #tpu.memory_space<vmem>>, vector<40x128xf32>
    tpu.vector_store %arg8[%c200, %c0_39], %65 {strides = array<i32>} : memref<240x128xf32, #tpu.memory_space<vmem>>, vector<40x128xf32>,
    %cst_40 = arith.constant 0.000000e+00 : f32
    %67 = vector.broadcast %cst_40 : f32 to vector<176x128xf32>
    %68 = arith.select %2, %62, %67 : vector<176x128xi1>, vector<176x128xf32>
    %c24 = arith.constant 24 : index
    %c0_41 = arith.constant 0 : index
    %69 = vector.load %arg8[%c24, %c0_41] : memref<240x128xf32, #tpu.memory_space<vmem>>, vector<176x128xf32>
    tpu.vector_store %arg8[%c24, %c0_41], %68 {strides = array<i32>} : memref<240x128xf32, #tpu.memory_space<vmem>>, vector<176x128xf32>,
    %c0_42 = arith.constant 0 : index
    %c0_43 = arith.constant 0 : index
    %70 = vector.load %arg8[%c0_42, %c0_43] : memref<240x128xf32, #tpu.memory_space<vmem>>, vector<240x128xf32>
    %71 = vector.extract_strided_slice %70 {offsets = [7, 0], sizes = [176, 128], strides = [1, 1]} : vector<240x128xf32> to vector<176x128xf32>
    %72 = arith.truncf %71 : vector<176x128xf32> to vector<176x128xbf16>
    %c0_44 = arith.constant 0 : index
    %c0_45 = arith.constant 0 : index
    %c0_46 = arith.constant 0 : index
    %73 = vector.load %arg5[%c0_44, %c0_45, %c0_46] : memref<16x128x128xbf16, #tpu.memory_space<vmem>>, vector<1x128x128xbf16>
    %74 = vector.shape_cast %73 : vector<1x128x128xbf16> to vector<128x128xbf16>
    %cst_47 = arith.constant dense<0.000000e+00> : vector<176x128xf32>
    %75 = tpu.matmul %72, %74, %cst_47 {dimension_numbers = #tpu.dot_dimension_numbers<[1], [0], [0], [1], [0, 0, 1, 1], [], []>} : vector<176x128xbf16>, vector<128x128xbf16>, vector<176x128xf32> -> vector<176x128xf32>
    %76 = vector.extract_strided_slice %70 {offsets = [8, 0], sizes = [176, 128], strides = [1, 1]} : vector<240x128xf32> to vector<176x128xf32>
    %77 = arith.truncf %76 : vector<176x128xf32> to vector<176x128xbf16>
    %c1_48 = arith.constant 1 : index
    %c0_49 = arith.constant 0 : index
    %c0_50 = arith.constant 0 : index
    %78 = vector.load %arg5[%c1_48, %c0_49, %c0_50] : memref<16x128x128xbf16, #tpu.memory_space<vmem>>, vector<1x128x128xbf16>
    %79 = vector.shape_cast %78 : vector<1x128x128xbf16> to vector<128x128xbf16>
    %cst_51 = arith.constant dense<0.000000e+00> : vector<176x128xf32>
    %80 = tpu.matmul %77, %79, %cst_51 {dimension_numbers = #tpu.dot_dimension_numbers<[1], [0], [0], [1], [0, 0, 1, 1], [], []>} : vector<176x128xbf16>, vector<128x128xbf16>, vector<176x128xf32> -> vector<176x128xf32>
    %81 = arith.addf %75, %80 : vector<176x128xf32>
    %82 = vector.extract_strided_slice %70 {offsets = [9, 0], sizes = [176, 128], strides = [1, 1]} : vector<240x128xf32> to vector<176x128xf32>
    %83 = arith.truncf %82 : vector<176x128xf32> to vector<176x128xbf16>
    %c2_52 = arith.constant 2 : index
    %c0_53 = arith.constant 0 : index
    %c0_54 = arith.constant 0 : index
    %84 = vector.load %arg5[%c2_52, %c0_53, %c0_54] : memref<16x128x128xbf16, #tpu.memory_space<vmem>>, vector<1x128x128xbf16>
    %85 = vector.shape_cast %84 : vector<1x128x128xbf16> to vector<128x128xbf16>
    %cst_55 = arith.constant dense<0.000000e+00> : vector<176x128xf32>
    %86 = tpu.matmul %83, %85, %cst_55 {dimension_numbers = #tpu.dot_dimension_numbers<[1], [0], [0], [1], [0, 0, 1, 1], [], []>} : vector<176x128xbf16>, vector<128x128xbf16>, vector<176x128xf32> -> vector<176x128xf32>
    %87 = arith.addf %81, %86 : vector<176x128xf32>
    %88 = vector.extract_strided_slice %70 {offsets = [10, 0], sizes = [176, 128], strides = [1, 1]} : vector<240x128xf32> to vector<176x128xf32>
    %89 = arith.truncf %88 : vector<176x128xf32> to vector<176x128xbf16>
    %c3_56 = arith.constant 3 : index
    %c0_57 = arith.constant 0 : index
    %c0_58 = arith.constant 0 : index
    %90 = vector.load %arg5[%c3_56, %c0_57, %c0_58] : memref<16x128x128xbf16, #tpu.memory_space<vmem>>, vector<1x128x128xbf16>
    %91 = vector.shape_cast %90 : vector<1x128x128xbf16> to vector<128x128xbf16>
    %cst_59 = arith.constant dense<0.000000e+00> : vector<176x128xf32>
    %92 = tpu.matmul %89, %91, %cst_59 {dimension_numbers = #tpu.dot_dimension_numbers<[1], [0], [0], [1], [0, 0, 1, 1], [], []>} : vector<176x128xbf16>, vector<128x128xbf16>, vector<176x128xf32> -> vector<176x128xf32>
    %93 = arith.addf %87, %92 : vector<176x128xf32>
    %94 = vector.extract_strided_slice %70 {offsets = [23, 0], sizes = [176, 128], strides = [1, 1]} : vector<240x128xf32> to vector<176x128xf32>
    %95 = arith.truncf %94 : vector<176x128xf32> to vector<176x128xbf16>
    %c4_60 = arith.constant 4 : index
    %c0_61 = arith.constant 0 : index
    %c0_62 = arith.constant 0 : index
    %96 = vector.load %arg5[%c4_60, %c0_61, %c0_62] : memref<16x128x128xbf16, #tpu.memory_space<vmem>>, vector<1x128x128xbf16>
    %97 = vector.shape_cast %96 : vector<1x128x128xbf16> to vector<128x128xbf16>
    %cst_63 = arith.constant dense<0.000000e+00> : vector<176x128xf32>
    %98 = tpu.matmul %95, %97, %cst_63 {dimension_numbers = #tpu.dot_dimension_numbers<[1], [0], [0], [1], [0, 0, 1, 1], [], []>} : vector<176x128xbf16>, vector<128x128xbf16>, vector<176x128xf32> -> vector<176x128xf32>
    %99 = arith.addf %93, %98 : vector<176x128xf32>
    %100 = vector.extract_strided_slice %70 {offsets = [24, 0], sizes = [176, 128], strides = [1, 1]} : vector<240x128xf32> to vector<176x128xf32>
    %101 = arith.truncf %100 : vector<176x128xf32> to vector<176x128xbf16>
    %c5_64 = arith.constant 5 : index
    %c0_65 = arith.constant 0 : index
    %c0_66 = arith.constant 0 : index
    %102 = vector.load %arg5[%c5_64, %c0_65, %c0_66] : memref<16x128x128xbf16, #tpu.memory_space<vmem>>, vector<1x128x128xbf16>
    %103 = vector.shape_cast %102 : vector<1x128x128xbf16> to vector<128x128xbf16>
    %cst_67 = arith.constant dense<0.000000e+00> : vector<176x128xf32>
    %104 = tpu.matmul %101, %103, %cst_67 {dimension_numbers = #tpu.dot_dimension_numbers<[1], [0], [0], [1], [0, 0, 1, 1], [], []>} : vector<176x128xbf16>, vector<128x128xbf16>, vector<176x128xf32> -> vector<176x128xf32>
    %105 = arith.addf %99, %104 : vector<176x128xf32>
    %106 = vector.extract_strided_slice %70 {offsets = [25, 0], sizes = [176, 128], strides = [1, 1]} : vector<240x128xf32> to vector<176x128xf32>
    %107 = arith.truncf %106 : vector<176x128xf32> to vector<176x128xbf16>
    %c6_68 = arith.constant 6 : index
    %c0_69 = arith.constant 0 : index
    %c0_70 = arith.constant 0 : index
    %108 = vector.load %arg5[%c6_68, %c0_69, %c0_70] : memref<16x128x128xbf16, #tpu.memory_space<vmem>>, vector<1x128x128xbf16>
    %109 = vector.shape_cast %108 : vector<1x128x128xbf16> to vector<128x128xbf16>
    %cst_71 = arith.constant dense<0.000000e+00> : vector<176x128xf32>
    %110 = tpu.matmul %107, %109, %cst_71 {dimension_numbers = #tpu.dot_dimension_numbers<[1], [0], [0], [1], [0, 0, 1, 1], [], []>} : vector<176x128xbf16>, vector<128x128xbf16>, vector<176x128xf32> -> vector<176x128xf32>
    %111 = arith.addf %105, %110 : vector<176x128xf32>
    %112 = vector.extract_strided_slice %70 {offsets = [26, 0], sizes = [176, 128], strides = [1, 1]} : vector<240x128xf32> to vector<176x128xf32>
    %113 = arith.truncf %112 : vector<176x128xf32> to vector<176x128xbf16>
    %c7_72 = arith.constant 7 : index
    %c0_73 = arith.constant 0 : index
    %c0_74 = arith.constant 0 : index
    %114 = vector.load %arg5[%c7_72, %c0_73, %c0_74] : memref<16x128x128xbf16, #tpu.memory_space<vmem>>, vector<1x128x128xbf16>
    %115 = vector.shape_cast %114 : vector<1x128x128xbf16> to vector<128x128xbf16>
    %cst_75 = arith.constant dense<0.000000e+00> : vector<176x128xf32>
    %116 = tpu.matmul %113, %115, %cst_75 {dimension_numbers = #tpu.dot_dimension_numbers<[1], [0], [0], [1], [0, 0, 1, 1], [], []>} : vector<176x128xbf16>, vector<128x128xbf16>, vector<176x128xf32> -> vector<176x128xf32>
    %117 = arith.addf %111, %116 : vector<176x128xf32>
    %118 = vector.extract_strided_slice %70 {offsets = [39, 0], sizes = [176, 128], strides = [1, 1]} : vector<240x128xf32> to vector<176x128xf32>
    %119 = arith.truncf %118 : vector<176x128xf32> to vector<176x128xbf16>
    %c8_76 = arith.constant 8 : index
    %c0_77 = arith.constant 0 : index
    %c0_78 = arith.constant 0 : index
    %120 = vector.load %arg5[%c8_76, %c0_77, %c0_78] : memref<16x128x128xbf16, #tpu.memory_space<vmem>>, vector<1x128x128xbf16>
    %121 = vector.shape_cast %120 : vector<1x128x128xbf16> to vector<128x128xbf16>
    %cst_79 = arith.constant dense<0.000000e+00> : vector<176x128xf32>
    %122 = tpu.matmul %119, %121, %cst_79 {dimension_numbers = #tpu.dot_dimension_numbers<[1], [0], [0], [1], [0, 0, 1, 1], [], []>} : vector<176x128xbf16>, vector<128x128xbf16>, vector<176x128xf32> -> vector<176x128xf32>
    %123 = arith.addf %117, %122 : vector<176x128xf32>
    %124 = vector.extract_strided_slice %70 {offsets = [40, 0], sizes = [176, 128], strides = [1, 1]} : vector<240x128xf32> to vector<176x128xf32>
    %125 = arith.truncf %124 : vector<176x128xf32> to vector<176x128xbf16>
    %c9 = arith.constant 9 : index
    %c0_80 = arith.constant 0 : index
    %c0_81 = arith.constant 0 : index
    %126 = vector.load %arg5[%c9, %c0_80, %c0_81] : memref<16x128x128xbf16, #tpu.memory_space<vmem>>, vector<1x128x128xbf16>
    %127 = vector.shape_cast %126 : vector<1x128x128xbf16> to vector<128x128xbf16>
    %cst_82 = arith.constant dense<0.000000e+00> : vector<176x128xf32>
    %128 = tpu.matmul %125, %127, %cst_82 {dimension_numbers = #tpu.dot_dimension_numbers<[1], [0], [0], [1], [0, 0, 1, 1], [], []>} : vector<176x128xbf16>, vector<128x128xbf16>, vector<176x128xf32> -> vector<176x128xf32>
    %129 = arith.addf %123, %128 : vector<176x128xf32>
    %130 = vector.extract_strided_slice %70 {offsets = [41, 0], sizes = [176, 128], strides = [1, 1]} : vector<240x128xf32> to vector<176x128xf32>
    %131 = arith.truncf %130 : vector<176x128xf32> to vector<176x128xbf16>
    %c10 = arith.constant 10 : index
    %c0_83 = arith.constant 0 : index
    %c0_84 = arith.constant 0 : index
    %132 = vector.load %arg5[%c10, %c0_83, %c0_84] : memref<16x128x128xbf16, #tpu.memory_space<vmem>>, vector<1x128x128xbf16>
    %133 = vector.shape_cast %132 : vector<1x128x128xbf16> to vector<128x128xbf16>
    %cst_85 = arith.constant dense<0.000000e+00> : vector<176x128xf32>
    %134 = tpu.matmul %131, %133, %cst_85 {dimension_numbers = #tpu.dot_dimension_numbers<[1], [0], [0], [1], [0, 0, 1, 1], [], []>} : vector<176x128xbf16>, vector<128x128xbf16>, vector<176x128xf32> -> vector<176x128xf32>
    %135 = arith.addf %129, %134 : vector<176x128xf32>
    %136 = vector.extract_strided_slice %70 {offsets = [42, 0], sizes = [176, 128], strides = [1, 1]} : vector<240x128xf32> to vector<176x128xf32>
    %137 = arith.truncf %136 : vector<176x128xf32> to vector<176x128xbf16>
    %c11 = arith.constant 11 : index
    %c0_86 = arith.constant 0 : index
    %c0_87 = arith.constant 0 : index
    %138 = vector.load %arg5[%c11, %c0_86, %c0_87] : memref<16x128x128xbf16, #tpu.memory_space<vmem>>, vector<1x128x128xbf16>
    %139 = vector.shape_cast %138 : vector<1x128x128xbf16> to vector<128x128xbf16>
    %cst_88 = arith.constant dense<0.000000e+00> : vector<176x128xf32>
    %140 = tpu.matmul %137, %139, %cst_88 {dimension_numbers = #tpu.dot_dimension_numbers<[1], [0], [0], [1], [0, 0, 1, 1], [], []>} : vector<176x128xbf16>, vector<128x128xbf16>, vector<176x128xf32> -> vector<176x128xf32>
    %141 = arith.addf %135, %140 : vector<176x128xf32>
    %142 = vector.extract_strided_slice %70 {offsets = [55, 0], sizes = [176, 128], strides = [1, 1]} : vector<240x128xf32> to vector<176x128xf32>
    %143 = arith.truncf %142 : vector<176x128xf32> to vector<176x128xbf16>
    %c12 = arith.constant 12 : index
    %c0_89 = arith.constant 0 : index
    %c0_90 = arith.constant 0 : index
    %144 = vector.load %arg5[%c12, %c0_89, %c0_90] : memref<16x128x128xbf16, #tpu.memory_space<vmem>>, vector<1x128x128xbf16>
    %145 = vector.shape_cast %144 : vector<1x128x128xbf16> to vector<128x128xbf16>
    %cst_91 = arith.constant dense<0.000000e+00> : vector<176x128xf32>
    %146 = tpu.matmul %143, %145, %cst_91 {dimension_numbers = #tpu.dot_dimension_numbers<[1], [0], [0], [1], [0, 0, 1, 1], [], []>} : vector<176x128xbf16>, vector<128x128xbf16>, vector<176x128xf32> -> vector<176x128xf32>
    %147 = arith.addf %141, %146 : vector<176x128xf32>
    %148 = vector.extract_strided_slice %70 {offsets = [56, 0], sizes = [176, 128], strides = [1, 1]} : vector<240x128xf32> to vector<176x128xf32>
    %149 = arith.truncf %148 : vector<176x128xf32> to vector<176x128xbf16>
    %c13 = arith.constant 13 : index
    %c0_92 = arith.constant 0 : index
    %c0_93 = arith.constant 0 : index
    %150 = vector.load %arg5[%c13, %c0_92, %c0_93] : memref<16x128x128xbf16, #tpu.memory_space<vmem>>, vector<1x128x128xbf16>
    %151 = vector.shape_cast %150 : vector<1x128x128xbf16> to vector<128x128xbf16>
    %cst_94 = arith.constant dense<0.000000e+00> : vector<176x128xf32>
    %152 = tpu.matmul %149, %151, %cst_94 {dimension_numbers = #tpu.dot_dimension_numbers<[1], [0], [0], [1], [0, 0, 1, 1], [], []>} : vector<176x128xbf16>, vector<128x128xbf16>, vector<176x128xf32> -> vector<176x128xf32>
    %153 = arith.addf %147, %152 : vector<176x128xf32>
    %154 = vector.extract_strided_slice %70 {offsets = [57, 0], sizes = [176, 128], strides = [1, 1]} : vector<240x128xf32> to vector<176x128xf32>
    %155 = arith.truncf %154 : vector<176x128xf32> to vector<176x128xbf16>
    %c14 = arith.constant 14 : index
    %c0_95 = arith.constant 0 : index
    %c0_96 = arith.constant 0 : index
    %156 = vector.load %arg5[%c14, %c0_95, %c0_96] : memref<16x128x128xbf16, #tpu.memory_space<vmem>>, vector<1x128x128xbf16>
    %157 = vector.shape_cast %156 : vector<1x128x128xbf16> to vector<128x128xbf16>
    %cst_97 = arith.constant dense<0.000000e+00> : vector<176x128xf32>
    %158 = tpu.matmul %155, %157, %cst_97 {dimension_numbers = #tpu.dot_dimension_numbers<[1], [0], [0], [1], [0, 0, 1, 1], [], []>} : vector<176x128xbf16>, vector<128x128xbf16>, vector<176x128xf32> -> vector<176x128xf32>
    %159 = arith.addf %153, %158 : vector<176x128xf32>
    %160 = vector.extract_strided_slice %70 {offsets = [58, 0], sizes = [176, 128], strides = [1, 1]} : vector<240x128xf32> to vector<176x128xf32>
    %161 = arith.truncf %160 : vector<176x128xf32> to vector<176x128xbf16>
    %c15 = arith.constant 15 : index
    %c0_98 = arith.constant 0 : index
    %c0_99 = arith.constant 0 : index
    %162 = vector.load %arg5[%c15, %c0_98, %c0_99] : memref<16x128x128xbf16, #tpu.memory_space<vmem>>, vector<1x128x128xbf16>
    %163 = vector.shape_cast %162 : vector<1x128x128xbf16> to vector<128x128xbf16>
    %cst_100 = arith.constant dense<0.000000e+00> : vector<176x128xf32>
    %164 = tpu.matmul %161, %163, %cst_100 {dimension_numbers = #tpu.dot_dimension_numbers<[1], [0], [0], [1], [0, 0, 1, 1], [], []>} : vector<176x128xbf16>, vector<128x128xbf16>, vector<176x128xf32> -> vector<176x128xf32>
    %165 = arith.addf %159, %164 : vector<176x128xf32>
    %c0_101 = arith.constant 0 : index
    %c0_102 = arith.constant 0 : index
    %166 = vector.load %arg6[%c0_101, %c0_102] : memref<1x128xf32, #tpu.memory_space<vmem>>, vector<1x128xf32>
    %167 = vector.broadcast %166 : vector<1x128xf32> to vector<176x128xf32>
    %168 = arith.addf %165, %167 : vector<176x128xf32>
    %cst_103 = arith.constant 0.000000e+00 : f32
    %169 = vector.broadcast %cst_103 : f32 to vector<176x128xf32>
    %170 = arith.subf %169, %168 : vector<176x128xf32>
    %171 = math.exp %170 : vector<176x128xf32>
    %cst_104 = arith.constant 1.000000e+00 : f32
    %172 = vector.broadcast %cst_104 : f32 to vector<176x128xf32>
    %173 = arith.addf %172, %171 : vector<176x128xf32>
    %cst_105 = arith.constant 1.000000e+00 : f32
    %174 = vector.broadcast %cst_105 : f32 to vector<176x128xf32>
    %175 = arith.divf %174, %173 : vector<176x128xf32>
    %176 = arith.mulf %168, %175 : vector<176x128xf32>
    %cst_106 = arith.constant 0xFF800000 : f32
    %177 = vector.broadcast %cst_106 : f32 to vector<24x128xf32>
    %c0_107 = arith.constant 0 : index
    %c0_108 = arith.constant 0 : index
    %178 = vector.load %arg9[%c0_107, %c0_108] : memref<240x128xf32, #tpu.memory_space<vmem>>, vector<24x128xf32>
    tpu.vector_store %arg9[%c0_107, %c0_108], %177 {strides = array<i32>} : memref<240x128xf32, #tpu.memory_space<vmem>>, vector<24x128xf32>,
    %cst_109 = arith.constant 0xFF800000 : f32
    %179 = vector.broadcast %cst_109 : f32 to vector<40x128xf32>
    %c200_110 = arith.constant 200 : index
    %c0_111 = arith.constant 0 : index
    %180 = vector.load %arg9[%c200_110, %c0_111] : memref<240x128xf32, #tpu.memory_space<vmem>>, vector<40x128xf32>
    tpu.vector_store %arg9[%c200_110, %c0_111], %179 {strides = array<i32>} : memref<240x128xf32, #tpu.memory_space<vmem>>, vector<40x128xf32>,
    %cst_112 = arith.constant 0xFF800000 : f32
    %181 = vector.broadcast %cst_112 : f32 to vector<176x128xf32>
    %182 = arith.select %2, %176, %181 : vector<176x128xi1>, vector<176x128xf32>
    %c24_113 = arith.constant 24 : index
    %c0_114 = arith.constant 0 : index
    %183 = vector.load %arg9[%c24_113, %c0_114] : memref<240x128xf32, #tpu.memory_space<vmem>>, vector<176x128xf32>
    tpu.vector_store %arg9[%c24_113, %c0_114], %182 {strides = array<i32>} : memref<240x128xf32, #tpu.memory_space<vmem>>, vector<176x128xf32>,
    %c0_115 = arith.constant 0 : index
    %c0_116 = arith.constant 0 : index
    %184 = vector.load %arg9[%c0_115, %c0_116] : memref<240x128xf32, #tpu.memory_space<vmem>>, vector<240x128xf32>
    %185 = vector.extract_strided_slice %184 {offsets = [7, 0], sizes = [176, 128], strides = [1, 1]} : vector<240x128xf32> to vector<176x128xf32>
    %186 = vector.extract_strided_slice %184 {offsets = [8, 0], sizes = [176, 128], strides = [1, 1]} : vector<240x128xf32> to vector<176x128xf32>
    %187 = arith.maximumf %185, %186 : vector<176x128xf32>
    %188 = vector.extract_strided_slice %184 {offsets = [9, 0], sizes = [176, 128], strides = [1, 1]} : vector<240x128xf32> to vector<176x128xf32>
    %189 = arith.maximumf %187, %188 : vector<176x128xf32>
    %190 = vector.extract_strided_slice %184 {offsets = [23, 0], sizes = [176, 128], strides = [1, 1]} : vector<240x128xf32> to vector<176x128xf32>
    %191 = arith.maximumf %189, %190 : vector<176x128xf32>
    %192 = vector.extract_strided_slice %184 {offsets = [24, 0], sizes = [176, 128], strides = [1, 1]} : vector<240x128xf32> to vector<176x128xf32>
    %193 = arith.maximumf %191, %192 : vector<176x128xf32>
    %194 = vector.extract_strided_slice %184 {offsets = [25, 0], sizes = [176, 128], strides = [1, 1]} : vector<240x128xf32> to vector<176x128xf32>
    %195 = arith.maximumf %193, %194 : vector<176x128xf32>
    %196 = vector.extract_strided_slice %184 {offsets = [39, 0], sizes = [176, 128], strides = [1, 1]} : vector<240x128xf32> to vector<176x128xf32>
    %197 = arith.maximumf %195, %196 : vector<176x128xf32>
    %198 = vector.extract_strided_slice %184 {offsets = [40, 0], sizes = [176, 128], strides = [1, 1]} : vector<240x128xf32> to vector<176x128xf32>
    %199 = arith.maximumf %197, %198 : vector<176x128xf32>
    %200 = vector.extract_strided_slice %184 {offsets = [41, 0], sizes = [176, 128], strides = [1, 1]} : vector<240x128xf32> to vector<176x128xf32>
    %201 = arith.maximumf %199, %200 : vector<176x128xf32>
    %202 = vector.extract_strided_slice %4 {offsets = [24, 0], sizes = [176, 128], strides = [1, 1]} : vector<240x128xf32> to vector<176x128xf32>
    %203 = arith.addf %201, %202 : vector<176x128xf32>
    %cst_117 = arith.constant 0.000000e+00 : f32
    %204 = vector.broadcast %cst_117 : f32 to vector<176x128xf32>
    %205 = arith.select %2, %203, %204 : vector<176x128xi1>, vector<176x128xf32>
    %c0_118 = arith.constant 0 : index
    %c0_119 = arith.constant 0 : index
    %c0_120 = arith.constant 0 : index
    %206 = vector.load %arg7[%c0_118, %c0_119, %c0_120] : memref<1x176x128xf32, #tpu.memory_space<vmem>>, vector<1x176x128xf32>
    %207 = vector.shape_cast %206 : vector<1x176x128xf32> to vector<176x128xf32>
    %208 = vector.shape_cast %205 : vector<176x128xf32> to vector<1x176x128xf32>
    tpu.vector_store %arg7[%c0_118, %c0_119, %c0_120], %208 {strides = array<i32>} : memref<1x176x128xf32, #tpu.memory_space<vmem>>, vector<1x176x128xf32>,
    return
  }
  func.func @transform_0(%arg0: i32) -> (i32, i32, i32) {
    %c0_i32 = arith.constant 0 : i32
    %c0_i32_0 = arith.constant 0 : i32
    %c0_i32_1 = arith.constant 0 : i32
    return %arg0, %c0_i32, %c0_i32_0 : i32, i32, i32
  }
  func.func @transform_1(%arg0: i32) -> (i32, i32) {
    %c0_i32 = arith.constant 0 : i32
    %c0_i32_0 = arith.constant 0 : i32
    %c0_i32_1 = arith.constant 0 : i32
    return %c0_i32, %c0_i32_0 : i32, i32
  }
  func.func @transform_2(%arg0: i32) -> (i32, i32, i32) {
    %c0_i32 = arith.constant 0 : i32
    %c0_i32_0 = arith.constant 0 : i32
    %c0_i32_1 = arith.constant 0 : i32
    %c0_i32_2 = arith.constant 0 : i32
    return %c0_i32, %c0_i32_0, %c0_i32_1 : i32, i32, i32
  }
  func.func @transform_3(%arg0: i32) -> (i32, i32) {
    %c0_i32 = arith.constant 0 : i32
    %c0_i32_0 = arith.constant 0 : i32
    %c0_i32_1 = arith.constant 0 : i32
    return %c0_i32, %c0_i32_0 : i32, i32
  }
  func.func @transform_4(%arg0: i32) -> (i32, i32, i32) {
    %c0_i32 = arith.constant 0 : i32
    %c0_i32_0 = arith.constant 0 : i32
    %c0_i32_1 = arith.constant 0 : i32
    %c0_i32_2 = arith.constant 0 : i32
    return %c0_i32, %c0_i32_0, %c0_i32_1 : i32, i32, i32
  }
  func.func @transform_5(%arg0: i32) -> (i32, i32) {
    %c0_i32 = arith.constant 0 : i32
    %c0_i32_0 = arith.constant 0 : i32
    %c0_i32_1 = arith.constant 0 : i32
    return %c0_i32, %c0_i32_0 : i32, i32
  }
  func.func @transform_6(%arg0: i32) -> (i32, i32, i32) {
    %c0_i32 = arith.constant 0 : i32
    %c0_i32_0 = arith.constant 0 : i32
    %c0_i32_1 = arith.constant 0 : i32
    return %arg0, %c0_i32, %c0_i32_0 : i32, i32, i32
  }
}

</mosaic_0001>

<llo_original>
// kernel: forward_impl.1
$region0: #{forward_impl.1}
  #allocation0 [shape = 'u32[]', space=smem, size = 0x4, offset = 0x4, fixed_abs, tag = 'smem constant byte address 0x4 - core index']
  #allocation1 [shape = 'u32[144,128]{1,0:T(1,128)}', space=vmem, size = 0x12000, scoped, tag = 'internal scratch']
  #allocation2 [shape = 'f32[240,128]{1,0:T(8,128)}', space=vmem, size = 0x1e000, scoped, tag = 'scratch operand']
  #allocation3 [shape = 'f32[240,128]{1,0:T(8,128)}', space=vmem, size = 0x1e000, scoped, tag = 'scratch operand']
  %s0 = inlined_call_operand.vmem [shape: f32[2,240,128], index: 0, kind: input, shape index: {}]
  %s1 = inlined_call_operand.vmem [shape: f32[176,128], index: 1, kind: input, shape index: {}]
  %s2 = inlined_call_operand.vmem [shape: bf16[9,128,128], index: 2, kind: input, shape index: {}]
  %s3 = inlined_call_operand.vmem [shape: f32[1,128], index: 3, kind: input, shape index: {}]
  %s4 = inlined_call_operand.vmem [shape: bf16[16,128,128], index: 4, kind: input, shape index: {}]
  %s5 = inlined_call_operand.vmem [shape: f32[1,128], index: 5, kind: input, shape index: {}]
  %s6 = inlined_call_operand.vmem [shape: f32[2,176,128], index: 6, kind: output, shape index: {}]
  %s7 = sld [smem:[#allocation0]]
  $region57: #{forward_impl.1} parent=0
    _
  %s9 = ssub.s32 1, %s7
  %s10 = scalar_select 0, %s9, %s7
  loop: start=0, step=1, limit=4
  $region2: #{forward_impl.1} parent=0 // loop_pre_header
    _
  $region3: #{forward_impl.1} parent=0 // loop_header
    %s12 = sphi 0, %s16
    %p13 = scmp.ge.s32.totalorder %s12, 4
    %s22 = sphi 0, %s24
    %s25 = sphi 0, %s22
    %s26 = sphi 0, %s25
    %s42 = sphi 0, %s26
    %s46 = sphi 0, %s46
    %s48 = sphi 0, %s46
    %s49 = sphi 0, %s48
    %s63 = sphi 0, %s49
    %s67 = sphi 0, %s67
    %s69 = sphi 0, %s67
    %s70 = sphi 0, %s69
    %s84 = sphi 0, %s70
    %s88 = sphi 0, %s88
    %s90 = sphi 0, %s88
    %s91 = sphi 0, %s90
    %s105 = sphi 0, %s91
    %s109 = sphi 0, %s109
    %s111 = sphi 0, %s109
    %s112 = sphi 0, %s111
    %s126 = sphi 0, %s112
    %s130 = sphi 0, %s130
    %s132 = sphi 0, %s130
    %s133 = sphi 0, %s132
    %s147 = sphi 0, %s133
    %s153 = sphi 0, %s155
    %s156 = sphi 0, %s153
    %s157 = sphi 0, %s156
    %s173 = sphi 0, %s157
  $region4: #{forward_impl.1} parent=0 // loop_header_branch
    %15 = sbr.rel (%p13) target = $region8
  $region5: #{forward_impl.1} parent=0 // loop_body
    %s17 = ssub.s32 %s12, 1
    %s18 = ssub.s32 %s12, 2
    %s19 = sadd.s32 %s12, 1
    %s20 = ssub.s32 %s12, %s19
    %p21 = scmp.eq.s32.totalorder %s20, 0
    %s23 = sadd.s32 %s22, 1
    %s24 = scalar_select %p21, %s22, %s23
    %p27 = pneg %p21
    %p28 = scmp.eq.s32.totalorder %s12, 1
    %p29 = por %p27, %p28
    %p30 = scmp.ne.s32.totalorder %s22, %s25
    %p31 = scmp.eq.s32.totalorder %s12, 0
    %p32 = por %p30, %p31
    %p33 = scmp.ne.s32.totalorder %s22, %s25
    %p34 = scmp.eq.s32.totalorder %s17, 1
    %p35 = por %p33, %p34
    %p36 = scmp.ne.s32.totalorder %s25, %s26
    %p37 = scmp.eq.s32.totalorder %s17, 0
    %p38 = por %p36, %p37
    %p39 = scmp.ne.s32.totalorder %s25, %s26
    %p40 = scmp.eq.s32.totalorder %s18, 1
    %p41 = por %p39, %p40
    %p43 = scmp.ne.s32.totalorder %s26, %s42
    %p44 = scmp.eq.s32.totalorder %s18, 0
    %p45 = por %p43, %p44
    %s47 = sadd.s32 %s46, 1
    %p50 = scmp.eq.s32.totalorder %s12, 1
    %p51 = scmp.ne.s32.totalorder %s46, %s48
    %p52 = scmp.eq.s32.totalorder %s12, 0
    %p53 = por %p51, %p52
    %p54 = scmp.ne.s32.totalorder %s46, %s48
    %p55 = scmp.eq.s32.totalorder %s17, 1
    %p56 = por %p54, %p55
    %p57 = scmp.ne.s32.totalorder %s48, %s49
    %p58 = scmp.eq.s32.totalorder %s17, 0
    %p59 = por %p57, %p58
    %p60 = scmp.ne.s32.totalorder %s48, %s49
    %p61 = scmp.eq.s32.totalorder %s18, 1
    %p62 = por %p60, %p61
    %p64 = scmp.ne.s32.totalorder %s49, %s63
    %p65 = scmp.eq.s32.totalorder %s18, 0
    %p66 = por %p64, %p65
    %s68 = sadd.s32 %s67, 1
    %p71 = scmp.eq.s32.totalorder %s12, 1
    %p72 = scmp.ne.s32.totalorder %s67, %s69
    %p73 = scmp.eq.s32.totalorder %s12, 0
    %p74 = por %p72, %p73
    %p75 = scmp.ne.s32.totalorder %s67, %s69
    %p76 = scmp.eq.s32.totalorder %s17, 1
    %p77 = por %p75, %p76
    %p78 = scmp.ne.s32.totalorder %s69, %s70
    %p79 = scmp.eq.s32.totalorder %s17, 0
    %p80 = por %p78, %p79
    %p81 = scmp.ne.s32.totalorder %s69, %s70
    %p82 = scmp.eq.s32.totalorder %s18, 1
    %p83 = por %p81, %p82
    %p85 = scmp.ne.s32.totalorder %s70, %s84
    %p86 = scmp.eq.s32.totalorder %s18, 0
    %p87 = por %p85, %p86
    %s89 = sadd.s32 %s88, 1
    %p92 = scmp.eq.s32.totalorder %s12, 1
    %p93 = scmp.ne.s32.totalorder %s88, %s90
    %p94 = scmp.eq.s32.totalorder %s12, 0
    %p95 = por %p93, %p94
    %p96 = scmp.ne.s32.totalorder %s88, %s90
    %p97 = scmp.eq.s32.totalorder %s17, 1
    %p98 = por %p96, %p97
    %p99 = scmp.ne.s32.totalorder %s90, %s91
    %p100 = scmp.eq.s32.totalorder %s17, 0
    %p101 = por %p99, %p100
    %p102 = scmp.ne.s32.totalorder %s90, %s91
    %p103 = scmp.eq.s32.totalorder %s18, 1
    %p104 = por %p102, %p103
    %p106 = scmp.ne.s32.totalorder %s91, %s105
    %p107 = scmp.eq.s32.totalorder %s18, 0
    %p108 = por %p106, %p107
    %s110 = sadd.s32 %s109, 1
    %p113 = scmp.eq.s32.totalorder %s12, 1
    %p114 = scmp.ne.s32.totalorder %s109, %s111
    %p115 = scmp.eq.s32.totalorder %s12, 0
    %p116 = por %p114, %p115
    %p117 = scmp.ne.s32.totalorder %s109, %s111
    %p118 = scmp.eq.s32.totalorder %s17, 1
    %p119 = por %p117, %p118
    %p120 = scmp.ne.s32.totalorder %s111, %s112
    %p121 = scmp.eq.s32.totalorder %s17, 0
    %p122 = por %p120, %p121
    %p123 = scmp.ne.s32.totalorder %s111, %s112
    %p124 = scmp.eq.s32.totalorder %s18, 1
    %p125 = por %p123, %p124
    %p127 = scmp.ne.s32.totalorder %s112, %s126
    %p128 = scmp.eq.s32.totalorder %s18, 0
    %p129 = por %p127, %p128
    %s131 = sadd.s32 %s130, 1
    %p134 = scmp.eq.s32.totalorder %s12, 1
    %p135 = scmp.ne.s32.totalorder %s130, %s132
    %p136 = scmp.eq.s32.totalorder %s12, 0
    %p137 = por %p135, %p136
    %p138 = scmp.ne.s32.totalorder %s130, %s132
    %p139 = scmp.eq.s32.totalorder %s17, 1
    %p140 = por %p138, %p139
    %p141 = scmp.ne.s32.totalorder %s132, %s133
    %p142 = scmp.eq.s32.totalorder %s17, 0
    %p143 = por %p141, %p142
    %p144 = scmp.ne.s32.totalorder %s132, %s133
    %p145 = scmp.eq.s32.totalorder %s18, 1
    %p146 = por %p144, %p145
    %p148 = scmp.ne.s32.totalorder %s133, %s147
    %p149 = scmp.eq.s32.totalorder %s18, 0
    %p150 = por %p148, %p149
    %s151 = ssub.s32 %s12, %s19
    %p152 = scmp.eq.s32.totalorder %s151, 0
    %s154 = sadd.s32 %s153, 1
    %s155 = scalar_select %p152, %s153, %s154
    %p158 = pneg %p152
    %p159 = scmp.eq.s32.totalorder %s12, 1
    %p160 = por %p158, %p159
    %p161 = scmp.ne.s32.totalorder %s153, %s156
    %p162 = scmp.eq.s32.totalorder %s12, 0
    %p163 = por %p161, %p162
    %p164 = scmp.ne.s32.totalorder %s153, %s156
    %p165 = scmp.eq.s32.totalorder %s17, 1
    %p166 = por %p164, %p165
    %p167 = scmp.ne.s32.totalorder %s156, %s157
    %p168 = scmp.eq.s32.totalorder %s17, 0
    %p169 = por %p167, %p168
    %p170 = scmp.ne.s32.totalorder %s156, %s157
    %p171 = scmp.eq.s32.totalorder %s18, 1
    %p172 = por %p170, %p171
    %p174 = scmp.ne.s32.totalorder %s157, %s173
    %p175 = scmp.eq.s32.totalorder %s18, 0
    %p176 = por %p174, %p175
    %p177 = scmp.le.s32.totalorder 1, %s12
    %p178 = scmp.lt.s32.totalorder %s12, 3
    %p179 = pnand %p177, %p178
    %p180 = pneg %p179
    // Predicated region
    $region9: #{forward_impl.1} parent=5 // pred_check
      _
    $region10: #{forward_impl.1} parent=5 // pred_check_branch
      %182 = sbr.rel (%p179) target = $region12
    $region11: #{forward_impl.1} parent=5 // pred_region
      %s183 = ssub.s32 %s12, 1
      // Predicated region
      $region13: #{forward_impl.1} parent=11 // pred_check
        %p184 = pneg %p59
      $region14: #{forward_impl.1} parent=11 // pred_check_branch
        %186 = sbr.rel (%p184) target = $region16
      $region15: #{forward_impl.1} parent=11 // pred_region
        _
      $region16: #{forward_impl.1} parent=11 // pred_fallthru
        _
      // Predicated region
      $region17: #{forward_impl.1} parent=11 // pred_check
        %p187 = pneg %p80
      $region18: #{forward_impl.1} parent=11 // pred_check_branch
        %189 = sbr.rel (%p187) target = $region20
      $region19: #{forward_impl.1} parent=11 // pred_region
        _
      $region20: #{forward_impl.1} parent=11 // pred_fallthru
        _
      // Predicated region
      $region21: #{forward_impl.1} parent=11 // pred_check
        %p190 = pneg %p101
      $region22: #{forward_impl.1} parent=11 // pred_check_branch
        %192 = sbr.rel (%p190) target = $region24
      $region23: #{forward_impl.1} parent=11 // pred_region
        _
      $region24: #{forward_impl.1} parent=11 // pred_fallthru
        _
      // Predicated region
      $region25: #{forward_impl.1} parent=11 // pred_check
        %p193 = pneg %p122
      $region26: #{forward_impl.1} parent=11 // pred_check_branch
        %195 = sbr.rel (%p193) target = $region28
      $region27: #{forward_impl.1} parent=11 // pred_region
        _
      $region28: #{forward_impl.1} parent=11 // pred_fallthru
        _
      // Predicated region
      $region29: #{forward_impl.1} parent=11 // pred_check
        %p196 = pneg %p143
      $region30: #{forward_impl.1} parent=11 // pred_check_branch
        %198 = sbr.rel (%p196) target = $region32
      $region31: #{forward_impl.1} parent=11 // pred_region
        _
      $region32: #{forward_impl.1} parent=11 // pred_fallthru
        _
    $region12: #{forward_impl.1} parent=5 // pred_fallthru
      _
    %p199 = scmp.lt.s32.totalorder %s12, 2
    // Predicated region
    $region33: #{forward_impl.1} parent=5 // pred_check
      %p200 = pneg %p199
    $region34: #{forward_impl.1} parent=5 // pred_check_branch
      %202 = sbr.rel (%p200) target = $region36
    $region35: #{forward_impl.1} parent=5 // pred_region
      // Predicated region
      $region37: #{forward_impl.1} parent=35 // pred_check
        %p203 = pneg %p32
      $region38: #{forward_impl.1} parent=35 // pred_check_branch
        %205 = sbr.rel (%p203) target = $region40
      $region39: #{forward_impl.1} parent=35 // pred_region
        %p206 = scmp.lt.s32.totalorder %s12, 1
        %s207 = scalar_select %p206, %s12, 1
        %s208 = smul.addr %s207, 30
        %s209 = smul.addr %s208, 8
        %s210 = scalar_lea.vmem %s0, %s209
      $region40: #{forward_impl.1} parent=35 // pred_fallthru
        _
    $region36: #{forward_impl.1} parent=5 // pred_fallthru
      _
    %p211 = scmp.le.s32.totalorder 1, %s12
    %p212 = scmp.lt.s32.totalorder %s12, 3
    %p213 = pnand %p211, %p212
    %p214 = pneg %p213
    // Predicated region
    $region41: #{forward_impl.1} parent=5 // pred_check
      _
    $region42: #{forward_impl.1} parent=5 // pred_check_branch
      %216 = sbr.rel (%p213) target = $region44
    $region43: #{forward_impl.1} parent=5 // pred_region
      %s217 = ssub.s32 %s12, 1
      %p218 = scmp.lt.s32.totalorder %s17, 1
      %s219 = scalar_select %p218, %s17, 1
      %s220 = smul.addr %s219, 30
      %s221 = smul.addr %s220, 8
      %s222 = scalar_lea.vmem %s0, %s221
      %p223 = pneg %p38
      %p224 = pneg %p35
      %p225 = pneg %p59
      %p226 = pneg %p56
      %p227 = pneg %p80
      %p228 = pneg %p77
      %p229 = pneg %p101
      %p230 = pneg %p98
      %p231 = pneg %p122
      %p232 = pneg %p119
      %p233 = pneg %p143
      %p234 = pneg %p140
      %p235 = pneg %p169
      %p236 = pneg %p166
      %p237 = scmp.lt.s32.totalorder %s17, 1
      %s238 = scalar_select %p237, %s17, 1
      %s239 = smul.addr %s238, 22
      %s240 = smul.addr %s239, 8
      %s241 = scalar_lea.vmem %s6, %s240
      %p242 = scmp.lt.s32.totalorder %s17, 1
      %s243 = scalar_select %p242, %s17, 1
      %s244 = smul.addr %s243, 30
      %s245 = smul.addr %s244, 8
      %s246 = scalar_lea.vmem %s0, %s245
      %p247 = scmp.lt.s32.totalorder %s17, 1
      %s248 = scalar_select %p247, %s17, 1
      %s249 = smul.addr %s248, 22
      %s250 = smul.addr %s249, 8
      %s251 = scalar_lea.vmem %s6, %s250
      %v253 = vld [vmem:[%s1] sm:$0xff]
      %v254 = vld [vmem:[%s1 + $0x8] sm:$0xff]
      %v255 = vld [vmem:[%s1 + $0x10] sm:$0xff]
      %v256 = vld [vmem:[%s1 + $0x18] sm:$0xff]
      %v257 = vld [vmem:[%s1 + $0x20] sm:$0xff]
      %v258 = vld [vmem:[%s1 + $0x28] sm:$0xff]
      %v259 = vld [vmem:[%s1 + $0x30] sm:$0xff]
      %v260 = vld [vmem:[%s1 + $0x38] sm:$0xff]
      %v261 = vld [vmem:[%s1 + $0x40] sm:$0xff]
      %v262 = vld [vmem:[%s1 + $0x48] sm:$0xff]
      %v263 = vld [vmem:[%s1 + $0x50] sm:$0xff]
      %v264 = vld [vmem:[%s1 + $0x58] sm:$0xff]
      %v265 = vld [vmem:[%s1 + $0x60] sm:$0xff]
      %v266 = vld [vmem:[%s1 + $0x68] sm:$0xff]
      %v267 = vld [vmem:[%s1 + $0x70] sm:$0xff]
      %v268 = vld [vmem:[%s1 + $0x78] sm:$0xff]
      %v269 = vld [vmem:[%s1 + $0x80] sm:$0xff]
      %v270 = vld [vmem:[%s1 + $0x88] sm:$0xff]
      %v271 = vld [vmem:[%s1 + $0x90] sm:$0xff]
      %v272 = vld [vmem:[%s1 + $0x98] sm:$0xff]
      %v273 = vld [vmem:[%s1 + $0xa0] sm:$0xff]
      %v274 = vld [vmem:[%s1 + $0xa8] sm:$0xff]
      %vm275 = vcmp.gt.f32.partialorder %v253, 0.5
      %vm276 = vcmp.gt.f32.partialorder %v254, 0.5
      %vm277 = vcmp.gt.f32.partialorder %v255, 0.5
      %vm278 = vcmp.gt.f32.partialorder %v256, 0.5
      %vm279 = vcmp.gt.f32.partialorder %v257, 0.5
      %vm280 = vcmp.gt.f32.partialorder %v258, 0.5
      %vm281 = vcmp.gt.f32.partialorder %v259, 0.5
      %vm282 = vcmp.gt.f32.partialorder %v260, 0.5
      %vm283 = vcmp.gt.f32.partialorder %v261, 0.5
      %vm284 = vcmp.gt.f32.partialorder %v262, 0.5
      %vm285 = vcmp.gt.f32.partialorder %v263, 0.5
      %vm286 = vcmp.gt.f32.partialorder %v264, 0.5
      %vm287 = vcmp.gt.f32.partialorder %v265, 0.5
      %vm288 = vcmp.gt.f32.partialorder %v266, 0.5
      %vm289 = vcmp.gt.f32.partialorder %v267, 0.5
      %vm290 = vcmp.gt.f32.partialorder %v268, 0.5
      %vm291 = vcmp.gt.f32.partialorder %v269, 0.5
      %vm292 = vcmp.gt.f32.partialorder %v270, 0.5
      %vm293 = vcmp.gt.f32.partialorder %v271, 0.5
      %vm294 = vcmp.gt.f32.partialorder %v272, 0.5
      %vm295 = vcmp.gt.f32.partialorder %v273, 0.5
      %vm296 = vcmp.gt.f32.partialorder %v274, 0.5
      %v297 = vld [vmem:[%s246] sm:$0xff]
      %v298 = vld [vmem:[%s246 + $0x8] sm:$0xff]
      %v299 = vld [vmem:[%s246 + $0x10] sm:$0xff]
      %v300 = vld [vmem:[%s246 + $0x18] sm:$0xff]
      %v301 = vld [vmem:[%s246 + $0x20] sm:$0xff]
      %v302 = vld [vmem:[%s246 + $0x28] sm:$0xff]
      %v303 = vld [vmem:[%s246 + $0x30] sm:$0xff]
      %v304 = vld [vmem:[%s246 + $0x38] sm:$0xff]
      %v305 = vld [vmem:[%s246 + $0x40] sm:$0xff]
      %v306 = vld [vmem:[%s246 + $0x48] sm:$0xff]
      %v307 = vld [vmem:[%s246 + $0x50] sm:$0xff]
      %v308 = vld [vmem:[%s246 + $0x58] sm:$0xff]
      %v309 = vld [vmem:[%s246 + $0x60] sm:$0xff]
      %v310 = vld [vmem:[%s246 + $0x68] sm:$0xff]
      %v311 = vld [vmem:[%s246 + $0x70] sm:$0xff]
      %v312 = vld [vmem:[%s246 + $0x78] sm:$0xff]
      %v313 = vld [vmem:[%s246 + $0x80] sm:$0xff]
      %v314 = vld [vmem:[%s246 + $0x88] sm:$0xff]
      %v315 = vld [vmem:[%s246 + $0x90] sm:$0xff]
      %v316 = vld [vmem:[%s246 + $0x98] sm:$0xff]
      %v317 = vld [vmem:[%s246 + $0xa0] sm:$0xff]
      %v318 = vld [vmem:[%s246 + $0xa8] sm:$0xff]
      %v319 = vld [vmem:[%s246 + $0xb0] sm:$0xff]
      %v320 = vld [vmem:[%s246 + $0xb8] sm:$0xff]
      %v321 = vld [vmem:[%s246 + $0xc0] sm:$0xff]
      %v322 = vld [vmem:[%s246 + $0xc8] sm:$0xff]
      %v323 = vld [vmem:[%s246 + $0xd0] sm:$0xff]
      %v324 = vld [vmem:[%s246 + $0xd8] sm:$0xff]
      %v325 = vpack.c.bf16 %v298, %v297
      %v326 = vpack.c.bf16 %v300, %v299
      %v327 = vpack.c.bf16 %v302, %v301
      %v328 = vpack.c.bf16 %v304, %v303
      %v329 = vpack.c.bf16 %v306, %v305
      %v330 = vpack.c.bf16 %v308, %v307
      %v331 = vpack.c.bf16 %v310, %v309
      %v332 = vpack.c.bf16 %v312, %v311
      %v333 = vpack.c.bf16 %v314, %v313
      %v334 = vpack.c.bf16 %v316, %v315
      %v335 = vpack.c.bf16 %v318, %v317
      %v336 = vpack.c.bf16 %v319, %v319
      %v337 = vld [vmem:[%s2] sm:$0xf]
      %v338 = vld [vmem:[%s2 + $0x4] sm:$0xf]
      %v339 = vld [vmem:[%s2 + $0x8] sm:$0xf]
      %v340 = vld [vmem:[%s2 + $0xc] sm:$0xf]
      %v341 = vld [vmem:[%s2 + $0x10] sm:$0xf]
      %v342 = vld [vmem:[%s2 + $0x14] sm:$0xf]
      %v343 = vld [vmem:[%s2 + $0x18] sm:$0xf]
      %v344 = vld [vmem:[%s2 + $0x1c] sm:$0xf]
      %v345 = vld [vmem:[%s2 + $0x20] sm:$0xf]
      %v346 = vld [vmem:[%s2 + $0x24] sm:$0xf]
      %v347 = vld [vmem:[%s2 + $0x28] sm:$0xf]
      %v348 = vld [vmem:[%s2 + $0x2c] sm:$0xf]
      %v349 = vld [vmem:[%s2 + $0x30] sm:$0xf]
      %v350 = vld [vmem:[%s2 + $0x34] sm:$0xf]
      %v351 = vld [vmem:[%s2 + $0x38] sm:$0xf]
      %v352 = vld [vmem:[%s2 + $0x3c] sm:$0xf]
      %v353 = vpack.c.bf16 %v299, %v298
      %v354 = vpack.c.bf16 %v301, %v300
      %v355 = vpack.c.bf16 %v303, %v302
      %v356 = vpack.c.bf16 %v305, %v304
      %v357 = vpack.c.bf16 %v307, %v306
      %v358 = vpack.c.bf16 %v309, %v308
      %v359 = vpack.c.bf16 %v311, %v310
      %v360 = vpack.c.bf16 %v313, %v312
      %v361 = vpack.c.bf16 %v315, %v314
      %v362 = vpack.c.bf16 %v317, %v316
      %v363 = vpack.c.bf16 %v319, %v318
      %s364 = scalar_lea.vmem %s2, 64
      %v365 = vld [vmem:[%s364] sm:$0xf]
      %v366 = vld [vmem:[%s364 + $0x4] sm:$0xf]
      %v367 = vld [vmem:[%s364 + $0x8] sm:$0xf]
      %v368 = vld [vmem:[%s364 + $0xc] sm:$0xf]
      %v369 = vld [vmem:[%s364 + $0x10] sm:$0xf]
      %v370 = vld [vmem:[%s364 + $0x14] sm:$0xf]
      %v371 = vld [vmem:[%s364 + $0x18] sm:$0xf]
      %v372 = vld [vmem:[%s364 + $0x1c] sm:$0xf]
      %v373 = vld [vmem:[%s364 + $0x20] sm:$0xf]
      %v374 = vld [vmem:[%s364 + $0x24] sm:$0xf]
      %v375 = vld [vmem:[%s364 + $0x28] sm:$0xf]
      %v376 = vld [vmem:[%s364 + $0x2c] sm:$0xf]
      %v377 = vld [vmem:[%s364 + $0x30] sm:$0xf]
      %v378 = vld [vmem:[%s364 + $0x34] sm:$0xf]
      %v379 = vld [vmem:[%s364 + $0x38] sm:$0xf]
      %v380 = vld [vmem:[%s364 + $0x3c] sm:$0xf]
      %v397 = vunpack.c.l.b16 %v365
      %v398 = vunpack.c.l.b16 %v366
      %v399 = vunpack.c.l.b16 %v367
      %v400 = vunpack.c.l.b16 %v368
      %v401 = vunpack.c.l.b16 %v369
      %v402 = vunpack.c.l.b16 %v370
      %v403 = vunpack.c.l.b16 %v371
      %v404 = vunpack.c.l.b16 %v372
      %v405 = vunpack.c.l.b16 %v373
      %v406 = vunpack.c.l.b16 %v374
      %v407 = vunpack.c.l.b16 %v375
      %v408 = vunpack.c.l.b16 %v376
      %v409 = vunpack.c.l.b16 %v377
      %v410 = vunpack.c.l.b16 %v378
      %v411 = vunpack.c.l.b16 %v379
      %v412 = vunpack.c.l.b16 %v380
      %v413 = vpack.c.b16 %v398, %v397
      %v414 = vpack.c.b16 %v400, %v399
      %v415 = vpack.c.b16 %v402, %v401
      %v416 = vpack.c.b16 %v404, %v403
      %v417 = vpack.c.b16 %v406, %v405
      %v418 = vpack.c.b16 %v408, %v407
      %v419 = vpack.c.b16 %v410, %v409
      %v420 = vpack.c.b16 %v412, %v411
      %429 = vmatprep.subr.bf16.mxu0 0
      %430 = vmatpush1.bf16.msra.mxu0 %v413
      %431 = vmatprep.subr.bf16.mxu0 0
      %432 = vmatpush1.bf16.msra.mxu0 %v414
      %433 = vmatprep.subr.bf16.mxu0 0
      %434 = vmatpush1.bf16.msra.mxu0 %v415
      %435 = vmatprep.subr.bf16.mxu0 0
      %436 = vmatpush1.bf16.msra.mxu0 %v416
      %437 = vmatprep.subr.bf16.mxu0 0
      %438 = vmatpush1.bf16.msra.mxu0 %v417
      %439 = vmatprep.subr.bf16.mxu0 0
      %440 = vmatpush1.bf16.msra.mxu0 %v418
      %441 = vmatprep.subr.bf16.mxu0 0
      %442 = vmatpush1.bf16.msra.mxu0 %v419
      %443 = vmatprep.subr.bf16.mxu0 0
      %444 = vmatpush1.bf16.msra.mxu0 %v420
      %445 = vmatprep.subr.bf16.mxu0 0
      %446 = vmatpush1.bf16.msra.mxu0 0
      %447 = vmatprep.subr.bf16.mxu0 0
      %448 = vmatpush1.bf16.msra.mxu0 0
      %449 = vmatprep.subr.bf16.mxu0 0
      %450 = vmatpush1.bf16.msra.mxu0 0
      %451 = vmatprep.subr.bf16.mxu0 0
      %452 = vmatpush1.bf16.msra.mxu0 0
      %453 = vmatprep.subr.bf16.mxu0 0
      %454 = vmatpush1.bf16.msra.mxu0 0
      %455 = vmatprep.subr.bf16.mxu0 0
      %456 = vmatpush1.bf16.msra.mxu0 0
      %457 = vmatprep.subr.bf16.mxu0 0
      %458 = vmatpush1.bf16.msra.mxu0 0
      %459 = vmatprep.subr.bf16.mxu0 0
      %460 = vmatpush1.bf16.msra.mxu0 0
      %461 = vmatprep.mubr.bf16.mxu0 0
      %462 = vmatmul.mubr.bf16.gmra.mrb[0].mxu0 %v353
      %v463 = vpop.f32.mrb[0].mxu0
      %v464 = vadd.f32 0.0, %v463
      %v465 = vpop.f32.mrb[0].mxu0
      %v466 = vpop.f32.mrb[0].mxu0
      %v467 = vadd.f32 0.0, %v466
      %v468 = vpop.f32.mrb[0].mxu0
      %469 = vmatprep.mubr.bf16.mxu0 0
      %470 = vmatmul.mubr.bf16.gmra.mrb[0].mxu0 %v354
      %v471 = vpop.f32.mrb[0].mxu0
      %v472 = vadd.f32 0.0, %v471
      %v473 = vpop.f32.mrb[0].mxu0
      %v474 = vpop.f32.mrb[0].mxu0
      %v475 = vadd.f32 0.0, %v474
      %v476 = vpop.f32.mrb[0].mxu0
      %477 = vmatprep.mubr.bf16.mxu0 0
      %478 = vmatmul.mubr.bf16.gmra.mrb[0].mxu0 %v355
      %v479 = vpop.f32.mrb[0].mxu0
      %v480 = vadd.f32 0.0, %v479
      %v481 = vpop.f32.mrb[0].mxu0
      %v482 = vpop.f32.mrb[0].mxu0
      %v483 = vadd.f32 0.0, %v482
      %v484 = vpop.f32.mrb[0].mxu0
      %485 = vmatprep.mubr.bf16.mxu0 0
      %486 = vmatmul.mubr.bf16.gmra.mrb[0].mxu0 %v356
      %v487 = vpop.f32.mrb[0].mxu0
      %v488 = vadd.f32 0.0, %v487
      %v489 = vpop.f32.mrb[0].mxu0
      %v490 = vpop.f32.mrb[0].mxu0
      %v491 = vadd.f32 0.0, %v490
      %v492 = vpop.f32.mrb[0].mxu0
      %493 = vmatprep.mubr.bf16.mxu0 0
      %494 = vmatmul.mubr.bf16.gmra.mrb[0].mxu0 %v357
      %v495 = vpop.f32.mrb[0].mxu0
      %v496 = vadd.f32 0.0, %v495
      %v497 = vpop.f32.mrb[0].mxu0
      %v498 = vpop.f32.mrb[0].mxu0
      %v499 = vadd.f32 0.0, %v498
      %v500 = vpop.f32.mrb[0].mxu0
      %501 = vmatprep.mubr.bf16.mxu0 0
      %502 = vmatmul.mubr.bf16.gmra.mrb[0].mxu0 %v358
      %v503 = vpop.f32.mrb[0].mxu0
      %v504 = vadd.f32 0.0, %v503
      %v505 = vpop.f32.mrb[0].mxu0
      %v506 = vpop.f32.mrb[0].mxu0
      %v507 = vadd.f32 0.0, %v506
      %v508 = vpop.f32.mrb[0].mxu0
      %509 = vmatprep.mubr.bf16.mxu0 0
      %510 = vmatmul.mubr.bf16.gmra.mrb[0].mxu0 %v359
      %v511 = vpop.f32.mrb[0].mxu0
      %v512 = vadd.f32 0.0, %v511
      %v513 = vpop.f32.mrb[0].mxu0
      %v514 = vpop.f32.mrb[0].mxu0
      %v515 = vadd.f32 0.0, %v514
      %v516 = vpop.f32.mrb[0].mxu0
      %517 = vmatprep.mubr.bf16.mxu0 0
      %518 = vmatmul.mubr.bf16.gmra.mrb[0].mxu0 %v360
      %v519 = vpop.f32.mrb[0].mxu0
      %v520 = vadd.f32 0.0, %v519
      %v521 = vpop.f32.mrb[0].mxu0
      %v522 = vpop.f32.mrb[0].mxu0
      %v523 = vadd.f32 0.0, %v522
      %v524 = vpop.f32.mrb[0].mxu0
      %525 = vmatprep.mubr.bf16.mxu0 0
      %526 = vmatmul.mubr.bf16.gmra.mrb[0].mxu0 %v361
      %v527 = vpop.f32.mrb[0].mxu0
      %v528 = vadd.f32 0.0, %v527
      %v529 = vpop.f32.mrb[0].mxu0
      %v530 = vpop.f32.mrb[0].mxu0
      %v531 = vadd.f32 0.0, %v530
      %v532 = vpop.f32.mrb[0].mxu0
      %533 = vmatprep.mubr.bf16.mxu0 0
      %534 = vmatmul.mubr.bf16.gmra.mrb[0].mxu0 %v362
      %v535 = vpop.f32.mrb[0].mxu0
      %v536 = vadd.f32 0.0, %v535
      %v537 = vpop.f32.mrb[0].mxu0
      %v538 = vpop.f32.mrb[0].mxu0
      %v539 = vadd.f32 0.0, %v538
      %v540 = vpop.f32.mrb[0].mxu0
      %541 = vmatprep.mubr.bf16.mxu0 0
      %542 = vmatmul.mubr.bf16.gmra.mrb[0].mxu0 %v363
      %v543 = vpop.f32.mrb[0].mxu0
      %v544 = vadd.f32 0.0, %v543
      %v545 = vpop.f32.mrb[0].mxu0
      %v546 = vpop.f32.mrb[0].mxu0
      %v547 = vadd.f32 0.0, %v546
      %v548 = vpop.f32.mrb[0].mxu0
      %549 = vdwg.mxu0
      %vm550 = vsmask.f32 4352
      %v552 = vshrl.u32 %v325, 16
      %v554 = vrot.slane %v552, 3
      %v555 = vshll.u32 %v325, 16
      %v557 = vrot.slane %v555, 4
      %v558 = vor.u32 %v554, %v557
      %v560 = vshrl.u32 %v326, 16
      %v562 = vrot.slane %v560, 3
      %v563 = vshll.u32 %v326, 16
      %v565 = vrot.slane %v563, 4
      %v566 = vor.u32 %v562, %v565
      %v567 = vsel %vm550, %v558, %v566
      %v569 = vshrl.u32 %v327, 16
      %v571 = vrot.slane %v569, 3
      %v572 = vshll.u32 %v327, 16
      %v574 = vrot.slane %v572, 4
      %v575 = vor.u32 %v571, %v574
      %v576 = vsel %vm550, %v566, %v575
      %v578 = vshrl.u32 %v328, 16
      %v580 = vrot.slane %v578, 3
      %v581 = vshll.u32 %v328, 16
      %v583 = vrot.slane %v581, 4
      %v584 = vor.u32 %v580, %v583
      %v585 = vsel %vm550, %v575, %v584
      %v587 = vshrl.u32 %v329, 16
      %v589 = vrot.slane %v587, 3
      %v590 = vshll.u32 %v329, 16
      %v592 = vrot.slane %v590, 4
      %v593 = vor.u32 %v589, %v592
      %v594 = vsel %vm550, %v584, %v593
      %v596 = vshrl.u32 %v330, 16
      %v598 = vrot.slane %v596, 3
      %v599 = vshll.u32 %v330, 16
      %v601 = vrot.slane %v599, 4
      %v602 = vor.u32 %v598, %v601
      %v603 = vsel %vm550, %v593, %v602
      %v605 = vshrl.u32 %v331, 16
      %v607 = vrot.slane %v605, 3
      %v608 = vshll.u32 %v331, 16
      %v610 = vrot.slane %v608, 4
      %v611 = vor.u32 %v607, %v610
      %v612 = vsel %vm550, %v602, %v611
      %v614 = vshrl.u32 %v332, 16
      %v616 = vrot.slane %v614, 3
      %v617 = vshll.u32 %v332, 16
      %v619 = vrot.slane %v617, 4
      %v620 = vor.u32 %v616, %v619
      %v621 = vsel %vm550, %v611, %v620
      %v623 = vshrl.u32 %v333, 16
      %v625 = vrot.slane %v623, 3
      %v626 = vshll.u32 %v333, 16
      %v628 = vrot.slane %v626, 4
      %v629 = vor.u32 %v625, %v628
      %v630 = vsel %vm550, %v620, %v629
      %v632 = vshrl.u32 %v334, 16
      %v634 = vrot.slane %v632, 3
      %v635 = vshll.u32 %v334, 16
      %v637 = vrot.slane %v635, 4
      %v638 = vor.u32 %v634, %v637
      %v639 = vsel %vm550, %v629, %v638
      %v641 = vshrl.u32 %v335, 16
      %v643 = vrot.slane %v641, 3
      %v644 = vshll.u32 %v335, 16
      %v646 = vrot.slane %v644, 4
      %v647 = vor.u32 %v643, %v646
      %v648 = vsel %vm550, %v638, %v647
      %v650 = vshrl.u32 %v336, 16
      %v652 = vrot.slane %v650, 3
      %v653 = vshll.u32 %v336, 16
      %v655 = vrot.slane %v653, 4
      %v656 = vor.u32 %v652, %v655
      %v657 = vsel %vm550, %v647, %v656
      %v685 = vunpack.c.l.b16 %v337
      %v686 = vunpack.c.l.b16 %v338
      %v687 = vunpack.c.l.b16 %v339
      %v688 = vunpack.c.l.b16 %v340
      %v689 = vunpack.c.l.b16 %v341
      %v690 = vunpack.c.l.b16 %v342
      %v691 = vunpack.c.l.b16 %v343
      %v692 = vunpack.c.l.b16 %v344
      %v693 = vunpack.c.l.b16 %v345
      %v694 = vunpack.c.l.b16 %v346
      %v695 = vunpack.c.l.b16 %v347
      %v696 = vunpack.c.l.b16 %v348
      %v697 = vunpack.c.l.b16 %v349
      %v698 = vunpack.c.l.b16 %v350
      %v699 = vunpack.c.l.b16 %v351
      %v700 = vunpack.c.l.b16 %v352
      %v701 = vpack.c.b16 %v686, %v685
      %v702 = vpack.c.b16 %v688, %v687
      %v703 = vpack.c.b16 %v690, %v689
      %v704 = vpack.c.b16 %v692, %v691
      %v705 = vpack.c.b16 %v694, %v693
      %v706 = vpack.c.b16 %v696, %v695
      %v707 = vpack.c.b16 %v698, %v697
      %v708 = vpack.c.b16 %v700, %v699
      %717 = vmatprep.subr.bf16.mxu0 0
      %718 = vmatpush1.bf16.msra.mxu0 %v701
      %719 = vmatprep.subr.bf16.mxu0 0
      %720 = vmatpush1.bf16.msra.mxu0 %v702
      %721 = vmatprep.subr.bf16.mxu0 0
      %722 = vmatpush1.bf16.msra.mxu0 %v703
      %723 = vmatprep.subr.bf16.mxu0 0
      %724 = vmatpush1.bf16.msra.mxu0 %v704
      %725 = vmatprep.subr.bf16.mxu0 0
      %726 = vmatpush1.bf16.msra.mxu0 %v705
      %727 = vmatprep.subr.bf16.mxu0 0
      %728 = vmatpush1.bf16.msra.mxu0 %v706
      %729 = vmatprep.subr.bf16.mxu0 0
      %730 = vmatpush1.bf16.msra.mxu0 %v707
      %731 = vmatprep.subr.bf16.mxu0 0
      %732 = vmatpush1.bf16.msra.mxu0 %v708
      %733 = vmatprep.subr.bf16.mxu0 0
      %734 = vmatpush1.bf16.msra.mxu0 0
      %735 = vmatprep.subr.bf16.mxu0 0
      %736 = vmatpush1.bf16.msra.mxu0 0
      %737 = vmatprep.subr.bf16.mxu0 0
      %738 = vmatpush1.bf16.msra.mxu0 0
      %739 = vmatprep.subr.bf16.mxu0 0
      %740 = vmatpush1.bf16.msra.mxu0 0
      %741 = vmatprep.subr.bf16.mxu0 0
      %742 = vmatpush1.bf16.msra.mxu0 0
      %743 = vmatprep.subr.bf16.mxu0 0
      %744 = vmatpush1.bf16.msra.mxu0 0
      %745 = vmatprep.subr.bf16.mxu0 0
      %746 = vmatpush1.bf16.msra.mxu0 0
      %747 = vmatprep.subr.bf16.mxu0 0
      %748 = vmatpush1.bf16.msra.mxu0 0
      %749 = vmatprep.mubr.bf16.mxu0 0
      %750 = vmatmul.mubr.bf16.gmra.mrb[0].mxu0 %v567
      %v751 = vpop.f32.mrb[0].mxu0
      %v752 = vadd.f32 %v464, %v751
      %v753 = vpop.f32.mrb[0].mxu0
      %v754 = vpop.f32.mrb[0].mxu0
      %v755 = vadd.f32 %v467, %v754
      %v756 = vpop.f32.mrb[0].mxu0
      %757 = vmatprep.mubr.bf16.mxu0 0
      %758 = vmatmul.mubr.bf16.gmra.mrb[0].mxu0 %v576
      %v759 = vpop.f32.mrb[0].mxu0
      %v760 = vadd.f32 %v472, %v759
      %v761 = vpop.f32.mrb[0].mxu0
      %v762 = vpop.f32.mrb[0].mxu0
      %v763 = vadd.f32 %v475, %v762
      %v764 = vpop.f32.mrb[0].mxu0
      %765 = vmatprep.mubr.bf16.mxu0 0
      %766 = vmatmul.mubr.bf16.gmra.mrb[0].mxu0 %v585
      %v767 = vpop.f32.mrb[0].mxu0
      %v768 = vadd.f32 %v480, %v767
      %v769 = vpop.f32.mrb[0].mxu0
      %v770 = vpop.f32.mrb[0].mxu0
      %v771 = vadd.f32 %v483, %v770
      %v772 = vpop.f32.mrb[0].mxu0
      %773 = vmatprep.mubr.bf16.mxu0 0
      %774 = vmatmul.mubr.bf16.gmra.mrb[0].mxu0 %v594
      %v775 = vpop.f32.mrb[0].mxu0
      %v776 = vadd.f32 %v488, %v775
      %v777 = vpop.f32.mrb[0].mxu0
      %v778 = vpop.f32.mrb[0].mxu0
      %v779 = vadd.f32 %v491, %v778
      %v780 = vpop.f32.mrb[0].mxu0
      %781 = vmatprep.mubr.bf16.mxu0 0
      %782 = vmatmul.mubr.bf16.gmra.mrb[0].mxu0 %v603
      %v783 = vpop.f32.mrb[0].mxu0
      %v784 = vadd.f32 %v496, %v783
      %v785 = vpop.f32.mrb[0].mxu0
      %v786 = vpop.f32.mrb[0].mxu0
      %v787 = vadd.f32 %v499, %v786
      %v788 = vpop.f32.mrb[0].mxu0
      %789 = vmatprep.mubr.bf16.mxu0 0
      %790 = vmatmul.mubr.bf16.gmra.mrb[0].mxu0 %v612
      %v791 = vpop.f32.mrb[0].mxu0
      %v792 = vadd.f32 %v504, %v791
      %v793 = vpop.f32.mrb[0].mxu0
      %v794 = vpop.f32.mrb[0].mxu0
      %v795 = vadd.f32 %v507, %v794
      %v796 = vpop.f32.mrb[0].mxu0
      %797 = vmatprep.mubr.bf16.mxu0 0
      %798 = vmatmul.mubr.bf16.gmra.mrb[0].mxu0 %v621
      %v799 = vpop.f32.mrb[0].mxu0
      %v800 = vadd.f32 %v512, %v799
      %v801 = vpop.f32.mrb[0].mxu0
      %v802 = vpop.f32.mrb[0].mxu0
      %v803 = vadd.f32 %v515, %v802
      %v804 = vpop.f32.mrb[0].mxu0
      %805 = vmatprep.mubr.bf16.mxu0 0
      %806 = vmatmul.mubr.bf16.gmra.mrb[0].mxu0 %v630
      %v807 = vpop.f32.mrb[0].mxu0
      %v808 = vadd.f32 %v520, %v807
      %v809 = vpop.f32.mrb[0].mxu0
      %v810 = vpop.f32.mrb[0].mxu0
      %v811 = vadd.f32 %v523, %v810
      %v812 = vpop.f32.mrb[0].mxu0
      %813 = vmatprep.mubr.bf16.mxu0 0
      %814 = vmatmul.mubr.bf16.gmra.mrb[0].mxu0 %v639
      %v815 = vpop.f32.mrb[0].mxu0
      %v816 = vadd.f32 %v528, %v815
      %v817 = vpop.f32.mrb[0].mxu0
      %v818 = vpop.f32.mrb[0].mxu0
      %v819 = vadd.f32 %v531, %v818
      %v820 = vpop.f32.mrb[0].mxu0
      %821 = vmatprep.mubr.bf16.mxu0 0
      %822 = vmatmul.mubr.bf16.gmra.mrb[0].mxu0 %v648
      %v823 = vpop.f32.mrb[0].mxu0
      %v824 = vadd.f32 %v536, %v823
      %v825 = vpop.f32.mrb[0].mxu0
      %v826 = vpop.f32.mrb[0].mxu0
      %v827 = vadd.f32 %v539, %v826
      %v828 = vpop.f32.mrb[0].mxu0
      %829 = vmatprep.mubr.bf16.mxu0 0
      %830 = vmatmul.mubr.bf16.gmra.mrb[0].mxu0 %v657
      %v831 = vpop.f32.mrb[0].mxu0
      %v832 = vadd.f32 %v544, %v831
      %v833 = vpop.f32.mrb[0].mxu0
      %v834 = vpop.f32.mrb[0].mxu0
      %v835 = vadd.f32 %v547, %v834
      %v836 = vpop.f32.mrb[0].mxu0
      %837 = vdwg.mxu0
      %v838 = vpack.c.bf16 %v320, %v320
      %s839 = scalar_lea.vmem %s2, 128
      %v840 = vld [vmem:[%s839] sm:$0xf]
      %v841 = vld [vmem:[%s839 + $0x4] sm:$0xf]
      %v842 = vld [vmem:[%s839 + $0x8] sm:$0xf]
      %v843 = vld [vmem:[%s839 + $0xc] sm:$0xf]
      %v844 = vld [vmem:[%s839 + $0x10] sm:$0xf]
      %v845 = vld [vmem:[%s839 + $0x14] sm:$0xf]
      %v846 = vld [vmem:[%s839 + $0x18] sm:$0xf]
      %v847 = vld [vmem:[%s839 + $0x1c] sm:$0xf]
      %v848 = vld [vmem:[%s839 + $0x20] sm:$0xf]
      %v849 = vld [vmem:[%s839 + $0x24] sm:$0xf]
      %v850 = vld [vmem:[%s839 + $0x28] sm:$0xf]
      %v851 = vld [vmem:[%s839 + $0x2c] sm:$0xf]
      %v852 = vld [vmem:[%s839 + $0x30] sm:$0xf]
      %v853 = vld [vmem:[%s839 + $0x34] sm:$0xf]
      %v854 = vld [vmem:[%s839 + $0x38] sm:$0xf]
      %v855 = vld [vmem:[%s839 + $0x3c] sm:$0xf]
      %vm856 = vsmask.f32 7424
      %v858 = vshrl.u32 %v353, 16
      %v860 = vshll.u32 %v353, 16
      %v862 = vrot.slane %v860, 1
      %v863 = vor.u32 %v858, %v862
      %v865 = vshll.u32 %v354, 16
      %v867 = vrot.slane %v865, 1
      %v868 = vsel %vm856, %v863, %v867
      %v869 = vshrl.u32 %v354, 16
      %v871 = vor.u32 %v869, %v867
      %v873 = vshll.u32 %v355, 16
      %v875 = vrot.slane %v873, 1
      %v876 = vsel %vm856, %v871, %v875
      %v877 = vshrl.u32 %v355, 16
      %v879 = vor.u32 %v877, %v875
      %v881 = vshll.u32 %v356, 16
      %v883 = vrot.slane %v881, 1
      %v884 = vsel %vm856, %v879, %v883
      %v885 = vshrl.u32 %v356, 16
      %v887 = vor.u32 %v885, %v883
      %v889 = vshll.u32 %v357, 16
      %v891 = vrot.slane %v889, 1
      %v892 = vsel %vm856, %v887, %v891
      %v893 = vshrl.u32 %v357, 16
      %v895 = vor.u32 %v893, %v891
      %v897 = vshll.u32 %v358, 16
      %v899 = vrot.slane %v897, 1
      %v900 = vsel %vm856, %v895, %v899
      %v901 = vshrl.u32 %v358, 16
      %v903 = vor.u32 %v901, %v899
      %v905 = vshll.u32 %v359, 16
      %v907 = vrot.slane %v905, 1
      %v908 = vsel %vm856, %v903, %v907
      %v909 = vshrl.u32 %v359, 16
      %v911 = vor.u32 %v909, %v907
      %v913 = vshll.u32 %v360, 16
      %v915 = vrot.slane %v913, 1
      %v916 = vsel %vm856, %v911, %v915
      %v917 = vshrl.u32 %v360, 16
      %v919 = vor.u32 %v917, %v915
      %v921 = vshll.u32 %v361, 16
      %v923 = vrot.slane %v921, 1
      %v924 = vsel %vm856, %v919, %v923
      %v925 = vshrl.u32 %v361, 16
      %v927 = vor.u32 %v925, %v923
      %v929 = vshll.u32 %v362, 16
      %v931 = vrot.slane %v929, 1
      %v932 = vsel %vm856, %v927, %v931
      %v933 = vshrl.u32 %v362, 16
      %v935 = vor.u32 %v933, %v931
      %v937 = vshll.u32 %v363, 16
      %v939 = vrot.slane %v937, 1
      %v940 = vsel %vm856, %v935, %v939
      %v941 = vshrl.u32 %v363, 16
      %v943 = vor.u32 %v941, %v939
      %v945 = vshll.u32 %v838, 16
      %v947 = vrot.slane %v945, 1
      %v948 = vsel %vm856, %v943, %v947
      %v976 = vunpack.c.l.b16 %v840
      %v977 = vunpack.c.l.b16 %v841
      %v978 = vunpack.c.l.b16 %v842
      %v979 = vunpack.c.l.b16 %v843
      %v980 = vunpack.c.l.b16 %v844
      %v981 = vunpack.c.l.b16 %v845
      %v982 = vunpack.c.l.b16 %v846
      %v983 = vunpack.c.l.b16 %v847
      %v984 = vunpack.c.l.b16 %v848
      %v985 = vunpack.c.l.b16 %v849
      %v986 = vunpack.c.l.b16 %v850
      %v987 = vunpack.c.l.b16 %v851
      %v988 = vunpack.c.l.b16 %v852
      %v989 = vunpack.c.l.b16 %v853
      %v990 = vunpack.c.l.b16 %v854
      %v991 = vunpack.c.l.b16 %v855
      %v992 = vpack.c.b16 %v977, %v976
      %v993 = vpack.c.b16 %v979, %v978
      %v994 = vpack.c.b16 %v981, %v980
      %v995 = vpack.c.b16 %v983, %v982
      %v996 = vpack.c.b16 %v985, %v984
      %v997 = vpack.c.b16 %v987, %v986
      %v998 = vpack.c.b16 %v989, %v988
      %v999 = vpack.c.b16 %v991, %v990
      %1008 = vmatprep.subr.bf16.mxu0 0
      %1009 = vmatpush1.bf16.msra.mxu0 %v992
      %1010 = vmatprep.subr.bf16.mxu0 0
      %1011 = vmatpush1.bf16.msra.mxu0 %v993
      %1012 = vmatprep.subr.bf16.mxu0 0
      %1013 = vmatpush1.bf16.msra.mxu0 %v994
      %1014 = vmatprep.subr.bf16.mxu0 0
      %1015 = vmatpush1.bf16.msra.mxu0 %v995
      %1016 = vmatprep.subr.bf16.mxu0 0
      %1017 = vmatpush1.bf16.msra.mxu0 %v996
      %1018 = vmatprep.subr.bf16.mxu0 0
      %1019 = vmatpush1.bf16.msra.mxu0 %v997
      %1020 = vmatprep.subr.bf16.mxu0 0
      %1021 = vmatpush1.bf16.msra.mxu0 %v998
      %1022 = vmatprep.subr.bf16.mxu0 0
      %1023 = vmatpush1.bf16.msra.mxu0 %v999
      %1024 = vmatprep.subr.bf16.mxu0 0
      %1025 = vmatpush1.bf16.msra.mxu0 0
      %1026 = vmatprep.subr.bf16.mxu0 0
      %1027 = vmatpush1.bf16.msra.mxu0 0
      %1028 = vmatprep.subr.bf16.mxu0 0
      %1029 = vmatpush1.bf16.msra.mxu0 0
      %1030 = vmatprep.subr.bf16.mxu0 0
      %1031 = vmatpush1.bf16.msra.mxu0 0
      %1032 = vmatprep.subr.bf16.mxu0 0
      %1033 = vmatpush1.bf16.msra.mxu0 0
      %1034 = vmatprep.subr.bf16.mxu0 0
      %1035 = vmatpush1.bf16.msra.mxu0 0
      %1036 = vmatprep.subr.bf16.mxu0 0
      %1037 = vmatpush1.bf16.msra.mxu0 0
      %1038 = vmatprep.subr.bf16.mxu0 0
      %1039 = vmatpush1.bf16.msra.mxu0 0
      %1040 = vmatprep.mubr.bf16.mxu0 0
      %1041 = vmatmul.mubr.bf16.gmra.mrb[0].mxu0 %v868
      %v1042 = vpop.f32.mrb[0].mxu0
      %v1043 = vadd.f32 0.0, %v1042
      %v1044 = vpop.f32.mrb[0].mxu0
      %v1045 = vpop.f32.mrb[0].mxu0
      %v1046 = vadd.f32 0.0, %v1045
      %v1047 = vpop.f32.mrb[0].mxu0
      %1048 = vmatprep.mubr.bf16.mxu0 0
      %1049 = vmatmul.mubr.bf16.gmra.mrb[0].mxu0 %v876
      %v1050 = vpop.f32.mrb[0].mxu0
      %v1051 = vadd.f32 0.0, %v1050
      %v1052 = vpop.f32.mrb[0].mxu0
      %v1053 = vpop.f32.mrb[0].mxu0
      %v1054 = vadd.f32 0.0, %v1053
      %v1055 = vpop.f32.mrb[0].mxu0
      %1056 = vmatprep.mubr.bf16.mxu0 0
      %1057 = vmatmul.mubr.bf16.gmra.mrb[0].mxu0 %v884
      %v1058 = vpop.f32.mrb[0].mxu0
      %v1059 = vadd.f32 0.0, %v1058
      %v1060 = vpop.f32.mrb[0].mxu0
      %v1061 = vpop.f32.mrb[0].mxu0
      %v1062 = vadd.f32 0.0, %v1061
      %v1063 = vpop.f32.mrb[0].mxu0
      %1064 = vmatprep.mubr.bf16.mxu0 0
      %1065 = vmatmul.mubr.bf16.gmra.mrb[0].mxu0 %v892
      %v1066 = vpop.f32.mrb[0].mxu0
      %v1067 = vadd.f32 0.0, %v1066
      %v1068 = vpop.f32.mrb[0].mxu0
      %v1069 = vpop.f32.mrb[0].mxu0
      %v1070 = vadd.f32 0.0, %v1069
      %v1071 = vpop.f32.mrb[0].mxu0
      %1072 = vmatprep.mubr.bf16.mxu0 0
      %1073 = vmatmul.mubr.bf16.gmra.mrb[0].mxu0 %v900
      %v1074 = vpop.f32.mrb[0].mxu0
      %v1075 = vadd.f32 0.0, %v1074
      %v1076 = vpop.f32.mrb[0].mxu0
      %v1077 = vpop.f32.mrb[0].mxu0
      %v1078 = vadd.f32 0.0, %v1077
      %v1079 = vpop.f32.mrb[0].mxu0
      %1080 = vmatprep.mubr.bf16.mxu0 0
      %1081 = vmatmul.mubr.bf16.gmra.mrb[0].mxu0 %v908
      %v1082 = vpop.f32.mrb[0].mxu0
      %v1083 = vadd.f32 0.0, %v1082
      %v1084 = vpop.f32.mrb[0].mxu0
      %v1085 = vpop.f32.mrb[0].mxu0
      %v1086 = vadd.f32 0.0, %v1085
      %v1087 = vpop.f32.mrb[0].mxu0
      %1088 = vmatprep.mubr.bf16.mxu0 0
      %1089 = vmatmul.mubr.bf16.gmra.mrb[0].mxu0 %v916
      %v1090 = vpop.f32.mrb[0].mxu0
      %v1091 = vadd.f32 0.0, %v1090
      %v1092 = vpop.f32.mrb[0].mxu0
      %v1093 = vpop.f32.mrb[0].mxu0
      %v1094 = vadd.f32 0.0, %v1093
      %v1095 = vpop.f32.mrb[0].mxu0
      %1096 = vmatprep.mubr.bf16.mxu0 0
      %1097 = vmatmul.mubr.bf16.gmra.mrb[0].mxu0 %v924
      %v1098 = vpop.f32.mrb[0].mxu0
      %v1099 = vadd.f32 0.0, %v1098
      %v1100 = vpop.f32.mrb[0].mxu0
      %v1101 = vpop.f32.mrb[0].mxu0
      %v1102 = vadd.f32 0.0, %v1101
      %v1103 = vpop.f32.mrb[0].mxu0
      %1104 = vmatprep.mubr.bf16.mxu0 0
      %1105 = vmatmul.mubr.bf16.gmra.mrb[0].mxu0 %v932
      %v1106 = vpop.f32.mrb[0].mxu0
      %v1107 = vadd.f32 0.0, %v1106
      %v1108 = vpop.f32.mrb[0].mxu0
      %v1109 = vpop.f32.mrb[0].mxu0
      %v1110 = vadd.f32 0.0, %v1109
      %v1111 = vpop.f32.mrb[0].mxu0
      %1112 = vmatprep.mubr.bf16.mxu0 0
      %1113 = vmatmul.mubr.bf16.gmra.mrb[0].mxu0 %v940
      %v1114 = vpop.f32.mrb[0].mxu0
      %v1115 = vadd.f32 0.0, %v1114
      %v1116 = vpop.f32.mrb[0].mxu0
      %v1117 = vpop.f32.mrb[0].mxu0
      %v1118 = vadd.f32 0.0, %v1117
      %v1119 = vpop.f32.mrb[0].mxu0
      %1120 = vmatprep.mubr.bf16.mxu0 0
      %1121 = vmatmul.mubr.bf16.gmra.mrb[0].mxu0 %v948
      %v1122 = vpop.f32.mrb[0].mxu0
      %v1123 = vadd.f32 0.0, %v1122
      %v1124 = vpop.f32.mrb[0].mxu0
      %v1125 = vpop.f32.mrb[0].mxu0
      %v1126 = vadd.f32 0.0, %v1125
      %v1127 = vpop.f32.mrb[0].mxu0
      %1128 = vdwg.mxu0
      %v1129 = vadd.f32 %v752, %v1043
      %v1130 = vadd.f32 %v755, %v1046
      %v1131 = vadd.f32 %v760, %v1051
      %v1132 = vadd.f32 %v763, %v1054
      %v1133 = vadd.f32 %v768, %v1059
      %v1134 = vadd.f32 %v771, %v1062
      %v1135 = vadd.f32 %v776, %v1067
      %v1136 = vadd.f32 %v779, %v1070
      %v1137 = vadd.f32 %v784, %v1075
      %v1138 = vadd.f32 %v787, %v1078
      %v1139 = vadd.f32 %v792, %v1083
      %v1140 = vadd.f32 %v795, %v1086
      %v1141 = vadd.f32 %v800, %v1091
      %v1142 = vadd.f32 %v803, %v1094
      %v1143 = vadd.f32 %v808, %v1099
      %v1144 = vadd.f32 %v811, %v1102
      %v1145 = vadd.f32 %v816, %v1107
      %v1146 = vadd.f32 %v819, %v1110
      %v1147 = vadd.f32 %v824, %v1115
      %v1148 = vadd.f32 %v827, %v1118
      %v1149 = vadd.f32 %v832, %v1123
      %v1150 = vadd.f32 %v835, %v1126
      %v1151 = vpack.c.bf16 %v320, %v319
      %v1152 = vpack.c.bf16 %v321, %v321
      %s1153 = scalar_lea.vmem %s2, 192
      %v1154 = vld [vmem:[%s1153] sm:$0xf]
      %v1155 = vld [vmem:[%s1153 + $0x4] sm:$0xf]
      %v1156 = vld [vmem:[%s1153 + $0x8] sm:$0xf]
      %v1157 = vld [vmem:[%s1153 + $0xc] sm:$0xf]
      %v1158 = vld [vmem:[%s1153 + $0x10] sm:$0xf]
      %v1159 = vld [vmem:[%s1153 + $0x14] sm:$0xf]
      %v1160 = vld [vmem:[%s1153 + $0x18] sm:$0xf]
      %v1161 = vld [vmem:[%s1153 + $0x1c] sm:$0xf]
      %v1162 = vld [vmem:[%s1153 + $0x20] sm:$0xf]
      %v1163 = vld [vmem:[%s1153 + $0x24] sm:$0xf]
      %v1164 = vld [vmem:[%s1153 + $0x28] sm:$0xf]
      %v1165 = vld [vmem:[%s1153 + $0x2c] sm:$0xf]
      %v1166 = vld [vmem:[%s1153 + $0x30] sm:$0xf]
      %v1167 = vld [vmem:[%s1153 + $0x34] sm:$0xf]
      %v1168 = vld [vmem:[%s1153 + $0x38] sm:$0xf]
      %v1169 = vld [vmem:[%s1153 + $0x3c] sm:$0xf]
      %v1171 = vshrl.u32 %v1151, 16
      %v1173 = vrot.slane %v1171, 3
      %v1174 = vshll.u32 %v1151, 16
      %v1176 = vrot.slane %v1174, 4
      %v1177 = vor.u32 %v1173, %v1176
      %v1178 = vsel %vm550, %v647, %v1177
      %v1180 = vshrl.u32 %v1152, 16
      %v1182 = vrot.slane %v1180, 3
      %v1183 = vshll.u32 %v1152, 16
      %v1185 = vrot.slane %v1183, 4
      %v1186 = vor.u32 %v1182, %v1185
      %v1187 = vsel %vm550, %v1177, %v1186
      %v1206 = vunpack.c.l.b16 %v1154
      %v1207 = vunpack.c.l.b16 %v1155
      %v1208 = vunpack.c.l.b16 %v1156
      %v1209 = vunpack.c.l.b16 %v1157
      %v1210 = vunpack.c.l.b16 %v1158
      %v1211 = vunpack.c.l.b16 %v1159
      %v1212 = vunpack.c.l.b16 %v1160
      %v1213 = vunpack.c.l.b16 %v1161
      %v1214 = vunpack.c.l.b16 %v1162
      %v1215 = vunpack.c.l.b16 %v1163
      %v1216 = vunpack.c.l.b16 %v1164
      %v1217 = vunpack.c.l.b16 %v1165
      %v1218 = vunpack.c.l.b16 %v1166
      %v1219 = vunpack.c.l.b16 %v1167
      %v1220 = vunpack.c.l.b16 %v1168
      %v1221 = vunpack.c.l.b16 %v1169
      %v1222 = vpack.c.b16 %v1207, %v1206
      %v1223 = vpack.c.b16 %v1209, %v1208
      %v1224 = vpack.c.b16 %v1211, %v1210
      %v1225 = vpack.c.b16 %v1213, %v1212
      %v1226 = vpack.c.b16 %v1215, %v1214
      %v1227 = vpack.c.b16 %v1217, %v1216
      %v1228 = vpack.c.b16 %v1219, %v1218
      %v1229 = vpack.c.b16 %v1221, %v1220
      %1238 = vmatprep.subr.bf16.mxu0 0
      %1239 = vmatpush1.bf16.msra.mxu0 %v1222
      %1240 = vmatprep.subr.bf16.mxu0 0
      %1241 = vmatpush1.bf16.msra.mxu0 %v1223
      %1242 = vmatprep.subr.bf16.mxu0 0
      %1243 = vmatpush1.bf16.msra.mxu0 %v1224
      %1244 = vmatprep.subr.bf16.mxu0 0
      %1245 = vmatpush1.bf16.msra.mxu0 %v1225
      %1246 = vmatprep.subr.bf16.mxu0 0
      %1247 = vmatpush1.bf16.msra.mxu0 %v1226
      %1248 = vmatprep.subr.bf16.mxu0 0
      %1249 = vmatpush1.bf16.msra.mxu0 %v1227
      %1250 = vmatprep.subr.bf16.mxu0 0
      %1251 = vmatpush1.bf16.msra.mxu0 %v1228
      %1252 = vmatprep.subr.bf16.mxu0 0
      %1253 = vmatpush1.bf16.msra.mxu0 %v1229
      %1254 = vmatprep.subr.bf16.mxu0 0
      %1255 = vmatpush1.bf16.msra.mxu0 0
      %1256 = vmatprep.subr.bf16.mxu0 0
      %1257 = vmatpush1.bf16.msra.mxu0 0
      %1258 = vmatprep.subr.bf16.mxu0 0
      %1259 = vmatpush1.bf16.msra.mxu0 0
      %1260 = vmatprep.subr.bf16.mxu0 0
      %1261 = vmatpush1.bf16.msra.mxu0 0
      %1262 = vmatprep.subr.bf16.mxu0 0
      %1263 = vmatpush1.bf16.msra.mxu0 0
      %1264 = vmatprep.subr.bf16.mxu0 0
      %1265 = vmatpush1.bf16.msra.mxu0 0
      %1266 = vmatprep.subr.bf16.mxu0 0
      %1267 = vmatpush1.bf16.msra.mxu0 0
      %1268 = vmatprep.subr.bf16.mxu0 0
      %1269 = vmatpush1.bf16.msra.mxu0 0
      %1270 = vmatprep.mubr.bf16.mxu0 0
      %1271 = vmatmul.mubr.bf16.gmra.mrb[0].mxu0 %v576
      %v1272 = vpop.f32.mrb[0].mxu0
      %v1273 = vadd.f32 0.0, %v1272
      %v1274 = vpop.f32.mrb[0].mxu0
      %v1275 = vpop.f32.mrb[0].mxu0
      %v1276 = vadd.f32 0.0, %v1275
      %v1277 = vpop.f32.mrb[0].mxu0
      %1278 = vmatprep.mubr.bf16.mxu0 0
      %1279 = vmatmul.mubr.bf16.gmra.mrb[0].mxu0 %v585
      %v1280 = vpop.f32.mrb[0].mxu0
      %v1281 = vadd.f32 0.0, %v1280
      %v1282 = vpop.f32.mrb[0].mxu0
      %v1283 = vpop.f32.mrb[0].mxu0
      %v1284 = vadd.f32 0.0, %v1283
      %v1285 = vpop.f32.mrb[0].mxu0
      %1286 = vmatprep.mubr.bf16.mxu0 0
      %1287 = vmatmul.mubr.bf16.gmra.mrb[0].mxu0 %v594
      %v1288 = vpop.f32.mrb[0].mxu0
      %v1289 = vadd.f32 0.0, %v1288
      %v1290 = vpop.f32.mrb[0].mxu0
      %v1291 = vpop.f32.mrb[0].mxu0
      %v1292 = vadd.f32 0.0, %v1291
      %v1293 = vpop.f32.mrb[0].mxu0
      %1294 = vmatprep.mubr.bf16.mxu0 0
      %1295 = vmatmul.mubr.bf16.gmra.mrb[0].mxu0 %v603
      %v1296 = vpop.f32.mrb[0].mxu0
      %v1297 = vadd.f32 0.0, %v1296
      %v1298 = vpop.f32.mrb[0].mxu0
      %v1299 = vpop.f32.mrb[0].mxu0
      %v1300 = vadd.f32 0.0, %v1299
      %v1301 = vpop.f32.mrb[0].mxu0
      %1302 = vmatprep.mubr.bf16.mxu0 0
      %1303 = vmatmul.mubr.bf16.gmra.mrb[0].mxu0 %v612
      %v1304 = vpop.f32.mrb[0].mxu0
      %v1305 = vadd.f32 0.0, %v1304
      %v1306 = vpop.f32.mrb[0].mxu0
      %v1307 = vpop.f32.mrb[0].mxu0
      %v1308 = vadd.f32 0.0, %v1307
      %v1309 = vpop.f32.mrb[0].mxu0
      %1310 = vmatprep.mubr.bf16.mxu0 0
      %1311 = vmatmul.mubr.bf16.gmra.mrb[0].mxu0 %v621
      %v1312 = vpop.f32.mrb[0].mxu0
      %v1313 = vadd.f32 0.0, %v1312
      %v1314 = vpop.f32.mrb[0].mxu0
      %v1315 = vpop.f32.mrb[0].mxu0
      %v1316 = vadd.f32 0.0, %v1315
      %v1317 = vpop.f32.mrb[0].mxu0
      %1318 = vmatprep.mubr.bf16.mxu0 0
      %1319 = vmatmul.mubr.bf16.gmra.mrb[0].mxu0 %v630
      %v1320 = vpop.f32.mrb[0].mxu0
      %v1321 = vadd.f32 0.0, %v1320
      %v1322 = vpop.f32.mrb[0].mxu0
      %v1323 = vpop.f32.mrb[0].mxu0
      %v1324 = vadd.f32 0.0, %v1323
      %v1325 = vpop.f32.mrb[0].mxu0
      %1326 = vmatprep.mubr.bf16.mxu0 0
      %1327 = vmatmul.mubr.bf16.gmra.mrb[0].mxu0 %v639
      %v1328 = vpop.f32.mrb[0].mxu0
      %v1329 = vadd.f32 0.0, %v1328
      %v1330 = vpop.f32.mrb[0].mxu0
      %v1331 = vpop.f32.mrb[0].mxu0
      %v1332 = vadd.f32 0.0, %v1331
      %v1333 = vpop.f32.mrb[0].mxu0
      %1334 = vmatprep.mubr.bf16.mxu0 0
      %1335 = vmatmul.mubr.bf16.gmra.mrb[0].mxu0 %v648
      %v1336 = vpop.f32.mrb[0].mxu0
      %v1337 = vadd.f32 0.0, %v1336
      %v1338 = vpop.f32.mrb[0].mxu0
      %v1339 = vpop.f32.mrb[0].mxu0
      %v1340 = vadd.f32 0.0, %v1339
      %v1341 = vpop.f32.mrb[0].mxu0
      %1342 = vmatprep.mubr.bf16.mxu0 0
      %1343 = vmatmul.mubr.bf16.gmra.mrb[0].mxu0 %v1178
      %v1344 = vpop.f32.mrb[0].mxu0
      %v1345 = vadd.f32 0.0, %v1344
      %v1346 = vpop.f32.mrb[0].mxu0
      %v1347 = vpop.f32.mrb[0].mxu0
      %v1348 = vadd.f32 0.0, %v1347
      %v1349 = vpop.f32.mrb[0].mxu0
      %1350 = vmatprep.mubr.bf16.mxu0 0
      %1351 = vmatmul.mubr.bf16.gmra.mrb[0].mxu0 %v1187
      %v1352 = vpop.f32.mrb[0].mxu0
      %v1353 = vadd.f32 0.0, %v1352
      %v1354 = vpop.f32.mrb[0].mxu0
      %v1355 = vpop.f32.mrb[0].mxu0
      %v1356 = vadd.f32 0.0, %v1355
      %v1357 = vpop.f32.mrb[0].mxu0
      %1358 = vdwg.mxu0
      %v1359 = vadd.f32 %v1129, %v1273
      %v1360 = vadd.f32 %v1130, %v1276
      %v1361 = vadd.f32 %v1131, %v1281
      %v1362 = vadd.f32 %v1132, %v1284
      %v1363 = vadd.f32 %v1133, %v1289
      %v1364 = vadd.f32 %v1134, %v1292
      %v1365 = vadd.f32 %v1135, %v1297
      %v1366 = vadd.f32 %v1136, %v1300
      %v1367 = vadd.f32 %v1137, %v1305
      %v1368 = vadd.f32 %v1138, %v1308
      %v1369 = vadd.f32 %v1139, %v1313
      %v1370 = vadd.f32 %v1140, %v1316
      %v1371 = vadd.f32 %v1141, %v1321
      %v1372 = vadd.f32 %v1142, %v1324
      %v1373 = vadd.f32 %v1143, %v1329
      %v1374 = vadd.f32 %v1144, %v1332
      %v1375 = vadd.f32 %v1145, %v1337
      %v1376 = vadd.f32 %v1146, %v1340
      %v1377 = vadd.f32 %v1147, %v1345
      %v1378 = vadd.f32 %v1148, %v1348
      %v1379 = vadd.f32 %v1149, %v1353
      %v1380 = vadd.f32 %v1150, %v1356
      %v1381 = vpack.c.bf16 %v321, %v320
      %s1382 = scalar_lea.vmem %s2, 256
      %v1383 = vld [vmem:[%s1382] sm:$0xf]
      %v1384 = vld [vmem:[%s1382 + $0x4] sm:$0xf]
      %v1385 = vld [vmem:[%s1382 + $0x8] sm:$0xf]
      %v1386 = vld [vmem:[%s1382 + $0xc] sm:$0xf]
      %v1387 = vld [vmem:[%s1382 + $0x10] sm:$0xf]
      %v1388 = vld [vmem:[%s1382 + $0x14] sm:$0xf]
      %v1389 = vld [vmem:[%s1382 + $0x18] sm:$0xf]
      %v1390 = vld [vmem:[%s1382 + $0x1c] sm:$0xf]
      %v1391 = vld [vmem:[%s1382 + $0x20] sm:$0xf]
      %v1392 = vld [vmem:[%s1382 + $0x24] sm:$0xf]
      %v1393 = vld [vmem:[%s1382 + $0x28] sm:$0xf]
      %v1394 = vld [vmem:[%s1382 + $0x2c] sm:$0xf]
      %v1395 = vld [vmem:[%s1382 + $0x30] sm:$0xf]
      %v1396 = vld [vmem:[%s1382 + $0x34] sm:$0xf]
      %v1397 = vld [vmem:[%s1382 + $0x38] sm:$0xf]
      %v1398 = vld [vmem:[%s1382 + $0x3c] sm:$0xf]
      %v1415 = vunpack.c.l.b16 %v1383
      %v1416 = vunpack.c.l.b16 %v1384
      %v1417 = vunpack.c.l.b16 %v1385
      %v1418 = vunpack.c.l.b16 %v1386
      %v1419 = vunpack.c.l.b16 %v1387
      %v1420 = vunpack.c.l.b16 %v1388
      %v1421 = vunpack.c.l.b16 %v1389
      %v1422 = vunpack.c.l.b16 %v1390
      %v1423 = vunpack.c.l.b16 %v1391
      %v1424 = vunpack.c.l.b16 %v1392
      %v1425 = vunpack.c.l.b16 %v1393
      %v1426 = vunpack.c.l.b16 %v1394
      %v1427 = vunpack.c.l.b16 %v1395
      %v1428 = vunpack.c.l.b16 %v1396
      %v1429 = vunpack.c.l.b16 %v1397
      %v1430 = vunpack.c.l.b16 %v1398
      %v1431 = vpack.c.b16 %v1416, %v1415
      %v1432 = vpack.c.b16 %v1418, %v1417
      %v1433 = vpack.c.b16 %v1420, %v1419
      %v1434 = vpack.c.b16 %v1422, %v1421
      %v1435 = vpack.c.b16 %v1424, %v1423
      %v1436 = vpack.c.b16 %v1426, %v1425
      %v1437 = vpack.c.b16 %v1428, %v1427
      %v1438 = vpack.c.b16 %v1430, %v1429
      %1447 = vmatprep.subr.bf16.mxu0 0
      %1448 = vmatpush1.bf16.msra.mxu0 %v1431
      %1449 = vmatprep.subr.bf16.mxu0 0
      %1450 = vmatpush1.bf16.msra.mxu0 %v1432
      %1451 = vmatprep.subr.bf16.mxu0 0
      %1452 = vmatpush1.bf16.msra.mxu0 %v1433
      %1453 = vmatprep.subr.bf16.mxu0 0
      %1454 = vmatpush1.bf16.msra.mxu0 %v1434
      %1455 = vmatprep.subr.bf16.mxu0 0
      %1456 = vmatpush1.bf16.msra.mxu0 %v1435
      %1457 = vmatprep.subr.bf16.mxu0 0
      %1458 = vmatpush1.bf16.msra.mxu0 %v1436
      %1459 = vmatprep.subr.bf16.mxu0 0
      %1460 = vmatpush1.bf16.msra.mxu0 %v1437
      %1461 = vmatprep.subr.bf16.mxu0 0
      %1462 = vmatpush1.bf16.msra.mxu0 %v1438
      %1463 = vmatprep.subr.bf16.mxu0 0
      %1464 = vmatpush1.bf16.msra.mxu0 0
      %1465 = vmatprep.subr.bf16.mxu0 0
      %1466 = vmatpush1.bf16.msra.mxu0 0
      %1467 = vmatprep.subr.bf16.mxu0 0
      %1468 = vmatpush1.bf16.msra.mxu0 0
      %1469 = vmatprep.subr.bf16.mxu0 0
      %1470 = vmatpush1.bf16.msra.mxu0 0
      %1471 = vmatprep.subr.bf16.mxu0 0
      %1472 = vmatpush1.bf16.msra.mxu0 0
      %1473 = vmatprep.subr.bf16.mxu0 0
      %1474 = vmatpush1.bf16.msra.mxu0 0
      %1475 = vmatprep.subr.bf16.mxu0 0
      %1476 = vmatpush1.bf16.msra.mxu0 0
      %1477 = vmatprep.subr.bf16.mxu0 0
      %1478 = vmatpush1.bf16.msra.mxu0 0
      %1479 = vmatprep.mubr.bf16.mxu0 0
      %1480 = vmatmul.mubr.bf16.gmra.mrb[0].mxu0 %v354
      %v1481 = vpop.f32.mrb[0].mxu0
      %v1482 = vadd.f32 0.0, %v1481
      %v1483 = vpop.f32.mrb[0].mxu0
      %v1484 = vpop.f32.mrb[0].mxu0
      %v1485 = vadd.f32 0.0, %v1484
      %v1486 = vpop.f32.mrb[0].mxu0
      %1487 = vmatprep.mubr.bf16.mxu0 0
      %1488 = vmatmul.mubr.bf16.gmra.mrb[0].mxu0 %v355
      %v1489 = vpop.f32.mrb[0].mxu0
      %v1490 = vadd.f32 0.0, %v1489
      %v1491 = vpop.f32.mrb[0].mxu0
      %v1492 = vpop.f32.mrb[0].mxu0
      %v1493 = vadd.f32 0.0, %v1492
      %v1494 = vpop.f32.mrb[0].mxu0
      %1495 = vmatprep.mubr.bf16.mxu0 0
      %1496 = vmatmul.mubr.bf16.gmra.mrb[0].mxu0 %v356
      %v1497 = vpop.f32.mrb[0].mxu0
      %v1498 = vadd.f32 0.0, %v1497
      %v1499 = vpop.f32.mrb[0].mxu0
      %v1500 = vpop.f32.mrb[0].mxu0
      %v1501 = vadd.f32 0.0, %v1500
      %v1502 = vpop.f32.mrb[0].mxu0
      %1503 = vmatprep.mubr.bf16.mxu0 0
      %1504 = vmatmul.mubr.bf16.gmra.mrb[0].mxu0 %v357
      %v1505 = vpop.f32.mrb[0].mxu0
      %v1506 = vadd.f32 0.0, %v1505
      %v1507 = vpop.f32.mrb[0].mxu0
      %v1508 = vpop.f32.mrb[0].mxu0
      %v1509 = vadd.f32 0.0, %v1508
      %v1510 = vpop.f32.mrb[0].mxu0
      %1511 = vmatprep.mubr.bf16.mxu0 0
      %1512 = vmatmul.mubr.bf16.gmra.mrb[0].mxu0 %v358
      %v1513 = vpop.f32.mrb[0].mxu0
      %v1514 = vadd.f32 0.0, %v1513
      %v1515 = vpop.f32.mrb[0].mxu0
      %v1516 = vpop.f32.mrb[0].mxu0
      %v1517 = vadd.f32 0.0, %v1516
      %v1518 = vpop.f32.mrb[0].mxu0
      %1519 = vmatprep.mubr.bf16.mxu0 0
      %1520 = vmatmul.mubr.bf16.gmra.mrb[0].mxu0 %v359
      %v1521 = vpop.f32.mrb[0].mxu0
      %v1522 = vadd.f32 0.0, %v1521
      %v1523 = vpop.f32.mrb[0].mxu0
      %v1524 = vpop.f32.mrb[0].mxu0
      %v1525 = vadd.f32 0.0, %v1524
      %v1526 = vpop.f32.mrb[0].mxu0
      %1527 = vmatprep.mubr.bf16.mxu0 0
      %1528 = vmatmul.mubr.bf16.gmra.mrb[0].mxu0 %v360
      %v1529 = vpop.f32.mrb[0].mxu0
      %v1530 = vadd.f32 0.0, %v1529
      %v1531 = vpop.f32.mrb[0].mxu0
      %v1532 = vpop.f32.mrb[0].mxu0
      %v1533 = vadd.f32 0.0, %v1532
      %v1534 = vpop.f32.mrb[0].mxu0
      %1535 = vmatprep.mubr.bf16.mxu0 0
      %1536 = vmatmul.mubr.bf16.gmra.mrb[0].mxu0 %v361
      %v1537 = vpop.f32.mrb[0].mxu0
      %v1538 = vadd.f32 0.0, %v1537
      %v1539 = vpop.f32.mrb[0].mxu0
      %v1540 = vpop.f32.mrb[0].mxu0
      %v1541 = vadd.f32 0.0, %v1540
      %v1542 = vpop.f32.mrb[0].mxu0
      %1543 = vmatprep.mubr.bf16.mxu0 0
      %1544 = vmatmul.mubr.bf16.gmra.mrb[0].mxu0 %v362
      %v1545 = vpop.f32.mrb[0].mxu0
      %v1546 = vadd.f32 0.0, %v1545
      %v1547 = vpop.f32.mrb[0].mxu0
      %v1548 = vpop.f32.mrb[0].mxu0
      %v1549 = vadd.f32 0.0, %v1548
      %v1550 = vpop.f32.mrb[0].mxu0
      %1551 = vmatprep.mubr.bf16.mxu0 0
      %1552 = vmatmul.mubr.bf16.gmra.mrb[0].mxu0 %v363
      %v1553 = vpop.f32.mrb[0].mxu0
      %v1554 = vadd.f32 0.0, %v1553
      %v1555 = vpop.f32.mrb[0].mxu0
      %v1556 = vpop.f32.mrb[0].mxu0
      %v1557 = vadd.f32 0.0, %v1556
      %v1558 = vpop.f32.mrb[0].mxu0
      %1559 = vmatprep.mubr.bf16.mxu0 0
      %1560 = vmatmul.mubr.bf16.gmra.mrb[0].mxu0 %v1381
      %v1561 = vpop.f32.mrb[0].mxu0
      %v1562 = vadd.f32 0.0, %v1561
      %v1563 = vpop.f32.mrb[0].mxu0
      %v1564 = vpop.f32.mrb[0].mxu0
      %v1565 = vadd.f32 0.0, %v1564
      %v1566 = vpop.f32.mrb[0].mxu0
      %1567 = vdwg.mxu0
      %v1568 = vadd.f32 %v1359, %v1482
      %v1569 = vadd.f32 %v1360, %v1485
      %v1570 = vadd.f32 %v1361, %v1490
      %v1571 = vadd.f32 %v1362, %v1493
      %v1572 = vadd.f32 %v1363, %v1498
      %v1573 = vadd.f32 %v1364, %v1501
      %v1574 = vadd.f32 %v1365, %v1506
      %v1575 = vadd.f32 %v1366, %v1509
      %v1576 = vadd.f32 %v1367, %v1514
      %v1577 = vadd.f32 %v1368, %v1517
      %v1578 = vadd.f32 %v1369, %v1522
      %v1579 = vadd.f32 %v1370, %v1525
      %v1580 = vadd.f32 %v1371, %v1530
      %v1581 = vadd.f32 %v1372, %v1533
      %v1582 = vadd.f32 %v1373, %v1538
      %v1583 = vadd.f32 %v1374, %v1541
      %v1584 = vadd.f32 %v1375, %v1546
      %v1585 = vadd.f32 %v1376, %v1549
      %v1586 = vadd.f32 %v1377, %v1554
      %v1587 = vadd.f32 %v1378, %v1557
      %v1588 = vadd.f32 %v1379, %v1562
      %v1589 = vadd.f32 %v1380, %v1565
      %v1590 = vpack.c.bf16 %v322, %v322
      %s1591 = scalar_lea.vmem %s2, 320
      %v1592 = vld [vmem:[%s1591] sm:$0xf]
      %v1593 = vld [vmem:[%s1591 + $0x4] sm:$0xf]
      %v1594 = vld [vmem:[%s1591 + $0x8] sm:$0xf]
      %v1595 = vld [vmem:[%s1591 + $0xc] sm:$0xf]
      %v1596 = vld [vmem:[%s1591 + $0x10] sm:$0xf]
      %v1597 = vld [vmem:[%s1591 + $0x14] sm:$0xf]
      %v1598 = vld [vmem:[%s1591 + $0x18] sm:$0xf]
      %v1599 = vld [vmem:[%s1591 + $0x1c] sm:$0xf]
      %v1600 = vld [vmem:[%s1591 + $0x20] sm:$0xf]
      %v1601 = vld [vmem:[%s1591 + $0x24] sm:$0xf]
      %v1602 = vld [vmem:[%s1591 + $0x28] sm:$0xf]
      %v1603 = vld [vmem:[%s1591 + $0x2c] sm:$0xf]
      %v1604 = vld [vmem:[%s1591 + $0x30] sm:$0xf]
      %v1605 = vld [vmem:[%s1591 + $0x34] sm:$0xf]
      %v1606 = vld [vmem:[%s1591 + $0x38] sm:$0xf]
      %v1607 = vld [vmem:[%s1591 + $0x3c] sm:$0xf]
      %v1609 = vshll.u32 %v1381, 16
      %v1611 = vrot.slane %v1609, 1
      %v1612 = vsel %vm856, %v943, %v1611
      %v1613 = vshrl.u32 %v1381, 16
      %v1615 = vor.u32 %v1613, %v1611
      %v1617 = vshll.u32 %v1590, 16
      %v1619 = vrot.slane %v1617, 1
      %v1620 = vsel %vm856, %v1615, %v1619
      %v1639 = vunpack.c.l.b16 %v1592
      %v1640 = vunpack.c.l.b16 %v1593
      %v1641 = vunpack.c.l.b16 %v1594
      %v1642 = vunpack.c.l.b16 %v1595
      %v1643 = vunpack.c.l.b16 %v1596
      %v1644 = vunpack.c.l.b16 %v1597
      %v1645 = vunpack.c.l.b16 %v1598
      %v1646 = vunpack.c.l.b16 %v1599
      %v1647 = vunpack.c.l.b16 %v1600
      %v1648 = vunpack.c.l.b16 %v1601
      %v1649 = vunpack.c.l.b16 %v1602
      %v1650 = vunpack.c.l.b16 %v1603
      %v1651 = vunpack.c.l.b16 %v1604
      %v1652 = vunpack.c.l.b16 %v1605
      %v1653 = vunpack.c.l.b16 %v1606
      %v1654 = vunpack.c.l.b16 %v1607
      %v1655 = vpack.c.b16 %v1640, %v1639
      %v1656 = vpack.c.b16 %v1642, %v1641
      %v1657 = vpack.c.b16 %v1644, %v1643
      %v1658 = vpack.c.b16 %v1646, %v1645
      %v1659 = vpack.c.b16 %v1648, %v1647
      %v1660 = vpack.c.b16 %v1650, %v1649
      %v1661 = vpack.c.b16 %v1652, %v1651
      %v1662 = vpack.c.b16 %v1654, %v1653
      %1671 = vmatprep.subr.bf16.mxu0 0
      %1672 = vmatpush1.bf16.msra.mxu0 %v1655
      %1673 = vmatprep.subr.bf16.mxu0 0
      %1674 = vmatpush1.bf16.msra.mxu0 %v1656
      %1675 = vmatprep.subr.bf16.mxu0 0
      %1676 = vmatpush1.bf16.msra.mxu0 %v1657
      %1677 = vmatprep.subr.bf16.mxu0 0
      %1678 = vmatpush1.bf16.msra.mxu0 %v1658
      %1679 = vmatprep.subr.bf16.mxu0 0
      %1680 = vmatpush1.bf16.msra.mxu0 %v1659
      %1681 = vmatprep.subr.bf16.mxu0 0
      %1682 = vmatpush1.bf16.msra.mxu0 %v1660
      %1683 = vmatprep.subr.bf16.mxu0 0
      %1684 = vmatpush1.bf16.msra.mxu0 %v1661
      %1685 = vmatprep.subr.bf16.mxu0 0
      %1686 = vmatpush1.bf16.msra.mxu0 %v1662
      %1687 = vmatprep.subr.bf16.mxu0 0
      %1688 = vmatpush1.bf16.msra.mxu0 0
      %1689 = vmatprep.subr.bf16.mxu0 0
      %1690 = vmatpush1.bf16.msra.mxu0 0
      %1691 = vmatprep.subr.bf16.mxu0 0
      %1692 = vmatpush1.bf16.msra.mxu0 0
      %1693 = vmatprep.subr.bf16.mxu0 0
      %1694 = vmatpush1.bf16.msra.mxu0 0
      %1695 = vmatprep.subr.bf16.mxu0 0
      %1696 = vmatpush1.bf16.msra.mxu0 0
      %1697 = vmatprep.subr.bf16.mxu0 0
      %1698 = vmatpush1.bf16.msra.mxu0 0
      %1699 = vmatprep.subr.bf16.mxu0 0
      %1700 = vmatpush1.bf16.msra.mxu0 0
      %1701 = vmatprep.subr.bf16.mxu0 0
      %1702 = vmatpush1.bf16.msra.mxu0 0
      %1703 = vmatprep.mubr.bf16.mxu0 0
      %1704 = vmatmul.mubr.bf16.gmra.mrb[0].mxu0 %v876
      %v1705 = vpop.f32.mrb[0].mxu0
      %v1706 = vadd.f32 0.0, %v1705
      %v1707 = vpop.f32.mrb[0].mxu0
      %v1708 = vpop.f32.mrb[0].mxu0
      %v1709 = vadd.f32 0.0, %v1708
      %v1710 = vpop.f32.mrb[0].mxu0
      %1711 = vmatprep.mubr.bf16.mxu0 0
      %1712 = vmatmul.mubr.bf16.gmra.mrb[0].mxu0 %v884
      %v1713 = vpop.f32.mrb[0].mxu0
      %v1714 = vadd.f32 0.0, %v1713
      %v1715 = vpop.f32.mrb[0].mxu0
      %v1716 = vpop.f32.mrb[0].mxu0
      %v1717 = vadd.f32 0.0, %v1716
      %v1718 = vpop.f32.mrb[0].mxu0
      %1719 = vmatprep.mubr.bf16.mxu0 0
      %1720 = vmatmul.mubr.bf16.gmra.mrb[0].mxu0 %v892
      %v1721 = vpop.f32.mrb[0].mxu0
      %v1722 = vadd.f32 0.0, %v1721
      %v1723 = vpop.f32.mrb[0].mxu0
      %v1724 = vpop.f32.mrb[0].mxu0
      %v1725 = vadd.f32 0.0, %v1724
      %v1726 = vpop.f32.mrb[0].mxu0
      %1727 = vmatprep.mubr.bf16.mxu0 0
      %1728 = vmatmul.mubr.bf16.gmra.mrb[0].mxu0 %v900
      %v1729 = vpop.f32.mrb[0].mxu0
      %v1730 = vadd.f32 0.0, %v1729
      %v1731 = vpop.f32.mrb[0].mxu0
      %v1732 = vpop.f32.mrb[0].mxu0
      %v1733 = vadd.f32 0.0, %v1732
      %v1734 = vpop.f32.mrb[0].mxu0
      %1735 = vmatprep.mubr.bf16.mxu0 0
      %1736 = vmatmul.mubr.bf16.gmra.mrb[0].mxu0 %v908
      %v1737 = vpop.f32.mrb[0].mxu0
      %v1738 = vadd.f32 0.0, %v1737
      %v1739 = vpop.f32.mrb[0].mxu0
      %v1740 = vpop.f32.mrb[0].mxu0
      %v1741 = vadd.f32 0.0, %v1740
      %v1742 = vpop.f32.mrb[0].mxu0
      %1743 = vmatprep.mubr.bf16.mxu0 0
      %1744 = vmatmul.mubr.bf16.gmra.mrb[0].mxu0 %v916
      %v1745 = vpop.f32.mrb[0].mxu0
      %v1746 = vadd.f32 0.0, %v1745
      %v1747 = vpop.f32.mrb[0].mxu0
      %v1748 = vpop.f32.mrb[0].mxu0
      %v1749 = vadd.f32 0.0, %v1748
      %v1750 = vpop.f32.mrb[0].mxu0
      %1751 = vmatprep.mubr.bf16.mxu0 0
      %1752 = vmatmul.mubr.bf16.gmra.mrb[0].mxu0 %v924
      %v1753 = vpop.f32.mrb[0].mxu0
      %v1754 = vadd.f32 0.0, %v1753
      %v1755 = vpop.f32.mrb[0].mxu0
      %v1756 = vpop.f32.mrb[0].mxu0
      %v1757 = vadd.f32 0.0, %v1756
      %v1758 = vpop.f32.mrb[0].mxu0
      %1759 = vmatprep.mubr.bf16.mxu0 0
      %1760 = vmatmul.mubr.bf16.gmra.mrb[0].mxu0 %v932
      %v1761 = vpop.f32.mrb[0].mxu0
      %v1762 = vadd.f32 0.0, %v1761
      %v1763 = vpop.f32.mrb[0].mxu0
      %v1764 = vpop.f32.mrb[0].mxu0
      %v1765 = vadd.f32 0.0, %v1764
      %v1766 = vpop.f32.mrb[0].mxu0
      %1767 = vmatprep.mubr.bf16.mxu0 0
      %1768 = vmatmul.mubr.bf16.gmra.mrb[0].mxu0 %v940
      %v1769 = vpop.f32.mrb[0].mxu0
      %v1770 = vadd.f32 0.0, %v1769
      %v1771 = vpop.f32.mrb[0].mxu0
      %v1772 = vpop.f32.mrb[0].mxu0
      %v1773 = vadd.f32 0.0, %v1772
      %v1774 = vpop.f32.mrb[0].mxu0
      %1775 = vmatprep.mubr.bf16.mxu0 0
      %1776 = vmatmul.mubr.bf16.gmra.mrb[0].mxu0 %v1612
      %v1777 = vpop.f32.mrb[0].mxu0
      %v1778 = vadd.f32 0.0, %v1777
      %v1779 = vpop.f32.mrb[0].mxu0
      %v1780 = vpop.f32.mrb[0].mxu0
      %v1781 = vadd.f32 0.0, %v1780
      %v1782 = vpop.f32.mrb[0].mxu0
      %1783 = vmatprep.mubr.bf16.mxu0 0
      %1784 = vmatmul.mubr.bf16.gmra.mrb[0].mxu0 %v1620
      %v1785 = vpop.f32.mrb[0].mxu0
      %v1786 = vadd.f32 0.0, %v1785
      %v1787 = vpop.f32.mrb[0].mxu0
      %v1788 = vpop.f32.mrb[0].mxu0
      %v1789 = vadd.f32 0.0, %v1788
      %v1790 = vpop.f32.mrb[0].mxu0
      %1791 = vdwg.mxu0
      %v1792 = vadd.f32 %v1568, %v1706
      %v1793 = vadd.f32 %v1569, %v1709
      %v1794 = vadd.f32 %v1570, %v1714
      %v1795 = vadd.f32 %v1571, %v1717
      %v1796 = vadd.f32 %v1572, %v1722
      %v1797 = vadd.f32 %v1573, %v1725
      %v1798 = vadd.f32 %v1574, %v1730
      %v1799 = vadd.f32 %v1575, %v1733
      %v1800 = vadd.f32 %v1576, %v1738
      %v1801 = vadd.f32 %v1577, %v1741
      %v1802 = vadd.f32 %v1578, %v1746
      %v1803 = vadd.f32 %v1579, %v1749
      %v1804 = vadd.f32 %v1580, %v1754
      %v1805 = vadd.f32 %v1581, %v1757
      %v1806 = vadd.f32 %v1582, %v1762
      %v1807 = vadd.f32 %v1583, %v1765
      %v1808 = vadd.f32 %v1584, %v1770
      %v1809 = vadd.f32 %v1585, %v1773
      %v1810 = vadd.f32 %v1586, %v1778
      %v1811 = vadd.f32 %v1587, %v1781
      %v1812 = vadd.f32 %v1588, %v1786
      %v1813 = vadd.f32 %v1589, %v1789
      %v1814 = vpack.c.bf16 %v322, %v321
      %v1815 = vpack.c.bf16 %v323, %v323
      %s1816 = scalar_lea.vmem %s2, 384
      %v1817 = vld [vmem:[%s1816] sm:$0xf]
      %v1818 = vld [vmem:[%s1816 + $0x4] sm:$0xf]
      %v1819 = vld [vmem:[%s1816 + $0x8] sm:$0xf]
      %v1820 = vld [vmem:[%s1816 + $0xc] sm:$0xf]
      %v1821 = vld [vmem:[%s1816 + $0x10] sm:$0xf]
      %v1822 = vld [vmem:[%s1816 + $0x14] sm:$0xf]
      %v1823 = vld [vmem:[%s1816 + $0x18] sm:$0xf]
      %v1824 = vld [vmem:[%s1816 + $0x1c] sm:$0xf]
      %v1825 = vld [vmem:[%s1816 + $0x20] sm:$0xf]
      %v1826 = vld [vmem:[%s1816 + $0x24] sm:$0xf]
      %v1827 = vld [vmem:[%s1816 + $0x28] sm:$0xf]
      %v1828 = vld [vmem:[%s1816 + $0x2c] sm:$0xf]
      %v1829 = vld [vmem:[%s1816 + $0x30] sm:$0xf]
      %v1830 = vld [vmem:[%s1816 + $0x34] sm:$0xf]
      %v1831 = vld [vmem:[%s1816 + $0x38] sm:$0xf]
      %v1832 = vld [vmem:[%s1816 + $0x3c] sm:$0xf]
      %v1834 = vshrl.u32 %v1814, 16
      %v1836 = vrot.slane %v1834, 3
      %v1837 = vshll.u32 %v1814, 16
      %v1839 = vrot.slane %v1837, 4
      %v1840 = vor.u32 %v1836, %v1839
      %v1841 = vsel %vm550, %v1177, %v1840
      %v1843 = vshrl.u32 %v1815, 16
      %v1845 = vrot.slane %v1843, 3
      %v1846 = vshll.u32 %v1815, 16
      %v1848 = vrot.slane %v1846, 4
      %v1849 = vor.u32 %v1845, %v1848
      %v1850 = vsel %vm550, %v1840, %v1849
      %v1869 = vunpack.c.l.b16 %v1817
      %v1870 = vunpack.c.l.b16 %v1818
      %v1871 = vunpack.c.l.b16 %v1819
      %v1872 = vunpack.c.l.b16 %v1820
      %v1873 = vunpack.c.l.b16 %v1821
      %v1874 = vunpack.c.l.b16 %v1822
      %v1875 = vunpack.c.l.b16 %v1823
      %v1876 = vunpack.c.l.b16 %v1824
      %v1877 = vunpack.c.l.b16 %v1825
      %v1878 = vunpack.c.l.b16 %v1826
      %v1879 = vunpack.c.l.b16 %v1827
      %v1880 = vunpack.c.l.b16 %v1828
      %v1881 = vunpack.c.l.b16 %v1829
      %v1882 = vunpack.c.l.b16 %v1830
      %v1883 = vunpack.c.l.b16 %v1831
      %v1884 = vunpack.c.l.b16 %v1832
      %v1885 = vpack.c.b16 %v1870, %v1869
      %v1886 = vpack.c.b16 %v1872, %v1871
      %v1887 = vpack.c.b16 %v1874, %v1873
      %v1888 = vpack.c.b16 %v1876, %v1875
      %v1889 = vpack.c.b16 %v1878, %v1877
      %v1890 = vpack.c.b16 %v1880, %v1879
      %v1891 = vpack.c.b16 %v1882, %v1881
      %v1892 = vpack.c.b16 %v1884, %v1883
      %1901 = vmatprep.subr.bf16.mxu0 0
      %1902 = vmatpush1.bf16.msra.mxu0 %v1885
      %1903 = vmatprep.subr.bf16.mxu0 0
      %1904 = vmatpush1.bf16.msra.mxu0 %v1886
      %1905 = vmatprep.subr.bf16.mxu0 0
      %1906 = vmatpush1.bf16.msra.mxu0 %v1887
      %1907 = vmatprep.subr.bf16.mxu0 0
      %1908 = vmatpush1.bf16.msra.mxu0 %v1888
      %1909 = vmatprep.subr.bf16.mxu0 0
      %1910 = vmatpush1.bf16.msra.mxu0 %v1889
      %1911 = vmatprep.subr.bf16.mxu0 0
      %1912 = vmatpush1.bf16.msra.mxu0 %v1890
      %1913 = vmatprep.subr.bf16.mxu0 0
      %1914 = vmatpush1.bf16.msra.mxu0 %v1891
      %1915 = vmatprep.subr.bf16.mxu0 0
      %1916 = vmatpush1.bf16.msra.mxu0 %v1892
      %1917 = vmatprep.subr.bf16.mxu0 0
      %1918 = vmatpush1.bf16.msra.mxu0 0
      %1919 = vmatprep.subr.bf16.mxu0 0
      %1920 = vmatpush1.bf16.msra.mxu0 0
      %1921 = vmatprep.subr.bf16.mxu0 0
      %1922 = vmatpush1.bf16.msra.mxu0 0
      %1923 = vmatprep.subr.bf16.mxu0 0
      %1924 = vmatpush1.bf16.msra.mxu0 0
      %1925 = vmatprep.subr.bf16.mxu0 0
      %1926 = vmatpush1.bf16.msra.mxu0 0
      %1927 = vmatprep.subr.bf16.mxu0 0
      %1928 = vmatpush1.bf16.msra.mxu0 0
      %1929 = vmatprep.subr.bf16.mxu0 0
      %1930 = vmatpush1.bf16.msra.mxu0 0
      %1931 = vmatprep.subr.bf16.mxu0 0
      %1932 = vmatpush1.bf16.msra.mxu0 0
      %1933 = vmatprep.mubr.bf16.mxu0 0
      %1934 = vmatmul.mubr.bf16.gmra.mrb[0].mxu0 %v585
      %v1935 = vpop.f32.mrb[0].mxu0
      %v1936 = vadd.f32 0.0, %v1935
      %v1937 = vpop.f32.mrb[0].mxu0
      %v1938 = vpop.f32.mrb[0].mxu0
      %v1939 = vadd.f32 0.0, %v1938
      %v1940 = vpop.f32.mrb[0].mxu0
      %1941 = vmatprep.mubr.bf16.mxu0 0
      %1942 = vmatmul.mubr.bf16.gmra.mrb[0].mxu0 %v594
      %v1943 = vpop.f32.mrb[0].mxu0
      %v1944 = vadd.f32 0.0, %v1943
      %v1945 = vpop.f32.mrb[0].mxu0
      %v1946 = vpop.f32.mrb[0].mxu0
      %v1947 = vadd.f32 0.0, %v1946
      %v1948 = vpop.f32.mrb[0].mxu0
      %1949 = vmatprep.mubr.bf16.mxu0 0
      %1950 = vmatmul.mubr.bf16.gmra.mrb[0].mxu0 %v603
      %v1951 = vpop.f32.mrb[0].mxu0
      %v1952 = vadd.f32 0.0, %v1951
      %v1953 = vpop.f32.mrb[0].mxu0
      %v1954 = vpop.f32.mrb[0].mxu0
      %v1955 = vadd.f32 0.0, %v1954
      %v1956 = vpop.f32.mrb[0].mxu0
      %1957 = vmatprep.mubr.bf16.mxu0 0
      %1958 = vmatmul.mubr.bf16.gmra.mrb[0].mxu0 %v612
      %v1959 = vpop.f32.mrb[0].mxu0
      %v1960 = vadd.f32 0.0, %v1959
      %v1961 = vpop.f32.mrb[0].mxu0
      %v1962 = vpop.f32.mrb[0].mxu0
      %v1963 = vadd.f32 0.0, %v1962
      %v1964 = vpop.f32.mrb[0].mxu0
      %1965 = vmatprep.mubr.bf16.mxu0 0
      %1966 = vmatmul.mubr.bf16.gmra.mrb[0].mxu0 %v621
      %v1967 = vpop.f32.mrb[0].mxu0
      %v1968 = vadd.f32 0.0, %v1967
      %v1969 = vpop.f32.mrb[0].mxu0
      %v1970 = vpop.f32.mrb[0].mxu0
      %v1971 = vadd.f32 0.0, %v1970
      %v1972 = vpop.f32.mrb[0].mxu0
      %1973 = vmatprep.mubr.bf16.mxu0 0
      %1974 = vmatmul.mubr.bf16.gmra.mrb[0].mxu0 %v630
      %v1975 = vpop.f32.mrb[0].mxu0
      %v1976 = vadd.f32 0.0, %v1975
      %v1977 = vpop.f32.mrb[0].mxu0
      %v1978 = vpop.f32.mrb[0].mxu0
      %v1979 = vadd.f32 0.0, %v1978
      %v1980 = vpop.f32.mrb[0].mxu0
      %1981 = vmatprep.mubr.bf16.mxu0 0
      %1982 = vmatmul.mubr.bf16.gmra.mrb[0].mxu0 %v639
      %v1983 = vpop.f32.mrb[0].mxu0
      %v1984 = vadd.f32 0.0, %v1983
      %v1985 = vpop.f32.mrb[0].mxu0
      %v1986 = vpop.f32.mrb[0].mxu0
      %v1987 = vadd.f32 0.0, %v1986
      %v1988 = vpop.f32.mrb[0].mxu0
      %1989 = vmatprep.mubr.bf16.mxu0 0
      %1990 = vmatmul.mubr.bf16.gmra.mrb[0].mxu0 %v648
      %v1991 = vpop.f32.mrb[0].mxu0
      %v1992 = vadd.f32 0.0, %v1991
      %v1993 = vpop.f32.mrb[0].mxu0
      %v1994 = vpop.f32.mrb[0].mxu0
      %v1995 = vadd.f32 0.0, %v1994
      %v1996 = vpop.f32.mrb[0].mxu0
      %1997 = vmatprep.mubr.bf16.mxu0 0
      %1998 = vmatmul.mubr.bf16.gmra.mrb[0].mxu0 %v1178
      %v1999 = vpop.f32.mrb[0].mxu0
      %v2000 = vadd.f32 0.0, %v1999
      %v2001 = vpop.f32.mrb[0].mxu0
      %v2002 = vpop.f32.mrb[0].mxu0
      %v2003 = vadd.f32 0.0, %v2002
      %v2004 = vpop.f32.mrb[0].mxu0
      %2005 = vmatprep.mubr.bf16.mxu0 0
      %2006 = vmatmul.mubr.bf16.gmra.mrb[0].mxu0 %v1841
      %v2007 = vpop.f32.mrb[0].mxu0
      %v2008 = vadd.f32 0.0, %v2007
      %v2009 = vpop.f32.mrb[0].mxu0
      %v2010 = vpop.f32.mrb[0].mxu0
      %v2011 = vadd.f32 0.0, %v2010
      %v2012 = vpop.f32.mrb[0].mxu0
      %2013 = vmatprep.mubr.bf16.mxu0 0
      %2014 = vmatmul.mubr.bf16.gmra.mrb[0].mxu0 %v1850
      %v2015 = vpop.f32.mrb[0].mxu0
      %v2016 = vadd.f32 0.0, %v2015
      %v2017 = vpop.f32.mrb[0].mxu0
      %v2018 = vpop.f32.mrb[0].mxu0
      %v2019 = vadd.f32 0.0, %v2018
      %v2020 = vpop.f32.mrb[0].mxu0
      %2021 = vdwg.mxu0
      %v2022 = vadd.f32 %v1792, %v1936
      %v2023 = vadd.f32 %v1793, %v1939
      %v2024 = vadd.f32 %v1794, %v1944
      %v2025 = vadd.f32 %v1795, %v1947
      %v2026 = vadd.f32 %v1796, %v1952
      %v2027 = vadd.f32 %v1797, %v1955
      %v2028 = vadd.f32 %v1798, %v1960
      %v2029 = vadd.f32 %v1799, %v1963
      %v2030 = vadd.f32 %v1800, %v1968
      %v2031 = vadd.f32 %v1801, %v1971
      %v2032 = vadd.f32 %v1802, %v1976
      %v2033 = vadd.f32 %v1803, %v1979
      %v2034 = vadd.f32 %v1804, %v1984
      %v2035 = vadd.f32 %v1805, %v1987
      %v2036 = vadd.f32 %v1806, %v1992
      %v2037 = vadd.f32 %v1807, %v1995
      %v2038 = vadd.f32 %v1808, %v2000
      %v2039 = vadd.f32 %v1809, %v2003
      %v2040 = vadd.f32 %v1810, %v2008
      %v2041 = vadd.f32 %v1811, %v2011
      %v2042 = vadd.f32 %v1812, %v2016
      %v2043 = vadd.f32 %v1813, %v2019
      %v2044 = vpack.c.bf16 %v323, %v322
      %s2045 = scalar_lea.vmem %s2, 448
      %v2046 = vld [vmem:[%s2045] sm:$0xf]
      %v2047 = vld [vmem:[%s2045 + $0x4] sm:$0xf]
      %v2048 = vld [vmem:[%s2045 + $0x8] sm:$0xf]
      %v2049 = vld [vmem:[%s2045 + $0xc] sm:$0xf]
      %v2050 = vld [vmem:[%s2045 + $0x10] sm:$0xf]
      %v2051 = vld [vmem:[%s2045 + $0x14] sm:$0xf]
      %v2052 = vld [vmem:[%s2045 + $0x18] sm:$0xf]
      %v2053 = vld [vmem:[%s2045 + $0x1c] sm:$0xf]
      %v2054 = vld [vmem:[%s2045 + $0x20] sm:$0xf]
      %v2055 = vld [vmem:[%s2045 + $0x24] sm:$0xf]
      %v2056 = vld [vmem:[%s2045 + $0x28] sm:$0xf]
      %v2057 = vld [vmem:[%s2045 + $0x2c] sm:$0xf]
      %v2058 = vld [vmem:[%s2045 + $0x30] sm:$0xf]
      %v2059 = vld [vmem:[%s2045 + $0x34] sm:$0xf]
      %v2060 = vld [vmem:[%s2045 + $0x38] sm:$0xf]
      %v2061 = vld [vmem:[%s2045 + $0x3c] sm:$0xf]
      %v2078 = vunpack.c.l.b16 %v2046
      %v2079 = vunpack.c.l.b16 %v2047
      %v2080 = vunpack.c.l.b16 %v2048
      %v2081 = vunpack.c.l.b16 %v2049
      %v2082 = vunpack.c.l.b16 %v2050
      %v2083 = vunpack.c.l.b16 %v2051
      %v2084 = vunpack.c.l.b16 %v2052
      %v2085 = vunpack.c.l.b16 %v2053
      %v2086 = vunpack.c.l.b16 %v2054
      %v2087 = vunpack.c.l.b16 %v2055
      %v2088 = vunpack.c.l.b16 %v2056
      %v2089 = vunpack.c.l.b16 %v2057
      %v2090 = vunpack.c.l.b16 %v2058
      %v2091 = vunpack.c.l.b16 %v2059
      %v2092 = vunpack.c.l.b16 %v2060
      %v2093 = vunpack.c.l.b16 %v2061
      %v2094 = vpack.c.b16 %v2079, %v2078
      %v2095 = vpack.c.b16 %v2081, %v2080
      %v2096 = vpack.c.b16 %v2083, %v2082
      %v2097 = vpack.c.b16 %v2085, %v2084
      %v2098 = vpack.c.b16 %v2087, %v2086
      %v2099 = vpack.c.b16 %v2089, %v2088
      %v2100 = vpack.c.b16 %v2091, %v2090
      %v2101 = vpack.c.b16 %v2093, %v2092
      %2110 = vmatprep.subr.bf16.mxu0 0
      %2111 = vmatpush1.bf16.msra.mxu0 %v2094
      %2112 = vmatprep.subr.bf16.mxu0 0
      %2113 = vmatpush1.bf16.msra.mxu0 %v2095
      %2114 = vmatprep.subr.bf16.mxu0 0
      %2115 = vmatpush1.bf16.msra.mxu0 %v2096
      %2116 = vmatprep.subr.bf16.mxu0 0
      %2117 = vmatpush1.bf16.msra.mxu0 %v2097
      %2118 = vmatprep.subr.bf16.mxu0 0
      %2119 = vmatpush1.bf16.msra.mxu0 %v2098
      %2120 = vmatprep.subr.bf16.mxu0 0
      %2121 = vmatpush1.bf16.msra.mxu0 %v2099
      %2122 = vmatprep.subr.bf16.mxu0 0
      %2123 = vmatpush1.bf16.msra.mxu0 %v2100
      %2124 = vmatprep.subr.bf16.mxu0 0
      %2125 = vmatpush1.bf16.msra.mxu0 %v2101
      %2126 = vmatprep.subr.bf16.mxu0 0
      %2127 = vmatpush1.bf16.msra.mxu0 0
      %2128 = vmatprep.subr.bf16.mxu0 0
      %2129 = vmatpush1.bf16.msra.mxu0 0
      %2130 = vmatprep.subr.bf16.mxu0 0
      %2131 = vmatpush1.bf16.msra.mxu0 0
      %2132 = vmatprep.subr.bf16.mxu0 0
      %2133 = vmatpush1.bf16.msra.mxu0 0
      %2134 = vmatprep.subr.bf16.mxu0 0
      %2135 = vmatpush1.bf16.msra.mxu0 0
      %2136 = vmatprep.subr.bf16.mxu0 0
      %2137 = vmatpush1.bf16.msra.mxu0 0
      %2138 = vmatprep.subr.bf16.mxu0 0
      %2139 = vmatpush1.bf16.msra.mxu0 0
      %2140 = vmatprep.subr.bf16.mxu0 0
      %2141 = vmatpush1.bf16.msra.mxu0 0
      %2142 = vmatprep.mubr.bf16.mxu0 0
      %2143 = vmatmul.mubr.bf16.gmra.mrb[0].mxu0 %v355
      %v2144 = vpop.f32.mrb[0].mxu0
      %v2145 = vadd.f32 0.0, %v2144
      %v2146 = vpop.f32.mrb[0].mxu0
      %v2147 = vpop.f32.mrb[0].mxu0
      %v2148 = vadd.f32 0.0, %v2147
      %v2149 = vpop.f32.mrb[0].mxu0
      %2150 = vmatprep.mubr.bf16.mxu0 0
      %2151 = vmatmul.mubr.bf16.gmra.mrb[0].mxu0 %v356
      %v2152 = vpop.f32.mrb[0].mxu0
      %v2153 = vadd.f32 0.0, %v2152
      %v2154 = vpop.f32.mrb[0].mxu0
      %v2155 = vpop.f32.mrb[0].mxu0
      %v2156 = vadd.f32 0.0, %v2155
      %v2157 = vpop.f32.mrb[0].mxu0
      %2158 = vmatprep.mubr.bf16.mxu0 0
      %2159 = vmatmul.mubr.bf16.gmra.mrb[0].mxu0 %v357
      %v2160 = vpop.f32.mrb[0].mxu0
      %v2161 = vadd.f32 0.0, %v2160
      %v2162 = vpop.f32.mrb[0].mxu0
      %v2163 = vpop.f32.mrb[0].mxu0
      %v2164 = vadd.f32 0.0, %v2163
      %v2165 = vpop.f32.mrb[0].mxu0
      %2166 = vmatprep.mubr.bf16.mxu0 0
      %2167 = vmatmul.mubr.bf16.gmra.mrb[0].mxu0 %v358
      %v2168 = vpop.f32.mrb[0].mxu0
      %v2169 = vadd.f32 0.0, %v2168
      %v2170 = vpop.f32.mrb[0].mxu0
      %v2171 = vpop.f32.mrb[0].mxu0
      %v2172 = vadd.f32 0.0, %v2171
      %v2173 = vpop.f32.mrb[0].mxu0
      %2174 = vmatprep.mubr.bf16.mxu0 0
      %2175 = vmatmul.mubr.bf16.gmra.mrb[0].mxu0 %v359
      %v2176 = vpop.f32.mrb[0].mxu0
      %v2177 = vadd.f32 0.0, %v2176
      %v2178 = vpop.f32.mrb[0].mxu0
      %v2179 = vpop.f32.mrb[0].mxu0
      %v2180 = vadd.f32 0.0, %v2179
      %v2181 = vpop.f32.mrb[0].mxu0
      %2182 = vmatprep.mubr.bf16.mxu0 0
      %2183 = vmatmul.mubr.bf16.gmra.mrb[0].mxu0 %v360
      %v2184 = vpop.f32.mrb[0].mxu0
      %v2185 = vadd.f32 0.0, %v2184
      %v2186 = vpop.f32.mrb[0].mxu0
      %v2187 = vpop.f32.mrb[0].mxu0
      %v2188 = vadd.f32 0.0, %v2187
      %v2189 = vpop.f32.mrb[0].mxu0
      %2190 = vmatprep.mubr.bf16.mxu0 0
      %2191 = vmatmul.mubr.bf16.gmra.mrb[0].mxu0 %v361
      %v2192 = vpop.f32.mrb[0].mxu0
      %v2193 = vadd.f32 0.0, %v2192
      %v2194 = vpop.f32.mrb[0].mxu0
      %v2195 = vpop.f32.mrb[0].mxu0
      %v2196 = vadd.f32 0.0, %v2195
      %v2197 = vpop.f32.mrb[0].mxu0
      %2198 = vmatprep.mubr.bf16.mxu0 0
      %2199 = vmatmul.mubr.bf16.gmra.mrb[0].mxu0 %v362
      %v2200 = vpop.f32.mrb[0].mxu0
      %v2201 = vadd.f32 0.0, %v2200
      %v2202 = vpop.f32.mrb[0].mxu0
      %v2203 = vpop.f32.mrb[0].mxu0
      %v2204 = vadd.f32 0.0, %v2203
      %v2205 = vpop.f32.mrb[0].mxu0
      %2206 = vmatprep.mubr.bf16.mxu0 0
      %2207 = vmatmul.mubr.bf16.gmra.mrb[0].mxu0 %v363
      %v2208 = vpop.f32.mrb[0].mxu0
      %v2209 = vadd.f32 0.0, %v2208
      %v2210 = vpop.f32.mrb[0].mxu0
      %v2211 = vpop.f32.mrb[0].mxu0
      %v2212 = vadd.f32 0.0, %v2211
      %v2213 = vpop.f32.mrb[0].mxu0
      %2214 = vmatprep.mubr.bf16.mxu0 0
      %2215 = vmatmul.mubr.bf16.gmra.mrb[0].mxu0 %v1381
      %v2216 = vpop.f32.mrb[0].mxu0
      %v2217 = vadd.f32 0.0, %v2216
      %v2218 = vpop.f32.mrb[0].mxu0
      %v2219 = vpop.f32.mrb[0].mxu0
      %v2220 = vadd.f32 0.0, %v2219
      %v2221 = vpop.f32.mrb[0].mxu0
      %2222 = vmatprep.mubr.bf16.mxu0 0
      %2223 = vmatmul.mubr.bf16.gmra.mrb[0].mxu0 %v2044
      %v2224 = vpop.f32.mrb[0].mxu0
      %v2225 = vadd.f32 0.0, %v2224
      %v2226 = vpop.f32.mrb[0].mxu0
      %v2227 = vpop.f32.mrb[0].mxu0
      %v2228 = vadd.f32 0.0, %v2227
      %v2229 = vpop.f32.mrb[0].mxu0
      %2230 = vdwg.mxu0
      %v2231 = vadd.f32 %v2022, %v2145
      %v2232 = vadd.f32 %v2023, %v2148
      %v2233 = vadd.f32 %v2024, %v2153
      %v2234 = vadd.f32 %v2025, %v2156
      %v2235 = vadd.f32 %v2026, %v2161
      %v2236 = vadd.f32 %v2027, %v2164
      %v2237 = vadd.f32 %v2028, %v2169
      %v2238 = vadd.f32 %v2029, %v2172
      %v2239 = vadd.f32 %v2030, %v2177
      %v2240 = vadd.f32 %v2031, %v2180
      %v2241 = vadd.f32 %v2032, %v2185
      %v2242 = vadd.f32 %v2033, %v2188
      %v2243 = vadd.f32 %v2034, %v2193
      %v2244 = vadd.f32 %v2035, %v2196
      %v2245 = vadd.f32 %v2036, %v2201
      %v2246 = vadd.f32 %v2037, %v2204
      %v2247 = vadd.f32 %v2038, %v2209
      %v2248 = vadd.f32 %v2039, %v2212
      %v2249 = vadd.f32 %v2040, %v2217
      %v2250 = vadd.f32 %v2041, %v2220
      %v2251 = vadd.f32 %v2042, %v2225
      %v2252 = vadd.f32 %v2043, %v2228
      %v2253 = vpack.c.bf16 %v324, %v324
      %s2254 = scalar_lea.vmem %s2, 512
      %v2255 = vld [vmem:[%s2254] sm:$0xf]
      %v2256 = vld [vmem:[%s2254 + $0x4] sm:$0xf]
      %v2257 = vld [vmem:[%s2254 + $0x8] sm:$0xf]
      %v2258 = vld [vmem:[%s2254 + $0xc] sm:$0xf]
      %v2259 = vld [vmem:[%s2254 + $0x10] sm:$0xf]
      %v2260 = vld [vmem:[%s2254 + $0x14] sm:$0xf]
      %v2261 = vld [vmem:[%s2254 + $0x18] sm:$0xf]
      %v2262 = vld [vmem:[%s2254 + $0x1c] sm:$0xf]
      %v2263 = vld [vmem:[%s2254 + $0x20] sm:$0xf]
      %v2264 = vld [vmem:[%s2254 + $0x24] sm:$0xf]
      %v2265 = vld [vmem:[%s2254 + $0x28] sm:$0xf]
      %v2266 = vld [vmem:[%s2254 + $0x2c] sm:$0xf]
      %v2267 = vld [vmem:[%s2254 + $0x30] sm:$0xf]
      %v2268 = vld [vmem:[%s2254 + $0x34] sm:$0xf]
      %v2269 = vld [vmem:[%s2254 + $0x38] sm:$0xf]
      %v2270 = vld [vmem:[%s2254 + $0x3c] sm:$0xf]
      %v2272 = vshll.u32 %v2044, 16
      %v2274 = vrot.slane %v2272, 1
      %v2275 = vsel %vm856, %v1615, %v2274
      %v2276 = vshrl.u32 %v2044, 16
      %v2278 = vor.u32 %v2276, %v2274
      %v2280 = vshll.u32 %v2253, 16
      %v2282 = vrot.slane %v2280, 1
      %v2283 = vsel %vm856, %v2278, %v2282
      %v2302 = vunpack.c.l.b16 %v2255
      %v2303 = vunpack.c.l.b16 %v2256
      %v2304 = vunpack.c.l.b16 %v2257
      %v2305 = vunpack.c.l.b16 %v2258
      %v2306 = vunpack.c.l.b16 %v2259
      %v2307 = vunpack.c.l.b16 %v2260
      %v2308 = vunpack.c.l.b16 %v2261
      %v2309 = vunpack.c.l.b16 %v2262
      %v2310 = vunpack.c.l.b16 %v2263
      %v2311 = vunpack.c.l.b16 %v2264
      %v2312 = vunpack.c.l.b16 %v2265
      %v2313 = vunpack.c.l.b16 %v2266
      %v2314 = vunpack.c.l.b16 %v2267
      %v2315 = vunpack.c.l.b16 %v2268
      %v2316 = vunpack.c.l.b16 %v2269
      %v2317 = vunpack.c.l.b16 %v2270
      %v2318 = vpack.c.b16 %v2303, %v2302
      %v2319 = vpack.c.b16 %v2305, %v2304
      %v2320 = vpack.c.b16 %v2307, %v2306
      %v2321 = vpack.c.b16 %v2309, %v2308
      %v2322 = vpack.c.b16 %v2311, %v2310
      %v2323 = vpack.c.b16 %v2313, %v2312
      %v2324 = vpack.c.b16 %v2315, %v2314
      %v2325 = vpack.c.b16 %v2317, %v2316
      %2334 = vmatprep.subr.bf16.mxu0 0
      %2335 = vmatpush1.bf16.msra.mxu0 %v2318
      %2336 = vmatprep.subr.bf16.mxu0 0
      %2337 = vmatpush1.bf16.msra.mxu0 %v2319
      %2338 = vmatprep.subr.bf16.mxu0 0
      %2339 = vmatpush1.bf16.msra.mxu0 %v2320
      %2340 = vmatprep.subr.bf16.mxu0 0
      %2341 = vmatpush1.bf16.msra.mxu0 %v2321
      %2342 = vmatprep.subr.bf16.mxu0 0
      %2343 = vmatpush1.bf16.msra.mxu0 %v2322
      %2344 = vmatprep.subr.bf16.mxu0 0
      %2345 = vmatpush1.bf16.msra.mxu0 %v2323
      %2346 = vmatprep.subr.bf16.mxu0 0
      %2347 = vmatpush1.bf16.msra.mxu0 %v2324
      %2348 = vmatprep.subr.bf16.mxu0 0
      %2349 = vmatpush1.bf16.msra.mxu0 %v2325
      %2350 = vmatprep.subr.bf16.mxu0 0
      %2351 = vmatpush1.bf16.msra.mxu0 0
      %2352 = vmatprep.subr.bf16.mxu0 0
      %2353 = vmatpush1.bf16.msra.mxu0 0
      %2354 = vmatprep.subr.bf16.mxu0 0
      %2355 = vmatpush1.bf16.msra.mxu0 0
      %2356 = vmatprep.subr.bf16.mxu0 0
      %2357 = vmatpush1.bf16.msra.mxu0 0
      %2358 = vmatprep.subr.bf16.mxu0 0
      %2359 = vmatpush1.bf16.msra.mxu0 0
      %2360 = vmatprep.subr.bf16.mxu0 0
      %2361 = vmatpush1.bf16.msra.mxu0 0
      %2362 = vmatprep.subr.bf16.mxu0 0
      %2363 = vmatpush1.bf16.msra.mxu0 0
      %2364 = vmatprep.subr.bf16.mxu0 0
      %2365 = vmatpush1.bf16.msra.mxu0 0
      %2366 = vmatprep.mubr.bf16.mxu0 0
      %2367 = vmatmul.mubr.bf16.gmra.mrb[0].mxu0 %v884
      %v2368 = vpop.f32.mrb[0].mxu0
      %v2369 = vadd.f32 0.0, %v2368
      %v2370 = vpop.f32.mrb[0].mxu0
      %v2371 = vpop.f32.mrb[0].mxu0
      %v2372 = vadd.f32 0.0, %v2371
      %v2373 = vpop.f32.mrb[0].mxu0
      %2374 = vmatprep.mubr.bf16.mxu0 0
      %2375 = vmatmul.mubr.bf16.gmra.mrb[0].mxu0 %v892
      %v2376 = vpop.f32.mrb[0].mxu0
      %v2377 = vadd.f32 0.0, %v2376
      %v2378 = vpop.f32.mrb[0].mxu0
      %v2379 = vpop.f32.mrb[0].mxu0
      %v2380 = vadd.f32 0.0, %v2379
      %v2381 = vpop.f32.mrb[0].mxu0
      %2382 = vmatprep.mubr.bf16.mxu0 0
      %2383 = vmatmul.mubr.bf16.gmra.mrb[0].mxu0 %v900
      %v2384 = vpop.f32.mrb[0].mxu0
      %v2385 = vadd.f32 0.0, %v2384
      %v2386 = vpop.f32.mrb[0].mxu0
      %v2387 = vpop.f32.mrb[0].mxu0
      %v2388 = vadd.f32 0.0, %v2387
      %v2389 = vpop.f32.mrb[0].mxu0
      %2390 = vmatprep.mubr.bf16.mxu0 0
      %2391 = vmatmul.mubr.bf16.gmra.mrb[0].mxu0 %v908
      %v2392 = vpop.f32.mrb[0].mxu0
      %v2393 = vadd.f32 0.0, %v2392
      %v2394 = vpop.f32.mrb[0].mxu0
      %v2395 = vpop.f32.mrb[0].mxu0
      %v2396 = vadd.f32 0.0, %v2395
      %v2397 = vpop.f32.mrb[0].mxu0
      %2398 = vmatprep.mubr.bf16.mxu0 0
      %2399 = vmatmul.mubr.bf16.gmra.mrb[0].mxu0 %v916
      %v2400 = vpop.f32.mrb[0].mxu0
      %v2401 = vadd.f32 0.0, %v2400
      %v2402 = vpop.f32.mrb[0].mxu0
      %v2403 = vpop.f32.mrb[0].mxu0
      %v2404 = vadd.f32 0.0, %v2403
      %v2405 = vpop.f32.mrb[0].mxu0
      %2406 = vmatprep.mubr.bf16.mxu0 0
      %2407 = vmatmul.mubr.bf16.gmra.mrb[0].mxu0 %v924
      %v2408 = vpop.f32.mrb[0].mxu0
      %v2409 = vadd.f32 0.0, %v2408
      %v2410 = vpop.f32.mrb[0].mxu0
      %v2411 = vpop.f32.mrb[0].mxu0
      %v2412 = vadd.f32 0.0, %v2411
      %v2413 = vpop.f32.mrb[0].mxu0
      %2414 = vmatprep.mubr.bf16.mxu0 0
      %2415 = vmatmul.mubr.bf16.gmra.mrb[0].mxu0 %v932
      %v2416 = vpop.f32.mrb[0].mxu0
      %v2417 = vadd.f32 0.0, %v2416
      %v2418 = vpop.f32.mrb[0].mxu0
      %v2419 = vpop.f32.mrb[0].mxu0
      %v2420 = vadd.f32 0.0, %v2419
      %v2421 = vpop.f32.mrb[0].mxu0
      %2422 = vmatprep.mubr.bf16.mxu0 0
      %2423 = vmatmul.mubr.bf16.gmra.mrb[0].mxu0 %v940
      %v2424 = vpop.f32.mrb[0].mxu0
      %v2425 = vadd.f32 0.0, %v2424
      %v2426 = vpop.f32.mrb[0].mxu0
      %v2427 = vpop.f32.mrb[0].mxu0
      %v2428 = vadd.f32 0.0, %v2427
      %v2429 = vpop.f32.mrb[0].mxu0
      %2430 = vmatprep.mubr.bf16.mxu0 0
      %2431 = vmatmul.mubr.bf16.gmra.mrb[0].mxu0 %v1612
      %v2432 = vpop.f32.mrb[0].mxu0
      %v2433 = vadd.f32 0.0, %v2432
      %v2434 = vpop.f32.mrb[0].mxu0
      %v2435 = vpop.f32.mrb[0].mxu0
      %v2436 = vadd.f32 0.0, %v2435
      %v2437 = vpop.f32.mrb[0].mxu0
      %2438 = vmatprep.mubr.bf16.mxu0 0
      %2439 = vmatmul.mubr.bf16.gmra.mrb[0].mxu0 %v2275
      %v2440 = vpop.f32.mrb[0].mxu0
      %v2441 = vadd.f32 0.0, %v2440
      %v2442 = vpop.f32.mrb[0].mxu0
      %v2443 = vpop.f32.mrb[0].mxu0
      %v2444 = vadd.f32 0.0, %v2443
      %v2445 = vpop.f32.mrb[0].mxu0
      %2446 = vmatprep.mubr.bf16.mxu0 0
      %2447 = vmatmul.mubr.bf16.gmra.mrb[0].mxu0 %v2283
      %v2448 = vpop.f32.mrb[0].mxu0
      %v2449 = vadd.f32 0.0, %v2448
      %v2450 = vpop.f32.mrb[0].mxu0
      %v2451 = vpop.f32.mrb[0].mxu0
      %v2452 = vadd.f32 0.0, %v2451
      %v2453 = vpop.f32.mrb[0].mxu0
      %2454 = vdwg.mxu0
      %v2455 = vadd.f32 %v2231, %v2369
      %v2456 = vadd.f32 %v2232, %v2372
      %v2457 = vadd.f32 %v2233, %v2377
      %v2458 = vadd.f32 %v2234, %v2380
      %v2459 = vadd.f32 %v2235, %v2385
      %v2460 = vadd.f32 %v2236, %v2388
      %v2461 = vadd.f32 %v2237, %v2393
      %v2462 = vadd.f32 %v2238, %v2396
      %v2463 = vadd.f32 %v2239, %v2401
      %v2464 = vadd.f32 %v2240, %v2404
      %v2465 = vadd.f32 %v2241, %v2409
      %v2466 = vadd.f32 %v2242, %v2412
      %v2467 = vadd.f32 %v2243, %v2417
      %v2468 = vadd.f32 %v2244, %v2420
      %v2469 = vadd.f32 %v2245, %v2425
      %v2470 = vadd.f32 %v2246, %v2428
      %v2471 = vadd.f32 %v2247, %v2433
      %v2472 = vadd.f32 %v2248, %v2436
      %v2473 = vadd.f32 %v2249, %v2441
      %v2474 = vadd.f32 %v2250, %v2444
      %v2475 = vadd.f32 %v2251, %v2449
      %v2476 = vadd.f32 %v2252, %v2452
      %v2477 = vld [vmem:[%s3] sm:$0x1]
      %v2479 = vlaneseq
      %v2480 = vshrl.u32 %v2479, 7
      %v2481 = vsub.s32 0, %v2480
      %v2482 = vrot.slane %v2477, %v2481
      %v2484 = vadd.f32 %v2455, %v2482
      %v2485 = vadd.f32 %v2456, %v2482
      %v2486 = vadd.f32 %v2457, %v2482
      %v2487 = vadd.f32 %v2458, %v2482
      %v2488 = vadd.f32 %v2459, %v2482
      %v2489 = vadd.f32 %v2460, %v2482
      %v2490 = vadd.f32 %v2461, %v2482
      %v2491 = vadd.f32 %v2462, %v2482
      %v2492 = vadd.f32 %v2463, %v2482
      %v2493 = vadd.f32 %v2464, %v2482
      %v2494 = vadd.f32 %v2465, %v2482
      %v2495 = vadd.f32 %v2466, %v2482
      %v2496 = vadd.f32 %v2467, %v2482
      %v2497 = vadd.f32 %v2468, %v2482
      %v2498 = vadd.f32 %v2469, %v2482
      %v2499 = vadd.f32 %v2470, %v2482
      %v2500 = vadd.f32 %v2471, %v2482
      %v2501 = vadd.f32 %v2472, %v2482
      %v2502 = vadd.f32 %v2473, %v2482
      %v2503 = vadd.f32 %v2474, %v2482
      %v2504 = vadd.f32 %v2475, %v2482
      %v2505 = vadd.f32 %v2476, %v2482
      %v2506 = vmax.f32 %v2484, 0.0
      %v2507 = vmax.f32 %v2485, 0.0
      %v2508 = vmax.f32 %v2486, 0.0
      %v2509 = vmax.f32 %v2487, 0.0
      %v2510 = vmax.f32 %v2488, 0.0
      %v2511 = vmax.f32 %v2489, 0.0
      %v2512 = vmax.f32 %v2490, 0.0
      %v2513 = vmax.f32 %v2491, 0.0
      %v2514 = vmax.f32 %v2492, 0.0
      %v2515 = vmax.f32 %v2493, 0.0
      %v2516 = vmax.f32 %v2494, 0.0
      %v2517 = vmax.f32 %v2495, 0.0
      %v2518 = vmax.f32 %v2496, 0.0
      %v2519 = vmax.f32 %v2497, 0.0
      %v2520 = vmax.f32 %v2498, 0.0
      %v2521 = vmax.f32 %v2499, 0.0
      %v2522 = vmax.f32 %v2500, 0.0
      %v2523 = vmax.f32 %v2501, 0.0
      %v2524 = vmax.f32 %v2502, 0.0
      %v2525 = vmax.f32 %v2503, 0.0
      %v2526 = vmax.f32 %v2504, 0.0
      %v2527 = vmax.f32 %v2505, 0.0
      %2528 = vst [vmem:[#allocation2] sm:$0xff] 0.0
      %2529 = vst [vmem:[#allocation2 + $0x8] sm:$0xff] 0.0
      %2530 = vst [vmem:[#allocation2 + $0x10] sm:$0xff] 0.0
      %2531 = vst [vmem:[#allocation2 + $0xc8] sm:$0xff] 0.0
      %2532 = vst [vmem:[#allocation2 + $0xd0] sm:$0xff] 0.0
      %2533 = vst [vmem:[#allocation2 + $0xd8] sm:$0xff] 0.0
      %2534 = vst [vmem:[#allocation2 + $0xe0] sm:$0xff] 0.0
      %2535 = vst [vmem:[#allocation2 + $0xe8] sm:$0xff] 0.0
      %v2536 = vsel %vm275, %v2506, 0.0
      %v2537 = vsel %vm276, %v2507, 0.0
      %v2538 = vsel %vm277, %v2508, 0.0
      %v2539 = vsel %vm278, %v2509, 0.0
      %v2540 = vsel %vm279, %v2510, 0.0
      %v2541 = vsel %vm280, %v2511, 0.0
      %v2542 = vsel %vm281, %v2512, 0.0
      %v2543 = vsel %vm282, %v2513, 0.0
      %v2544 = vsel %vm283, %v2514, 0.0
      %v2545 = vsel %vm284, %v2515, 0.0
      %v2546 = vsel %vm285, %v2516, 0.0
      %v2547 = vsel %vm286, %v2517, 0.0
      %v2548 = vsel %vm287, %v2518, 0.0
      %v2549 = vsel %vm288, %v2519, 0.0
      %v2550 = vsel %vm289, %v2520, 0.0
      %v2551 = vsel %vm290, %v2521, 0.0
      %v2552 = vsel %vm291, %v2522, 0.0
      %v2553 = vsel %vm292, %v2523, 0.0
      %v2554 = vsel %vm293, %v2524, 0.0
      %v2555 = vsel %vm294, %v2525, 0.0
      %v2556 = vsel %vm295, %v2526, 0.0
      %v2557 = vsel %vm296, %v2527, 0.0
      %2558 = vst [vmem:[#allocation2 + $0x18] sm:$0xff] %v2536
      %2559 = vst [vmem:[#allocation2 + $0x20] sm:$0xff] %v2537
      %2560 = vst [vmem:[#allocation2 + $0x28] sm:$0xff] %v2538
      %2561 = vst [vmem:[#allocation2 + $0x30] sm:$0xff] %v2539
      %2562 = vst [vmem:[#allocation2 + $0x38] sm:$0xff] %v2540
      %2563 = vst [vmem:[#allocation2 + $0x40] sm:$0xff] %v2541
      %2564 = vst [vmem:[#allocation2 + $0x48] sm:$0xff] %v2542
      %2565 = vst [vmem:[#allocation2 + $0x50] sm:$0xff] %v2543
      %2566 = vst [vmem:[#allocation2 + $0x58] sm:$0xff] %v2544
      %2567 = vst [vmem:[#allocation2 + $0x60] sm:$0xff] %v2545
      %2568 = vst [vmem:[#allocation2 + $0x68] sm:$0xff] %v2546
      %2569 = vst [vmem:[#allocation2 + $0x70] sm:$0xff] %v2547
      %2570 = vst [vmem:[#allocation2 + $0x78] sm:$0xff] %v2548
      %2571 = vst [vmem:[#allocation2 + $0x80] sm:$0xff] %v2549
      %2572 = vst [vmem:[#allocation2 + $0x88] sm:$0xff] %v2550
      %2573 = vst [vmem:[#allocation2 + $0x90] sm:$0xff] %v2551
      %2574 = vst [vmem:[#allocation2 + $0x98] sm:$0xff] %v2552
      %2575 = vst [vmem:[#allocation2 + $0xa0] sm:$0xff] %v2553
      %2576 = vst [vmem:[#allocation2 + $0xa8] sm:$0xff] %v2554
      %2577 = vst [vmem:[#allocation2 + $0xb0] sm:$0xff] %v2555
      %2578 = vst [vmem:[#allocation2 + $0xb8] sm:$0xff] %v2556
      %2579 = vst [vmem:[#allocation2 + $0xc0] sm:$0xff] %v2557
      %v2580 = vld [vmem:[#allocation2] sm:$0xff]
      %v2581 = vld [vmem:[#allocation2 + $0x8] sm:$0xff]
      %v2582 = vld [vmem:[#allocation2 + $0x10] sm:$0xff]
      %v2583 = vld [vmem:[#allocation2 + $0x18] sm:$0xff]
      %v2584 = vld [vmem:[#allocation2 + $0x20] sm:$0xff]
      %v2585 = vld [vmem:[#allocation2 + $0x28] sm:$0xff]
      %v2586 = vld [vmem:[#allocation2 + $0x30] sm:$0xff]
      %v2587 = vld [vmem:[#allocation2 + $0x38] sm:$0xff]
      %v2588 = vld [vmem:[#allocation2 + $0x40] sm:$0xff]
      %v2589 = vld [vmem:[#allocation2 + $0x48] sm:$0xff]
      %v2590 = vld [vmem:[#allocation2 + $0x50] sm:$0xff]
      %v2591 = vld [vmem:[#allocation2 + $0x58] sm:$0xff]
      %v2592 = vld [vmem:[#allocation2 + $0x60] sm:$0xff]
      %v2593 = vld [vmem:[#allocation2 + $0x68] sm:$0xff]
      %v2594 = vld [vmem:[#allocation2 + $0x70] sm:$0xff]
      %v2595 = vld [vmem:[#allocation2 + $0x78] sm:$0xff]
      %v2596 = vld [vmem:[#allocation2 + $0x80] sm:$0xff]
      %v2597 = vld [vmem:[#allocation2 + $0x88] sm:$0xff]
      %v2598 = vld [vmem:[#allocation2 + $0x90] sm:$0xff]
      %v2599 = vld [vmem:[#allocation2 + $0x98] sm:$0xff]
      %v2600 = vld [vmem:[#allocation2 + $0xa0] sm:$0xff]
      %v2601 = vld [vmem:[#allocation2 + $0xa8] sm:$0xff]
      %v2602 = vld [vmem:[#allocation2 + $0xb0] sm:$0xff]
      %v2603 = vld [vmem:[#allocation2 + $0xb8] sm:$0xff]
      %v2604 = vld [vmem:[#allocation2 + $0xc0] sm:$0xff]
      %v2605 = vld [vmem:[#allocation2 + $0xc8] sm:$0xff]
      %v2606 = vld [vmem:[#allocation2 + $0xd0] sm:$0xff]
      %v2607 = vld [vmem:[#allocation2 + $0xd8] sm:$0xff]
      %v2608 = vld [vmem:[#allocation2 + $0xe0] sm:$0xff]
      %v2609 = vld [vmem:[#allocation2 + $0xe8] sm:$0xff]
      %v2610 = vpack.c.bf16 %v2581, %v2580
      %v2611 = vpack.c.bf16 %v2583, %v2582
      %v2612 = vpack.c.bf16 %v2585, %v2584
      %v2613 = vpack.c.bf16 %v2587, %v2586
      %v2614 = vpack.c.bf16 %v2589, %v2588
      %v2615 = vpack.c.bf16 %v2591, %v2590
      %v2616 = vpack.c.bf16 %v2593, %v2592
      %v2617 = vpack.c.bf16 %v2595, %v2594
      %v2618 = vpack.c.bf16 %v2597, %v2596
      %v2619 = vpack.c.bf16 %v2599, %v2598
      %v2620 = vpack.c.bf16 %v2601, %v2600
      %v2621 = vpack.c.bf16 %v2602, %v2602
      %v2622 = vld [vmem:[%s4] sm:$0xf]
      %v2623 = vld [vmem:[%s4 + $0x4] sm:$0xf]
      %v2624 = vld [vmem:[%s4 + $0x8] sm:$0xf]
      %v2625 = vld [vmem:[%s4 + $0xc] sm:$0xf]
      %v2626 = vld [vmem:[%s4 + $0x10] sm:$0xf]
      %v2627 = vld [vmem:[%s4 + $0x14] sm:$0xf]
      %v2628 = vld [vmem:[%s4 + $0x18] sm:$0xf]
      %v2629 = vld [vmem:[%s4 + $0x1c] sm:$0xf]
      %v2630 = vld [vmem:[%s4 + $0x20] sm:$0xf]
      %v2631 = vld [vmem:[%s4 + $0x24] sm:$0xf]
      %v2632 = vld [vmem:[%s4 + $0x28] sm:$0xf]
      %v2633 = vld [vmem:[%s4 + $0x2c] sm:$0xf]
      %v2634 = vld [vmem:[%s4 + $0x30] sm:$0xf]
      %v2635 = vld [vmem:[%s4 + $0x34] sm:$0xf]
      %v2636 = vld [vmem:[%s4 + $0x38] sm:$0xf]
      %v2637 = vld [vmem:[%s4 + $0x3c] sm:$0xf]
      %v2638 = vpack.c.bf16 %v2582, %v2581
      %v2639 = vpack.c.bf16 %v2584, %v2583
      %v2640 = vpack.c.bf16 %v2586, %v2585
      %v2641 = vpack.c.bf16 %v2588, %v2587
      %v2642 = vpack.c.bf16 %v2590, %v2589
      %v2643 = vpack.c.bf16 %v2592, %v2591
      %v2644 = vpack.c.bf16 %v2594, %v2593
      %v2645 = vpack.c.bf16 %v2596, %v2595
      %v2646 = vpack.c.bf16 %v2598, %v2597
      %v2647 = vpack.c.bf16 %v2600, %v2599
      %v2648 = vpack.c.bf16 %v2602, %v2601
      %s2649 = scalar_lea.vmem %s4, 64
      %v2650 = vld [vmem:[%s2649] sm:$0xf]
      %v2651 = vld [vmem:[%s2649 + $0x4] sm:$0xf]
      %v2652 = vld [vmem:[%s2649 + $0x8] sm:$0xf]
      %v2653 = vld [vmem:[%s2649 + $0xc] sm:$0xf]
      %v2654 = vld [vmem:[%s2649 + $0x10] sm:$0xf]
      %v2655 = vld [vmem:[%s2649 + $0x14] sm:$0xf]
      %v2656 = vld [vmem:[%s2649 + $0x18] sm:$0xf]
      %v2657 = vld [vmem:[%s2649 + $0x1c] sm:$0xf]
      %v2658 = vld [vmem:[%s2649 + $0x20] sm:$0xf]
      %v2659 = vld [vmem:[%s2649 + $0x24] sm:$0xf]
      %v2660 = vld [vmem:[%s2649 + $0x28] sm:$0xf]
      %v2661 = vld [vmem:[%s2649 + $0x2c] sm:$0xf]
      %v2662 = vld [vmem:[%s2649 + $0x30] sm:$0xf]
      %v2663 = vld [vmem:[%s2649 + $0x34] sm:$0xf]
      %v2664 = vld [vmem:[%s2649 + $0x38] sm:$0xf]
      %v2665 = vld [vmem:[%s2649 + $0x3c] sm:$0xf]
      %v2682 = vunpack.c.l.b16 %v2650
      %v2683 = vunpack.c.l.b16 %v2651
      %v2684 = vunpack.c.l.b16 %v2652
      %v2685 = vunpack.c.l.b16 %v2653
      %v2686 = vunpack.c.l.b16 %v2654
      %v2687 = vunpack.c.l.b16 %v2655
      %v2688 = vunpack.c.l.b16 %v2656
      %v2689 = vunpack.c.l.b16 %v2657
      %v2690 = vunpack.c.l.b16 %v2658
      %v2691 = vunpack.c.l.b16 %v2659
      %v2692 = vunpack.c.l.b16 %v2660
      %v2693 = vunpack.c.l.b16 %v2661
      %v2694 = vunpack.c.l.b16 %v2662
      %v2695 = vunpack.c.l.b16 %v2663
      %v2696 = vunpack.c.l.b16 %v2664
      %v2697 = vunpack.c.l.b16 %v2665
      %v2698 = vpack.c.b16 %v2683, %v2682
      %v2699 = vpack.c.b16 %v2685, %v2684
      %v2700 = vpack.c.b16 %v2687, %v2686
      %v2701 = vpack.c.b16 %v2689, %v2688
      %v2702 = vpack.c.b16 %v2691, %v2690
      %v2703 = vpack.c.b16 %v2693, %v2692
      %v2704 = vpack.c.b16 %v2695, %v2694
      %v2705 = vpack.c.b16 %v2697, %v2696
      %2714 = vmatprep.subr.bf16.mxu0 0
      %2715 = vmatpush1.bf16.msra.mxu0 %v2698
      %2716 = vmatprep.subr.bf16.mxu0 0
      %2717 = vmatpush1.bf16.msra.mxu0 %v2699
      %2718 = vmatprep.subr.bf16.mxu0 0
      %2719 = vmatpush1.bf16.msra.mxu0 %v2700
      %2720 = vmatprep.subr.bf16.mxu0 0
      %2721 = vmatpush1.bf16.msra.mxu0 %v2701
      %2722 = vmatprep.subr.bf16.mxu0 0
      %2723 = vmatpush1.bf16.msra.mxu0 %v2702
      %2724 = vmatprep.subr.bf16.mxu0 0
      %2725 = vmatpush1.bf16.msra.mxu0 %v2703
      %2726 = vmatprep.subr.bf16.mxu0 0
      %2727 = vmatpush1.bf16.msra.mxu0 %v2704
      %2728 = vmatprep.subr.bf16.mxu0 0
      %2729 = vmatpush1.bf16.msra.mxu0 %v2705
      %2730 = vmatprep.subr.bf16.mxu0 0
      %2731 = vmatpush1.bf16.msra.mxu0 0
      %2732 = vmatprep.subr.bf16.mxu0 0
      %2733 = vmatpush1.bf16.msra.mxu0 0
      %2734 = vmatprep.subr.bf16.mxu0 0
      %2735 = vmatpush1.bf16.msra.mxu0 0
      %2736 = vmatprep.subr.bf16.mxu0 0
      %2737 = vmatpush1.bf16.msra.mxu0 0
      %2738 = vmatprep.subr.bf16.mxu0 0
      %2739 = vmatpush1.bf16.msra.mxu0 0
      %2740 = vmatprep.subr.bf16.mxu0 0
      %2741 = vmatpush1.bf16.msra.mxu0 0
      %2742 = vmatprep.subr.bf16.mxu0 0
      %2743 = vmatpush1.bf16.msra.mxu0 0
      %2744 = vmatprep.subr.bf16.mxu0 0
      %2745 = vmatpush1.bf16.msra.mxu0 0
      %2746 = vmatprep.mubr.bf16.mxu0 0
      %2747 = vmatmul.mubr.bf16.gmra.mrb[0].mxu0 %v2638
      %v2748 = vpop.f32.mrb[0].mxu0
      %v2749 = vadd.f32 0.0, %v2748
      %v2750 = vpop.f32.mrb[0].mxu0
      %v2751 = vpop.f32.mrb[0].mxu0
      %v2752 = vadd.f32 0.0, %v2751
      %v2753 = vpop.f32.mrb[0].mxu0
      %2754 = vmatprep.mubr.bf16.mxu0 0
      %2755 = vmatmul.mubr.bf16.gmra.mrb[0].mxu0 %v2639
      %v2756 = vpop.f32.mrb[0].mxu0
      %v2757 = vadd.f32 0.0, %v2756
      %v2758 = vpop.f32.mrb[0].mxu0
      %v2759 = vpop.f32.mrb[0].mxu0
      %v2760 = vadd.f32 0.0, %v2759
      %v2761 = vpop.f32.mrb[0].mxu0
      %2762 = vmatprep.mubr.bf16.mxu0 0
      %2763 = vmatmul.mubr.bf16.gmra.mrb[0].mxu0 %v2640
      %v2764 = vpop.f32.mrb[0].mxu0
      %v2765 = vadd.f32 0.0, %v2764
      %v2766 = vpop.f32.mrb[0].mxu0
      %v2767 = vpop.f32.mrb[0].mxu0
      %v2768 = vadd.f32 0.0, %v2767
      %v2769 = vpop.f32.mrb[0].mxu0
      %2770 = vmatprep.mubr.bf16.mxu0 0
      %2771 = vmatmul.mubr.bf16.gmra.mrb[0].mxu0 %v2641
      %v2772 = vpop.f32.mrb[0].mxu0
      %v2773 = vadd.f32 0.0, %v2772
      %v2774 = vpop.f32.mrb[0].mxu0
      %v2775 = vpop.f32.mrb[0].mxu0
      %v2776 = vadd.f32 0.0, %v2775
      %v2777 = vpop.f32.mrb[0].mxu0
      %2778 = vmatprep.mubr.bf16.mxu0 0
      %2779 = vmatmul.mubr.bf16.gmra.mrb[0].mxu0 %v2642
      %v2780 = vpop.f32.mrb[0].mxu0
      %v2781 = vadd.f32 0.0, %v2780
      %v2782 = vpop.f32.mrb[0].mxu0
      %v2783 = vpop.f32.mrb[0].mxu0
      %v2784 = vadd.f32 0.0, %v2783
      %v2785 = vpop.f32.mrb[0].mxu0
      %2786 = vmatprep.mubr.bf16.mxu0 0
      %2787 = vmatmul.mubr.bf16.gmra.mrb[0].mxu0 %v2643
      %v2788 = vpop.f32.mrb[0].mxu0
      %v2789 = vadd.f32 0.0, %v2788
      %v2790 = vpop.f32.mrb[0].mxu0
      %v2791 = vpop.f32.mrb[0].mxu0
      %v2792 = vadd.f32 0.0, %v2791
      %v2793 = vpop.f32.mrb[0].mxu0
      %2794 = vmatprep.mubr.bf16.mxu0 0
      %2795 = vmatmul.mubr.bf16.gmra.mrb[0].mxu0 %v2644
      %v2796 = vpop.f32.mrb[0].mxu0
      %v2797 = vadd.f32 0.0, %v2796
      %v2798 = vpop.f32.mrb[0].mxu0
      %v2799 = vpop.f32.mrb[0].mxu0
      %v2800 = vadd.f32 0.0, %v2799
      %v2801 = vpop.f32.mrb[0].mxu0
      %2802 = vmatprep.mubr.bf16.mxu0 0
      %2803 = vmatmul.mubr.bf16.gmra.mrb[0].mxu0 %v2645
      %v2804 = vpop.f32.mrb[0].mxu0
      %v2805 = vadd.f32 0.0, %v2804
      %v2806 = vpop.f32.mrb[0].mxu0
      %v2807 = vpop.f32.mrb[0].mxu0
      %v2808 = vadd.f32 0.0, %v2807
      %v2809 = vpop.f32.mrb[0].mxu0
      %2810 = vmatprep.mubr.bf16.mxu0 0
      %2811 = vmatmul.mubr.bf16.gmra.mrb[0].mxu0 %v2646
      %v2812 = vpop.f32.mrb[0].mxu0
      %v2813 = vadd.f32 0.0, %v2812
      %v2814 = vpop.f32.mrb[0].mxu0
      %v2815 = vpop.f32.mrb[0].mxu0
      %v2816 = vadd.f32 0.0, %v2815
      %v2817 = vpop.f32.mrb[0].mxu0
      %2818 = vmatprep.mubr.bf16.mxu0 0
      %2819 = vmatmul.mubr.bf16.gmra.mrb[0].mxu0 %v2647
      %v2820 = vpop.f32.mrb[0].mxu0
      %v2821 = vadd.f32 0.0, %v2820
      %v2822 = vpop.f32.mrb[0].mxu0
      %v2823 = vpop.f32.mrb[0].mxu0
      %v2824 = vadd.f32 0.0, %v2823
      %v2825 = vpop.f32.mrb[0].mxu0
      %2826 = vmatprep.mubr.bf16.mxu0 0
      %2827 = vmatmul.mubr.bf16.gmra.mrb[0].mxu0 %v2648
      %v2828 = vpop.f32.mrb[0].mxu0
      %v2829 = vadd.f32 0.0, %v2828
      %v2830 = vpop.f32.mrb[0].mxu0
      %v2831 = vpop.f32.mrb[0].mxu0
      %v2832 = vadd.f32 0.0, %v2831
      %v2833 = vpop.f32.mrb[0].mxu0
      %2834 = vdwg.mxu0
      %v2836 = vshrl.u32 %v2610, 16
      %v2838 = vrot.slane %v2836, 3
      %v2839 = vshll.u32 %v2610, 16
      %v2841 = vrot.slane %v2839, 4
      %v2842 = vor.u32 %v2838, %v2841
      %v2844 = vshrl.u32 %v2611, 16
      %v2846 = vrot.slane %v2844, 3
      %v2847 = vshll.u32 %v2611, 16
      %v2849 = vrot.slane %v2847, 4
      %v2850 = vor.u32 %v2846, %v2849
      %v2851 = vsel %vm550, %v2842, %v2850
      %v2853 = vshrl.u32 %v2612, 16
      %v2855 = vrot.slane %v2853, 3
      %v2856 = vshll.u32 %v2612, 16
      %v2858 = vrot.slane %v2856, 4
      %v2859 = vor.u32 %v2855, %v2858
      %v2860 = vsel %vm550, %v2850, %v2859
      %v2862 = vshrl.u32 %v2613, 16
      %v2864 = vrot.slane %v2862, 3
      %v2865 = vshll.u32 %v2613, 16
      %v2867 = vrot.slane %v2865, 4
      %v2868 = vor.u32 %v2864, %v2867
      %v2869 = vsel %vm550, %v2859, %v2868
      %v2871 = vshrl.u32 %v2614, 16
      %v2873 = vrot.slane %v2871, 3
      %v2874 = vshll.u32 %v2614, 16
      %v2876 = vrot.slane %v2874, 4
      %v2877 = vor.u32 %v2873, %v2876
      %v2878 = vsel %vm550, %v2868, %v2877
      %v2880 = vshrl.u32 %v2615, 16
      %v2882 = vrot.slane %v2880, 3
      %v2883 = vshll.u32 %v2615, 16
      %v2885 = vrot.slane %v2883, 4
      %v2886 = vor.u32 %v2882, %v2885
      %v2887 = vsel %vm550, %v2877, %v2886
      %v2889 = vshrl.u32 %v2616, 16
      %v2891 = vrot.slane %v2889, 3
      %v2892 = vshll.u32 %v2616, 16
      %v2894 = vrot.slane %v2892, 4
      %v2895 = vor.u32 %v2891, %v2894
      %v2896 = vsel %vm550, %v2886, %v2895
      %v2898 = vshrl.u32 %v2617, 16
      %v2900 = vrot.slane %v2898, 3
      %v2901 = vshll.u32 %v2617, 16
      %v2903 = vrot.slane %v2901, 4
      %v2904 = vor.u32 %v2900, %v2903
      %v2905 = vsel %vm550, %v2895, %v2904
      %v2907 = vshrl.u32 %v2618, 16
      %v2909 = vrot.slane %v2907, 3
      %v2910 = vshll.u32 %v2618, 16
      %v2912 = vrot.slane %v2910, 4
      %v2913 = vor.u32 %v2909, %v2912
      %v2914 = vsel %vm550, %v2904, %v2913
      %v2916 = vshrl.u32 %v2619, 16
      %v2918 = vrot.slane %v2916, 3
      %v2919 = vshll.u32 %v2619, 16
      %v2921 = vrot.slane %v2919, 4
      %v2922 = vor.u32 %v2918, %v2921
      %v2923 = vsel %vm550, %v2913, %v2922
      %v2925 = vshrl.u32 %v2620, 16
      %v2927 = vrot.slane %v2925, 3
      %v2928 = vshll.u32 %v2620, 16
      %v2930 = vrot.slane %v2928, 4
      %v2931 = vor.u32 %v2927, %v2930
      %v2932 = vsel %vm550, %v2922, %v2931
      %v2934 = vshrl.u32 %v2621, 16
      %v2936 = vrot.slane %v2934, 3
      %v2937 = vshll.u32 %v2621, 16
      %v2939 = vrot.slane %v2937, 4
      %v2940 = vor.u32 %v2936, %v2939
      %v2941 = vsel %vm550, %v2931, %v2940
      %v2969 = vunpack.c.l.b16 %v2622
      %v2970 = vunpack.c.l.b16 %v2623
      %v2971 = vunpack.c.l.b16 %v2624
      %v2972 = vunpack.c.l.b16 %v2625
      %v2973 = vunpack.c.l.b16 %v2626
      %v2974 = vunpack.c.l.b16 %v2627
      %v2975 = vunpack.c.l.b16 %v2628
      %v2976 = vunpack.c.l.b16 %v2629
      %v2977 = vunpack.c.l.b16 %v2630
      %v2978 = vunpack.c.l.b16 %v2631
      %v2979 = vunpack.c.l.b16 %v2632
      %v2980 = vunpack.c.l.b16 %v2633
      %v2981 = vunpack.c.l.b16 %v2634
      %v2982 = vunpack.c.l.b16 %v2635
      %v2983 = vunpack.c.l.b16 %v2636
      %v2984 = vunpack.c.l.b16 %v2637
      %v2985 = vpack.c.b16 %v2970, %v2969
      %v2986 = vpack.c.b16 %v2972, %v2971
      %v2987 = vpack.c.b16 %v2974, %v2973
      %v2988 = vpack.c.b16 %v2976, %v2975
      %v2989 = vpack.c.b16 %v2978, %v2977
      %v2990 = vpack.c.b16 %v2980, %v2979
      %v2991 = vpack.c.b16 %v2982, %v2981
      %v2992 = vpack.c.b16 %v2984, %v2983
      %3001 = vmatprep.subr.bf16.mxu0 0
      %3002 = vmatpush1.bf16.msra.mxu0 %v2985
      %3003 = vmatprep.subr.bf16.mxu0 0
      %3004 = vmatpush1.bf16.msra.mxu0 %v2986
      %3005 = vmatprep.subr.bf16.mxu0 0
      %3006 = vmatpush1.bf16.msra.mxu0 %v2987
      %3007 = vmatprep.subr.bf16.mxu0 0
      %3008 = vmatpush1.bf16.msra.mxu0 %v2988
      %3009 = vmatprep.subr.bf16.mxu0 0
      %3010 = vmatpush1.bf16.msra.mxu0 %v2989
      %3011 = vmatprep.subr.bf16.mxu0 0
      %3012 = vmatpush1.bf16.msra.mxu0 %v2990
      %3013 = vmatprep.subr.bf16.mxu0 0
      %3014 = vmatpush1.bf16.msra.mxu0 %v2991
      %3015 = vmatprep.subr.bf16.mxu0 0
      %3016 = vmatpush1.bf16.msra.mxu0 %v2992
      %3017 = vmatprep.subr.bf16.mxu0 0
      %3018 = vmatpush1.bf16.msra.mxu0 0
      %3019 = vmatprep.subr.bf16.mxu0 0
      %3020 = vmatpush1.bf16.msra.mxu0 0
      %3021 = vmatprep.subr.bf16.mxu0 0
      %3022 = vmatpush1.bf16.msra.mxu0 0
      %3023 = vmatprep.subr.bf16.mxu0 0
      %3024 = vmatpush1.bf16.msra.mxu0 0
      %3025 = vmatprep.subr.bf16.mxu0 0
      %3026 = vmatpush1.bf16.msra.mxu0 0
      %3027 = vmatprep.subr.bf16.mxu0 0
      %3028 = vmatpush1.bf16.msra.mxu0 0
      %3029 = vmatprep.subr.bf16.mxu0 0
      %3030 = vmatpush1.bf16.msra.mxu0 0
      %3031 = vmatprep.subr.bf16.mxu0 0
      %3032 = vmatpush1.bf16.msra.mxu0 0
      %3033 = vmatprep.mubr.bf16.mxu0 0
      %3034 = vmatmul.mubr.bf16.gmra.mrb[0].mxu0 %v2851
      %v3035 = vpop.f32.mrb[0].mxu0
      %v3036 = vadd.f32 %v2749, %v3035
      %v3037 = vpop.f32.mrb[0].mxu0
      %v3038 = vpop.f32.mrb[0].mxu0
      %v3039 = vadd.f32 %v2752, %v3038
      %v3040 = vpop.f32.mrb[0].mxu0
      %3041 = vmatprep.mubr.bf16.mxu0 0
      %3042 = vmatmul.mubr.bf16.gmra.mrb[0].mxu0 %v2860
      %v3043 = vpop.f32.mrb[0].mxu0
      %v3044 = vadd.f32 %v2757, %v3043
      %v3045 = vpop.f32.mrb[0].mxu0
      %v3046 = vpop.f32.mrb[0].mxu0
      %v3047 = vadd.f32 %v2760, %v3046
      %v3048 = vpop.f32.mrb[0].mxu0
      %3049 = vmatprep.mubr.bf16.mxu0 0
      %3050 = vmatmul.mubr.bf16.gmra.mrb[0].mxu0 %v2869
      %v3051 = vpop.f32.mrb[0].mxu0
      %v3052 = vadd.f32 %v2765, %v3051
      %v3053 = vpop.f32.mrb[0].mxu0
      %v3054 = vpop.f32.mrb[0].mxu0
      %v3055 = vadd.f32 %v2768, %v3054
      %v3056 = vpop.f32.mrb[0].mxu0
      %3057 = vmatprep.mubr.bf16.mxu0 0
      %3058 = vmatmul.mubr.bf16.gmra.mrb[0].mxu0 %v2878
      %v3059 = vpop.f32.mrb[0].mxu0
      %v3060 = vadd.f32 %v2773, %v3059
      %v3061 = vpop.f32.mrb[0].mxu0
      %v3062 = vpop.f32.mrb[0].mxu0
      %v3063 = vadd.f32 %v2776, %v3062
      %v3064 = vpop.f32.mrb[0].mxu0
      %3065 = vmatprep.mubr.bf16.mxu0 0
      %3066 = vmatmul.mubr.bf16.gmra.mrb[0].mxu0 %v2887
      %v3067 = vpop.f32.mrb[0].mxu0
      %v3068 = vadd.f32 %v2781, %v3067
      %v3069 = vpop.f32.mrb[0].mxu0
      %v3070 = vpop.f32.mrb[0].mxu0
      %v3071 = vadd.f32 %v2784, %v3070
      %v3072 = vpop.f32.mrb[0].mxu0
      %3073 = vmatprep.mubr.bf16.mxu0 0
      %3074 = vmatmul.mubr.bf16.gmra.mrb[0].mxu0 %v2896
      %v3075 = vpop.f32.mrb[0].mxu0
      %v3076 = vadd.f32 %v2789, %v3075
      %v3077 = vpop.f32.mrb[0].mxu0
      %v3078 = vpop.f32.mrb[0].mxu0
      %v3079 = vadd.f32 %v2792, %v3078
      %v3080 = vpop.f32.mrb[0].mxu0
      %3081 = vmatprep.mubr.bf16.mxu0 0
      %3082 = vmatmul.mubr.bf16.gmra.mrb[0].mxu0 %v2905
      %v3083 = vpop.f32.mrb[0].mxu0
      %v3084 = vadd.f32 %v2797, %v3083
      %v3085 = vpop.f32.mrb[0].mxu0
      %v3086 = vpop.f32.mrb[0].mxu0
      %v3087 = vadd.f32 %v2800, %v3086
      %v3088 = vpop.f32.mrb[0].mxu0
      %3089 = vmatprep.mubr.bf16.mxu0 0
      %3090 = vmatmul.mubr.bf16.gmra.mrb[0].mxu0 %v2914
      %v3091 = vpop.f32.mrb[0].mxu0
      %v3092 = vadd.f32 %v2805, %v3091
      %v3093 = vpop.f32.mrb[0].mxu0
      %v3094 = vpop.f32.mrb[0].mxu0
      %v3095 = vadd.f32 %v2808, %v3094
      %v3096 = vpop.f32.mrb[0].mxu0
      %3097 = vmatprep.mubr.bf16.mxu0 0
      %3098 = vmatmul.mubr.bf16.gmra.mrb[0].mxu0 %v2923
      %v3099 = vpop.f32.mrb[0].mxu0
      %v3100 = vadd.f32 %v2813, %v3099
      %v3101 = vpop.f32.mrb[0].mxu0
      %v3102 = vpop.f32.mrb[0].mxu0
      %v3103 = vadd.f32 %v2816, %v3102
      %v3104 = vpop.f32.mrb[0].mxu0
      %3105 = vmatprep.mubr.bf16.mxu0 0
      %3106 = vmatmul.mubr.bf16.gmra.mrb[0].mxu0 %v2932
      %v3107 = vpop.f32.mrb[0].mxu0
      %v3108 = vadd.f32 %v2821, %v3107
      %v3109 = vpop.f32.mrb[0].mxu0
      %v3110 = vpop.f32.mrb[0].mxu0
      %v3111 = vadd.f32 %v2824, %v3110
      %v3112 = vpop.f32.mrb[0].mxu0
      %3113 = vmatprep.mubr.bf16.mxu0 0
      %3114 = vmatmul.mubr.bf16.gmra.mrb[0].mxu0 %v2941
      %v3115 = vpop.f32.mrb[0].mxu0
      %v3116 = vadd.f32 %v2829, %v3115
      %v3117 = vpop.f32.mrb[0].mxu0
      %v3118 = vpop.f32.mrb[0].mxu0
      %v3119 = vadd.f32 %v2832, %v3118
      %v3120 = vpop.f32.mrb[0].mxu0
      %3121 = vdwg.mxu0
      %v3122 = vpack.c.bf16 %v2603, %v2603
      %s3123 = scalar_lea.vmem %s4, 128
      %v3124 = vld [vmem:[%s3123] sm:$0xf]
      %v3125 = vld [vmem:[%s3123 + $0x4] sm:$0xf]
      %v3126 = vld [vmem:[%s3123 + $0x8] sm:$0xf]
      %v3127 = vld [vmem:[%s3123 + $0xc] sm:$0xf]
      %v3128 = vld [vmem:[%s3123 + $0x10] sm:$0xf]
      %v3129 = vld [vmem:[%s3123 + $0x14] sm:$0xf]
      %v3130 = vld [vmem:[%s3123 + $0x18] sm:$0xf]
      %v3131 = vld [vmem:[%s3123 + $0x1c] sm:$0xf]
      %v3132 = vld [vmem:[%s3123 + $0x20] sm:$0xf]
      %v3133 = vld [vmem:[%s3123 + $0x24] sm:$0xf]
      %v3134 = vld [vmem:[%s3123 + $0x28] sm:$0xf]
      %v3135 = vld [vmem:[%s3123 + $0x2c] sm:$0xf]
      %v3136 = vld [vmem:[%s3123 + $0x30] sm:$0xf]
      %v3137 = vld [vmem:[%s3123 + $0x34] sm:$0xf]
      %v3138 = vld [vmem:[%s3123 + $0x38] sm:$0xf]
      %v3139 = vld [vmem:[%s3123 + $0x3c] sm:$0xf]
      %v3141 = vshrl.u32 %v2638, 16
      %v3143 = vshll.u32 %v2638, 16
      %v3145 = vrot.slane %v3143, 1
      %v3146 = vor.u32 %v3141, %v3145
      %v3148 = vshll.u32 %v2639, 16
      %v3150 = vrot.slane %v3148, 1
      %v3151 = vsel %vm856, %v3146, %v3150
      %v3152 = vshrl.u32 %v2639, 16
      %v3154 = vor.u32 %v3152, %v3150
      %v3156 = vshll.u32 %v2640, 16
      %v3158 = vrot.slane %v3156, 1
      %v3159 = vsel %vm856, %v3154, %v3158
      %v3160 = vshrl.u32 %v2640, 16
      %v3162 = vor.u32 %v3160, %v3158
      %v3164 = vshll.u32 %v2641, 16
      %v3166 = vrot.slane %v3164, 1
      %v3167 = vsel %vm856, %v3162, %v3166
      %v3168 = vshrl.u32 %v2641, 16
      %v3170 = vor.u32 %v3168, %v3166
      %v3172 = vshll.u32 %v2642, 16
      %v3174 = vrot.slane %v3172, 1
      %v3175 = vsel %vm856, %v3170, %v3174
      %v3176 = vshrl.u32 %v2642, 16
      %v3178 = vor.u32 %v3176, %v3174
      %v3180 = vshll.u32 %v2643, 16
      %v3182 = vrot.slane %v3180, 1
      %v3183 = vsel %vm856, %v3178, %v3182
      %v3184 = vshrl.u32 %v2643, 16
      %v3186 = vor.u32 %v3184, %v3182
      %v3188 = vshll.u32 %v2644, 16
      %v3190 = vrot.slane %v3188, 1
      %v3191 = vsel %vm856, %v3186, %v3190
      %v3192 = vshrl.u32 %v2644, 16
      %v3194 = vor.u32 %v3192, %v3190
      %v3196 = vshll.u32 %v2645, 16
      %v3198 = vrot.slane %v3196, 1
      %v3199 = vsel %vm856, %v3194, %v3198
      %v3200 = vshrl.u32 %v2645, 16
      %v3202 = vor.u32 %v3200, %v3198
      %v3204 = vshll.u32 %v2646, 16
      %v3206 = vrot.slane %v3204, 1
      %v3207 = vsel %vm856, %v3202, %v3206
      %v3208 = vshrl.u32 %v2646, 16
      %v3210 = vor.u32 %v3208, %v3206
      %v3212 = vshll.u32 %v2647, 16
      %v3214 = vrot.slane %v3212, 1
      %v3215 = vsel %vm856, %v3210, %v3214
      %v3216 = vshrl.u32 %v2647, 16
      %v3218 = vor.u32 %v3216, %v3214
      %v3220 = vshll.u32 %v2648, 16
      %v3222 = vrot.slane %v3220, 1
      %v3223 = vsel %vm856, %v3218, %v3222
      %v3224 = vshrl.u32 %v2648, 16
      %v3226 = vor.u32 %v3224, %v3222
      %v3228 = vshll.u32 %v3122, 16
      %v3230 = vrot.slane %v3228, 1
      %v3231 = vsel %vm856, %v3226, %v3230
      %v3259 = vunpack.c.l.b16 %v3124
      %v3260 = vunpack.c.l.b16 %v3125
      %v3261 = vunpack.c.l.b16 %v3126
      %v3262 = vunpack.c.l.b16 %v3127
      %v3263 = vunpack.c.l.b16 %v3128
      %v3264 = vunpack.c.l.b16 %v3129
      %v3265 = vunpack.c.l.b16 %v3130
      %v3266 = vunpack.c.l.b16 %v3131
      %v3267 = vunpack.c.l.b16 %v3132
      %v3268 = vunpack.c.l.b16 %v3133
      %v3269 = vunpack.c.l.b16 %v3134
      %v3270 = vunpack.c.l.b16 %v3135
      %v3271 = vunpack.c.l.b16 %v3136
      %v3272 = vunpack.c.l.b16 %v3137
      %v3273 = vunpack.c.l.b16 %v3138
      %v3274 = vunpack.c.l.b16 %v3139
      %v3275 = vpack.c.b16 %v3260, %v3259
      %v3276 = vpack.c.b16 %v3262, %v3261
      %v3277 = vpack.c.b16 %v3264, %v3263
      %v3278 = vpack.c.b16 %v3266, %v3265
      %v3279 = vpack.c.b16 %v3268, %v3267
      %v3280 = vpack.c.b16 %v3270, %v3269
      %v3281 = vpack.c.b16 %v3272, %v3271
      %v3282 = vpack.c.b16 %v3274, %v3273
      %3291 = vmatprep.subr.bf16.mxu0 0
      %3292 = vmatpush1.bf16.msra.mxu0 %v3275
      %3293 = vmatprep.subr.bf16.mxu0 0
      %3294 = vmatpush1.bf16.msra.mxu0 %v3276
      %3295 = vmatprep.subr.bf16.mxu0 0
      %3296 = vmatpush1.bf16.msra.mxu0 %v3277
      %3297 = vmatprep.subr.bf16.mxu0 0
      %3298 = vmatpush1.bf16.msra.mxu0 %v3278
      %3299 = vmatprep.subr.bf16.mxu0 0
      %3300 = vmatpush1.bf16.msra.mxu0 %v3279
      %3301 = vmatprep.subr.bf16.mxu0 0
      %3302 = vmatpush1.bf16.msra.mxu0 %v3280
      %3303 = vmatprep.subr.bf16.mxu0 0
      %3304 = vmatpush1.bf16.msra.mxu0 %v3281
      %3305 = vmatprep.subr.bf16.mxu0 0
      %3306 = vmatpush1.bf16.msra.mxu0 %v3282
      %3307 = vmatprep.subr.bf16.mxu0 0
      %3308 = vmatpush1.bf16.msra.mxu0 0
      %3309 = vmatprep.subr.bf16.mxu0 0
      %3310 = vmatpush1.bf16.msra.mxu0 0
      %3311 = vmatprep.subr.bf16.mxu0 0
      %3312 = vmatpush1.bf16.msra.mxu0 0
      %3313 = vmatprep.subr.bf16.mxu0 0
      %3314 = vmatpush1.bf16.msra.mxu0 0
      %3315 = vmatprep.subr.bf16.mxu0 0
      %3316 = vmatpush1.bf16.msra.mxu0 0
      %3317 = vmatprep.subr.bf16.mxu0 0
      %3318 = vmatpush1.bf16.msra.mxu0 0
      %3319 = vmatprep.subr.bf16.mxu0 0
      %3320 = vmatpush1.bf16.msra.mxu0 0
      %3321 = vmatprep.subr.bf16.mxu0 0
      %3322 = vmatpush1.bf16.msra.mxu0 0
      %3323 = vmatprep.mubr.bf16.mxu0 0
      %3324 = vmatmul.mubr.bf16.gmra.mrb[0].mxu0 %v3151
      %v3325 = vpop.f32.mrb[0].mxu0
      %v3326 = vadd.f32 0.0, %v3325
      %v3327 = vpop.f32.mrb[0].mxu0
      %v3328 = vpop.f32.mrb[0].mxu0
      %v3329 = vadd.f32 0.0, %v3328
      %v3330 = vpop.f32.mrb[0].mxu0
      %3331 = vmatprep.mubr.bf16.mxu0 0
      %3332 = vmatmul.mubr.bf16.gmra.mrb[0].mxu0 %v3159
      %v3333 = vpop.f32.mrb[0].mxu0
      %v3334 = vadd.f32 0.0, %v3333
      %v3335 = vpop.f32.mrb[0].mxu0
      %v3336 = vpop.f32.mrb[0].mxu0
      %v3337 = vadd.f32 0.0, %v3336
      %v3338 = vpop.f32.mrb[0].mxu0
      %3339 = vmatprep.mubr.bf16.mxu0 0
      %3340 = vmatmul.mubr.bf16.gmra.mrb[0].mxu0 %v3167
      %v3341 = vpop.f32.mrb[0].mxu0
      %v3342 = vadd.f32 0.0, %v3341
      %v3343 = vpop.f32.mrb[0].mxu0
      %v3344 = vpop.f32.mrb[0].mxu0
      %v3345 = vadd.f32 0.0, %v3344
      %v3346 = vpop.f32.mrb[0].mxu0
      %3347 = vmatprep.mubr.bf16.mxu0 0
      %3348 = vmatmul.mubr.bf16.gmra.mrb[0].mxu0 %v3175
      %v3349 = vpop.f32.mrb[0].mxu0
      %v3350 = vadd.f32 0.0, %v3349
      %v3351 = vpop.f32.mrb[0].mxu0
      %v3352 = vpop.f32.mrb[0].mxu0
      %v3353 = vadd.f32 0.0, %v3352
      %v3354 = vpop.f32.mrb[0].mxu0
      %3355 = vmatprep.mubr.bf16.mxu0 0
      %3356 = vmatmul.mubr.bf16.gmra.mrb[0].mxu0 %v3183
      %v3357 = vpop.f32.mrb[0].mxu0
      %v3358 = vadd.f32 0.0, %v3357
      %v3359 = vpop.f32.mrb[0].mxu0
      %v3360 = vpop.f32.mrb[0].mxu0
      %v3361 = vadd.f32 0.0, %v3360
      %v3362 = vpop.f32.mrb[0].mxu0
      %3363 = vmatprep.mubr.bf16.mxu0 0
      %3364 = vmatmul.mubr.bf16.gmra.mrb[0].mxu0 %v3191
      %v3365 = vpop.f32.mrb[0].mxu0
      %v3366 = vadd.f32 0.0, %v3365
      %v3367 = vpop.f32.mrb[0].mxu0
      %v3368 = vpop.f32.mrb[0].mxu0
      %v3369 = vadd.f32 0.0, %v3368
      %v3370 = vpop.f32.mrb[0].mxu0
      %3371 = vmatprep.mubr.bf16.mxu0 0
      %3372 = vmatmul.mubr.bf16.gmra.mrb[0].mxu0 %v3199
      %v3373 = vpop.f32.mrb[0].mxu0
      %v3374 = vadd.f32 0.0, %v3373
      %v3375 = vpop.f32.mrb[0].mxu0
      %v3376 = vpop.f32.mrb[0].mxu0
      %v3377 = vadd.f32 0.0, %v3376
      %v3378 = vpop.f32.mrb[0].mxu0
      %3379 = vmatprep.mubr.bf16.mxu0 0
      %3380 = vmatmul.mubr.bf16.gmra.mrb[0].mxu0 %v3207
      %v3381 = vpop.f32.mrb[0].mxu0
      %v3382 = vadd.f32 0.0, %v3381
      %v3383 = vpop.f32.mrb[0].mxu0
      %v3384 = vpop.f32.mrb[0].mxu0
      %v3385 = vadd.f32 0.0, %v3384
      %v3386 = vpop.f32.mrb[0].mxu0
      %3387 = vmatprep.mubr.bf16.mxu0 0
      %3388 = vmatmul.mubr.bf16.gmra.mrb[0].mxu0 %v3215
      %v3389 = vpop.f32.mrb[0].mxu0
      %v3390 = vadd.f32 0.0, %v3389
      %v3391 = vpop.f32.mrb[0].mxu0
      %v3392 = vpop.f32.mrb[0].mxu0
      %v3393 = vadd.f32 0.0, %v3392
      %v3394 = vpop.f32.mrb[0].mxu0
      %3395 = vmatprep.mubr.bf16.mxu0 0
      %3396 = vmatmul.mubr.bf16.gmra.mrb[0].mxu0 %v3223
      %v3397 = vpop.f32.mrb[0].mxu0
      %v3398 = vadd.f32 0.0, %v3397
      %v3399 = vpop.f32.mrb[0].mxu0
      %v3400 = vpop.f32.mrb[0].mxu0
      %v3401 = vadd.f32 0.0, %v3400
      %v3402 = vpop.f32.mrb[0].mxu0
      %3403 = vmatprep.mubr.bf16.mxu0 0
      %3404 = vmatmul.mubr.bf16.gmra.mrb[0].mxu0 %v3231
      %v3405 = vpop.f32.mrb[0].mxu0
      %v3406 = vadd.f32 0.0, %v3405
      %v3407 = vpop.f32.mrb[0].mxu0
      %v3408 = vpop.f32.mrb[0].mxu0
      %v3409 = vadd.f32 0.0, %v3408
      %v3410 = vpop.f32.mrb[0].mxu0
      %3411 = vdwg.mxu0
      %v3412 = vadd.f32 %v3036, %v3326
      %v3413 = vadd.f32 %v3039, %v3329
      %v3414 = vadd.f32 %v3044, %v3334
      %v3415 = vadd.f32 %v3047, %v3337
      %v3416 = vadd.f32 %v3052, %v3342
      %v3417 = vadd.f32 %v3055, %v3345
      %v3418 = vadd.f32 %v3060, %v3350
      %v3419 = vadd.f32 %v3063, %v3353
      %v3420 = vadd.f32 %v3068, %v3358
      %v3421 = vadd.f32 %v3071, %v3361
      %v3422 = vadd.f32 %v3076, %v3366
      %v3423 = vadd.f32 %v3079, %v3369
      %v3424 = vadd.f32 %v3084, %v3374
      %v3425 = vadd.f32 %v3087, %v3377
      %v3426 = vadd.f32 %v3092, %v3382
      %v3427 = vadd.f32 %v3095, %v3385
      %v3428 = vadd.f32 %v3100, %v3390
      %v3429 = vadd.f32 %v3103, %v3393
      %v3430 = vadd.f32 %v3108, %v3398
      %v3431 = vadd.f32 %v3111, %v3401
      %v3432 = vadd.f32 %v3116, %v3406
      %v3433 = vadd.f32 %v3119, %v3409
      %s3434 = scalar_lea.vmem %s4, 192
      %v3435 = vld [vmem:[%s3434] sm:$0xf]
      %v3436 = vld [vmem:[%s3434 + $0x4] sm:$0xf]
      %v3437 = vld [vmem:[%s3434 + $0x8] sm:$0xf]
      %v3438 = vld [vmem:[%s3434 + $0xc] sm:$0xf]
      %v3439 = vld [vmem:[%s3434 + $0x10] sm:$0xf]
      %v3440 = vld [vmem:[%s3434 + $0x14] sm:$0xf]
      %v3441 = vld [vmem:[%s3434 + $0x18] sm:$0xf]
      %v3442 = vld [vmem:[%s3434 + $0x1c] sm:$0xf]
      %v3443 = vld [vmem:[%s3434 + $0x20] sm:$0xf]
      %v3444 = vld [vmem:[%s3434 + $0x24] sm:$0xf]
      %v3445 = vld [vmem:[%s3434 + $0x28] sm:$0xf]
      %v3446 = vld [vmem:[%s3434 + $0x2c] sm:$0xf]
      %v3447 = vld [vmem:[%s3434 + $0x30] sm:$0xf]
      %v3448 = vld [vmem:[%s3434 + $0x34] sm:$0xf]
      %v3449 = vld [vmem:[%s3434 + $0x38] sm:$0xf]
      %v3450 = vld [vmem:[%s3434 + $0x3c] sm:$0xf]
      %vm3463 = vcmask 1046528
      %v3464 = vrot.slane %v2638, 1
      %v3465 = vrot.slane %v2639, 1
      %v3466 = vsel %vm3463, %v3464, %v3465
      %v3467 = vrot.slane %v2640, 1
      %v3468 = vsel %vm3463, %v3465, %v3467
      %v3469 = vrot.slane %v2641, 1
      %v3470 = vsel %vm3463, %v3467, %v3469
      %v3471 = vrot.slane %v2642, 1
      %v3472 = vsel %vm3463, %v3469, %v3471
      %v3473 = vrot.slane %v2643, 1
      %v3474 = vsel %vm3463, %v3471, %v3473
      %v3475 = vrot.slane %v2644, 1
      %v3476 = vsel %vm3463, %v3473, %v3475
      %v3477 = vrot.slane %v2645, 1
      %v3478 = vsel %vm3463, %v3475, %v3477
      %v3479 = vrot.slane %v2646, 1
      %v3480 = vsel %vm3463, %v3477, %v3479
      %v3481 = vrot.slane %v2647, 1
      %v3482 = vsel %vm3463, %v3479, %v3481
      %v3483 = vrot.slane %v2648, 1
      %v3484 = vsel %vm3463, %v3481, %v3483
      %v3485 = vrot.slane %v3122, 1
      %v3486 = vsel %vm3463, %v3483, %v3485
      %v3514 = vunpack.c.l.b16 %v3435
      %v3515 = vunpack.c.l.b16 %v3436
      %v3516 = vunpack.c.l.b16 %v3437
      %v3517 = vunpack.c.l.b16 %v3438
      %v3518 = vunpack.c.l.b16 %v3439
      %v3519 = vunpack.c.l.b16 %v3440
      %v3520 = vunpack.c.l.b16 %v3441
      %v3521 = vunpack.c.l.b16 %v3442
      %v3522 = vunpack.c.l.b16 %v3443
      %v3523 = vunpack.c.l.b16 %v3444
      %v3524 = vunpack.c.l.b16 %v3445
      %v3525 = vunpack.c.l.b16 %v3446
      %v3526 = vunpack.c.l.b16 %v3447
      %v3527 = vunpack.c.l.b16 %v3448
      %v3528 = vunpack.c.l.b16 %v3449
      %v3529 = vunpack.c.l.b16 %v3450
      %v3530 = vpack.c.b16 %v3515, %v3514
      %v3531 = vpack.c.b16 %v3517, %v3516
      %v3532 = vpack.c.b16 %v3519, %v3518
      %v3533 = vpack.c.b16 %v3521, %v3520
      %v3534 = vpack.c.b16 %v3523, %v3522
      %v3535 = vpack.c.b16 %v3525, %v3524
      %v3536 = vpack.c.b16 %v3527, %v3526
      %v3537 = vpack.c.b16 %v3529, %v3528
      %3546 = vmatprep.subr.bf16.mxu0 0
      %3547 = vmatpush1.bf16.msra.mxu0 %v3530
      %3548 = vmatprep.subr.bf16.mxu0 0
      %3549 = vmatpush1.bf16.msra.mxu0 %v3531
      %3550 = vmatprep.subr.bf16.mxu0 0
      %3551 = vmatpush1.bf16.msra.mxu0 %v3532
      %3552 = vmatprep.subr.bf16.mxu0 0
      %3553 = vmatpush1.bf16.msra.mxu0 %v3533
      %3554 = vmatprep.subr.bf16.mxu0 0
      %3555 = vmatpush1.bf16.msra.mxu0 %v3534
      %3556 = vmatprep.subr.bf16.mxu0 0
      %3557 = vmatpush1.bf16.msra.mxu0 %v3535
      %3558 = vmatprep.subr.bf16.mxu0 0
      %3559 = vmatpush1.bf16.msra.mxu0 %v3536
      %3560 = vmatprep.subr.bf16.mxu0 0
      %3561 = vmatpush1.bf16.msra.mxu0 %v3537
      %3562 = vmatprep.subr.bf16.mxu0 0
      %3563 = vmatpush1.bf16.msra.mxu0 0
      %3564 = vmatprep.subr.bf16.mxu0 0
      %3565 = vmatpush1.bf16.msra.mxu0 0
      %3566 = vmatprep.subr.bf16.mxu0 0
      %3567 = vmatpush1.bf16.msra.mxu0 0
      %3568 = vmatprep.subr.bf16.mxu0 0
      %3569 = vmatpush1.bf16.msra.mxu0 0
      %3570 = vmatprep.subr.bf16.mxu0 0
      %3571 = vmatpush1.bf16.msra.mxu0 0
      %3572 = vmatprep.subr.bf16.mxu0 0
      %3573 = vmatpush1.bf16.msra.mxu0 0
      %3574 = vmatprep.subr.bf16.mxu0 0
      %3575 = vmatpush1.bf16.msra.mxu0 0
      %3576 = vmatprep.subr.bf16.mxu0 0
      %3577 = vmatpush1.bf16.msra.mxu0 0
      %3578 = vmatprep.mubr.bf16.mxu0 0
      %3579 = vmatmul.mubr.bf16.gmra.mrb[0].mxu0 %v3466
      %v3580 = vpop.f32.mrb[0].mxu0
      %v3581 = vadd.f32 0.0, %v3580
      %v3582 = vpop.f32.mrb[0].mxu0
      %v3583 = vpop.f32.mrb[0].mxu0
      %v3584 = vadd.f32 0.0, %v3583
      %v3585 = vpop.f32.mrb[0].mxu0
      %3586 = vmatprep.mubr.bf16.mxu0 0
      %3587 = vmatmul.mubr.bf16.gmra.mrb[0].mxu0 %v3468
      %v3588 = vpop.f32.mrb[0].mxu0
      %v3589 = vadd.f32 0.0, %v3588
      %v3590 = vpop.f32.mrb[0].mxu0
      %v3591 = vpop.f32.mrb[0].mxu0
      %v3592 = vadd.f32 0.0, %v3591
      %v3593 = vpop.f32.mrb[0].mxu0
      %3594 = vmatprep.mubr.bf16.mxu0 0
      %3595 = vmatmul.mubr.bf16.gmra.mrb[0].mxu0 %v3470
      %v3596 = vpop.f32.mrb[0].mxu0
      %v3597 = vadd.f32 0.0, %v3596
      %v3598 = vpop.f32.mrb[0].mxu0
      %v3599 = vpop.f32.mrb[0].mxu0
      %v3600 = vadd.f32 0.0, %v3599
      %v3601 = vpop.f32.mrb[0].mxu0
      %3602 = vmatprep.mubr.bf16.mxu0 0
      %3603 = vmatmul.mubr.bf16.gmra.mrb[0].mxu0 %v3472
      %v3604 = vpop.f32.mrb[0].mxu0
      %v3605 = vadd.f32 0.0, %v3604
      %v3606 = vpop.f32.mrb[0].mxu0
      %v3607 = vpop.f32.mrb[0].mxu0
      %v3608 = vadd.f32 0.0, %v3607
      %v3609 = vpop.f32.mrb[0].mxu0
      %3610 = vmatprep.mubr.bf16.mxu0 0
      %3611 = vmatmul.mubr.bf16.gmra.mrb[0].mxu0 %v3474
      %v3612 = vpop.f32.mrb[0].mxu0
      %v3613 = vadd.f32 0.0, %v3612
      %v3614 = vpop.f32.mrb[0].mxu0
      %v3615 = vpop.f32.mrb[0].mxu0
      %v3616 = vadd.f32 0.0, %v3615
      %v3617 = vpop.f32.mrb[0].mxu0
      %3618 = vmatprep.mubr.bf16.mxu0 0
      %3619 = vmatmul.mubr.bf16.gmra.mrb[0].mxu0 %v3476
      %v3620 = vpop.f32.mrb[0].mxu0
      %v3621 = vadd.f32 0.0, %v3620
      %v3622 = vpop.f32.mrb[0].mxu0
      %v3623 = vpop.f32.mrb[0].mxu0
      %v3624 = vadd.f32 0.0, %v3623
      %v3625 = vpop.f32.mrb[0].mxu0
      %3626 = vmatprep.mubr.bf16.mxu0 0
      %3627 = vmatmul.mubr.bf16.gmra.mrb[0].mxu0 %v3478
      %v3628 = vpop.f32.mrb[0].mxu0
      %v3629 = vadd.f32 0.0, %v3628
      %v3630 = vpop.f32.mrb[0].mxu0
      %v3631 = vpop.f32.mrb[0].mxu0
      %v3632 = vadd.f32 0.0, %v3631
      %v3633 = vpop.f32.mrb[0].mxu0
      %3634 = vmatprep.mubr.bf16.mxu0 0
      %3635 = vmatmul.mubr.bf16.gmra.mrb[0].mxu0 %v3480
      %v3636 = vpop.f32.mrb[0].mxu0
      %v3637 = vadd.f32 0.0, %v3636
      %v3638 = vpop.f32.mrb[0].mxu0
      %v3639 = vpop.f32.mrb[0].mxu0
      %v3640 = vadd.f32 0.0, %v3639
      %v3641 = vpop.f32.mrb[0].mxu0
      %3642 = vmatprep.mubr.bf16.mxu0 0
      %3643 = vmatmul.mubr.bf16.gmra.mrb[0].mxu0 %v3482
      %v3644 = vpop.f32.mrb[0].mxu0
      %v3645 = vadd.f32 0.0, %v3644
      %v3646 = vpop.f32.mrb[0].mxu0
      %v3647 = vpop.f32.mrb[0].mxu0
      %v3648 = vadd.f32 0.0, %v3647
      %v3649 = vpop.f32.mrb[0].mxu0
      %3650 = vmatprep.mubr.bf16.mxu0 0
      %3651 = vmatmul.mubr.bf16.gmra.mrb[0].mxu0 %v3484
      %v3652 = vpop.f32.mrb[0].mxu0
      %v3653 = vadd.f32 0.0, %v3652
      %v3654 = vpop.f32.mrb[0].mxu0
      %v3655 = vpop.f32.mrb[0].mxu0
      %v3656 = vadd.f32 0.0, %v3655
      %v3657 = vpop.f32.mrb[0].mxu0
      %3658 = vmatprep.mubr.bf16.mxu0 0
      %3659 = vmatmul.mubr.bf16.gmra.mrb[0].mxu0 %v3486
      %v3660 = vpop.f32.mrb[0].mxu0
      %v3661 = vadd.f32 0.0, %v3660
      %v3662 = vpop.f32.mrb[0].mxu0
      %v3663 = vpop.f32.mrb[0].mxu0
      %v3664 = vadd.f32 0.0, %v3663
      %v3665 = vpop.f32.mrb[0].mxu0
      %3666 = vdwg.mxu0
      %v3667 = vadd.f32 %v3412, %v3581
      %v3668 = vadd.f32 %v3413, %v3584
      %v3669 = vadd.f32 %v3414, %v3589
      %v3670 = vadd.f32 %v3415, %v3592
      %v3671 = vadd.f32 %v3416, %v3597
      %v3672 = vadd.f32 %v3417, %v3600
      %v3673 = vadd.f32 %v3418, %v3605
      %v3674 = vadd.f32 %v3419, %v3608
      %v3675 = vadd.f32 %v3420, %v3613
      %v3676 = vadd.f32 %v3421, %v3616
      %v3677 = vadd.f32 %v3422, %v3621
      %v3678 = vadd.f32 %v3423, %v3624
      %v3679 = vadd.f32 %v3424, %v3629
      %v3680 = vadd.f32 %v3425, %v3632
      %v3681 = vadd.f32 %v3426, %v3637
      %v3682 = vadd.f32 %v3427, %v3640
      %v3683 = vadd.f32 %v3428, %v3645
      %v3684 = vadd.f32 %v3429, %v3648
      %v3685 = vadd.f32 %v3430, %v3653
      %v3686 = vadd.f32 %v3431, %v3656
      %v3687 = vadd.f32 %v3432, %v3661
      %v3688 = vadd.f32 %v3433, %v3664
      %v3689 = vpack.c.bf16 %v2603, %v2602
      %v3690 = vpack.c.bf16 %v2604, %v2604
      %s3691 = scalar_lea.vmem %s4, 256
      %v3692 = vld [vmem:[%s3691] sm:$0xf]
      %v3693 = vld [vmem:[%s3691 + $0x4] sm:$0xf]
      %v3694 = vld [vmem:[%s3691 + $0x8] sm:$0xf]
      %v3695 = vld [vmem:[%s3691 + $0xc] sm:$0xf]
      %v3696 = vld [vmem:[%s3691 + $0x10] sm:$0xf]
      %v3697 = vld [vmem:[%s3691 + $0x14] sm:$0xf]
      %v3698 = vld [vmem:[%s3691 + $0x18] sm:$0xf]
      %v3699 = vld [vmem:[%s3691 + $0x1c] sm:$0xf]
      %v3700 = vld [vmem:[%s3691 + $0x20] sm:$0xf]
      %v3701 = vld [vmem:[%s3691 + $0x24] sm:$0xf]
      %v3702 = vld [vmem:[%s3691 + $0x28] sm:$0xf]
      %v3703 = vld [vmem:[%s3691 + $0x2c] sm:$0xf]
      %v3704 = vld [vmem:[%s3691 + $0x30] sm:$0xf]
      %v3705 = vld [vmem:[%s3691 + $0x34] sm:$0xf]
      %v3706 = vld [vmem:[%s3691 + $0x38] sm:$0xf]
      %v3707 = vld [vmem:[%s3691 + $0x3c] sm:$0xf]
      %v3709 = vshrl.u32 %v3689, 16
      %v3711 = vrot.slane %v3709, 3
      %v3712 = vshll.u32 %v3689, 16
      %v3714 = vrot.slane %v3712, 4
      %v3715 = vor.u32 %v3711, %v3714
      %v3716 = vsel %vm550, %v2931, %v3715
      %v3718 = vshrl.u32 %v3690, 16
      %v3720 = vrot.slane %v3718, 3
      %v3721 = vshll.u32 %v3690, 16
      %v3723 = vrot.slane %v3721, 4
      %v3724 = vor.u32 %v3720, %v3723
      %v3725 = vsel %vm550, %v3715, %v3724
      %v3744 = vunpack.c.l.b16 %v3692
      %v3745 = vunpack.c.l.b16 %v3693
      %v3746 = vunpack.c.l.b16 %v3694
      %v3747 = vunpack.c.l.b16 %v3695
      %v3748 = vunpack.c.l.b16 %v3696
      %v3749 = vunpack.c.l.b16 %v3697
      %v3750 = vunpack.c.l.b16 %v3698
      %v3751 = vunpack.c.l.b16 %v3699
      %v3752 = vunpack.c.l.b16 %v3700
      %v3753 = vunpack.c.l.b16 %v3701
      %v3754 = vunpack.c.l.b16 %v3702
      %v3755 = vunpack.c.l.b16 %v3703
      %v3756 = vunpack.c.l.b16 %v3704
      %v3757 = vunpack.c.l.b16 %v3705
      %v3758 = vunpack.c.l.b16 %v3706
      %v3759 = vunpack.c.l.b16 %v3707
      %v3760 = vpack.c.b16 %v3745, %v3744
      %v3761 = vpack.c.b16 %v3747, %v3746
      %v3762 = vpack.c.b16 %v3749, %v3748
      %v3763 = vpack.c.b16 %v3751, %v3750
      %v3764 = vpack.c.b16 %v3753, %v3752
      %v3765 = vpack.c.b16 %v3755, %v3754
      %v3766 = vpack.c.b16 %v3757, %v3756
      %v3767 = vpack.c.b16 %v3759, %v3758
      %3776 = vmatprep.subr.bf16.mxu0 0
      %3777 = vmatpush1.bf16.msra.mxu0 %v3760
      %3778 = vmatprep.subr.bf16.mxu0 0
      %3779 = vmatpush1.bf16.msra.mxu0 %v3761
      %3780 = vmatprep.subr.bf16.mxu0 0
      %3781 = vmatpush1.bf16.msra.mxu0 %v3762
      %3782 = vmatprep.subr.bf16.mxu0 0
      %3783 = vmatpush1.bf16.msra.mxu0 %v3763
      %3784 = vmatprep.subr.bf16.mxu0 0
      %3785 = vmatpush1.bf16.msra.mxu0 %v3764
      %3786 = vmatprep.subr.bf16.mxu0 0
      %3787 = vmatpush1.bf16.msra.mxu0 %v3765
      %3788 = vmatprep.subr.bf16.mxu0 0
      %3789 = vmatpush1.bf16.msra.mxu0 %v3766
      %3790 = vmatprep.subr.bf16.mxu0 0
      %3791 = vmatpush1.bf16.msra.mxu0 %v3767
      %3792 = vmatprep.subr.bf16.mxu0 0
      %3793 = vmatpush1.bf16.msra.mxu0 0
      %3794 = vmatprep.subr.bf16.mxu0 0
      %3795 = vmatpush1.bf16.msra.mxu0 0
      %3796 = vmatprep.subr.bf16.mxu0 0
      %3797 = vmatpush1.bf16.msra.mxu0 0
      %3798 = vmatprep.subr.bf16.mxu0 0
      %3799 = vmatpush1.bf16.msra.mxu0 0
      %3800 = vmatprep.subr.bf16.mxu0 0
      %3801 = vmatpush1.bf16.msra.mxu0 0
      %3802 = vmatprep.subr.bf16.mxu0 0
      %3803 = vmatpush1.bf16.msra.mxu0 0
      %3804 = vmatprep.subr.bf16.mxu0 0
      %3805 = vmatpush1.bf16.msra.mxu0 0
      %3806 = vmatprep.subr.bf16.mxu0 0
      %3807 = vmatpush1.bf16.msra.mxu0 0
      %3808 = vmatprep.mubr.bf16.mxu0 0
      %3809 = vmatmul.mubr.bf16.gmra.mrb[0].mxu0 %v2860
      %v3810 = vpop.f32.mrb[0].mxu0
      %v3811 = vadd.f32 0.0, %v3810
      %v3812 = vpop.f32.mrb[0].mxu0
      %v3813 = vpop.f32.mrb[0].mxu0
      %v3814 = vadd.f32 0.0, %v3813
      %v3815 = vpop.f32.mrb[0].mxu0
      %3816 = vmatprep.mubr.bf16.mxu0 0
      %3817 = vmatmul.mubr.bf16.gmra.mrb[0].mxu0 %v2869
      %v3818 = vpop.f32.mrb[0].mxu0
      %v3819 = vadd.f32 0.0, %v3818
      %v3820 = vpop.f32.mrb[0].mxu0
      %v3821 = vpop.f32.mrb[0].mxu0
      %v3822 = vadd.f32 0.0, %v3821
      %v3823 = vpop.f32.mrb[0].mxu0
      %3824 = vmatprep.mubr.bf16.mxu0 0
      %3825 = vmatmul.mubr.bf16.gmra.mrb[0].mxu0 %v2878
      %v3826 = vpop.f32.mrb[0].mxu0
      %v3827 = vadd.f32 0.0, %v3826
      %v3828 = vpop.f32.mrb[0].mxu0
      %v3829 = vpop.f32.mrb[0].mxu0
      %v3830 = vadd.f32 0.0, %v3829
      %v3831 = vpop.f32.mrb[0].mxu0
      %3832 = vmatprep.mubr.bf16.mxu0 0
      %3833 = vmatmul.mubr.bf16.gmra.mrb[0].mxu0 %v2887
      %v3834 = vpop.f32.mrb[0].mxu0
      %v3835 = vadd.f32 0.0, %v3834
      %v3836 = vpop.f32.mrb[0].mxu0
      %v3837 = vpop.f32.mrb[0].mxu0
      %v3838 = vadd.f32 0.0, %v3837
      %v3839 = vpop.f32.mrb[0].mxu0
      %3840 = vmatprep.mubr.bf16.mxu0 0
      %3841 = vmatmul.mubr.bf16.gmra.mrb[0].mxu0 %v2896
      %v3842 = vpop.f32.mrb[0].mxu0
      %v3843 = vadd.f32 0.0, %v3842
      %v3844 = vpop.f32.mrb[0].mxu0
      %v3845 = vpop.f32.mrb[0].mxu0
      %v3846 = vadd.f32 0.0, %v3845
      %v3847 = vpop.f32.mrb[0].mxu0
      %3848 = vmatprep.mubr.bf16.mxu0 0
      %3849 = vmatmul.mubr.bf16.gmra.mrb[0].mxu0 %v2905
      %v3850 = vpop.f32.mrb[0].mxu0
      %v3851 = vadd.f32 0.0, %v3850
      %v3852 = vpop.f32.mrb[0].mxu0
      %v3853 = vpop.f32.mrb[0].mxu0
      %v3854 = vadd.f32 0.0, %v3853
      %v3855 = vpop.f32.mrb[0].mxu0
      %3856 = vmatprep.mubr.bf16.mxu0 0
      %3857 = vmatmul.mubr.bf16.gmra.mrb[0].mxu0 %v2914
      %v3858 = vpop.f32.mrb[0].mxu0
      %v3859 = vadd.f32 0.0, %v3858
      %v3860 = vpop.f32.mrb[0].mxu0
      %v3861 = vpop.f32.mrb[0].mxu0
      %v3862 = vadd.f32 0.0, %v3861
      %v3863 = vpop.f32.mrb[0].mxu0
      %3864 = vmatprep.mubr.bf16.mxu0 0
      %3865 = vmatmul.mubr.bf16.gmra.mrb[0].mxu0 %v2923
      %v3866 = vpop.f32.mrb[0].mxu0
      %v3867 = vadd.f32 0.0, %v3866
      %v3868 = vpop.f32.mrb[0].mxu0
      %v3869 = vpop.f32.mrb[0].mxu0
      %v3870 = vadd.f32 0.0, %v3869
      %v3871 = vpop.f32.mrb[0].mxu0
      %3872 = vmatprep.mubr.bf16.mxu0 0
      %3873 = vmatmul.mubr.bf16.gmra.mrb[0].mxu0 %v2932
      %v3874 = vpop.f32.mrb[0].mxu0
      %v3875 = vadd.f32 0.0, %v3874
      %v3876 = vpop.f32.mrb[0].mxu0
      %v3877 = vpop.f32.mrb[0].mxu0
      %v3878 = vadd.f32 0.0, %v3877
      %v3879 = vpop.f32.mrb[0].mxu0
      %3880 = vmatprep.mubr.bf16.mxu0 0
      %3881 = vmatmul.mubr.bf16.gmra.mrb[0].mxu0 %v3716
      %v3882 = vpop.f32.mrb[0].mxu0
      %v3883 = vadd.f32 0.0, %v3882
      %v3884 = vpop.f32.mrb[0].mxu0
      %v3885 = vpop.f32.mrb[0].mxu0
      %v3886 = vadd.f32 0.0, %v3885
      %v3887 = vpop.f32.mrb[0].mxu0
      %3888 = vmatprep.mubr.bf16.mxu0 0
      %3889 = vmatmul.mubr.bf16.gmra.mrb[0].mxu0 %v3725
      %v3890 = vpop.f32.mrb[0].mxu0
      %v3891 = vadd.f32 0.0, %v3890
      %v3892 = vpop.f32.mrb[0].mxu0
      %v3893 = vpop.f32.mrb[0].mxu0
      %v3894 = vadd.f32 0.0, %v3893
      %v3895 = vpop.f32.mrb[0].mxu0
      %3896 = vdwg.mxu0
      %v3897 = vadd.f32 %v3667, %v3811
      %v3898 = vadd.f32 %v3668, %v3814
      %v3899 = vadd.f32 %v3669, %v3819
      %v3900 = vadd.f32 %v3670, %v3822
      %v3901 = vadd.f32 %v3671, %v3827
      %v3902 = vadd.f32 %v3672, %v3830
      %v3903 = vadd.f32 %v3673, %v3835
      %v3904 = vadd.f32 %v3674, %v3838
      %v3905 = vadd.f32 %v3675, %v3843
      %v3906 = vadd.f32 %v3676, %v3846
      %v3907 = vadd.f32 %v3677, %v3851
      %v3908 = vadd.f32 %v3678, %v3854
      %v3909 = vadd.f32 %v3679, %v3859
      %v3910 = vadd.f32 %v3680, %v3862
      %v3911 = vadd.f32 %v3681, %v3867
      %v3912 = vadd.f32 %v3682, %v3870
      %v3913 = vadd.f32 %v3683, %v3875
      %v3914 = vadd.f32 %v3684, %v3878
      %v3915 = vadd.f32 %v3685, %v3883
      %v3916 = vadd.f32 %v3686, %v3886
      %v3917 = vadd.f32 %v3687, %v3891
      %v3918 = vadd.f32 %v3688, %v3894
      %v3919 = vpack.c.bf16 %v2604, %v2603
      %s3920 = scalar_lea.vmem %s4, 320
      %v3921 = vld [vmem:[%s3920] sm:$0xf]
      %v3922 = vld [vmem:[%s3920 + $0x4] sm:$0xf]
      %v3923 = vld [vmem:[%s3920 + $0x8] sm:$0xf]
      %v3924 = vld [vmem:[%s3920 + $0xc] sm:$0xf]
      %v3925 = vld [vmem:[%s3920 + $0x10] sm:$0xf]
      %v3926 = vld [vmem:[%s3920 + $0x14] sm:$0xf]
      %v3927 = vld [vmem:[%s3920 + $0x18] sm:$0xf]
      %v3928 = vld [vmem:[%s3920 + $0x1c] sm:$0xf]
      %v3929 = vld [vmem:[%s3920 + $0x20] sm:$0xf]
      %v3930 = vld [vmem:[%s3920 + $0x24] sm:$0xf]
      %v3931 = vld [vmem:[%s3920 + $0x28] sm:$0xf]
      %v3932 = vld [vmem:[%s3920 + $0x2c] sm:$0xf]
      %v3933 = vld [vmem:[%s3920 + $0x30] sm:$0xf]
      %v3934 = vld [vmem:[%s3920 + $0x34] sm:$0xf]
      %v3935 = vld [vmem:[%s3920 + $0x38] sm:$0xf]
      %v3936 = vld [vmem:[%s3920 + $0x3c] sm:$0xf]
      %v3953 = vunpack.c.l.b16 %v3921
      %v3954 = vunpack.c.l.b16 %v3922
      %v3955 = vunpack.c.l.b16 %v3923
      %v3956 = vunpack.c.l.b16 %v3924
      %v3957 = vunpack.c.l.b16 %v3925
      %v3958 = vunpack.c.l.b16 %v3926
      %v3959 = vunpack.c.l.b16 %v3927
      %v3960 = vunpack.c.l.b16 %v3928
      %v3961 = vunpack.c.l.b16 %v3929
      %v3962 = vunpack.c.l.b16 %v3930
      %v3963 = vunpack.c.l.b16 %v3931
      %v3964 = vunpack.c.l.b16 %v3932
      %v3965 = vunpack.c.l.b16 %v3933
      %v3966 = vunpack.c.l.b16 %v3934
      %v3967 = vunpack.c.l.b16 %v3935
      %v3968 = vunpack.c.l.b16 %v3936
      %v3969 = vpack.c.b16 %v3954, %v3953
      %v3970 = vpack.c.b16 %v3956, %v3955
      %v3971 = vpack.c.b16 %v3958, %v3957
      %v3972 = vpack.c.b16 %v3960, %v3959
      %v3973 = vpack.c.b16 %v3962, %v3961
      %v3974 = vpack.c.b16 %v3964, %v3963
      %v3975 = vpack.c.b16 %v3966, %v3965
      %v3976 = vpack.c.b16 %v3968, %v3967
      %3985 = vmatprep.subr.bf16.mxu0 0
      %3986 = vmatpush1.bf16.msra.mxu0 %v3969
      %3987 = vmatprep.subr.bf16.mxu0 0
      %3988 = vmatpush1.bf16.msra.mxu0 %v3970
      %3989 = vmatprep.subr.bf16.mxu0 0
      %3990 = vmatpush1.bf16.msra.mxu0 %v3971
      %3991 = vmatprep.subr.bf16.mxu0 0
      %3992 = vmatpush1.bf16.msra.mxu0 %v3972
      %3993 = vmatprep.subr.bf16.mxu0 0
      %3994 = vmatpush1.bf16.msra.mxu0 %v3973
      %3995 = vmatprep.subr.bf16.mxu0 0
      %3996 = vmatpush1.bf16.msra.mxu0 %v3974
      %3997 = vmatprep.subr.bf16.mxu0 0
      %3998 = vmatpush1.bf16.msra.mxu0 %v3975
      %3999 = vmatprep.subr.bf16.mxu0 0
      %4000 = vmatpush1.bf16.msra.mxu0 %v3976
      %4001 = vmatprep.subr.bf16.mxu0 0
      %4002 = vmatpush1.bf16.msra.mxu0 0
      %4003 = vmatprep.subr.bf16.mxu0 0
      %4004 = vmatpush1.bf16.msra.mxu0 0
      %4005 = vmatprep.subr.bf16.mxu0 0
      %4006 = vmatpush1.bf16.msra.mxu0 0
      %4007 = vmatprep.subr.bf16.mxu0 0
      %4008 = vmatpush1.bf16.msra.mxu0 0
      %4009 = vmatprep.subr.bf16.mxu0 0
      %4010 = vmatpush1.bf16.msra.mxu0 0
      %4011 = vmatprep.subr.bf16.mxu0 0
      %4012 = vmatpush1.bf16.msra.mxu0 0
      %4013 = vmatprep.subr.bf16.mxu0 0
      %4014 = vmatpush1.bf16.msra.mxu0 0
      %4015 = vmatprep.subr.bf16.mxu0 0
      %4016 = vmatpush1.bf16.msra.mxu0 0
      %4017 = vmatprep.mubr.bf16.mxu0 0
      %4018 = vmatmul.mubr.bf16.gmra.mrb[0].mxu0 %v2639
      %v4019 = vpop.f32.mrb[0].mxu0
      %v4020 = vadd.f32 0.0, %v4019
      %v4021 = vpop.f32.mrb[0].mxu0
      %v4022 = vpop.f32.mrb[0].mxu0
      %v4023 = vadd.f32 0.0, %v4022
      %v4024 = vpop.f32.mrb[0].mxu0
      %4025 = vmatprep.mubr.bf16.mxu0 0
      %4026 = vmatmul.mubr.bf16.gmra.mrb[0].mxu0 %v2640
      %v4027 = vpop.f32.mrb[0].mxu0
      %v4028 = vadd.f32 0.0, %v4027
      %v4029 = vpop.f32.mrb[0].mxu0
      %v4030 = vpop.f32.mrb[0].mxu0
      %v4031 = vadd.f32 0.0, %v4030
      %v4032 = vpop.f32.mrb[0].mxu0
      %4033 = vmatprep.mubr.bf16.mxu0 0
      %4034 = vmatmul.mubr.bf16.gmra.mrb[0].mxu0 %v2641
      %v4035 = vpop.f32.mrb[0].mxu0
      %v4036 = vadd.f32 0.0, %v4035
      %v4037 = vpop.f32.mrb[0].mxu0
      %v4038 = vpop.f32.mrb[0].mxu0
      %v4039 = vadd.f32 0.0, %v4038
      %v4040 = vpop.f32.mrb[0].mxu0
      %4041 = vmatprep.mubr.bf16.mxu0 0
      %4042 = vmatmul.mubr.bf16.gmra.mrb[0].mxu0 %v2642
      %v4043 = vpop.f32.mrb[0].mxu0
      %v4044 = vadd.f32 0.0, %v4043
      %v4045 = vpop.f32.mrb[0].mxu0
      %v4046 = vpop.f32.mrb[0].mxu0
      %v4047 = vadd.f32 0.0, %v4046
      %v4048 = vpop.f32.mrb[0].mxu0
      %4049 = vmatprep.mubr.bf16.mxu0 0
      %4050 = vmatmul.mubr.bf16.gmra.mrb[0].mxu0 %v2643
      %v4051 = vpop.f32.mrb[0].mxu0
      %v4052 = vadd.f32 0.0, %v4051
      %v4053 = vpop.f32.mrb[0].mxu0
      %v4054 = vpop.f32.mrb[0].mxu0
      %v4055 = vadd.f32 0.0, %v4054
      %v4056 = vpop.f32.mrb[0].mxu0
      %4057 = vmatprep.mubr.bf16.mxu0 0
      %4058 = vmatmul.mubr.bf16.gmra.mrb[0].mxu0 %v2644
      %v4059 = vpop.f32.mrb[0].mxu0
      %v4060 = vadd.f32 0.0, %v4059
      %v4061 = vpop.f32.mrb[0].mxu0
      %v4062 = vpop.f32.mrb[0].mxu0
      %v4063 = vadd.f32 0.0, %v4062
      %v4064 = vpop.f32.mrb[0].mxu0
      %4065 = vmatprep.mubr.bf16.mxu0 0
      %4066 = vmatmul.mubr.bf16.gmra.mrb[0].mxu0 %v2645
      %v4067 = vpop.f32.mrb[0].mxu0
      %v4068 = vadd.f32 0.0, %v4067
      %v4069 = vpop.f32.mrb[0].mxu0
      %v4070 = vpop.f32.mrb[0].mxu0
      %v4071 = vadd.f32 0.0, %v4070
      %v4072 = vpop.f32.mrb[0].mxu0
      %4073 = vmatprep.mubr.bf16.mxu0 0
      %4074 = vmatmul.mubr.bf16.gmra.mrb[0].mxu0 %v2646
      %v4075 = vpop.f32.mrb[0].mxu0
      %v4076 = vadd.f32 0.0, %v4075
      %v4077 = vpop.f32.mrb[0].mxu0
      %v4078 = vpop.f32.mrb[0].mxu0
      %v4079 = vadd.f32 0.0, %v4078
      %v4080 = vpop.f32.mrb[0].mxu0
      %4081 = vmatprep.mubr.bf16.mxu0 0
      %4082 = vmatmul.mubr.bf16.gmra.mrb[0].mxu0 %v2647
      %v4083 = vpop.f32.mrb[0].mxu0
      %v4084 = vadd.f32 0.0, %v4083
      %v4085 = vpop.f32.mrb[0].mxu0
      %v4086 = vpop.f32.mrb[0].mxu0
      %v4087 = vadd.f32 0.0, %v4086
      %v4088 = vpop.f32.mrb[0].mxu0
      %4089 = vmatprep.mubr.bf16.mxu0 0
      %4090 = vmatmul.mubr.bf16.gmra.mrb[0].mxu0 %v2648
      %v4091 = vpop.f32.mrb[0].mxu0
      %v4092 = vadd.f32 0.0, %v4091
      %v4093 = vpop.f32.mrb[0].mxu0
      %v4094 = vpop.f32.mrb[0].mxu0
      %v4095 = vadd.f32 0.0, %v4094
      %v4096 = vpop.f32.mrb[0].mxu0
      %4097 = vmatprep.mubr.bf16.mxu0 0
      %4098 = vmatmul.mubr.bf16.gmra.mrb[0].mxu0 %v3919
      %v4099 = vpop.f32.mrb[0].mxu0
      %v4100 = vadd.f32 0.0, %v4099
      %v4101 = vpop.f32.mrb[0].mxu0
      %v4102 = vpop.f32.mrb[0].mxu0
      %v4103 = vadd.f32 0.0, %v4102
      %v4104 = vpop.f32.mrb[0].mxu0
      %4105 = vdwg.mxu0
      %v4106 = vadd.f32 %v3897, %v4020
      %v4107 = vadd.f32 %v3898, %v4023
      %v4108 = vadd.f32 %v3899, %v4028
      %v4109 = vadd.f32 %v3900, %v4031
      %v4110 = vadd.f32 %v3901, %v4036
      %v4111 = vadd.f32 %v3902, %v4039
      %v4112 = vadd.f32 %v3903, %v4044
      %v4113 = vadd.f32 %v3904, %v4047
      %v4114 = vadd.f32 %v3905, %v4052
      %v4115 = vadd.f32 %v3906, %v4055
      %v4116 = vadd.f32 %v3907, %v4060
      %v4117 = vadd.f32 %v3908, %v4063
      %v4118 = vadd.f32 %v3909, %v4068
      %v4119 = vadd.f32 %v3910, %v4071
      %v4120 = vadd.f32 %v3911, %v4076
      %v4121 = vadd.f32 %v3912, %v4079
      %v4122 = vadd.f32 %v3913, %v4084
      %v4123 = vadd.f32 %v3914, %v4087
      %v4124 = vadd.f32 %v3915, %v4092
      %v4125 = vadd.f32 %v3916, %v4095
      %v4126 = vadd.f32 %v3917, %v4100
      %v4127 = vadd.f32 %v3918, %v4103
      %v4128 = vpack.c.bf16 %v2605, %v2605
      %s4129 = scalar_lea.vmem %s4, 384
      %v4130 = vld [vmem:[%s4129] sm:$0xf]
      %v4131 = vld [vmem:[%s4129 + $0x4] sm:$0xf]
      %v4132 = vld [vmem:[%s4129 + $0x8] sm:$0xf]
      %v4133 = vld [vmem:[%s4129 + $0xc] sm:$0xf]
      %v4134 = vld [vmem:[%s4129 + $0x10] sm:$0xf]
      %v4135 = vld [vmem:[%s4129 + $0x14] sm:$0xf]
      %v4136 = vld [vmem:[%s4129 + $0x18] sm:$0xf]
      %v4137 = vld [vmem:[%s4129 + $0x1c] sm:$0xf]
      %v4138 = vld [vmem:[%s4129 + $0x20] sm:$0xf]
      %v4139 = vld [vmem:[%s4129 + $0x24] sm:$0xf]
      %v4140 = vld [vmem:[%s4129 + $0x28] sm:$0xf]
      %v4141 = vld [vmem:[%s4129 + $0x2c] sm:$0xf]
      %v4142 = vld [vmem:[%s4129 + $0x30] sm:$0xf]
      %v4143 = vld [vmem:[%s4129 + $0x34] sm:$0xf]
      %v4144 = vld [vmem:[%s4129 + $0x38] sm:$0xf]
      %v4145 = vld [vmem:[%s4129 + $0x3c] sm:$0xf]
      %v4147 = vshll.u32 %v3919, 16
      %v4149 = vrot.slane %v4147, 1
      %v4150 = vsel %vm856, %v3226, %v4149
      %v4151 = vshrl.u32 %v3919, 16
      %v4153 = vor.u32 %v4151, %v4149
      %v4155 = vshll.u32 %v4128, 16
      %v4157 = vrot.slane %v4155, 1
      %v4158 = vsel %vm856, %v4153, %v4157
      %v4177 = vunpack.c.l.b16 %v4130
      %v4178 = vunpack.c.l.b16 %v4131
      %v4179 = vunpack.c.l.b16 %v4132
      %v4180 = vunpack.c.l.b16 %v4133
      %v4181 = vunpack.c.l.b16 %v4134
      %v4182 = vunpack.c.l.b16 %v4135
      %v4183 = vunpack.c.l.b16 %v4136
      %v4184 = vunpack.c.l.b16 %v4137
      %v4185 = vunpack.c.l.b16 %v4138
      %v4186 = vunpack.c.l.b16 %v4139
      %v4187 = vunpack.c.l.b16 %v4140
      %v4188 = vunpack.c.l.b16 %v4141
      %v4189 = vunpack.c.l.b16 %v4142
      %v4190 = vunpack.c.l.b16 %v4143
      %v4191 = vunpack.c.l.b16 %v4144
      %v4192 = vunpack.c.l.b16 %v4145
      %v4193 = vpack.c.b16 %v4178, %v4177
      %v4194 = vpack.c.b16 %v4180, %v4179
      %v4195 = vpack.c.b16 %v4182, %v4181
      %v4196 = vpack.c.b16 %v4184, %v4183
      %v4197 = vpack.c.b16 %v4186, %v4185
      %v4198 = vpack.c.b16 %v4188, %v4187
      %v4199 = vpack.c.b16 %v4190, %v4189
      %v4200 = vpack.c.b16 %v4192, %v4191
      %4209 = vmatprep.subr.bf16.mxu0 0
      %4210 = vmatpush1.bf16.msra.mxu0 %v4193
      %4211 = vmatprep.subr.bf16.mxu0 0
      %4212 = vmatpush1.bf16.msra.mxu0 %v4194
      %4213 = vmatprep.subr.bf16.mxu0 0
      %4214 = vmatpush1.bf16.msra.mxu0 %v4195
      %4215 = vmatprep.subr.bf16.mxu0 0
      %4216 = vmatpush1.bf16.msra.mxu0 %v4196
      %4217 = vmatprep.subr.bf16.mxu0 0
      %4218 = vmatpush1.bf16.msra.mxu0 %v4197
      %4219 = vmatprep.subr.bf16.mxu0 0
      %4220 = vmatpush1.bf16.msra.mxu0 %v4198
      %4221 = vmatprep.subr.bf16.mxu0 0
      %4222 = vmatpush1.bf16.msra.mxu0 %v4199
      %4223 = vmatprep.subr.bf16.mxu0 0
      %4224 = vmatpush1.bf16.msra.mxu0 %v4200
      %4225 = vmatprep.subr.bf16.mxu0 0
      %4226 = vmatpush1.bf16.msra.mxu0 0
      %4227 = vmatprep.subr.bf16.mxu0 0
      %4228 = vmatpush1.bf16.msra.mxu0 0
      %4229 = vmatprep.subr.bf16.mxu0 0
      %4230 = vmatpush1.bf16.msra.mxu0 0
      %4231 = vmatprep.subr.bf16.mxu0 0
      %4232 = vmatpush1.bf16.msra.mxu0 0
      %4233 = vmatprep.subr.bf16.mxu0 0
      %4234 = vmatpush1.bf16.msra.mxu0 0
      %4235 = vmatprep.subr.bf16.mxu0 0
      %4236 = vmatpush1.bf16.msra.mxu0 0
      %4237 = vmatprep.subr.bf16.mxu0 0
      %4238 = vmatpush1.bf16.msra.mxu0 0
      %4239 = vmatprep.subr.bf16.mxu0 0
      %4240 = vmatpush1.bf16.msra.mxu0 0
      %4241 = vmatprep.mubr.bf16.mxu0 0
      %4242 = vmatmul.mubr.bf16.gmra.mrb[0].mxu0 %v3159
      %v4243 = vpop.f32.mrb[0].mxu0
      %v4244 = vadd.f32 0.0, %v4243
      %v4245 = vpop.f32.mrb[0].mxu0
      %v4246 = vpop.f32.mrb[0].mxu0
      %v4247 = vadd.f32 0.0, %v4246
      %v4248 = vpop.f32.mrb[0].mxu0
      %4249 = vmatprep.mubr.bf16.mxu0 0
      %4250 = vmatmul.mubr.bf16.gmra.mrb[0].mxu0 %v3167
      %v4251 = vpop.f32.mrb[0].mxu0
      %v4252 = vadd.f32 0.0, %v4251
      %v4253 = vpop.f32.mrb[0].mxu0
      %v4254 = vpop.f32.mrb[0].mxu0
      %v4255 = vadd.f32 0.0, %v4254
      %v4256 = vpop.f32.mrb[0].mxu0
      %4257 = vmatprep.mubr.bf16.mxu0 0
      %4258 = vmatmul.mubr.bf16.gmra.mrb[0].mxu0 %v3175
      %v4259 = vpop.f32.mrb[0].mxu0
      %v4260 = vadd.f32 0.0, %v4259
      %v4261 = vpop.f32.mrb[0].mxu0
      %v4262 = vpop.f32.mrb[0].mxu0
      %v4263 = vadd.f32 0.0, %v4262
      %v4264 = vpop.f32.mrb[0].mxu0
      %4265 = vmatprep.mubr.bf16.mxu0 0
      %4266 = vmatmul.mubr.bf16.gmra.mrb[0].mxu0 %v3183
      %v4267 = vpop.f32.mrb[0].mxu0
      %v4268 = vadd.f32 0.0, %v4267
      %v4269 = vpop.f32.mrb[0].mxu0
      %v4270 = vpop.f32.mrb[0].mxu0
      %v4271 = vadd.f32 0.0, %v4270
      %v4272 = vpop.f32.mrb[0].mxu0
      %4273 = vmatprep.mubr.bf16.mxu0 0
      %4274 = vmatmul.mubr.bf16.gmra.mrb[0].mxu0 %v3191
      %v4275 = vpop.f32.mrb[0].mxu0
      %v4276 = vadd.f32 0.0, %v4275
      %v4277 = vpop.f32.mrb[0].mxu0
      %v4278 = vpop.f32.mrb[0].mxu0
      %v4279 = vadd.f32 0.0, %v4278
      %v4280 = vpop.f32.mrb[0].mxu0
      %4281 = vmatprep.mubr.bf16.mxu0 0
      %4282 = vmatmul.mubr.bf16.gmra.mrb[0].mxu0 %v3199
      %v4283 = vpop.f32.mrb[0].mxu0
      %v4284 = vadd.f32 0.0, %v4283
      %v4285 = vpop.f32.mrb[0].mxu0
      %v4286 = vpop.f32.mrb[0].mxu0
      %v4287 = vadd.f32 0.0, %v4286
      %v4288 = vpop.f32.mrb[0].mxu0
      %4289 = vmatprep.mubr.bf16.mxu0 0
      %4290 = vmatmul.mubr.bf16.gmra.mrb[0].mxu0 %v3207
      %v4291 = vpop.f32.mrb[0].mxu0
      %v4292 = vadd.f32 0.0, %v4291
      %v4293 = vpop.f32.mrb[0].mxu0
      %v4294 = vpop.f32.mrb[0].mxu0
      %v4295 = vadd.f32 0.0, %v4294
      %v4296 = vpop.f32.mrb[0].mxu0
      %4297 = vmatprep.mubr.bf16.mxu0 0
      %4298 = vmatmul.mubr.bf16.gmra.mrb[0].mxu0 %v3215
      %v4299 = vpop.f32.mrb[0].mxu0
      %v4300 = vadd.f32 0.0, %v4299
      %v4301 = vpop.f32.mrb[0].mxu0
      %v4302 = vpop.f32.mrb[0].mxu0
      %v4303 = vadd.f32 0.0, %v4302
      %v4304 = vpop.f32.mrb[0].mxu0
      %4305 = vmatprep.mubr.bf16.mxu0 0
      %4306 = vmatmul.mubr.bf16.gmra.mrb[0].mxu0 %v3223
      %v4307 = vpop.f32.mrb[0].mxu0
      %v4308 = vadd.f32 0.0, %v4307
      %v4309 = vpop.f32.mrb[0].mxu0
      %v4310 = vpop.f32.mrb[0].mxu0
      %v4311 = vadd.f32 0.0, %v4310
      %v4312 = vpop.f32.mrb[0].mxu0
      %4313 = vmatprep.mubr.bf16.mxu0 0
      %4314 = vmatmul.mubr.bf16.gmra.mrb[0].mxu0 %v4150
      %v4315 = vpop.f32.mrb[0].mxu0
      %v4316 = vadd.f32 0.0, %v4315
      %v4317 = vpop.f32.mrb[0].mxu0
      %v4318 = vpop.f32.mrb[0].mxu0
      %v4319 = vadd.f32 0.0, %v4318
      %v4320 = vpop.f32.mrb[0].mxu0
      %4321 = vmatprep.mubr.bf16.mxu0 0
      %4322 = vmatmul.mubr.bf16.gmra.mrb[0].mxu0 %v4158
      %v4323 = vpop.f32.mrb[0].mxu0
      %v4324 = vadd.f32 0.0, %v4323
      %v4325 = vpop.f32.mrb[0].mxu0
      %v4326 = vpop.f32.mrb[0].mxu0
      %v4327 = vadd.f32 0.0, %v4326
      %v4328 = vpop.f32.mrb[0].mxu0
      %4329 = vdwg.mxu0
      %v4330 = vadd.f32 %v4106, %v4244
      %v4331 = vadd.f32 %v4107, %v4247
      %v4332 = vadd.f32 %v4108, %v4252
      %v4333 = vadd.f32 %v4109, %v4255
      %v4334 = vadd.f32 %v4110, %v4260
      %v4335 = vadd.f32 %v4111, %v4263
      %v4336 = vadd.f32 %v4112, %v4268
      %v4337 = vadd.f32 %v4113, %v4271
      %v4338 = vadd.f32 %v4114, %v4276
      %v4339 = vadd.f32 %v4115, %v4279
      %v4340 = vadd.f32 %v4116, %v4284
      %v4341 = vadd.f32 %v4117, %v4287
      %v4342 = vadd.f32 %v4118, %v4292
      %v4343 = vadd.f32 %v4119, %v4295
      %v4344 = vadd.f32 %v4120, %v4300
      %v4345 = vadd.f32 %v4121, %v4303
      %v4346 = vadd.f32 %v4122, %v4308
      %v4347 = vadd.f32 %v4123, %v4311
      %v4348 = vadd.f32 %v4124, %v4316
      %v4349 = vadd.f32 %v4125, %v4319
      %v4350 = vadd.f32 %v4126, %v4324
      %v4351 = vadd.f32 %v4127, %v4327
      %s4352 = scalar_lea.vmem %s4, 448
      %v4353 = vld [vmem:[%s4352] sm:$0xf]
      %v4354 = vld [vmem:[%s4352 + $0x4] sm:$0xf]
      %v4355 = vld [vmem:[%s4352 + $0x8] sm:$0xf]
      %v4356 = vld [vmem:[%s4352 + $0xc] sm:$0xf]
      %v4357 = vld [vmem:[%s4352 + $0x10] sm:$0xf]
      %v4358 = vld [vmem:[%s4352 + $0x14] sm:$0xf]
      %v4359 = vld [vmem:[%s4352 + $0x18] sm:$0xf]
      %v4360 = vld [vmem:[%s4352 + $0x1c] sm:$0xf]
      %v4361 = vld [vmem:[%s4352 + $0x20] sm:$0xf]
      %v4362 = vld [vmem:[%s4352 + $0x24] sm:$0xf]
      %v4363 = vld [vmem:[%s4352 + $0x28] sm:$0xf]
      %v4364 = vld [vmem:[%s4352 + $0x2c] sm:$0xf]
      %v4365 = vld [vmem:[%s4352 + $0x30] sm:$0xf]
      %v4366 = vld [vmem:[%s4352 + $0x34] sm:$0xf]
      %v4367 = vld [vmem:[%s4352 + $0x38] sm:$0xf]
      %v4368 = vld [vmem:[%s4352 + $0x3c] sm:$0xf]
      %v4371 = vrot.slane %v3919, 1
      %v4372 = vsel %vm3463, %v3483, %v4371
      %v4373 = vrot.slane %v4128, 1
      %v4374 = vsel %vm3463, %v4371, %v4373
      %v4393 = vunpack.c.l.b16 %v4353
      %v4394 = vunpack.c.l.b16 %v4354
      %v4395 = vunpack.c.l.b16 %v4355
      %v4396 = vunpack.c.l.b16 %v4356
      %v4397 = vunpack.c.l.b16 %v4357
      %v4398 = vunpack.c.l.b16 %v4358
      %v4399 = vunpack.c.l.b16 %v4359
      %v4400 = vunpack.c.l.b16 %v4360
      %v4401 = vunpack.c.l.b16 %v4361
      %v4402 = vunpack.c.l.b16 %v4362
      %v4403 = vunpack.c.l.b16 %v4363
      %v4404 = vunpack.c.l.b16 %v4364
      %v4405 = vunpack.c.l.b16 %v4365
      %v4406 = vunpack.c.l.b16 %v4366
      %v4407 = vunpack.c.l.b16 %v4367
      %v4408 = vunpack.c.l.b16 %v4368
      %v4409 = vpack.c.b16 %v4394, %v4393
      %v4410 = vpack.c.b16 %v4396, %v4395
      %v4411 = vpack.c.b16 %v4398, %v4397
      %v4412 = vpack.c.b16 %v4400, %v4399
      %v4413 = vpack.c.b16 %v4402, %v4401
      %v4414 = vpack.c.b16 %v4404, %v4403
      %v4415 = vpack.c.b16 %v4406, %v4405
      %v4416 = vpack.c.b16 %v4408, %v4407
      %4425 = vmatprep.subr.bf16.mxu0 0
      %4426 = vmatpush1.bf16.msra.mxu0 %v4409
      %4427 = vmatprep.subr.bf16.mxu0 0
      %4428 = vmatpush1.bf16.msra.mxu0 %v4410
      %4429 = vmatprep.subr.bf16.mxu0 0
      %4430 = vmatpush1.bf16.msra.mxu0 %v4411
      %4431 = vmatprep.subr.bf16.mxu0 0
      %4432 = vmatpush1.bf16.msra.mxu0 %v4412
      %4433 = vmatprep.subr.bf16.mxu0 0
      %4434 = vmatpush1.bf16.msra.mxu0 %v4413
      %4435 = vmatprep.subr.bf16.mxu0 0
      %4436 = vmatpush1.bf16.msra.mxu0 %v4414
      %4437 = vmatprep.subr.bf16.mxu0 0
      %4438 = vmatpush1.bf16.msra.mxu0 %v4415
      %4439 = vmatprep.subr.bf16.mxu0 0
      %4440 = vmatpush1.bf16.msra.mxu0 %v4416
      %4441 = vmatprep.subr.bf16.mxu0 0
      %4442 = vmatpush1.bf16.msra.mxu0 0
      %4443 = vmatprep.subr.bf16.mxu0 0
      %4444 = vmatpush1.bf16.msra.mxu0 0
      %4445 = vmatprep.subr.bf16.mxu0 0
      %4446 = vmatpush1.bf16.msra.mxu0 0
      %4447 = vmatprep.subr.bf16.mxu0 0
      %4448 = vmatpush1.bf16.msra.mxu0 0
      %4449 = vmatprep.subr.bf16.mxu0 0
      %4450 = vmatpush1.bf16.msra.mxu0 0
      %4451 = vmatprep.subr.bf16.mxu0 0
      %4452 = vmatpush1.bf16.msra.mxu0 0
      %4453 = vmatprep.subr.bf16.mxu0 0
      %4454 = vmatpush1.bf16.msra.mxu0 0
      %4455 = vmatprep.subr.bf16.mxu0 0
      %4456 = vmatpush1.bf16.msra.mxu0 0
      %4457 = vmatprep.mubr.bf16.mxu0 0
      %4458 = vmatmul.mubr.bf16.gmra.mrb[0].mxu0 %v3468
      %v4459 = vpop.f32.mrb[0].mxu0
      %v4460 = vadd.f32 0.0, %v4459
      %v4461 = vpop.f32.mrb[0].mxu0
      %v4462 = vpop.f32.mrb[0].mxu0
      %v4463 = vadd.f32 0.0, %v4462
      %v4464 = vpop.f32.mrb[0].mxu0
      %4465 = vmatprep.mubr.bf16.mxu0 0
      %4466 = vmatmul.mubr.bf16.gmra.mrb[0].mxu0 %v3470
      %v4467 = vpop.f32.mrb[0].mxu0
      %v4468 = vadd.f32 0.0, %v4467
      %v4469 = vpop.f32.mrb[0].mxu0
      %v4470 = vpop.f32.mrb[0].mxu0
      %v4471 = vadd.f32 0.0, %v4470
      %v4472 = vpop.f32.mrb[0].mxu0
      %4473 = vmatprep.mubr.bf16.mxu0 0
      %4474 = vmatmul.mubr.bf16.gmra.mrb[0].mxu0 %v3472
      %v4475 = vpop.f32.mrb[0].mxu0
      %v4476 = vadd.f32 0.0, %v4475
      %v4477 = vpop.f32.mrb[0].mxu0
      %v4478 = vpop.f32.mrb[0].mxu0
      %v4479 = vadd.f32 0.0, %v4478
      %v4480 = vpop.f32.mrb[0].mxu0
      %4481 = vmatprep.mubr.bf16.mxu0 0
      %4482 = vmatmul.mubr.bf16.gmra.mrb[0].mxu0 %v3474
      %v4483 = vpop.f32.mrb[0].mxu0
      %v4484 = vadd.f32 0.0, %v4483
      %v4485 = vpop.f32.mrb[0].mxu0
      %v4486 = vpop.f32.mrb[0].mxu0
      %v4487 = vadd.f32 0.0, %v4486
      %v4488 = vpop.f32.mrb[0].mxu0
      %4489 = vmatprep.mubr.bf16.mxu0 0
      %4490 = vmatmul.mubr.bf16.gmra.mrb[0].mxu0 %v3476
      %v4491 = vpop.f32.mrb[0].mxu0
      %v4492 = vadd.f32 0.0, %v4491
      %v4493 = vpop.f32.mrb[0].mxu0
      %v4494 = vpop.f32.mrb[0].mxu0
      %v4495 = vadd.f32 0.0, %v4494
      %v4496 = vpop.f32.mrb[0].mxu0
      %4497 = vmatprep.mubr.bf16.mxu0 0
      %4498 = vmatmul.mubr.bf16.gmra.mrb[0].mxu0 %v3478
      %v4499 = vpop.f32.mrb[0].mxu0
      %v4500 = vadd.f32 0.0, %v4499
      %v4501 = vpop.f32.mrb[0].mxu0
      %v4502 = vpop.f32.mrb[0].mxu0
      %v4503 = vadd.f32 0.0, %v4502
      %v4504 = vpop.f32.mrb[0].mxu0
      %4505 = vmatprep.mubr.bf16.mxu0 0
      %4506 = vmatmul.mubr.bf16.gmra.mrb[0].mxu0 %v3480
      %v4507 = vpop.f32.mrb[0].mxu0
      %v4508 = vadd.f32 0.0, %v4507
      %v4509 = vpop.f32.mrb[0].mxu0
      %v4510 = vpop.f32.mrb[0].mxu0
      %v4511 = vadd.f32 0.0, %v4510
      %v4512 = vpop.f32.mrb[0].mxu0
      %4513 = vmatprep.mubr.bf16.mxu0 0
      %4514 = vmatmul.mubr.bf16.gmra.mrb[0].mxu0 %v3482
      %v4515 = vpop.f32.mrb[0].mxu0
      %v4516 = vadd.f32 0.0, %v4515
      %v4517 = vpop.f32.mrb[0].mxu0
      %v4518 = vpop.f32.mrb[0].mxu0
      %v4519 = vadd.f32 0.0, %v4518
      %v4520 = vpop.f32.mrb[0].mxu0
      %4521 = vmatprep.mubr.bf16.mxu0 0
      %4522 = vmatmul.mubr.bf16.gmra.mrb[0].mxu0 %v3484
      %v4523 = vpop.f32.mrb[0].mxu0
      %v4524 = vadd.f32 0.0, %v4523
      %v4525 = vpop.f32.mrb[0].mxu0
      %v4526 = vpop.f32.mrb[0].mxu0
      %v4527 = vadd.f32 0.0, %v4526
      %v4528 = vpop.f32.mrb[0].mxu0
      %4529 = vmatprep.mubr.bf16.mxu0 0
      %4530 = vmatmul.mubr.bf16.gmra.mrb[0].mxu0 %v4372
      %v4531 = vpop.f32.mrb[0].mxu0
      %v4532 = vadd.f32 0.0, %v4531
      %v4533 = vpop.f32.mrb[0].mxu0
      %v4534 = vpop.f32.mrb[0].mxu0
      %v4535 = vadd.f32 0.0, %v4534
      %v4536 = vpop.f32.mrb[0].mxu0
      %4537 = vmatprep.mubr.bf16.mxu0 0
      %4538 = vmatmul.mubr.bf16.gmra.mrb[0].mxu0 %v4374
      %v4539 = vpop.f32.mrb[0].mxu0
      %v4540 = vadd.f32 0.0, %v4539
      %v4541 = vpop.f32.mrb[0].mxu0
      %v4542 = vpop.f32.mrb[0].mxu0
      %v4543 = vadd.f32 0.0, %v4542
      %v4544 = vpop.f32.mrb[0].mxu0
      %4545 = vdwg.mxu0
      %v4546 = vadd.f32 %v4330, %v4460
      %v4547 = vadd.f32 %v4331, %v4463
      %v4548 = vadd.f32 %v4332, %v4468
      %v4549 = vadd.f32 %v4333, %v4471
      %v4550 = vadd.f32 %v4334, %v4476
      %v4551 = vadd.f32 %v4335, %v4479
      %v4552 = vadd.f32 %v4336, %v4484
      %v4553 = vadd.f32 %v4337, %v4487
      %v4554 = vadd.f32 %v4338, %v4492
      %v4555 = vadd.f32 %v4339, %v4495
      %v4556 = vadd.f32 %v4340, %v4500
      %v4557 = vadd.f32 %v4341, %v4503
      %v4558 = vadd.f32 %v4342, %v4508
      %v4559 = vadd.f32 %v4343, %v4511
      %v4560 = vadd.f32 %v4344, %v4516
      %v4561 = vadd.f32 %v4345, %v4519
      %v4562 = vadd.f32 %v4346, %v4524
      %v4563 = vadd.f32 %v4347, %v4527
      %v4564 = vadd.f32 %v4348, %v4532
      %v4565 = vadd.f32 %v4349, %v4535
      %v4566 = vadd.f32 %v4350, %v4540
      %v4567 = vadd.f32 %v4351, %v4543
      %v4568 = vpack.c.bf16 %v2605, %v2604
      %v4569 = vpack.c.bf16 %v2606, %v2606
      %s4570 = scalar_lea.vmem %s4, 512
      %v4571 = vld [vmem:[%s4570] sm:$0xf]
      %v4572 = vld [vmem:[%s4570 + $0x4] sm:$0xf]
      %v4573 = vld [vmem:[%s4570 + $0x8] sm:$0xf]
      %v4574 = vld [vmem:[%s4570 + $0xc] sm:$0xf]
      %v4575 = vld [vmem:[%s4570 + $0x10] sm:$0xf]
      %v4576 = vld [vmem:[%s4570 + $0x14] sm:$0xf]
      %v4577 = vld [vmem:[%s4570 + $0x18] sm:$0xf]
      %v4578 = vld [vmem:[%s4570 + $0x1c] sm:$0xf]
      %v4579 = vld [vmem:[%s4570 + $0x20] sm:$0xf]
      %v4580 = vld [vmem:[%s4570 + $0x24] sm:$0xf]
      %v4581 = vld [vmem:[%s4570 + $0x28] sm:$0xf]
      %v4582 = vld [vmem:[%s4570 + $0x2c] sm:$0xf]
      %v4583 = vld [vmem:[%s4570 + $0x30] sm:$0xf]
      %v4584 = vld [vmem:[%s4570 + $0x34] sm:$0xf]
      %v4585 = vld [vmem:[%s4570 + $0x38] sm:$0xf]
      %v4586 = vld [vmem:[%s4570 + $0x3c] sm:$0xf]
      %v4588 = vshrl.u32 %v4568, 16
      %v4590 = vrot.slane %v4588, 3
      %v4591 = vshll.u32 %v4568, 16
      %v4593 = vrot.slane %v4591, 4
      %v4594 = vor.u32 %v4590, %v4593
      %v4595 = vsel %vm550, %v3715, %v4594
      %v4597 = vshrl.u32 %v4569, 16
      %v4599 = vrot.slane %v4597, 3
      %v4600 = vshll.u32 %v4569, 16
      %v4602 = vrot.slane %v4600, 4
      %v4603 = vor.u32 %v4599, %v4602
      %v4604 = vsel %vm550, %v4594, %v4603
      %v4623 = vunpack.c.l.b16 %v4571
      %v4624 = vunpack.c.l.b16 %v4572
      %v4625 = vunpack.c.l.b16 %v4573
      %v4626 = vunpack.c.l.b16 %v4574
      %v4627 = vunpack.c.l.b16 %v4575
      %v4628 = vunpack.c.l.b16 %v4576
      %v4629 = vunpack.c.l.b16 %v4577
      %v4630 = vunpack.c.l.b16 %v4578
      %v4631 = vunpack.c.l.b16 %v4579
      %v4632 = vunpack.c.l.b16 %v4580
      %v4633 = vunpack.c.l.b16 %v4581
      %v4634 = vunpack.c.l.b16 %v4582
      %v4635 = vunpack.c.l.b16 %v4583
      %v4636 = vunpack.c.l.b16 %v4584
      %v4637 = vunpack.c.l.b16 %v4585
      %v4638 = vunpack.c.l.b16 %v4586
      %v4639 = vpack.c.b16 %v4624, %v4623
      %v4640 = vpack.c.b16 %v4626, %v4625
      %v4641 = vpack.c.b16 %v4628, %v4627
      %v4642 = vpack.c.b16 %v4630, %v4629
      %v4643 = vpack.c.b16 %v4632, %v4631
      %v4644 = vpack.c.b16 %v4634, %v4633
      %v4645 = vpack.c.b16 %v4636, %v4635
      %v4646 = vpack.c.b16 %v4638, %v4637
      %4655 = vmatprep.subr.bf16.mxu0 0
      %4656 = vmatpush1.bf16.msra.mxu0 %v4639
      %4657 = vmatprep.subr.bf16.mxu0 0
      %4658 = vmatpush1.bf16.msra.mxu0 %v4640
      %4659 = vmatprep.subr.bf16.mxu0 0
      %4660 = vmatpush1.bf16.msra.mxu0 %v4641
      %4661 = vmatprep.subr.bf16.mxu0 0
      %4662 = vmatpush1.bf16.msra.mxu0 %v4642
      %4663 = vmatprep.subr.bf16.mxu0 0
      %4664 = vmatpush1.bf16.msra.mxu0 %v4643
      %4665 = vmatprep.subr.bf16.mxu0 0
      %4666 = vmatpush1.bf16.msra.mxu0 %v4644
      %4667 = vmatprep.subr.bf16.mxu0 0
      %4668 = vmatpush1.bf16.msra.mxu0 %v4645
      %4669 = vmatprep.subr.bf16.mxu0 0
      %4670 = vmatpush1.bf16.msra.mxu0 %v4646
      %4671 = vmatprep.subr.bf16.mxu0 0
      %4672 = vmatpush1.bf16.msra.mxu0 0
      %4673 = vmatprep.subr.bf16.mxu0 0
      %4674 = vmatpush1.bf16.msra.mxu0 0
      %4675 = vmatprep.subr.bf16.mxu0 0
      %4676 = vmatpush1.bf16.msra.mxu0 0
      %4677 = vmatprep.subr.bf16.mxu0 0
      %4678 = vmatpush1.bf16.msra.mxu0 0
      %4679 = vmatprep.subr.bf16.mxu0 0
      %4680 = vmatpush1.bf16.msra.mxu0 0
      %4681 = vmatprep.subr.bf16.mxu0 0
      %4682 = vmatpush1.bf16.msra.mxu0 0
      %4683 = vmatprep.subr.bf16.mxu0 0
      %4684 = vmatpush1.bf16.msra.mxu0 0
      %4685 = vmatprep.subr.bf16.mxu0 0
      %4686 = vmatpush1.bf16.msra.mxu0 0
      %4687 = vmatprep.mubr.bf16.mxu0 0
      %4688 = vmatmul.mubr.bf16.gmra.mrb[0].mxu0 %v2869
      %v4689 = vpop.f32.mrb[0].mxu0
      %v4690 = vadd.f32 0.0, %v4689
      %v4691 = vpop.f32.mrb[0].mxu0
      %v4692 = vpop.f32.mrb[0].mxu0
      %v4693 = vadd.f32 0.0, %v4692
      %v4694 = vpop.f32.mrb[0].mxu0
      %4695 = vmatprep.mubr.bf16.mxu0 0
      %4696 = vmatmul.mubr.bf16.gmra.mrb[0].mxu0 %v2878
      %v4697 = vpop.f32.mrb[0].mxu0
      %v4698 = vadd.f32 0.0, %v4697
      %v4699 = vpop.f32.mrb[0].mxu0
      %v4700 = vpop.f32.mrb[0].mxu0
      %v4701 = vadd.f32 0.0, %v4700
      %v4702 = vpop.f32.mrb[0].mxu0
      %4703 = vmatprep.mubr.bf16.mxu0 0
      %4704 = vmatmul.mubr.bf16.gmra.mrb[0].mxu0 %v2887
      %v4705 = vpop.f32.mrb[0].mxu0
      %v4706 = vadd.f32 0.0, %v4705
      %v4707 = vpop.f32.mrb[0].mxu0
      %v4708 = vpop.f32.mrb[0].mxu0
      %v4709 = vadd.f32 0.0, %v4708
      %v4710 = vpop.f32.mrb[0].mxu0
      %4711 = vmatprep.mubr.bf16.mxu0 0
      %4712 = vmatmul.mubr.bf16.gmra.mrb[0].mxu0 %v2896
      %v4713 = vpop.f32.mrb[0].mxu0
      %v4714 = vadd.f32 0.0, %v4713
      %v4715 = vpop.f32.mrb[0].mxu0
      %v4716 = vpop.f32.mrb[0].mxu0
      %v4717 = vadd.f32 0.0, %v4716
      %v4718 = vpop.f32.mrb[0].mxu0
      %4719 = vmatprep.mubr.bf16.mxu0 0
      %4720 = vmatmul.mubr.bf16.gmra.mrb[0].mxu0 %v2905
      %v4721 = vpop.f32.mrb[0].mxu0
      %v4722 = vadd.f32 0.0, %v4721
      %v4723 = vpop.f32.mrb[0].mxu0
      %v4724 = vpop.f32.mrb[0].mxu0
      %v4725 = vadd.f32 0.0, %v4724
      %v4726 = vpop.f32.mrb[0].mxu0
      %4727 = vmatprep.mubr.bf16.mxu0 0
      %4728 = vmatmul.mubr.bf16.gmra.mrb[0].mxu0 %v2914
      %v4729 = vpop.f32.mrb[0].mxu0
      %v4730 = vadd.f32 0.0, %v4729
      %v4731 = vpop.f32.mrb[0].mxu0
      %v4732 = vpop.f32.mrb[0].mxu0
      %v4733 = vadd.f32 0.0, %v4732
      %v4734 = vpop.f32.mrb[0].mxu0
      %4735 = vmatprep.mubr.bf16.mxu0 0
      %4736 = vmatmul.mubr.bf16.gmra.mrb[0].mxu0 %v2923
      %v4737 = vpop.f32.mrb[0].mxu0
      %v4738 = vadd.f32 0.0, %v4737
      %v4739 = vpop.f32.mrb[0].mxu0
      %v4740 = vpop.f32.mrb[0].mxu0
      %v4741 = vadd.f32 0.0, %v4740
      %v4742 = vpop.f32.mrb[0].mxu0
      %4743 = vmatprep.mubr.bf16.mxu0 0
      %4744 = vmatmul.mubr.bf16.gmra.mrb[0].mxu0 %v2932
      %v4745 = vpop.f32.mrb[0].mxu0
      %v4746 = vadd.f32 0.0, %v4745
      %v4747 = vpop.f32.mrb[0].mxu0
      %v4748 = vpop.f32.mrb[0].mxu0
      %v4749 = vadd.f32 0.0, %v4748
      %v4750 = vpop.f32.mrb[0].mxu0
      %4751 = vmatprep.mubr.bf16.mxu0 0
      %4752 = vmatmul.mubr.bf16.gmra.mrb[0].mxu0 %v3716
      %v4753 = vpop.f32.mrb[0].mxu0
      %v4754 = vadd.f32 0.0, %v4753
      %v4755 = vpop.f32.mrb[0].mxu0
      %v4756 = vpop.f32.mrb[0].mxu0
      %v4757 = vadd.f32 0.0, %v4756
      %v4758 = vpop.f32.mrb[0].mxu0
      %4759 = vmatprep.mubr.bf16.mxu0 0
      %4760 = vmatmul.mubr.bf16.gmra.mrb[0].mxu0 %v4595
      %v4761 = vpop.f32.mrb[0].mxu0
      %v4762 = vadd.f32 0.0, %v4761
      %v4763 = vpop.f32.mrb[0].mxu0
      %v4764 = vpop.f32.mrb[0].mxu0
      %v4765 = vadd.f32 0.0, %v4764
      %v4766 = vpop.f32.mrb[0].mxu0
      %4767 = vmatprep.mubr.bf16.mxu0 0
      %4768 = vmatmul.mubr.bf16.gmra.mrb[0].mxu0 %v4604
      %v4769 = vpop.f32.mrb[0].mxu0
      %v4770 = vadd.f32 0.0, %v4769
      %v4771 = vpop.f32.mrb[0].mxu0
      %v4772 = vpop.f32.mrb[0].mxu0
      %v4773 = vadd.f32 0.0, %v4772
      %v4774 = vpop.f32.mrb[0].mxu0
      %4775 = vdwg.mxu0
      %v4776 = vadd.f32 %v4546, %v4690
      %v4777 = vadd.f32 %v4547, %v4693
      %v4778 = vadd.f32 %v4548, %v4698
      %v4779 = vadd.f32 %v4549, %v4701
      %v4780 = vadd.f32 %v4550, %v4706
      %v4781 = vadd.f32 %v4551, %v4709
      %v4782 = vadd.f32 %v4552, %v4714
      %v4783 = vadd.f32 %v4553, %v4717
      %v4784 = vadd.f32 %v4554, %v4722
      %v4785 = vadd.f32 %v4555, %v4725
      %v4786 = vadd.f32 %v4556, %v4730
      %v4787 = vadd.f32 %v4557, %v4733
      %v4788 = vadd.f32 %v4558, %v4738
      %v4789 = vadd.f32 %v4559, %v4741
      %v4790 = vadd.f32 %v4560, %v4746
      %v4791 = vadd.f32 %v4561, %v4749
      %v4792 = vadd.f32 %v4562, %v4754
      %v4793 = vadd.f32 %v4563, %v4757
      %v4794 = vadd.f32 %v4564, %v4762
      %v4795 = vadd.f32 %v4565, %v4765
      %v4796 = vadd.f32 %v4566, %v4770
      %v4797 = vadd.f32 %v4567, %v4773
      %v4798 = vpack.c.bf16 %v2606, %v2605
      %s4799 = scalar_lea.vmem %s4, 576
      %v4800 = vld [vmem:[%s4799] sm:$0xf]
      %v4801 = vld [vmem:[%s4799 + $0x4] sm:$0xf]
      %v4802 = vld [vmem:[%s4799 + $0x8] sm:$0xf]
      %v4803 = vld [vmem:[%s4799 + $0xc] sm:$0xf]
      %v4804 = vld [vmem:[%s4799 + $0x10] sm:$0xf]
      %v4805 = vld [vmem:[%s4799 + $0x14] sm:$0xf]
      %v4806 = vld [vmem:[%s4799 + $0x18] sm:$0xf]
      %v4807 = vld [vmem:[%s4799 + $0x1c] sm:$0xf]
      %v4808 = vld [vmem:[%s4799 + $0x20] sm:$0xf]
      %v4809 = vld [vmem:[%s4799 + $0x24] sm:$0xf]
      %v4810 = vld [vmem:[%s4799 + $0x28] sm:$0xf]
      %v4811 = vld [vmem:[%s4799 + $0x2c] sm:$0xf]
      %v4812 = vld [vmem:[%s4799 + $0x30] sm:$0xf]
      %v4813 = vld [vmem:[%s4799 + $0x34] sm:$0xf]
      %v4814 = vld [vmem:[%s4799 + $0x38] sm:$0xf]
      %v4815 = vld [vmem:[%s4799 + $0x3c] sm:$0xf]
      %v4832 = vunpack.c.l.b16 %v4800
      %v4833 = vunpack.c.l.b16 %v4801
      %v4834 = vunpack.c.l.b16 %v4802
      %v4835 = vunpack.c.l.b16 %v4803
      %v4836 = vunpack.c.l.b16 %v4804
      %v4837 = vunpack.c.l.b16 %v4805
      %v4838 = vunpack.c.l.b16 %v4806
      %v4839 = vunpack.c.l.b16 %v4807
      %v4840 = vunpack.c.l.b16 %v4808
      %v4841 = vunpack.c.l.b16 %v4809
      %v4842 = vunpack.c.l.b16 %v4810
      %v4843 = vunpack.c.l.b16 %v4811
      %v4844 = vunpack.c.l.b16 %v4812
      %v4845 = vunpack.c.l.b16 %v4813
      %v4846 = vunpack.c.l.b16 %v4814
      %v4847 = vunpack.c.l.b16 %v4815
      %v4848 = vpack.c.b16 %v4833, %v4832
      %v4849 = vpack.c.b16 %v4835, %v4834
      %v4850 = vpack.c.b16 %v4837, %v4836
      %v4851 = vpack.c.b16 %v4839, %v4838
      %v4852 = vpack.c.b16 %v4841, %v4840
      %v4853 = vpack.c.b16 %v4843, %v4842
      %v4854 = vpack.c.b16 %v4845, %v4844
      %v4855 = vpack.c.b16 %v4847, %v4846
      %4864 = vmatprep.subr.bf16.mxu0 0
      %4865 = vmatpush1.bf16.msra.mxu0 %v4848
      %4866 = vmatprep.subr.bf16.mxu0 0
      %4867 = vmatpush1.bf16.msra.mxu0 %v4849
      %4868 = vmatprep.subr.bf16.mxu0 0
      %4869 = vmatpush1.bf16.msra.mxu0 %v4850
      %4870 = vmatprep.subr.bf16.mxu0 0
      %4871 = vmatpush1.bf16.msra.mxu0 %v4851
      %4872 = vmatprep.subr.bf16.mxu0 0
      %4873 = vmatpush1.bf16.msra.mxu0 %v4852
      %4874 = vmatprep.subr.bf16.mxu0 0
      %4875 = vmatpush1.bf16.msra.mxu0 %v4853
      %4876 = vmatprep.subr.bf16.mxu0 0
      %4877 = vmatpush1.bf16.msra.mxu0 %v4854
      %4878 = vmatprep.subr.bf16.mxu0 0
      %4879 = vmatpush1.bf16.msra.mxu0 %v4855
      %4880 = vmatprep.subr.bf16.mxu0 0
      %4881 = vmatpush1.bf16.msra.mxu0 0
      %4882 = vmatprep.subr.bf16.mxu0 0
      %4883 = vmatpush1.bf16.msra.mxu0 0
      %4884 = vmatprep.subr.bf16.mxu0 0
      %4885 = vmatpush1.bf16.msra.mxu0 0
      %4886 = vmatprep.subr.bf16.mxu0 0
      %4887 = vmatpush1.bf16.msra.mxu0 0
      %4888 = vmatprep.subr.bf16.mxu0 0
      %4889 = vmatpush1.bf16.msra.mxu0 0
      %4890 = vmatprep.subr.bf16.mxu0 0
      %4891 = vmatpush1.bf16.msra.mxu0 0
      %4892 = vmatprep.subr.bf16.mxu0 0
      %4893 = vmatpush1.bf16.msra.mxu0 0
      %4894 = vmatprep.subr.bf16.mxu0 0
      %4895 = vmatpush1.bf16.msra.mxu0 0
      %4896 = vmatprep.mubr.bf16.mxu0 0
      %4897 = vmatmul.mubr.bf16.gmra.mrb[0].mxu0 %v2640
      %v4898 = vpop.f32.mrb[0].mxu0
      %v4899 = vadd.f32 0.0, %v4898
      %v4900 = vpop.f32.mrb[0].mxu0
      %v4901 = vpop.f32.mrb[0].mxu0
      %v4902 = vadd.f32 0.0, %v4901
      %v4903 = vpop.f32.mrb[0].mxu0
      %4904 = vmatprep.mubr.bf16.mxu0 0
      %4905 = vmatmul.mubr.bf16.gmra.mrb[0].mxu0 %v2641
      %v4906 = vpop.f32.mrb[0].mxu0
      %v4907 = vadd.f32 0.0, %v4906
      %v4908 = vpop.f32.mrb[0].mxu0
      %v4909 = vpop.f32.mrb[0].mxu0
      %v4910 = vadd.f32 0.0, %v4909
      %v4911 = vpop.f32.mrb[0].mxu0
      %4912 = vmatprep.mubr.bf16.mxu0 0
      %4913 = vmatmul.mubr.bf16.gmra.mrb[0].mxu0 %v2642
      %v4914 = vpop.f32.mrb[0].mxu0
      %v4915 = vadd.f32 0.0, %v4914
      %v4916 = vpop.f32.mrb[0].mxu0
      %v4917 = vpop.f32.mrb[0].mxu0
      %v4918 = vadd.f32 0.0, %v4917
      %v4919 = vpop.f32.mrb[0].mxu0
      %4920 = vmatprep.mubr.bf16.mxu0 0
      %4921 = vmatmul.mubr.bf16.gmra.mrb[0].mxu0 %v2643
      %v4922 = vpop.f32.mrb[0].mxu0
      %v4923 = vadd.f32 0.0, %v4922
      %v4924 = vpop.f32.mrb[0].mxu0
      %v4925 = vpop.f32.mrb[0].mxu0
      %v4926 = vadd.f32 0.0, %v4925
      %v4927 = vpop.f32.mrb[0].mxu0
      %4928 = vmatprep.mubr.bf16.mxu0 0
      %4929 = vmatmul.mubr.bf16.gmra.mrb[0].mxu0 %v2644
      %v4930 = vpop.f32.mrb[0].mxu0
      %v4931 = vadd.f32 0.0, %v4930
      %v4932 = vpop.f32.mrb[0].mxu0
      %v4933 = vpop.f32.mrb[0].mxu0
      %v4934 = vadd.f32 0.0, %v4933
      %v4935 = vpop.f32.mrb[0].mxu0
      %4936 = vmatprep.mubr.bf16.mxu0 0
      %4937 = vmatmul.mubr.bf16.gmra.mrb[0].mxu0 %v2645
      %v4938 = vpop.f32.mrb[0].mxu0
      %v4939 = vadd.f32 0.0, %v4938
      %v4940 = vpop.f32.mrb[0].mxu0
      %v4941 = vpop.f32.mrb[0].mxu0
      %v4942 = vadd.f32 0.0, %v4941
      %v4943 = vpop.f32.mrb[0].mxu0
      %4944 = vmatprep.mubr.bf16.mxu0 0
      %4945 = vmatmul.mubr.bf16.gmra.mrb[0].mxu0 %v2646
      %v4946 = vpop.f32.mrb[0].mxu0
      %v4947 = vadd.f32 0.0, %v4946
      %v4948 = vpop.f32.mrb[0].mxu0
      %v4949 = vpop.f32.mrb[0].mxu0
      %v4950 = vadd.f32 0.0, %v4949
      %v4951 = vpop.f32.mrb[0].mxu0
      %4952 = vmatprep.mubr.bf16.mxu0 0
      %4953 = vmatmul.mubr.bf16.gmra.mrb[0].mxu0 %v2647
      %v4954 = vpop.f32.mrb[0].mxu0
      %v4955 = vadd.f32 0.0, %v4954
      %v4956 = vpop.f32.mrb[0].mxu0
      %v4957 = vpop.f32.mrb[0].mxu0
      %v4958 = vadd.f32 0.0, %v4957
      %v4959 = vpop.f32.mrb[0].mxu0
      %4960 = vmatprep.mubr.bf16.mxu0 0
      %4961 = vmatmul.mubr.bf16.gmra.mrb[0].mxu0 %v2648
      %v4962 = vpop.f32.mrb[0].mxu0
      %v4963 = vadd.f32 0.0, %v4962
      %v4964 = vpop.f32.mrb[0].mxu0
      %v4965 = vpop.f32.mrb[0].mxu0
      %v4966 = vadd.f32 0.0, %v4965
      %v4967 = vpop.f32.mrb[0].mxu0
      %4968 = vmatprep.mubr.bf16.mxu0 0
      %4969 = vmatmul.mubr.bf16.gmra.mrb[0].mxu0 %v3919
      %v4970 = vpop.f32.mrb[0].mxu0
      %v4971 = vadd.f32 0.0, %v4970
      %v4972 = vpop.f32.mrb[0].mxu0
      %v4973 = vpop.f32.mrb[0].mxu0
      %v4974 = vadd.f32 0.0, %v4973
      %v4975 = vpop.f32.mrb[0].mxu0
      %4976 = vmatprep.mubr.bf16.mxu0 0
      %4977 = vmatmul.mubr.bf16.gmra.mrb[0].mxu0 %v4798
      %v4978 = vpop.f32.mrb[0].mxu0
      %v4979 = vadd.f32 0.0, %v4978
      %v4980 = vpop.f32.mrb[0].mxu0
      %v4981 = vpop.f32.mrb[0].mxu0
      %v4982 = vadd.f32 0.0, %v4981
      %v4983 = vpop.f32.mrb[0].mxu0
      %4984 = vdwg.mxu0
      %v4985 = vadd.f32 %v4776, %v4899
      %v4986 = vadd.f32 %v4777, %v4902
      %v4987 = vadd.f32 %v4778, %v4907
      %v4988 = vadd.f32 %v4779, %v4910
      %v4989 = vadd.f32 %v4780, %v4915
      %v4990 = vadd.f32 %v4781, %v4918
      %v4991 = vadd.f32 %v4782, %v4923
      %v4992 = vadd.f32 %v4783, %v4926
      %v4993 = vadd.f32 %v4784, %v4931
      %v4994 = vadd.f32 %v4785, %v4934
      %v4995 = vadd.f32 %v4786, %v4939
      %v4996 = vadd.f32 %v4787, %v4942
      %v4997 = vadd.f32 %v4788, %v4947
      %v4998 = vadd.f32 %v4789, %v4950
      %v4999 = vadd.f32 %v4790, %v4955
      %v5000 = vadd.f32 %v4791, %v4958
      %v5001 = vadd.f32 %v4792, %v4963
      %v5002 = vadd.f32 %v4793, %v4966
      %v5003 = vadd.f32 %v4794, %v4971
      %v5004 = vadd.f32 %v4795, %v4974
      %v5005 = vadd.f32 %v4796, %v4979
      %v5006 = vadd.f32 %v4797, %v4982
      %v5007 = vpack.c.bf16 %v2607, %v2607
      %s5008 = scalar_lea.vmem %s4, 640
      %v5009 = vld [vmem:[%s5008] sm:$0xf]
      %v5010 = vld [vmem:[%s5008 + $0x4] sm:$0xf]
      %v5011 = vld [vmem:[%s5008 + $0x8] sm:$0xf]
      %v5012 = vld [vmem:[%s5008 + $0xc] sm:$0xf]
      %v5013 = vld [vmem:[%s5008 + $0x10] sm:$0xf]
      %v5014 = vld [vmem:[%s5008 + $0x14] sm:$0xf]
      %v5015 = vld [vmem:[%s5008 + $0x18] sm:$0xf]
      %v5016 = vld [vmem:[%s5008 + $0x1c] sm:$0xf]
      %v5017 = vld [vmem:[%s5008 + $0x20] sm:$0xf]
      %v5018 = vld [vmem:[%s5008 + $0x24] sm:$0xf]
      %v5019 = vld [vmem:[%s5008 + $0x28] sm:$0xf]
      %v5020 = vld [vmem:[%s5008 + $0x2c] sm:$0xf]
      %v5021 = vld [vmem:[%s5008 + $0x30] sm:$0xf]
      %v5022 = vld [vmem:[%s5008 + $0x34] sm:$0xf]
      %v5023 = vld [vmem:[%s5008 + $0x38] sm:$0xf]
      %v5024 = vld [vmem:[%s5008 + $0x3c] sm:$0xf]
      %v5026 = vshll.u32 %v4798, 16
      %v5028 = vrot.slane %v5026, 1
      %v5029 = vsel %vm856, %v4153, %v5028
      %v5030 = vshrl.u32 %v4798, 16
      %v5032 = vor.u32 %v5030, %v5028
      %v5034 = vshll.u32 %v5007, 16
      %v5036 = vrot.slane %v5034, 1
      %v5037 = vsel %vm856, %v5032, %v5036
      %v5056 = vunpack.c.l.b16 %v5009
      %v5057 = vunpack.c.l.b16 %v5010
      %v5058 = vunpack.c.l.b16 %v5011
      %v5059 = vunpack.c.l.b16 %v5012
      %v5060 = vunpack.c.l.b16 %v5013
      %v5061 = vunpack.c.l.b16 %v5014
      %v5062 = vunpack.c.l.b16 %v5015
      %v5063 = vunpack.c.l.b16 %v5016
      %v5064 = vunpack.c.l.b16 %v5017
      %v5065 = vunpack.c.l.b16 %v5018
      %v5066 = vunpack.c.l.b16 %v5019
      %v5067 = vunpack.c.l.b16 %v5020
      %v5068 = vunpack.c.l.b16 %v5021
      %v5069 = vunpack.c.l.b16 %v5022
      %v5070 = vunpack.c.l.b16 %v5023
      %v5071 = vunpack.c.l.b16 %v5024
      %v5072 = vpack.c.b16 %v5057, %v5056
      %v5073 = vpack.c.b16 %v5059, %v5058
      %v5074 = vpack.c.b16 %v5061, %v5060
      %v5075 = vpack.c.b16 %v5063, %v5062
      %v5076 = vpack.c.b16 %v5065, %v5064
      %v5077 = vpack.c.b16 %v5067, %v5066
      %v5078 = vpack.c.b16 %v5069, %v5068
      %v5079 = vpack.c.b16 %v5071, %v5070
      %5088 = vmatprep.subr.bf16.mxu0 0
      %5089 = vmatpush1.bf16.msra.mxu0 %v5072
      %5090 = vmatprep.subr.bf16.mxu0 0
      %5091 = vmatpush1.bf16.msra.mxu0 %v5073
      %5092 = vmatprep.subr.bf16.mxu0 0
      %5093 = vmatpush1.bf16.msra.mxu0 %v5074
      %5094 = vmatprep.subr.bf16.mxu0 0
      %5095 = vmatpush1.bf16.msra.mxu0 %v5075
      %5096 = vmatprep.subr.bf16.mxu0 0
      %5097 = vmatpush1.bf16.msra.mxu0 %v5076
      %5098 = vmatprep.subr.bf16.mxu0 0
      %5099 = vmatpush1.bf16.msra.mxu0 %v5077
      %5100 = vmatprep.subr.bf16.mxu0 0
      %5101 = vmatpush1.bf16.msra.mxu0 %v5078
      %5102 = vmatprep.subr.bf16.mxu0 0
      %5103 = vmatpush1.bf16.msra.mxu0 %v5079
      %5104 = vmatprep.subr.bf16.mxu0 0
      %5105 = vmatpush1.bf16.msra.mxu0 0
      %5106 = vmatprep.subr.bf16.mxu0 0
      %5107 = vmatpush1.bf16.msra.mxu0 0
      %5108 = vmatprep.subr.bf16.mxu0 0
      %5109 = vmatpush1.bf16.msra.mxu0 0
      %5110 = vmatprep.subr.bf16.mxu0 0
      %5111 = vmatpush1.bf16.msra.mxu0 0
      %5112 = vmatprep.subr.bf16.mxu0 0
      %5113 = vmatpush1.bf16.msra.mxu0 0
      %5114 = vmatprep.subr.bf16.mxu0 0
      %5115 = vmatpush1.bf16.msra.mxu0 0
      %5116 = vmatprep.subr.bf16.mxu0 0
      %5117 = vmatpush1.bf16.msra.mxu0 0
      %5118 = vmatprep.subr.bf16.mxu0 0
      %5119 = vmatpush1.bf16.msra.mxu0 0
      %5120 = vmatprep.mubr.bf16.mxu0 0
      %5121 = vmatmul.mubr.bf16.gmra.mrb[0].mxu0 %v3167
      %v5122 = vpop.f32.mrb[0].mxu0
      %v5123 = vadd.f32 0.0, %v5122
      %v5124 = vpop.f32.mrb[0].mxu0
      %v5125 = vpop.f32.mrb[0].mxu0
      %v5126 = vadd.f32 0.0, %v5125
      %v5127 = vpop.f32.mrb[0].mxu0
      %5128 = vmatprep.mubr.bf16.mxu0 0
      %5129 = vmatmul.mubr.bf16.gmra.mrb[0].mxu0 %v3175
      %v5130 = vpop.f32.mrb[0].mxu0
      %v5131 = vadd.f32 0.0, %v5130
      %v5132 = vpop.f32.mrb[0].mxu0
      %v5133 = vpop.f32.mrb[0].mxu0
      %v5134 = vadd.f32 0.0, %v5133
      %v5135 = vpop.f32.mrb[0].mxu0
      %5136 = vmatprep.mubr.bf16.mxu0 0
      %5137 = vmatmul.mubr.bf16.gmra.mrb[0].mxu0 %v3183
      %v5138 = vpop.f32.mrb[0].mxu0
      %v5139 = vadd.f32 0.0, %v5138
      %v5140 = vpop.f32.mrb[0].mxu0
      %v5141 = vpop.f32.mrb[0].mxu0
      %v5142 = vadd.f32 0.0, %v5141
      %v5143 = vpop.f32.mrb[0].mxu0
      %5144 = vmatprep.mubr.bf16.mxu0 0
      %5145 = vmatmul.mubr.bf16.gmra.mrb[0].mxu0 %v3191
      %v5146 = vpop.f32.mrb[0].mxu0
      %v5147 = vadd.f32 0.0, %v5146
      %v5148 = vpop.f32.mrb[0].mxu0
      %v5149 = vpop.f32.mrb[0].mxu0
      %v5150 = vadd.f32 0.0, %v5149
      %v5151 = vpop.f32.mrb[0].mxu0
      %5152 = vmatprep.mubr.bf16.mxu0 0
      %5153 = vmatmul.mubr.bf16.gmra.mrb[0].mxu0 %v3199
      %v5154 = vpop.f32.mrb[0].mxu0
      %v5155 = vadd.f32 0.0, %v5154
      %v5156 = vpop.f32.mrb[0].mxu0
      %v5157 = vpop.f32.mrb[0].mxu0
      %v5158 = vadd.f32 0.0, %v5157
      %v5159 = vpop.f32.mrb[0].mxu0
      %5160 = vmatprep.mubr.bf16.mxu0 0
      %5161 = vmatmul.mubr.bf16.gmra.mrb[0].mxu0 %v3207
      %v5162 = vpop.f32.mrb[0].mxu0
      %v5163 = vadd.f32 0.0, %v5162
      %v5164 = vpop.f32.mrb[0].mxu0
      %v5165 = vpop.f32.mrb[0].mxu0
      %v5166 = vadd.f32 0.0, %v5165
      %v5167 = vpop.f32.mrb[0].mxu0
      %5168 = vmatprep.mubr.bf16.mxu0 0
      %5169 = vmatmul.mubr.bf16.gmra.mrb[0].mxu0 %v3215
      %v5170 = vpop.f32.mrb[0].mxu0
      %v5171 = vadd.f32 0.0, %v5170
      %v5172 = vpop.f32.mrb[0].mxu0
      %v5173 = vpop.f32.mrb[0].mxu0
      %v5174 = vadd.f32 0.0, %v5173
      %v5175 = vpop.f32.mrb[0].mxu0
      %5176 = vmatprep.mubr.bf16.mxu0 0
      %5177 = vmatmul.mubr.bf16.gmra.mrb[0].mxu0 %v3223
      %v5178 = vpop.f32.mrb[0].mxu0
      %v5179 = vadd.f32 0.0, %v5178
      %v5180 = vpop.f32.mrb[0].mxu0
      %v5181 = vpop.f32.mrb[0].mxu0
      %v5182 = vadd.f32 0.0, %v5181
      %v5183 = vpop.f32.mrb[0].mxu0
      %5184 = vmatprep.mubr.bf16.mxu0 0
      %5185 = vmatmul.mubr.bf16.gmra.mrb[0].mxu0 %v4150
      %v5186 = vpop.f32.mrb[0].mxu0
      %v5187 = vadd.f32 0.0, %v5186
      %v5188 = vpop.f32.mrb[0].mxu0
      %v5189 = vpop.f32.mrb[0].mxu0
      %v5190 = vadd.f32 0.0, %v5189
      %v5191 = vpop.f32.mrb[0].mxu0
      %5192 = vmatprep.mubr.bf16.mxu0 0
      %5193 = vmatmul.mubr.bf16.gmra.mrb[0].mxu0 %v5029
      %v5194 = vpop.f32.mrb[0].mxu0
      %v5195 = vadd.f32 0.0, %v5194
      %v5196 = vpop.f32.mrb[0].mxu0
      %v5197 = vpop.f32.mrb[0].mxu0
      %v5198 = vadd.f32 0.0, %v5197
      %v5199 = vpop.f32.mrb[0].mxu0
      %5200 = vmatprep.mubr.bf16.mxu0 0
      %5201 = vmatmul.mubr.bf16.gmra.mrb[0].mxu0 %v5037
      %v5202 = vpop.f32.mrb[0].mxu0
      %v5203 = vadd.f32 0.0, %v5202
      %v5204 = vpop.f32.mrb[0].mxu0
      %v5205 = vpop.f32.mrb[0].mxu0
      %v5206 = vadd.f32 0.0, %v5205
      %v5207 = vpop.f32.mrb[0].mxu0
      %5208 = vdwg.mxu0
      %v5209 = vadd.f32 %v4985, %v5123
      %v5210 = vadd.f32 %v4986, %v5126
      %v5211 = vadd.f32 %v4987, %v5131
      %v5212 = vadd.f32 %v4988, %v5134
      %v5213 = vadd.f32 %v4989, %v5139
      %v5214 = vadd.f32 %v4990, %v5142
      %v5215 = vadd.f32 %v4991, %v5147
      %v5216 = vadd.f32 %v4992, %v5150
      %v5217 = vadd.f32 %v4993, %v5155
      %v5218 = vadd.f32 %v4994, %v5158
      %v5219 = vadd.f32 %v4995, %v5163
      %v5220 = vadd.f32 %v4996, %v5166
      %v5221 = vadd.f32 %v4997, %v5171
      %v5222 = vadd.f32 %v4998, %v5174
      %v5223 = vadd.f32 %v4999, %v5179
      %v5224 = vadd.f32 %v5000, %v5182
      %v5225 = vadd.f32 %v5001, %v5187
      %v5226 = vadd.f32 %v5002, %v5190
      %v5227 = vadd.f32 %v5003, %v5195
      %v5228 = vadd.f32 %v5004, %v5198
      %v5229 = vadd.f32 %v5005, %v5203
      %v5230 = vadd.f32 %v5006, %v5206
      %s5231 = scalar_lea.vmem %s4, 704
      %v5232 = vld [vmem:[%s5231] sm:$0xf]
      %v5233 = vld [vmem:[%s5231 + $0x4] sm:$0xf]
      %v5234 = vld [vmem:[%s5231 + $0x8] sm:$0xf]
      %v5235 = vld [vmem:[%s5231 + $0xc] sm:$0xf]
      %v5236 = vld [vmem:[%s5231 + $0x10] sm:$0xf]
      %v5237 = vld [vmem:[%s5231 + $0x14] sm:$0xf]
      %v5238 = vld [vmem:[%s5231 + $0x18] sm:$0xf]
      %v5239 = vld [vmem:[%s5231 + $0x1c] sm:$0xf]
      %v5240 = vld [vmem:[%s5231 + $0x20] sm:$0xf]
      %v5241 = vld [vmem:[%s5231 + $0x24] sm:$0xf]
      %v5242 = vld [vmem:[%s5231 + $0x28] sm:$0xf]
      %v5243 = vld [vmem:[%s5231 + $0x2c] sm:$0xf]
      %v5244 = vld [vmem:[%s5231 + $0x30] sm:$0xf]
      %v5245 = vld [vmem:[%s5231 + $0x34] sm:$0xf]
      %v5246 = vld [vmem:[%s5231 + $0x38] sm:$0xf]
      %v5247 = vld [vmem:[%s5231 + $0x3c] sm:$0xf]
      %v5250 = vrot.slane %v4798, 1
      %v5251 = vsel %vm3463, %v4371, %v5250
      %v5252 = vrot.slane %v5007, 1
      %v5253 = vsel %vm3463, %v5250, %v5252
      %v5272 = vunpack.c.l.b16 %v5232
      %v5273 = vunpack.c.l.b16 %v5233
      %v5274 = vunpack.c.l.b16 %v5234
      %v5275 = vunpack.c.l.b16 %v5235
      %v5276 = vunpack.c.l.b16 %v5236
      %v5277 = vunpack.c.l.b16 %v5237
      %v5278 = vunpack.c.l.b16 %v5238
      %v5279 = vunpack.c.l.b16 %v5239
      %v5280 = vunpack.c.l.b16 %v5240
      %v5281 = vunpack.c.l.b16 %v5241
      %v5282 = vunpack.c.l.b16 %v5242
      %v5283 = vunpack.c.l.b16 %v5243
      %v5284 = vunpack.c.l.b16 %v5244
      %v5285 = vunpack.c.l.b16 %v5245
      %v5286 = vunpack.c.l.b16 %v5246
      %v5287 = vunpack.c.l.b16 %v5247
      %v5288 = vpack.c.b16 %v5273, %v5272
      %v5289 = vpack.c.b16 %v5275, %v5274
      %v5290 = vpack.c.b16 %v5277, %v5276
      %v5291 = vpack.c.b16 %v5279, %v5278
      %v5292 = vpack.c.b16 %v5281, %v5280
      %v5293 = vpack.c.b16 %v5283, %v5282
      %v5294 = vpack.c.b16 %v5285, %v5284
      %v5295 = vpack.c.b16 %v5287, %v5286
      %5304 = vmatprep.subr.bf16.mxu0 0
      %5305 = vmatpush1.bf16.msra.mxu0 %v5288
      %5306 = vmatprep.subr.bf16.mxu0 0
      %5307 = vmatpush1.bf16.msra.mxu0 %v5289
      %5308 = vmatprep.subr.bf16.mxu0 0
      %5309 = vmatpush1.bf16.msra.mxu0 %v5290
      %5310 = vmatprep.subr.bf16.mxu0 0
      %5311 = vmatpush1.bf16.msra.mxu0 %v5291
      %5312 = vmatprep.subr.bf16.mxu0 0
      %5313 = vmatpush1.bf16.msra.mxu0 %v5292
      %5314 = vmatprep.subr.bf16.mxu0 0
      %5315 = vmatpush1.bf16.msra.mxu0 %v5293
      %5316 = vmatprep.subr.bf16.mxu0 0
      %5317 = vmatpush1.bf16.msra.mxu0 %v5294
      %5318 = vmatprep.subr.bf16.mxu0 0
      %5319 = vmatpush1.bf16.msra.mxu0 %v5295
      %5320 = vmatprep.subr.bf16.mxu0 0
      %5321 = vmatpush1.bf16.msra.mxu0 0
      %5322 = vmatprep.subr.bf16.mxu0 0
      %5323 = vmatpush1.bf16.msra.mxu0 0
      %5324 = vmatprep.subr.bf16.mxu0 0
      %5325 = vmatpush1.bf16.msra.mxu0 0
      %5326 = vmatprep.subr.bf16.mxu0 0
      %5327 = vmatpush1.bf16.msra.mxu0 0
      %5328 = vmatprep.subr.bf16.mxu0 0
      %5329 = vmatpush1.bf16.msra.mxu0 0
      %5330 = vmatprep.subr.bf16.mxu0 0
      %5331 = vmatpush1.bf16.msra.mxu0 0
      %5332 = vmatprep.subr.bf16.mxu0 0
      %5333 = vmatpush1.bf16.msra.mxu0 0
      %5334 = vmatprep.subr.bf16.mxu0 0
      %5335 = vmatpush1.bf16.msra.mxu0 0
      %5336 = vmatprep.mubr.bf16.mxu0 0
      %5337 = vmatmul.mubr.bf16.gmra.mrb[0].mxu0 %v3470
      %v5338 = vpop.f32.mrb[0].mxu0
      %v5339 = vadd.f32 0.0, %v5338
      %v5340 = vpop.f32.mrb[0].mxu0
      %v5341 = vpop.f32.mrb[0].mxu0
      %v5342 = vadd.f32 0.0, %v5341
      %v5343 = vpop.f32.mrb[0].mxu0
      %5344 = vmatprep.mubr.bf16.mxu0 0
      %5345 = vmatmul.mubr.bf16.gmra.mrb[0].mxu0 %v3472
      %v5346 = vpop.f32.mrb[0].mxu0
      %v5347 = vadd.f32 0.0, %v5346
      %v5348 = vpop.f32.mrb[0].mxu0
      %v5349 = vpop.f32.mrb[0].mxu0
      %v5350 = vadd.f32 0.0, %v5349
      %v5351 = vpop.f32.mrb[0].mxu0
      %5352 = vmatprep.mubr.bf16.mxu0 0
      %5353 = vmatmul.mubr.bf16.gmra.mrb[0].mxu0 %v3474
      %v5354 = vpop.f32.mrb[0].mxu0
      %v5355 = vadd.f32 0.0, %v5354
      %v5356 = vpop.f32.mrb[0].mxu0
      %v5357 = vpop.f32.mrb[0].mxu0
      %v5358 = vadd.f32 0.0, %v5357
      %v5359 = vpop.f32.mrb[0].mxu0
      %5360 = vmatprep.mubr.bf16.mxu0 0
      %5361 = vmatmul.mubr.bf16.gmra.mrb[0].mxu0 %v3476
      %v5362 = vpop.f32.mrb[0].mxu0
      %v5363 = vadd.f32 0.0, %v5362
      %v5364 = vpop.f32.mrb[0].mxu0
      %v5365 = vpop.f32.mrb[0].mxu0
      %v5366 = vadd.f32 0.0, %v5365
      %v5367 = vpop.f32.mrb[0].mxu0
      %5368 = vmatprep.mubr.bf16.mxu0 0
      %5369 = vmatmul.mubr.bf16.gmra.mrb[0].mxu0 %v3478
      %v5370 = vpop.f32.mrb[0].mxu0
      %v5371 = vadd.f32 0.0, %v5370
      %v5372 = vpop.f32.mrb[0].mxu0
      %v5373 = vpop.f32.mrb[0].mxu0
      %v5374 = vadd.f32 0.0, %v5373
      %v5375 = vpop.f32.mrb[0].mxu0
      %5376 = vmatprep.mubr.bf16.mxu0 0
      %5377 = vmatmul.mubr.bf16.gmra.mrb[0].mxu0 %v3480
      %v5378 = vpop.f32.mrb[0].mxu0
      %v5379 = vadd.f32 0.0, %v5378
      %v5380 = vpop.f32.mrb[0].mxu0
      %v5381 = vpop.f32.mrb[0].mxu0
      %v5382 = vadd.f32 0.0, %v5381
      %v5383 = vpop.f32.mrb[0].mxu0
      %5384 = vmatprep.mubr.bf16.mxu0 0
      %5385 = vmatmul.mubr.bf16.gmra.mrb[0].mxu0 %v3482
      %v5386 = vpop.f32.mrb[0].mxu0
      %v5387 = vadd.f32 0.0, %v5386
      %v5388 = vpop.f32.mrb[0].mxu0
      %v5389 = vpop.f32.mrb[0].mxu0
      %v5390 = vadd.f32 0.0, %v5389
      %v5391 = vpop.f32.mrb[0].mxu0
      %5392 = vmatprep.mubr.bf16.mxu0 0
      %5393 = vmatmul.mubr.bf16.gmra.mrb[0].mxu0 %v3484
      %v5394 = vpop.f32.mrb[0].mxu0
      %v5395 = vadd.f32 0.0, %v5394
      %v5396 = vpop.f32.mrb[0].mxu0
      %v5397 = vpop.f32.mrb[0].mxu0
      %v5398 = vadd.f32 0.0, %v5397
      %v5399 = vpop.f32.mrb[0].mxu0
      %5400 = vmatprep.mubr.bf16.mxu0 0
      %5401 = vmatmul.mubr.bf16.gmra.mrb[0].mxu0 %v4372
      %v5402 = vpop.f32.mrb[0].mxu0
      %v5403 = vadd.f32 0.0, %v5402
      %v5404 = vpop.f32.mrb[0].mxu0
      %v5405 = vpop.f32.mrb[0].mxu0
      %v5406 = vadd.f32 0.0, %v5405
      %v5407 = vpop.f32.mrb[0].mxu0
      %5408 = vmatprep.mubr.bf16.mxu0 0
      %5409 = vmatmul.mubr.bf16.gmra.mrb[0].mxu0 %v5251
      %v5410 = vpop.f32.mrb[0].mxu0
      %v5411 = vadd.f32 0.0, %v5410
      %v5412 = vpop.f32.mrb[0].mxu0
      %v5413 = vpop.f32.mrb[0].mxu0
      %v5414 = vadd.f32 0.0, %v5413
      %v5415 = vpop.f32.mrb[0].mxu0
      %5416 = vmatprep.mubr.bf16.mxu0 0
      %5417 = vmatmul.mubr.bf16.gmra.mrb[0].mxu0 %v5253
      %v5418 = vpop.f32.mrb[0].mxu0
      %v5419 = vadd.f32 0.0, %v5418
      %v5420 = vpop.f32.mrb[0].mxu0
      %v5421 = vpop.f32.mrb[0].mxu0
      %v5422 = vadd.f32 0.0, %v5421
      %v5423 = vpop.f32.mrb[0].mxu0
      %5424 = vdwg.mxu0
      %v5425 = vadd.f32 %v5209, %v5339
      %v5426 = vadd.f32 %v5210, %v5342
      %v5427 = vadd.f32 %v5211, %v5347
      %v5428 = vadd.f32 %v5212, %v5350
      %v5429 = vadd.f32 %v5213, %v5355
      %v5430 = vadd.f32 %v5214, %v5358
      %v5431 = vadd.f32 %v5215, %v5363
      %v5432 = vadd.f32 %v5216, %v5366
      %v5433 = vadd.f32 %v5217, %v5371
      %v5434 = vadd.f32 %v5218, %v5374
      %v5435 = vadd.f32 %v5219, %v5379
      %v5436 = vadd.f32 %v5220, %v5382
      %v5437 = vadd.f32 %v5221, %v5387
      %v5438 = vadd.f32 %v5222, %v5390
      %v5439 = vadd.f32 %v5223, %v5395
      %v5440 = vadd.f32 %v5224, %v5398
      %v5441 = vadd.f32 %v5225, %v5403
      %v5442 = vadd.f32 %v5226, %v5406
      %v5443 = vadd.f32 %v5227, %v5411
      %v5444 = vadd.f32 %v5228, %v5414
      %v5445 = vadd.f32 %v5229, %v5419
      %v5446 = vadd.f32 %v5230, %v5422
      %v5447 = vpack.c.bf16 %v2607, %v2606
      %v5448 = vpack.c.bf16 %v2608, %v2608
      %s5449 = scalar_lea.vmem %s4, 768
      %v5450 = vld [vmem:[%s5449] sm:$0xf]
      %v5451 = vld [vmem:[%s5449 + $0x4] sm:$0xf]
      %v5452 = vld [vmem:[%s5449 + $0x8] sm:$0xf]
      %v5453 = vld [vmem:[%s5449 + $0xc] sm:$0xf]
      %v5454 = vld [vmem:[%s5449 + $0x10] sm:$0xf]
      %v5455 = vld [vmem:[%s5449 + $0x14] sm:$0xf]
      %v5456 = vld [vmem:[%s5449 + $0x18] sm:$0xf]
      %v5457 = vld [vmem:[%s5449 + $0x1c] sm:$0xf]
      %v5458 = vld [vmem:[%s5449 + $0x20] sm:$0xf]
      %v5459 = vld [vmem:[%s5449 + $0x24] sm:$0xf]
      %v5460 = vld [vmem:[%s5449 + $0x28] sm:$0xf]
      %v5461 = vld [vmem:[%s5449 + $0x2c] sm:$0xf]
      %v5462 = vld [vmem:[%s5449 + $0x30] sm:$0xf]
      %v5463 = vld [vmem:[%s5449 + $0x34] sm:$0xf]
      %v5464 = vld [vmem:[%s5449 + $0x38] sm:$0xf]
      %v5465 = vld [vmem:[%s5449 + $0x3c] sm:$0xf]
      %v5467 = vshrl.u32 %v5447, 16
      %v5469 = vrot.slane %v5467, 3
      %v5470 = vshll.u32 %v5447, 16
      %v5472 = vrot.slane %v5470, 4
      %v5473 = vor.u32 %v5469, %v5472
      %v5474 = vsel %vm550, %v4594, %v5473
      %v5476 = vshrl.u32 %v5448, 16
      %v5478 = vrot.slane %v5476, 3
      %v5479 = vshll.u32 %v5448, 16
      %v5481 = vrot.slane %v5479, 4
      %v5482 = vor.u32 %v5478, %v5481
      %v5483 = vsel %vm550, %v5473, %v5482
      %v5502 = vunpack.c.l.b16 %v5450
      %v5503 = vunpack.c.l.b16 %v5451
      %v5504 = vunpack.c.l.b16 %v5452
      %v5505 = vunpack.c.l.b16 %v5453
      %v5506 = vunpack.c.l.b16 %v5454
      %v5507 = vunpack.c.l.b16 %v5455
      %v5508 = vunpack.c.l.b16 %v5456
      %v5509 = vunpack.c.l.b16 %v5457
      %v5510 = vunpack.c.l.b16 %v5458
      %v5511 = vunpack.c.l.b16 %v5459
      %v5512 = vunpack.c.l.b16 %v5460
      %v5513 = vunpack.c.l.b16 %v5461
      %v5514 = vunpack.c.l.b16 %v5462
      %v5515 = vunpack.c.l.b16 %v5463
      %v5516 = vunpack.c.l.b16 %v5464
      %v5517 = vunpack.c.l.b16 %v5465
      %v5518 = vpack.c.b16 %v5503, %v5502
      %v5519 = vpack.c.b16 %v5505, %v5504
      %v5520 = vpack.c.b16 %v5507, %v5506
      %v5521 = vpack.c.b16 %v5509, %v5508
      %v5522 = vpack.c.b16 %v5511, %v5510
      %v5523 = vpack.c.b16 %v5513, %v5512
      %v5524 = vpack.c.b16 %v5515, %v5514
      %v5525 = vpack.c.b16 %v5517, %v5516
      %5534 = vmatprep.subr.bf16.mxu0 0
      %5535 = vmatpush1.bf16.msra.mxu0 %v5518
      %5536 = vmatprep.subr.bf16.mxu0 0
      %5537 = vmatpush1.bf16.msra.mxu0 %v5519
      %5538 = vmatprep.subr.bf16.mxu0 0
      %5539 = vmatpush1.bf16.msra.mxu0 %v5520
      %5540 = vmatprep.subr.bf16.mxu0 0
      %5541 = vmatpush1.bf16.msra.mxu0 %v5521
      %5542 = vmatprep.subr.bf16.mxu0 0
      %5543 = vmatpush1.bf16.msra.mxu0 %v5522
      %5544 = vmatprep.subr.bf16.mxu0 0
      %5545 = vmatpush1.bf16.msra.mxu0 %v5523
      %5546 = vmatprep.subr.bf16.mxu0 0
      %5547 = vmatpush1.bf16.msra.mxu0 %v5524
      %5548 = vmatprep.subr.bf16.mxu0 0
      %5549 = vmatpush1.bf16.msra.mxu0 %v5525
      %5550 = vmatprep.subr.bf16.mxu0 0
      %5551 = vmatpush1.bf16.msra.mxu0 0
      %5552 = vmatprep.subr.bf16.mxu0 0
      %5553 = vmatpush1.bf16.msra.mxu0 0
      %5554 = vmatprep.subr.bf16.mxu0 0
      %5555 = vmatpush1.bf16.msra.mxu0 0
      %5556 = vmatprep.subr.bf16.mxu0 0
      %5557 = vmatpush1.bf16.msra.mxu0 0
      %5558 = vmatprep.subr.bf16.mxu0 0
      %5559 = vmatpush1.bf16.msra.mxu0 0
      %5560 = vmatprep.subr.bf16.mxu0 0
      %5561 = vmatpush1.bf16.msra.mxu0 0
      %5562 = vmatprep.subr.bf16.mxu0 0
      %5563 = vmatpush1.bf16.msra.mxu0 0
      %5564 = vmatprep.subr.bf16.mxu0 0
      %5565 = vmatpush1.bf16.msra.mxu0 0
      %5566 = vmatprep.mubr.bf16.mxu0 0
      %5567 = vmatmul.mubr.bf16.gmra.mrb[0].mxu0 %v2878
      %v5568 = vpop.f32.mrb[0].mxu0
      %v5569 = vadd.f32 0.0, %v5568
      %v5570 = vpop.f32.mrb[0].mxu0
      %v5571 = vpop.f32.mrb[0].mxu0
      %v5572 = vadd.f32 0.0, %v5571
      %v5573 = vpop.f32.mrb[0].mxu0
      %5574 = vmatprep.mubr.bf16.mxu0 0
      %5575 = vmatmul.mubr.bf16.gmra.mrb[0].mxu0 %v2887
      %v5576 = vpop.f32.mrb[0].mxu0
      %v5577 = vadd.f32 0.0, %v5576
      %v5578 = vpop.f32.mrb[0].mxu0
      %v5579 = vpop.f32.mrb[0].mxu0
      %v5580 = vadd.f32 0.0, %v5579
      %v5581 = vpop.f32.mrb[0].mxu0
      %5582 = vmatprep.mubr.bf16.mxu0 0
      %5583 = vmatmul.mubr.bf16.gmra.mrb[0].mxu0 %v2896
      %v5584 = vpop.f32.mrb[0].mxu0
      %v5585 = vadd.f32 0.0, %v5584
      %v5586 = vpop.f32.mrb[0].mxu0
      %v5587 = vpop.f32.mrb[0].mxu0
      %v5588 = vadd.f32 0.0, %v5587
      %v5589 = vpop.f32.mrb[0].mxu0
      %5590 = vmatprep.mubr.bf16.mxu0 0
      %5591 = vmatmul.mubr.bf16.gmra.mrb[0].mxu0 %v2905
      %v5592 = vpop.f32.mrb[0].mxu0
      %v5593 = vadd.f32 0.0, %v5592
      %v5594 = vpop.f32.mrb[0].mxu0
      %v5595 = vpop.f32.mrb[0].mxu0
      %v5596 = vadd.f32 0.0, %v5595
      %v5597 = vpop.f32.mrb[0].mxu0
      %5598 = vmatprep.mubr.bf16.mxu0 0
      %5599 = vmatmul.mubr.bf16.gmra.mrb[0].mxu0 %v2914
      %v5600 = vpop.f32.mrb[0].mxu0
      %v5601 = vadd.f32 0.0, %v5600
      %v5602 = vpop.f32.mrb[0].mxu0
      %v5603 = vpop.f32.mrb[0].mxu0
      %v5604 = vadd.f32 0.0, %v5603
      %v5605 = vpop.f32.mrb[0].mxu0
      %5606 = vmatprep.mubr.bf16.mxu0 0
      %5607 = vmatmul.mubr.bf16.gmra.mrb[0].mxu0 %v2923
      %v5608 = vpop.f32.mrb[0].mxu0
      %v5609 = vadd.f32 0.0, %v5608
      %v5610 = vpop.f32.mrb[0].mxu0
      %v5611 = vpop.f32.mrb[0].mxu0
      %v5612 = vadd.f32 0.0, %v5611
      %v5613 = vpop.f32.mrb[0].mxu0
      %5614 = vmatprep.mubr.bf16.mxu0 0
      %5615 = vmatmul.mubr.bf16.gmra.mrb[0].mxu0 %v2932
      %v5616 = vpop.f32.mrb[0].mxu0
      %v5617 = vadd.f32 0.0, %v5616
      %v5618 = vpop.f32.mrb[0].mxu0
      %v5619 = vpop.f32.mrb[0].mxu0
      %v5620 = vadd.f32 0.0, %v5619
      %v5621 = vpop.f32.mrb[0].mxu0
      %5622 = vmatprep.mubr.bf16.mxu0 0
      %5623 = vmatmul.mubr.bf16.gmra.mrb[0].mxu0 %v3716
      %v5624 = vpop.f32.mrb[0].mxu0
      %v5625 = vadd.f32 0.0, %v5624
      %v5626 = vpop.f32.mrb[0].mxu0
      %v5627 = vpop.f32.mrb[0].mxu0
      %v5628 = vadd.f32 0.0, %v5627
      %v5629 = vpop.f32.mrb[0].mxu0
      %5630 = vmatprep.mubr.bf16.mxu0 0
      %5631 = vmatmul.mubr.bf16.gmra.mrb[0].mxu0 %v4595
      %v5632 = vpop.f32.mrb[0].mxu0
      %v5633 = vadd.f32 0.0, %v5632
      %v5634 = vpop.f32.mrb[0].mxu0
      %v5635 = vpop.f32.mrb[0].mxu0
      %v5636 = vadd.f32 0.0, %v5635
      %v5637 = vpop.f32.mrb[0].mxu0
      %5638 = vmatprep.mubr.bf16.mxu0 0
      %5639 = vmatmul.mubr.bf16.gmra.mrb[0].mxu0 %v5474
      %v5640 = vpop.f32.mrb[0].mxu0
      %v5641 = vadd.f32 0.0, %v5640
      %v5642 = vpop.f32.mrb[0].mxu0
      %v5643 = vpop.f32.mrb[0].mxu0
      %v5644 = vadd.f32 0.0, %v5643
      %v5645 = vpop.f32.mrb[0].mxu0
      %5646 = vmatprep.mubr.bf16.mxu0 0
      %5647 = vmatmul.mubr.bf16.gmra.mrb[0].mxu0 %v5483
      %v5648 = vpop.f32.mrb[0].mxu0
      %v5649 = vadd.f32 0.0, %v5648
      %v5650 = vpop.f32.mrb[0].mxu0
      %v5651 = vpop.f32.mrb[0].mxu0
      %v5652 = vadd.f32 0.0, %v5651
      %v5653 = vpop.f32.mrb[0].mxu0
      %5654 = vdwg.mxu0
      %v5655 = vadd.f32 %v5425, %v5569
      %v5656 = vadd.f32 %v5426, %v5572
      %v5657 = vadd.f32 %v5427, %v5577
      %v5658 = vadd.f32 %v5428, %v5580
      %v5659 = vadd.f32 %v5429, %v5585
      %v5660 = vadd.f32 %v5430, %v5588
      %v5661 = vadd.f32 %v5431, %v5593
      %v5662 = vadd.f32 %v5432, %v5596
      %v5663 = vadd.f32 %v5433, %v5601
      %v5664 = vadd.f32 %v5434, %v5604
      %v5665 = vadd.f32 %v5435, %v5609
      %v5666 = vadd.f32 %v5436, %v5612
      %v5667 = vadd.f32 %v5437, %v5617
      %v5668 = vadd.f32 %v5438, %v5620
      %v5669 = vadd.f32 %v5439, %v5625
      %v5670 = vadd.f32 %v5440, %v5628
      %v5671 = vadd.f32 %v5441, %v5633
      %v5672 = vadd.f32 %v5442, %v5636
      %v5673 = vadd.f32 %v5443, %v5641
      %v5674 = vadd.f32 %v5444, %v5644
      %v5675 = vadd.f32 %v5445, %v5649
      %v5676 = vadd.f32 %v5446, %v5652
      %v5677 = vpack.c.bf16 %v2608, %v2607
      %s5678 = scalar_lea.vmem %s4, 832
      %v5679 = vld [vmem:[%s5678] sm:$0xf]
      %v5680 = vld [vmem:[%s5678 + $0x4] sm:$0xf]
      %v5681 = vld [vmem:[%s5678 + $0x8] sm:$0xf]
      %v5682 = vld [vmem:[%s5678 + $0xc] sm:$0xf]
      %v5683 = vld [vmem:[%s5678 + $0x10] sm:$0xf]
      %v5684 = vld [vmem:[%s5678 + $0x14] sm:$0xf]
      %v5685 = vld [vmem:[%s5678 + $0x18] sm:$0xf]
      %v5686 = vld [vmem:[%s5678 + $0x1c] sm:$0xf]
      %v5687 = vld [vmem:[%s5678 + $0x20] sm:$0xf]
      %v5688 = vld [vmem:[%s5678 + $0x24] sm:$0xf]
      %v5689 = vld [vmem:[%s5678 + $0x28] sm:$0xf]
      %v5690 = vld [vmem:[%s5678 + $0x2c] sm:$0xf]
      %v5691 = vld [vmem:[%s5678 + $0x30] sm:$0xf]
      %v5692 = vld [vmem:[%s5678 + $0x34] sm:$0xf]
      %v5693 = vld [vmem:[%s5678 + $0x38] sm:$0xf]
      %v5694 = vld [vmem:[%s5678 + $0x3c] sm:$0xf]
      %v5711 = vunpack.c.l.b16 %v5679
      %v5712 = vunpack.c.l.b16 %v5680
      %v5713 = vunpack.c.l.b16 %v5681
      %v5714 = vunpack.c.l.b16 %v5682
      %v5715 = vunpack.c.l.b16 %v5683
      %v5716 = vunpack.c.l.b16 %v5684
      %v5717 = vunpack.c.l.b16 %v5685
      %v5718 = vunpack.c.l.b16 %v5686
      %v5719 = vunpack.c.l.b16 %v5687
      %v5720 = vunpack.c.l.b16 %v5688
      %v5721 = vunpack.c.l.b16 %v5689
      %v5722 = vunpack.c.l.b16 %v5690
      %v5723 = vunpack.c.l.b16 %v5691
      %v5724 = vunpack.c.l.b16 %v5692
      %v5725 = vunpack.c.l.b16 %v5693
      %v5726 = vunpack.c.l.b16 %v5694
      %v5727 = vpack.c.b16 %v5712, %v5711
      %v5728 = vpack.c.b16 %v5714, %v5713
      %v5729 = vpack.c.b16 %v5716, %v5715
      %v5730 = vpack.c.b16 %v5718, %v5717
      %v5731 = vpack.c.b16 %v5720, %v5719
      %v5732 = vpack.c.b16 %v5722, %v5721
      %v5733 = vpack.c.b16 %v5724, %v5723
      %v5734 = vpack.c.b16 %v5726, %v5725
      %5743 = vmatprep.subr.bf16.mxu0 0
      %5744 = vmatpush1.bf16.msra.mxu0 %v5727
      %5745 = vmatprep.subr.bf16.mxu0 0
      %5746 = vmatpush1.bf16.msra.mxu0 %v5728
      %5747 = vmatprep.subr.bf16.mxu0 0
      %5748 = vmatpush1.bf16.msra.mxu0 %v5729
      %5749 = vmatprep.subr.bf16.mxu0 0
      %5750 = vmatpush1.bf16.msra.mxu0 %v5730
      %5751 = vmatprep.subr.bf16.mxu0 0
      %5752 = vmatpush1.bf16.msra.mxu0 %v5731
      %5753 = vmatprep.subr.bf16.mxu0 0
      %5754 = vmatpush1.bf16.msra.mxu0 %v5732
      %5755 = vmatprep.subr.bf16.mxu0 0
      %5756 = vmatpush1.bf16.msra.mxu0 %v5733
      %5757 = vmatprep.subr.bf16.mxu0 0
      %5758 = vmatpush1.bf16.msra.mxu0 %v5734
      %5759 = vmatprep.subr.bf16.mxu0 0
      %5760 = vmatpush1.bf16.msra.mxu0 0
      %5761 = vmatprep.subr.bf16.mxu0 0
      %5762 = vmatpush1.bf16.msra.mxu0 0
      %5763 = vmatprep.subr.bf16.mxu0 0
      %5764 = vmatpush1.bf16.msra.mxu0 0
      %5765 = vmatprep.subr.bf16.mxu0 0
      %5766 = vmatpush1.bf16.msra.mxu0 0
      %5767 = vmatprep.subr.bf16.mxu0 0
      %5768 = vmatpush1.bf16.msra.mxu0 0
      %5769 = vmatprep.subr.bf16.mxu0 0
      %5770 = vmatpush1.bf16.msra.mxu0 0
      %5771 = vmatprep.subr.bf16.mxu0 0
      %5772 = vmatpush1.bf16.msra.mxu0 0
      %5773 = vmatprep.subr.bf16.mxu0 0
      %5774 = vmatpush1.bf16.msra.mxu0 0
      %5775 = vmatprep.mubr.bf16.mxu0 0
      %5776 = vmatmul.mubr.bf16.gmra.mrb[0].mxu0 %v2641
      %v5777 = vpop.f32.mrb[0].mxu0
      %v5778 = vadd.f32 0.0, %v5777
      %v5779 = vpop.f32.mrb[0].mxu0
      %v5780 = vpop.f32.mrb[0].mxu0
      %v5781 = vadd.f32 0.0, %v5780
      %v5782 = vpop.f32.mrb[0].mxu0
      %5783 = vmatprep.mubr.bf16.mxu0 0
      %5784 = vmatmul.mubr.bf16.gmra.mrb[0].mxu0 %v2642
      %v5785 = vpop.f32.mrb[0].mxu0
      %v5786 = vadd.f32 0.0, %v5785
      %v5787 = vpop.f32.mrb[0].mxu0
      %v5788 = vpop.f32.mrb[0].mxu0
      %v5789 = vadd.f32 0.0, %v5788
      %v5790 = vpop.f32.mrb[0].mxu0
      %5791 = vmatprep.mubr.bf16.mxu0 0
      %5792 = vmatmul.mubr.bf16.gmra.mrb[0].mxu0 %v2643
      %v5793 = vpop.f32.mrb[0].mxu0
      %v5794 = vadd.f32 0.0, %v5793
      %v5795 = vpop.f32.mrb[0].mxu0
      %v5796 = vpop.f32.mrb[0].mxu0
      %v5797 = vadd.f32 0.0, %v5796
      %v5798 = vpop.f32.mrb[0].mxu0
      %5799 = vmatprep.mubr.bf16.mxu0 0
      %5800 = vmatmul.mubr.bf16.gmra.mrb[0].mxu0 %v2644
      %v5801 = vpop.f32.mrb[0].mxu0
      %v5802 = vadd.f32 0.0, %v5801
      %v5803 = vpop.f32.mrb[0].mxu0
      %v5804 = vpop.f32.mrb[0].mxu0
      %v5805 = vadd.f32 0.0, %v5804
      %v5806 = vpop.f32.mrb[0].mxu0
      %5807 = vmatprep.mubr.bf16.mxu0 0
      %5808 = vmatmul.mubr.bf16.gmra.mrb[0].mxu0 %v2645
      %v5809 = vpop.f32.mrb[0].mxu0
      %v5810 = vadd.f32 0.0, %v5809
      %v5811 = vpop.f32.mrb[0].mxu0
      %v5812 = vpop.f32.mrb[0].mxu0
      %v5813 = vadd.f32 0.0, %v5812
      %v5814 = vpop.f32.mrb[0].mxu0
      %5815 = vmatprep.mubr.bf16.mxu0 0
      %5816 = vmatmul.mubr.bf16.gmra.mrb[0].mxu0 %v2646
      %v5817 = vpop.f32.mrb[0].mxu0
      %v5818 = vadd.f32 0.0, %v5817
      %v5819 = vpop.f32.mrb[0].mxu0
      %v5820 = vpop.f32.mrb[0].mxu0
      %v5821 = vadd.f32 0.0, %v5820
      %v5822 = vpop.f32.mrb[0].mxu0
      %5823 = vmatprep.mubr.bf16.mxu0 0
      %5824 = vmatmul.mubr.bf16.gmra.mrb[0].mxu0 %v2647
      %v5825 = vpop.f32.mrb[0].mxu0
      %v5826 = vadd.f32 0.0, %v5825
      %v5827 = vpop.f32.mrb[0].mxu0
      %v5828 = vpop.f32.mrb[0].mxu0
      %v5829 = vadd.f32 0.0, %v5828
      %v5830 = vpop.f32.mrb[0].mxu0
      %5831 = vmatprep.mubr.bf16.mxu0 0
      %5832 = vmatmul.mubr.bf16.gmra.mrb[0].mxu0 %v2648
      %v5833 = vpop.f32.mrb[0].mxu0
      %v5834 = vadd.f32 0.0, %v5833
      %v5835 = vpop.f32.mrb[0].mxu0
      %v5836 = vpop.f32.mrb[0].mxu0
      %v5837 = vadd.f32 0.0, %v5836
      %v5838 = vpop.f32.mrb[0].mxu0
      %5839 = vmatprep.mubr.bf16.mxu0 0
      %5840 = vmatmul.mubr.bf16.gmra.mrb[0].mxu0 %v3919
      %v5841 = vpop.f32.mrb[0].mxu0
      %v5842 = vadd.f32 0.0, %v5841
      %v5843 = vpop.f32.mrb[0].mxu0
      %v5844 = vpop.f32.mrb[0].mxu0
      %v5845 = vadd.f32 0.0, %v5844
      %v5846 = vpop.f32.mrb[0].mxu0
      %5847 = vmatprep.mubr.bf16.mxu0 0
      %5848 = vmatmul.mubr.bf16.gmra.mrb[0].mxu0 %v4798
      %v5849 = vpop.f32.mrb[0].mxu0
      %v5850 = vadd.f32 0.0, %v5849
      %v5851 = vpop.f32.mrb[0].mxu0
      %v5852 = vpop.f32.mrb[0].mxu0
      %v5853 = vadd.f32 0.0, %v5852
      %v5854 = vpop.f32.mrb[0].mxu0
      %5855 = vmatprep.mubr.bf16.mxu0 0
      %5856 = vmatmul.mubr.bf16.gmra.mrb[0].mxu0 %v5677
      %v5857 = vpop.f32.mrb[0].mxu0
      %v5858 = vadd.f32 0.0, %v5857
      %v5859 = vpop.f32.mrb[0].mxu0
      %v5860 = vpop.f32.mrb[0].mxu0
      %v5861 = vadd.f32 0.0, %v5860
      %v5862 = vpop.f32.mrb[0].mxu0
      %5863 = vdwg.mxu0
      %v5864 = vadd.f32 %v5655, %v5778
      %v5865 = vadd.f32 %v5656, %v5781
      %v5866 = vadd.f32 %v5657, %v5786
      %v5867 = vadd.f32 %v5658, %v5789
      %v5868 = vadd.f32 %v5659, %v5794
      %v5869 = vadd.f32 %v5660, %v5797
      %v5870 = vadd.f32 %v5661, %v5802
      %v5871 = vadd.f32 %v5662, %v5805
      %v5872 = vadd.f32 %v5663, %v5810
      %v5873 = vadd.f32 %v5664, %v5813
      %v5874 = vadd.f32 %v5665, %v5818
      %v5875 = vadd.f32 %v5666, %v5821
      %v5876 = vadd.f32 %v5667, %v5826
      %v5877 = vadd.f32 %v5668, %v5829
      %v5878 = vadd.f32 %v5669, %v5834
      %v5879 = vadd.f32 %v5670, %v5837
      %v5880 = vadd.f32 %v5671, %v5842
      %v5881 = vadd.f32 %v5672, %v5845
      %v5882 = vadd.f32 %v5673, %v5850
      %v5883 = vadd.f32 %v5674, %v5853
      %v5884 = vadd.f32 %v5675, %v5858
      %v5885 = vadd.f32 %v5676, %v5861
      %v5886 = vpack.c.bf16 %v2609, %v2609
      %s5887 = scalar_lea.vmem %s4, 896
      %v5888 = vld [vmem:[%s5887] sm:$0xf]
      %v5889 = vld [vmem:[%s5887 + $0x4] sm:$0xf]
      %v5890 = vld [vmem:[%s5887 + $0x8] sm:$0xf]
      %v5891 = vld [vmem:[%s5887 + $0xc] sm:$0xf]
      %v5892 = vld [vmem:[%s5887 + $0x10] sm:$0xf]
      %v5893 = vld [vmem:[%s5887 + $0x14] sm:$0xf]
      %v5894 = vld [vmem:[%s5887 + $0x18] sm:$0xf]
      %v5895 = vld [vmem:[%s5887 + $0x1c] sm:$0xf]
      %v5896 = vld [vmem:[%s5887 + $0x20] sm:$0xf]
      %v5897 = vld [vmem:[%s5887 + $0x24] sm:$0xf]
      %v5898 = vld [vmem:[%s5887 + $0x28] sm:$0xf]
      %v5899 = vld [vmem:[%s5887 + $0x2c] sm:$0xf]
      %v5900 = vld [vmem:[%s5887 + $0x30] sm:$0xf]
      %v5901 = vld [vmem:[%s5887 + $0x34] sm:$0xf]
      %v5902 = vld [vmem:[%s5887 + $0x38] sm:$0xf]
      %v5903 = vld [vmem:[%s5887 + $0x3c] sm:$0xf]
      %v5905 = vshll.u32 %v5677, 16
      %v5907 = vrot.slane %v5905, 1
      %v5908 = vsel %vm856, %v5032, %v5907
      %v5909 = vshrl.u32 %v5677, 16
      %v5911 = vor.u32 %v5909, %v5907
      %v5913 = vshll.u32 %v5886, 16
      %v5915 = vrot.slane %v5913, 1
      %v5916 = vsel %vm856, %v5911, %v5915
      %v5935 = vunpack.c.l.b16 %v5888
      %v5936 = vunpack.c.l.b16 %v5889
      %v5937 = vunpack.c.l.b16 %v5890
      %v5938 = vunpack.c.l.b16 %v5891
      %v5939 = vunpack.c.l.b16 %v5892
      %v5940 = vunpack.c.l.b16 %v5893
      %v5941 = vunpack.c.l.b16 %v5894
      %v5942 = vunpack.c.l.b16 %v5895
      %v5943 = vunpack.c.l.b16 %v5896
      %v5944 = vunpack.c.l.b16 %v5897
      %v5945 = vunpack.c.l.b16 %v5898
      %v5946 = vunpack.c.l.b16 %v5899
      %v5947 = vunpack.c.l.b16 %v5900
      %v5948 = vunpack.c.l.b16 %v5901
      %v5949 = vunpack.c.l.b16 %v5902
      %v5950 = vunpack.c.l.b16 %v5903
      %v5951 = vpack.c.b16 %v5936, %v5935
      %v5952 = vpack.c.b16 %v5938, %v5937
      %v5953 = vpack.c.b16 %v5940, %v5939
      %v5954 = vpack.c.b16 %v5942, %v5941
      %v5955 = vpack.c.b16 %v5944, %v5943
      %v5956 = vpack.c.b16 %v5946, %v5945
      %v5957 = vpack.c.b16 %v5948, %v5947
      %v5958 = vpack.c.b16 %v5950, %v5949
      %5967 = vmatprep.subr.bf16.mxu0 0
      %5968 = vmatpush1.bf16.msra.mxu0 %v5951
      %5969 = vmatprep.subr.bf16.mxu0 0
      %5970 = vmatpush1.bf16.msra.mxu0 %v5952
      %5971 = vmatprep.subr.bf16.mxu0 0
      %5972 = vmatpush1.bf16.msra.mxu0 %v5953
      %5973 = vmatprep.subr.bf16.mxu0 0
      %5974 = vmatpush1.bf16.msra.mxu0 %v5954
      %5975 = vmatprep.subr.bf16.mxu0 0
      %5976 = vmatpush1.bf16.msra.mxu0 %v5955
      %5977 = vmatprep.subr.bf16.mxu0 0
      %5978 = vmatpush1.bf16.msra.mxu0 %v5956
      %5979 = vmatprep.subr.bf16.mxu0 0
      %5980 = vmatpush1.bf16.msra.mxu0 %v5957
      %5981 = vmatprep.subr.bf16.mxu0 0
      %5982 = vmatpush1.bf16.msra.mxu0 %v5958
      %5983 = vmatprep.subr.bf16.mxu0 0
      %5984 = vmatpush1.bf16.msra.mxu0 0
      %5985 = vmatprep.subr.bf16.mxu0 0
      %5986 = vmatpush1.bf16.msra.mxu0 0
      %5987 = vmatprep.subr.bf16.mxu0 0
      %5988 = vmatpush1.bf16.msra.mxu0 0
      %5989 = vmatprep.subr.bf16.mxu0 0
      %5990 = vmatpush1.bf16.msra.mxu0 0
      %5991 = vmatprep.subr.bf16.mxu0 0
      %5992 = vmatpush1.bf16.msra.mxu0 0
      %5993 = vmatprep.subr.bf16.mxu0 0
      %5994 = vmatpush1.bf16.msra.mxu0 0
      %5995 = vmatprep.subr.bf16.mxu0 0
      %5996 = vmatpush1.bf16.msra.mxu0 0
      %5997 = vmatprep.subr.bf16.mxu0 0
      %5998 = vmatpush1.bf16.msra.mxu0 0
      %5999 = vmatprep.mubr.bf16.mxu0 0
      %6000 = vmatmul.mubr.bf16.gmra.mrb[0].mxu0 %v3175
      %v6001 = vpop.f32.mrb[0].mxu0
      %v6002 = vadd.f32 0.0, %v6001
      %v6003 = vpop.f32.mrb[0].mxu0
      %v6004 = vpop.f32.mrb[0].mxu0
      %v6005 = vadd.f32 0.0, %v6004
      %v6006 = vpop.f32.mrb[0].mxu0
      %6007 = vmatprep.mubr.bf16.mxu0 0
      %6008 = vmatmul.mubr.bf16.gmra.mrb[0].mxu0 %v3183
      %v6009 = vpop.f32.mrb[0].mxu0
      %v6010 = vadd.f32 0.0, %v6009
      %v6011 = vpop.f32.mrb[0].mxu0
      %v6012 = vpop.f32.mrb[0].mxu0
      %v6013 = vadd.f32 0.0, %v6012
      %v6014 = vpop.f32.mrb[0].mxu0
      %6015 = vmatprep.mubr.bf16.mxu0 0
      %6016 = vmatmul.mubr.bf16.gmra.mrb[0].mxu0 %v3191
      %v6017 = vpop.f32.mrb[0].mxu0
      %v6018 = vadd.f32 0.0, %v6017
      %v6019 = vpop.f32.mrb[0].mxu0
      %v6020 = vpop.f32.mrb[0].mxu0
      %v6021 = vadd.f32 0.0, %v6020
      %v6022 = vpop.f32.mrb[0].mxu0
      %6023 = vmatprep.mubr.bf16.mxu0 0
      %6024 = vmatmul.mubr.bf16.gmra.mrb[0].mxu0 %v3199
      %v6025 = vpop.f32.mrb[0].mxu0
      %v6026 = vadd.f32 0.0, %v6025
      %v6027 = vpop.f32.mrb[0].mxu0
      %v6028 = vpop.f32.mrb[0].mxu0
      %v6029 = vadd.f32 0.0, %v6028
      %v6030 = vpop.f32.mrb[0].mxu0
      %6031 = vmatprep.mubr.bf16.mxu0 0
      %6032 = vmatmul.mubr.bf16.gmra.mrb[0].mxu0 %v3207
      %v6033 = vpop.f32.mrb[0].mxu0
      %v6034 = vadd.f32 0.0, %v6033
      %v6035 = vpop.f32.mrb[0].mxu0
      %v6036 = vpop.f32.mrb[0].mxu0
      %v6037 = vadd.f32 0.0, %v6036
      %v6038 = vpop.f32.mrb[0].mxu0
      %6039 = vmatprep.mubr.bf16.mxu0 0
      %6040 = vmatmul.mubr.bf16.gmra.mrb[0].mxu0 %v3215
      %v6041 = vpop.f32.mrb[0].mxu0
      %v6042 = vadd.f32 0.0, %v6041
      %v6043 = vpop.f32.mrb[0].mxu0
      %v6044 = vpop.f32.mrb[0].mxu0
      %v6045 = vadd.f32 0.0, %v6044
      %v6046 = vpop.f32.mrb[0].mxu0
      %6047 = vmatprep.mubr.bf16.mxu0 0
      %6048 = vmatmul.mubr.bf16.gmra.mrb[0].mxu0 %v3223
      %v6049 = vpop.f32.mrb[0].mxu0
      %v6050 = vadd.f32 0.0, %v6049
      %v6051 = vpop.f32.mrb[0].mxu0
      %v6052 = vpop.f32.mrb[0].mxu0
      %v6053 = vadd.f32 0.0, %v6052
      %v6054 = vpop.f32.mrb[0].mxu0
      %6055 = vmatprep.mubr.bf16.mxu0 0
      %6056 = vmatmul.mubr.bf16.gmra.mrb[0].mxu0 %v4150
      %v6057 = vpop.f32.mrb[0].mxu0
      %v6058 = vadd.f32 0.0, %v6057
      %v6059 = vpop.f32.mrb[0].mxu0
      %v6060 = vpop.f32.mrb[0].mxu0
      %v6061 = vadd.f32 0.0, %v6060
      %v6062 = vpop.f32.mrb[0].mxu0
      %6063 = vmatprep.mubr.bf16.mxu0 0
      %6064 = vmatmul.mubr.bf16.gmra.mrb[0].mxu0 %v5029
      %v6065 = vpop.f32.mrb[0].mxu0
      %v6066 = vadd.f32 0.0, %v6065
      %v6067 = vpop.f32.mrb[0].mxu0
      %v6068 = vpop.f32.mrb[0].mxu0
      %v6069 = vadd.f32 0.0, %v6068
      %v6070 = vpop.f32.mrb[0].mxu0
      %6071 = vmatprep.mubr.bf16.mxu0 0
      %6072 = vmatmul.mubr.bf16.gmra.mrb[0].mxu0 %v5908
      %v6073 = vpop.f32.mrb[0].mxu0
      %v6074 = vadd.f32 0.0, %v6073
      %v6075 = vpop.f32.mrb[0].mxu0
      %v6076 = vpop.f32.mrb[0].mxu0
      %v6077 = vadd.f32 0.0, %v6076
      %v6078 = vpop.f32.mrb[0].mxu0
      %6079 = vmatprep.mubr.bf16.mxu0 0
      %6080 = vmatmul.mubr.bf16.gmra.mrb[0].mxu0 %v5916
      %v6081 = vpop.f32.mrb[0].mxu0
      %v6082 = vadd.f32 0.0, %v6081
      %v6083 = vpop.f32.mrb[0].mxu0
      %v6084 = vpop.f32.mrb[0].mxu0
      %v6085 = vadd.f32 0.0, %v6084
      %v6086 = vpop.f32.mrb[0].mxu0
      %6087 = vdwg.mxu0
      %v6088 = vadd.f32 %v5864, %v6002
      %v6089 = vadd.f32 %v5865, %v6005
      %v6090 = vadd.f32 %v5866, %v6010
      %v6091 = vadd.f32 %v5867, %v6013
      %v6092 = vadd.f32 %v5868, %v6018
      %v6093 = vadd.f32 %v5869, %v6021
      %v6094 = vadd.f32 %v5870, %v6026
      %v6095 = vadd.f32 %v5871, %v6029
      %v6096 = vadd.f32 %v5872, %v6034
      %v6097 = vadd.f32 %v5873, %v6037
      %v6098 = vadd.f32 %v5874, %v6042
      %v6099 = vadd.f32 %v5875, %v6045
      %v6100 = vadd.f32 %v5876, %v6050
      %v6101 = vadd.f32 %v5877, %v6053
      %v6102 = vadd.f32 %v5878, %v6058
      %v6103 = vadd.f32 %v5879, %v6061
      %v6104 = vadd.f32 %v5880, %v6066
      %v6105 = vadd.f32 %v5881, %v6069
      %v6106 = vadd.f32 %v5882, %v6074
      %v6107 = vadd.f32 %v5883, %v6077
      %v6108 = vadd.f32 %v5884, %v6082
      %v6109 = vadd.f32 %v5885, %v6085
      %s6110 = scalar_lea.vmem %s4, 960
      %v6111 = vld [vmem:[%s6110] sm:$0xf]
      %v6112 = vld [vmem:[%s6110 + $0x4] sm:$0xf]
      %v6113 = vld [vmem:[%s6110 + $0x8] sm:$0xf]
      %v6114 = vld [vmem:[%s6110 + $0xc] sm:$0xf]
      %v6115 = vld [vmem:[%s6110 + $0x10] sm:$0xf]
      %v6116 = vld [vmem:[%s6110 + $0x14] sm:$0xf]
      %v6117 = vld [vmem:[%s6110 + $0x18] sm:$0xf]
      %v6118 = vld [vmem:[%s6110 + $0x1c] sm:$0xf]
      %v6119 = vld [vmem:[%s6110 + $0x20] sm:$0xf]
      %v6120 = vld [vmem:[%s6110 + $0x24] sm:$0xf]
      %v6121 = vld [vmem:[%s6110 + $0x28] sm:$0xf]
      %v6122 = vld [vmem:[%s6110 + $0x2c] sm:$0xf]
      %v6123 = vld [vmem:[%s6110 + $0x30] sm:$0xf]
      %v6124 = vld [vmem:[%s6110 + $0x34] sm:$0xf]
      %v6125 = vld [vmem:[%s6110 + $0x38] sm:$0xf]
      %v6126 = vld [vmem:[%s6110 + $0x3c] sm:$0xf]
      %v6129 = vrot.slane %v5677, 1
      %v6130 = vsel %vm3463, %v5250, %v6129
      %v6131 = vrot.slane %v5886, 1
      %v6132 = vsel %vm3463, %v6129, %v6131
      %v6151 = vunpack.c.l.b16 %v6111
      %v6152 = vunpack.c.l.b16 %v6112
      %v6153 = vunpack.c.l.b16 %v6113
      %v6154 = vunpack.c.l.b16 %v6114
      %v6155 = vunpack.c.l.b16 %v6115
      %v6156 = vunpack.c.l.b16 %v6116
      %v6157 = vunpack.c.l.b16 %v6117
      %v6158 = vunpack.c.l.b16 %v6118
      %v6159 = vunpack.c.l.b16 %v6119
      %v6160 = vunpack.c.l.b16 %v6120
      %v6161 = vunpack.c.l.b16 %v6121
      %v6162 = vunpack.c.l.b16 %v6122
      %v6163 = vunpack.c.l.b16 %v6123
      %v6164 = vunpack.c.l.b16 %v6124
      %v6165 = vunpack.c.l.b16 %v6125
      %v6166 = vunpack.c.l.b16 %v6126
      %v6167 = vpack.c.b16 %v6152, %v6151
      %v6168 = vpack.c.b16 %v6154, %v6153
      %v6169 = vpack.c.b16 %v6156, %v6155
      %v6170 = vpack.c.b16 %v6158, %v6157
      %v6171 = vpack.c.b16 %v6160, %v6159
      %v6172 = vpack.c.b16 %v6162, %v6161
      %v6173 = vpack.c.b16 %v6164, %v6163
      %v6174 = vpack.c.b16 %v6166, %v6165
      %6183 = vmatprep.subr.bf16.mxu0 0
      %6184 = vmatpush1.bf16.msra.mxu0 %v6167
      %6185 = vmatprep.subr.bf16.mxu0 0
      %6186 = vmatpush1.bf16.msra.mxu0 %v6168
      %6187 = vmatprep.subr.bf16.mxu0 0
      %6188 = vmatpush1.bf16.msra.mxu0 %v6169
      %6189 = vmatprep.subr.bf16.mxu0 0
      %6190 = vmatpush1.bf16.msra.mxu0 %v6170
      %6191 = vmatprep.subr.bf16.mxu0 0
      %6192 = vmatpush1.bf16.msra.mxu0 %v6171
      %6193 = vmatprep.subr.bf16.mxu0 0
      %6194 = vmatpush1.bf16.msra.mxu0 %v6172
      %6195 = vmatprep.subr.bf16.mxu0 0
      %6196 = vmatpush1.bf16.msra.mxu0 %v6173
      %6197 = vmatprep.subr.bf16.mxu0 0
      %6198 = vmatpush1.bf16.msra.mxu0 %v6174
      %6199 = vmatprep.subr.bf16.mxu0 0
      %6200 = vmatpush1.bf16.msra.mxu0 0
      %6201 = vmatprep.subr.bf16.mxu0 0
      %6202 = vmatpush1.bf16.msra.mxu0 0
      %6203 = vmatprep.subr.bf16.mxu0 0
      %6204 = vmatpush1.bf16.msra.mxu0 0
      %6205 = vmatprep.subr.bf16.mxu0 0
      %6206 = vmatpush1.bf16.msra.mxu0 0
      %6207 = vmatprep.subr.bf16.mxu0 0
      %6208 = vmatpush1.bf16.msra.mxu0 0
      %6209 = vmatprep.subr.bf16.mxu0 0
      %6210 = vmatpush1.bf16.msra.mxu0 0
      %6211 = vmatprep.subr.bf16.mxu0 0
      %6212 = vmatpush1.bf16.msra.mxu0 0
      %6213 = vmatprep.subr.bf16.mxu0 0
      %6214 = vmatpush1.bf16.msra.mxu0 0
      %6215 = vmatprep.mubr.bf16.mxu0 0
      %6216 = vmatmul.mubr.bf16.gmra.mrb[0].mxu0 %v3472
      %v6217 = vpop.f32.mrb[0].mxu0
      %v6218 = vadd.f32 0.0, %v6217
      %v6219 = vpop.f32.mrb[0].mxu0
      %v6220 = vpop.f32.mrb[0].mxu0
      %v6221 = vadd.f32 0.0, %v6220
      %v6222 = vpop.f32.mrb[0].mxu0
      %6223 = vmatprep.mubr.bf16.mxu0 0
      %6224 = vmatmul.mubr.bf16.gmra.mrb[0].mxu0 %v3474
      %v6225 = vpop.f32.mrb[0].mxu0
      %v6226 = vadd.f32 0.0, %v6225
      %v6227 = vpop.f32.mrb[0].mxu0
      %v6228 = vpop.f32.mrb[0].mxu0
      %v6229 = vadd.f32 0.0, %v6228
      %v6230 = vpop.f32.mrb[0].mxu0
      %6231 = vmatprep.mubr.bf16.mxu0 0
      %6232 = vmatmul.mubr.bf16.gmra.mrb[0].mxu0 %v3476
      %v6233 = vpop.f32.mrb[0].mxu0
      %v6234 = vadd.f32 0.0, %v6233
      %v6235 = vpop.f32.mrb[0].mxu0
      %v6236 = vpop.f32.mrb[0].mxu0
      %v6237 = vadd.f32 0.0, %v6236
      %v6238 = vpop.f32.mrb[0].mxu0
      %6239 = vmatprep.mubr.bf16.mxu0 0
      %6240 = vmatmul.mubr.bf16.gmra.mrb[0].mxu0 %v3478
      %v6241 = vpop.f32.mrb[0].mxu0
      %v6242 = vadd.f32 0.0, %v6241
      %v6243 = vpop.f32.mrb[0].mxu0
      %v6244 = vpop.f32.mrb[0].mxu0
      %v6245 = vadd.f32 0.0, %v6244
      %v6246 = vpop.f32.mrb[0].mxu0
      %6247 = vmatprep.mubr.bf16.mxu0 0
      %6248 = vmatmul.mubr.bf16.gmra.mrb[0].mxu0 %v3480
      %v6249 = vpop.f32.mrb[0].mxu0
      %v6250 = vadd.f32 0.0, %v6249
      %v6251 = vpop.f32.mrb[0].mxu0
      %v6252 = vpop.f32.mrb[0].mxu0
      %v6253 = vadd.f32 0.0, %v6252
      %v6254 = vpop.f32.mrb[0].mxu0
      %6255 = vmatprep.mubr.bf16.mxu0 0
      %6256 = vmatmul.mubr.bf16.gmra.mrb[0].mxu0 %v3482
      %v6257 = vpop.f32.mrb[0].mxu0
      %v6258 = vadd.f32 0.0, %v6257
      %v6259 = vpop.f32.mrb[0].mxu0
      %v6260 = vpop.f32.mrb[0].mxu0
      %v6261 = vadd.f32 0.0, %v6260
      %v6262 = vpop.f32.mrb[0].mxu0
      %6263 = vmatprep.mubr.bf16.mxu0 0
      %6264 = vmatmul.mubr.bf16.gmra.mrb[0].mxu0 %v3484
      %v6265 = vpop.f32.mrb[0].mxu0
      %v6266 = vadd.f32 0.0, %v6265
      %v6267 = vpop.f32.mrb[0].mxu0
      %v6268 = vpop.f32.mrb[0].mxu0
      %v6269 = vadd.f32 0.0, %v6268
      %v6270 = vpop.f32.mrb[0].mxu0
      %6271 = vmatprep.mubr.bf16.mxu0 0
      %6272 = vmatmul.mubr.bf16.gmra.mrb[0].mxu0 %v4372
      %v6273 = vpop.f32.mrb[0].mxu0
      %v6274 = vadd.f32 0.0, %v6273
      %v6275 = vpop.f32.mrb[0].mxu0
      %v6276 = vpop.f32.mrb[0].mxu0
      %v6277 = vadd.f32 0.0, %v6276
      %v6278 = vpop.f32.mrb[0].mxu0
      %6279 = vmatprep.mubr.bf16.mxu0 0
      %6280 = vmatmul.mubr.bf16.gmra.mrb[0].mxu0 %v5251
      %v6281 = vpop.f32.mrb[0].mxu0
      %v6282 = vadd.f32 0.0, %v6281
      %v6283 = vpop.f32.mrb[0].mxu0
      %v6284 = vpop.f32.mrb[0].mxu0
      %v6285 = vadd.f32 0.0, %v6284
      %v6286 = vpop.f32.mrb[0].mxu0
      %6287 = vmatprep.mubr.bf16.mxu0 0
      %6288 = vmatmul.mubr.bf16.gmra.mrb[0].mxu0 %v6130
      %v6289 = vpop.f32.mrb[0].mxu0
      %v6290 = vadd.f32 0.0, %v6289
      %v6291 = vpop.f32.mrb[0].mxu0
      %v6292 = vpop.f32.mrb[0].mxu0
      %v6293 = vadd.f32 0.0, %v6292
      %v6294 = vpop.f32.mrb[0].mxu0
      %6295 = vmatprep.mubr.bf16.mxu0 0
      %6296 = vmatmul.mubr.bf16.gmra.mrb[0].mxu0 %v6132
      %v6297 = vpop.f32.mrb[0].mxu0
      %v6298 = vadd.f32 0.0, %v6297
      %v6299 = vpop.f32.mrb[0].mxu0
      %v6300 = vpop.f32.mrb[0].mxu0
      %v6301 = vadd.f32 0.0, %v6300
      %v6302 = vpop.f32.mrb[0].mxu0
      %6303 = vdwg.mxu0
      %v6304 = vadd.f32 %v6088, %v6218
      %v6305 = vadd.f32 %v6089, %v6221
      %v6306 = vadd.f32 %v6090, %v6226
      %v6307 = vadd.f32 %v6091, %v6229
      %v6308 = vadd.f32 %v6092, %v6234
      %v6309 = vadd.f32 %v6093, %v6237
      %v6310 = vadd.f32 %v6094, %v6242
      %v6311 = vadd.f32 %v6095, %v6245
      %v6312 = vadd.f32 %v6096, %v6250
      %v6313 = vadd.f32 %v6097, %v6253
      %v6314 = vadd.f32 %v6098, %v6258
      %v6315 = vadd.f32 %v6099, %v6261
      %v6316 = vadd.f32 %v6100, %v6266
      %v6317 = vadd.f32 %v6101, %v6269
      %v6318 = vadd.f32 %v6102, %v6274
      %v6319 = vadd.f32 %v6103, %v6277
      %v6320 = vadd.f32 %v6104, %v6282
      %v6321 = vadd.f32 %v6105, %v6285
      %v6322 = vadd.f32 %v6106, %v6290
      %v6323 = vadd.f32 %v6107, %v6293
      %v6324 = vadd.f32 %v6108, %v6298
      %v6325 = vadd.f32 %v6109, %v6301
      %v6326 = vld [vmem:[%s5] sm:$0x1]
      %v6328 = vlaneseq
      %v6329 = vshrl.u32 %v6328, 7
      %v6330 = vsub.s32 0, %v6329
      %v6331 = vrot.slane %v6326, %v6330
      %v6333 = vadd.f32 %v6304, %v6331
      %v6334 = vadd.f32 %v6305, %v6331
      %v6335 = vadd.f32 %v6306, %v6331
      %v6336 = vadd.f32 %v6307, %v6331
      %v6337 = vadd.f32 %v6308, %v6331
      %v6338 = vadd.f32 %v6309, %v6331
      %v6339 = vadd.f32 %v6310, %v6331
      %v6340 = vadd.f32 %v6311, %v6331
      %v6341 = vadd.f32 %v6312, %v6331
      %v6342 = vadd.f32 %v6313, %v6331
      %v6343 = vadd.f32 %v6314, %v6331
      %v6344 = vadd.f32 %v6315, %v6331
      %v6345 = vadd.f32 %v6316, %v6331
      %v6346 = vadd.f32 %v6317, %v6331
      %v6347 = vadd.f32 %v6318, %v6331
      %v6348 = vadd.f32 %v6319, %v6331
      %v6349 = vadd.f32 %v6320, %v6331
      %v6350 = vadd.f32 %v6321, %v6331
      %v6351 = vadd.f32 %v6322, %v6331
      %v6352 = vadd.f32 %v6323, %v6331
      %v6353 = vadd.f32 %v6324, %v6331
      %v6354 = vadd.f32 %v6325, %v6331
      %v6355 = vsub.f32 0.0, %v6333
      %v6356 = vsub.f32 0.0, %v6334
      %v6357 = vsub.f32 0.0, %v6335
      %v6358 = vsub.f32 0.0, %v6336
      %v6359 = vsub.f32 0.0, %v6337
      %v6360 = vsub.f32 0.0, %v6338
      %v6361 = vsub.f32 0.0, %v6339
      %v6362 = vsub.f32 0.0, %v6340
      %v6363 = vsub.f32 0.0, %v6341
      %v6364 = vsub.f32 0.0, %v6342
      %v6365 = vsub.f32 0.0, %v6343
      %v6366 = vsub.f32 0.0, %v6344
      %v6367 = vsub.f32 0.0, %v6345
      %v6368 = vsub.f32 0.0, %v6346
      %v6369 = vsub.f32 0.0, %v6347
      %v6370 = vsub.f32 0.0, %v6348
      %v6371 = vsub.f32 0.0, %v6349
      %v6372 = vsub.f32 0.0, %v6350
      %v6373 = vsub.f32 0.0, %v6351
      %v6374 = vsub.f32 0.0, %v6352
      %v6375 = vsub.f32 0.0, %v6353
      %v6376 = vsub.f32 0.0, %v6354
      %v6377 = vmul.f32 %v6355, 1.442695
      %v6378 = vpow.pop %v6377
      %v6379 = vmul.f32 %v6356, 1.442695
      %v6380 = vpow.pop %v6379
      %v6381 = vmul.f32 %v6357, 1.442695
      %v6382 = vpow.pop %v6381
      %v6383 = vmul.f32 %v6358, 1.442695
      %v6384 = vpow.pop %v6383
      %v6385 = vmul.f32 %v6359, 1.442695
      %v6386 = vpow.pop %v6385
      %v6387 = vmul.f32 %v6360, 1.442695
      %v6388 = vpow.pop %v6387
      %v6389 = vmul.f32 %v6361, 1.442695
      %v6390 = vpow.pop %v6389
      %v6391 = vmul.f32 %v6362, 1.442695
      %v6392 = vpow.pop %v6391
      %v6393 = vmul.f32 %v6363, 1.442695
      %v6394 = vpow.pop %v6393
      %v6395 = vmul.f32 %v6364, 1.442695
      %v6396 = vpow.pop %v6395
      %v6397 = vmul.f32 %v6365, 1.442695
      %v6398 = vpow.pop %v6397
      %v6399 = vmul.f32 %v6366, 1.442695
      %v6400 = vpow.pop %v6399
      %v6401 = vmul.f32 %v6367, 1.442695
      %v6402 = vpow.pop %v6401
      %v6403 = vmul.f32 %v6368, 1.442695
      %v6404 = vpow.pop %v6403
      %v6405 = vmul.f32 %v6369, 1.442695
      %v6406 = vpow.pop %v6405
      %v6407 = vmul.f32 %v6370, 1.442695
      %v6408 = vpow.pop %v6407
      %v6409 = vmul.f32 %v6371, 1.442695
      %v6410 = vpow.pop %v6409
      %v6411 = vmul.f32 %v6372, 1.442695
      %v6412 = vpow.pop %v6411
      %v6413 = vmul.f32 %v6373, 1.442695
      %v6414 = vpow.pop %v6413
      %v6415 = vmul.f32 %v6374, 1.442695
      %v6416 = vpow.pop %v6415
      %v6417 = vmul.f32 %v6375, 1.442695
      %v6418 = vpow.pop %v6417
      %v6419 = vmul.f32 %v6376, 1.442695
      %v6420 = vpow.pop %v6419
      %v6421 = vadd.f32 %v6378, 1.0
      %v6422 = vadd.f32 %v6380, 1.0
      %v6423 = vadd.f32 %v6382, 1.0
      %v6424 = vadd.f32 %v6384, 1.0
      %v6425 = vadd.f32 %v6386, 1.0
      %v6426 = vadd.f32 %v6388, 1.0
      %v6427 = vadd.f32 %v6390, 1.0
      %v6428 = vadd.f32 %v6392, 1.0
      %v6429 = vadd.f32 %v6394, 1.0
      %v6430 = vadd.f32 %v6396, 1.0
      %v6431 = vadd.f32 %v6398, 1.0
      %v6432 = vadd.f32 %v6400, 1.0
      %v6433 = vadd.f32 %v6402, 1.0
      %v6434 = vadd.f32 %v6404, 1.0
      %v6435 = vadd.f32 %v6406, 1.0
      %v6436 = vadd.f32 %v6408, 1.0
      %v6437 = vadd.f32 %v6410, 1.0
      %v6438 = vadd.f32 %v6412, 1.0
      %v6439 = vadd.f32 %v6414, 1.0
      %v6440 = vadd.f32 %v6416, 1.0
      %v6441 = vadd.f32 %v6418, 1.0
      %v6442 = vadd.f32 %v6420, 1.0
      %v6443 = vrcp.pop %v6421
      %v6444 = vmul.f32 1.0, %v6443
      %v6445 = vrcp.pop %v6422
      %v6446 = vmul.f32 1.0, %v6445
      %v6447 = vrcp.pop %v6423
      %v6448 = vmul.f32 1.0, %v6447
      %v6449 = vrcp.pop %v6424
      %v6450 = vmul.f32 1.0, %v6449
      %v6451 = vrcp.pop %v6425
      %v6452 = vmul.f32 1.0, %v6451
      %v6453 = vrcp.pop %v6426
      %v6454 = vmul.f32 1.0, %v6453
      %v6455 = vrcp.pop %v6427
      %v6456 = vmul.f32 1.0, %v6455
      %v6457 = vrcp.pop %v6428
      %v6458 = vmul.f32 1.0, %v6457
      %v6459 = vrcp.pop %v6429
      %v6460 = vmul.f32 1.0, %v6459
      %v6461 = vrcp.pop %v6430
      %v6462 = vmul.f32 1.0, %v6461
      %v6463 = vrcp.pop %v6431
      %v6464 = vmul.f32 1.0, %v6463
      %v6465 = vrcp.pop %v6432
      %v6466 = vmul.f32 1.0, %v6465
      %v6467 = vrcp.pop %v6433
      %v6468 = vmul.f32 1.0, %v6467
      %v6469 = vrcp.pop %v6434
      %v6470 = vmul.f32 1.0, %v6469
      %v6471 = vrcp.pop %v6435
      %v6472 = vmul.f32 1.0, %v6471
      %v6473 = vrcp.pop %v6436
      %v6474 = vmul.f32 1.0, %v6473
      %v6475 = vrcp.pop %v6437
      %v6476 = vmul.f32 1.0, %v6475
      %v6477 = vrcp.pop %v6438
      %v6478 = vmul.f32 1.0, %v6477
      %v6479 = vrcp.pop %v6439
      %v6480 = vmul.f32 1.0, %v6479
      %v6481 = vrcp.pop %v6440
      %v6482 = vmul.f32 1.0, %v6481
      %v6483 = vrcp.pop %v6441
      %v6484 = vmul.f32 1.0, %v6483
      %v6485 = vrcp.pop %v6442
      %v6486 = vmul.f32 1.0, %v6485
      %v6487 = vmul.f32 %v6333, %v6444
      %v6488 = vmul.f32 %v6334, %v6446
      %v6489 = vmul.f32 %v6335, %v6448
      %v6490 = vmul.f32 %v6336, %v6450
      %v6491 = vmul.f32 %v6337, %v6452
      %v6492 = vmul.f32 %v6338, %v6454
      %v6493 = vmul.f32 %v6339, %v6456
      %v6494 = vmul.f32 %v6340, %v6458
      %v6495 = vmul.f32 %v6341, %v6460
      %v6496 = vmul.f32 %v6342, %v6462
      %v6497 = vmul.f32 %v6343, %v6464
      %v6498 = vmul.f32 %v6344, %v6466
      %v6499 = vmul.f32 %v6345, %v6468
      %v6500 = vmul.f32 %v6346, %v6470
      %v6501 = vmul.f32 %v6347, %v6472
      %v6502 = vmul.f32 %v6348, %v6474
      %v6503 = vmul.f32 %v6349, %v6476
      %v6504 = vmul.f32 %v6350, %v6478
      %v6505 = vmul.f32 %v6351, %v6480
      %v6506 = vmul.f32 %v6352, %v6482
      %v6507 = vmul.f32 %v6353, %v6484
      %v6508 = vmul.f32 %v6354, %v6486
      %6509 = vst [vmem:[#allocation3] sm:$0xff] -inf
      %6510 = vst [vmem:[#allocation3 + $0x8] sm:$0xff] -inf
      %6511 = vst [vmem:[#allocation3 + $0x10] sm:$0xff] -inf
      %6512 = vst [vmem:[#allocation3 + $0xc8] sm:$0xff] -inf
      %6513 = vst [vmem:[#allocation3 + $0xd0] sm:$0xff] -inf
      %6514 = vst [vmem:[#allocation3 + $0xd8] sm:$0xff] -inf
      %6515 = vst [vmem:[#allocation3 + $0xe0] sm:$0xff] -inf
      %6516 = vst [vmem:[#allocation3 + $0xe8] sm:$0xff] -inf
      %v6517 = vsel %vm275, %v6487, -inf
      %v6518 = vsel %vm276, %v6488, -inf
      %v6519 = vsel %vm277, %v6489, -inf
      %v6520 = vsel %vm278, %v6490, -inf
      %v6521 = vsel %vm279, %v6491, -inf
      %v6522 = vsel %vm280, %v6492, -inf
      %v6523 = vsel %vm281, %v6493, -inf
      %v6524 = vsel %vm282, %v6494, -inf
      %v6525 = vsel %vm283, %v6495, -inf
      %v6526 = vsel %vm284, %v6496, -inf
      %v6527 = vsel %vm285, %v6497, -inf
      %v6528 = vsel %vm286, %v6498, -inf
      %v6529 = vsel %vm287, %v6499, -inf
      %v6530 = vsel %vm288, %v6500, -inf
      %v6531 = vsel %vm289, %v6501, -inf
      %v6532 = vsel %vm290, %v6502, -inf
      %v6533 = vsel %vm291, %v6503, -inf
      %v6534 = vsel %vm292, %v6504, -inf
      %v6535 = vsel %vm293, %v6505, -inf
      %v6536 = vsel %vm294, %v6506, -inf
      %v6537 = vsel %vm295, %v6507, -inf
      %v6538 = vsel %vm296, %v6508, -inf
      %6539 = vst [vmem:[#allocation3 + $0x18] sm:$0xff] %v6517
      %6540 = vst [vmem:[#allocation3 + $0x20] sm:$0xff] %v6518
      %6541 = vst [vmem:[#allocation3 + $0x28] sm:$0xff] %v6519
      %6542 = vst [vmem:[#allocation3 + $0x30] sm:$0xff] %v6520
      %6543 = vst [vmem:[#allocation3 + $0x38] sm:$0xff] %v6521
      %6544 = vst [vmem:[#allocation3 + $0x40] sm:$0xff] %v6522
      %6545 = vst [vmem:[#allocation3 + $0x48] sm:$0xff] %v6523
      %6546 = vst [vmem:[#allocation3 + $0x50] sm:$0xff] %v6524
      %6547 = vst [vmem:[#allocation3 + $0x58] sm:$0xff] %v6525
      %6548 = vst [vmem:[#allocation3 + $0x60] sm:$0xff] %v6526
      %6549 = vst [vmem:[#allocation3 + $0x68] sm:$0xff] %v6527
      %6550 = vst [vmem:[#allocation3 + $0x70] sm:$0xff] %v6528
      %6551 = vst [vmem:[#allocation3 + $0x78] sm:$0xff] %v6529
      %6552 = vst [vmem:[#allocation3 + $0x80] sm:$0xff] %v6530
      %6553 = vst [vmem:[#allocation3 + $0x88] sm:$0xff] %v6531
      %6554 = vst [vmem:[#allocation3 + $0x90] sm:$0xff] %v6532
      %6555 = vst [vmem:[#allocation3 + $0x98] sm:$0xff] %v6533
      %6556 = vst [vmem:[#allocation3 + $0xa0] sm:$0xff] %v6534
      %6557 = vst [vmem:[#allocation3 + $0xa8] sm:$0xff] %v6535
      %6558 = vst [vmem:[#allocation3 + $0xb0] sm:$0xff] %v6536
      %6559 = vst [vmem:[#allocation3 + $0xb8] sm:$0xff] %v6537
      %6560 = vst [vmem:[#allocation3 + $0xc0] sm:$0xff] %v6538
      %v6561 = vld [vmem:[#allocation3] sm:$0xff]
      %v6562 = vld [vmem:[#allocation3 + $0x8] sm:$0xff]
      %v6563 = vld [vmem:[#allocation3 + $0x10] sm:$0xff]
      %v6564 = vld [vmem:[#allocation3 + $0x18] sm:$0xff]
      %v6565 = vld [vmem:[#allocation3 + $0x20] sm:$0xff]
      %v6566 = vld [vmem:[#allocation3 + $0x28] sm:$0xff]
      %v6567 = vld [vmem:[#allocation3 + $0x30] sm:$0xff]
      %v6568 = vld [vmem:[#allocation3 + $0x38] sm:$0xff]
      %v6569 = vld [vmem:[#allocation3 + $0x40] sm:$0xff]
      %v6570 = vld [vmem:[#allocation3 + $0x48] sm:$0xff]
      %v6571 = vld [vmem:[#allocation3 + $0x50] sm:$0xff]
      %v6572 = vld [vmem:[#allocation3 + $0x58] sm:$0xff]
      %v6573 = vld [vmem:[#allocation3 + $0x60] sm:$0xff]
      %v6574 = vld [vmem:[#allocation3 + $0x68] sm:$0xff]
      %v6575 = vld [vmem:[#allocation3 + $0x70] sm:$0xff]
      %v6576 = vld [vmem:[#allocation3 + $0x78] sm:$0xff]
      %v6577 = vld [vmem:[#allocation3 + $0x80] sm:$0xff]
      %v6578 = vld [vmem:[#allocation3 + $0x88] sm:$0xff]
      %v6579 = vld [vmem:[#allocation3 + $0x90] sm:$0xff]
      %v6580 = vld [vmem:[#allocation3 + $0x98] sm:$0xff]
      %v6581 = vld [vmem:[#allocation3 + $0xa0] sm:$0xff]
      %v6582 = vld [vmem:[#allocation3 + $0xa8] sm:$0xff]
      %v6583 = vld [vmem:[#allocation3 + $0xb0] sm:$0xff]
      %v6584 = vld [vmem:[#allocation3 + $0xb8] sm:$0xff]
      %v6585 = vld [vmem:[#allocation3 + $0xc0] sm:$0xff]
      %v6586 = vld [vmem:[#allocation3 + $0xc8] sm:$0xff]
      %v6587 = vld [vmem:[#allocation3 + $0xd0] sm:$0xff]
      %v6588 = vld [vmem:[#allocation3 + $0xd8] sm:$0xff]
      %vm6611 = vcmask 1046528
      %v6612 = vrot.slane %v6562, 1
      %v6613 = vrot.slane %v6563, 1
      %v6614 = vsel %vm6611, %v6612, %v6613
      %v6615 = vrot.slane %v6564, 1
      %v6616 = vsel %vm6611, %v6613, %v6615
      %v6617 = vrot.slane %v6565, 1
      %v6618 = vsel %vm6611, %v6615, %v6617
      %v6619 = vrot.slane %v6566, 1
      %v6620 = vsel %vm6611, %v6617, %v6619
      %v6621 = vrot.slane %v6567, 1
      %v6622 = vsel %vm6611, %v6619, %v6621
      %v6623 = vrot.slane %v6568, 1
      %v6624 = vsel %vm6611, %v6621, %v6623
      %v6625 = vrot.slane %v6569, 1
      %v6626 = vsel %vm6611, %v6623, %v6625
      %v6627 = vrot.slane %v6570, 1
      %v6628 = vsel %vm6611, %v6625, %v6627
      %v6629 = vrot.slane %v6571, 1
      %v6630 = vsel %vm6611, %v6627, %v6629
      %v6631 = vrot.slane %v6572, 1
      %v6632 = vsel %vm6611, %v6629, %v6631
      %v6633 = vrot.slane %v6573, 1
      %v6634 = vsel %vm6611, %v6631, %v6633
      %v6635 = vrot.slane %v6574, 1
      %v6636 = vsel %vm6611, %v6633, %v6635
      %v6637 = vrot.slane %v6575, 1
      %v6638 = vsel %vm6611, %v6635, %v6637
      %v6639 = vrot.slane %v6576, 1
      %v6640 = vsel %vm6611, %v6637, %v6639
      %v6641 = vrot.slane %v6577, 1
      %v6642 = vsel %vm6611, %v6639, %v6641
      %v6643 = vrot.slane %v6578, 1
      %v6644 = vsel %vm6611, %v6641, %v6643
      %v6645 = vrot.slane %v6579, 1
      %v6646 = vsel %vm6611, %v6643, %v6645
      %v6647 = vrot.slane %v6580, 1
      %v6648 = vsel %vm6611, %v6645, %v6647
      %v6649 = vrot.slane %v6581, 1
      %v6650 = vsel %vm6611, %v6647, %v6649
      %v6651 = vrot.slane %v6582, 1
      %v6652 = vsel %vm6611, %v6649, %v6651
      %v6653 = vrot.slane %v6583, 1
      %v6654 = vsel %vm6611, %v6651, %v6653
      %v6678 = vmax.f32 %v6561, %v6612
      %v6679 = vmax.f32 %v6562, %v6614
      %v6680 = vmax.f32 %v6563, %v6616
      %v6681 = vmax.f32 %v6564, %v6618
      %v6682 = vmax.f32 %v6565, %v6620
      %v6683 = vmax.f32 %v6566, %v6622
      %v6684 = vmax.f32 %v6567, %v6624
      %v6685 = vmax.f32 %v6568, %v6626
      %v6686 = vmax.f32 %v6569, %v6628
      %v6687 = vmax.f32 %v6570, %v6630
      %v6688 = vmax.f32 %v6571, %v6632
      %v6689 = vmax.f32 %v6572, %v6634
      %v6690 = vmax.f32 %v6573, %v6636
      %v6691 = vmax.f32 %v6574, %v6638
      %v6692 = vmax.f32 %v6575, %v6640
      %v6693 = vmax.f32 %v6576, %v6642
      %v6694 = vmax.f32 %v6577, %v6644
      %v6695 = vmax.f32 %v6578, %v6646
      %v6696 = vmax.f32 %v6579, %v6648
      %v6697 = vmax.f32 %v6580, %v6650
      %v6698 = vmax.f32 %v6581, %v6652
      %v6699 = vmax.f32 %v6582, %v6654
      %v6700 = vmax.f32 %v6583, %v6653
      %vm6702 = vcmask 1045504
      %v6703 = vrot.slane %v6562, 2
      %v6704 = vrot.slane %v6563, 2
      %v6705 = vsel %vm6702, %v6703, %v6704
      %v6706 = vrot.slane %v6564, 2
      %v6707 = vsel %vm6702, %v6704, %v6706
      %v6708 = vrot.slane %v6565, 2
      %v6709 = vsel %vm6702, %v6706, %v6708
      %v6710 = vrot.slane %v6566, 2
      %v6711 = vsel %vm6702, %v6708, %v6710
      %v6712 = vrot.slane %v6567, 2
      %v6713 = vsel %vm6702, %v6710, %v6712
      %v6714 = vrot.slane %v6568, 2
      %v6715 = vsel %vm6702, %v6712, %v6714
      %v6716 = vrot.slane %v6569, 2
      %v6717 = vsel %vm6702, %v6714, %v6716
      %v6718 = vrot.slane %v6570, 2
      %v6719 = vsel %vm6702, %v6716, %v6718
      %v6720 = vrot.slane %v6571, 2
      %v6721 = vsel %vm6702, %v6718, %v6720
      %v6722 = vrot.slane %v6572, 2
      %v6723 = vsel %vm6702, %v6720, %v6722
      %v6724 = vrot.slane %v6573, 2
      %v6725 = vsel %vm6702, %v6722, %v6724
      %v6726 = vrot.slane %v6574, 2
      %v6727 = vsel %vm6702, %v6724, %v6726
      %v6728 = vrot.slane %v6575, 2
      %v6729 = vsel %vm6702, %v6726, %v6728
      %v6730 = vrot.slane %v6576, 2
      %v6731 = vsel %vm6702, %v6728, %v6730
      %v6732 = vrot.slane %v6577, 2
      %v6733 = vsel %vm6702, %v6730, %v6732
      %v6734 = vrot.slane %v6578, 2
      %v6735 = vsel %vm6702, %v6732, %v6734
      %v6736 = vrot.slane %v6579, 2
      %v6737 = vsel %vm6702, %v6734, %v6736
      %v6738 = vrot.slane %v6580, 2
      %v6739 = vsel %vm6702, %v6736, %v6738
      %v6740 = vrot.slane %v6581, 2
      %v6741 = vsel %vm6702, %v6738, %v6740
      %v6742 = vrot.slane %v6582, 2
      %v6743 = vsel %vm6702, %v6740, %v6742
      %v6744 = vrot.slane %v6583, 2
      %v6745 = vsel %vm6702, %v6742, %v6744
      %v6746 = vrot.slane %v6584, 2
      %v6747 = vsel %vm6702, %v6744, %v6746
      %v6771 = vmax.f32 %v6678, %v6703
      %v6772 = vmax.f32 %v6679, %v6705
      %v6773 = vmax.f32 %v6680, %v6707
      %v6774 = vmax.f32 %v6681, %v6709
      %v6775 = vmax.f32 %v6682, %v6711
      %v6776 = vmax.f32 %v6683, %v6713
      %v6777 = vmax.f32 %v6684, %v6715
      %v6778 = vmax.f32 %v6685, %v6717
      %v6779 = vmax.f32 %v6686, %v6719
      %v6780 = vmax.f32 %v6687, %v6721
      %v6781 = vmax.f32 %v6688, %v6723
      %v6782 = vmax.f32 %v6689, %v6725
      %v6783 = vmax.f32 %v6690, %v6727
      %v6784 = vmax.f32 %v6691, %v6729
      %v6785 = vmax.f32 %v6692, %v6731
      %v6786 = vmax.f32 %v6693, %v6733
      %v6787 = vmax.f32 %v6694, %v6735
      %v6788 = vmax.f32 %v6695, %v6737
      %v6789 = vmax.f32 %v6696, %v6739
      %v6790 = vmax.f32 %v6697, %v6741
      %v6791 = vmax.f32 %v6698, %v6743
      %v6792 = vmax.f32 %v6699, %v6745
      %v6793 = vmax.f32 %v6700, %v6747
      %v6794 = vmax.f32 %v6771, %v6563
      %v6795 = vmax.f32 %v6772, %v6564
      %v6796 = vmax.f32 %v6773, %v6565
      %v6797 = vmax.f32 %v6774, %v6566
      %v6798 = vmax.f32 %v6775, %v6567
      %v6799 = vmax.f32 %v6776, %v6568
      %v6800 = vmax.f32 %v6777, %v6569
      %v6801 = vmax.f32 %v6778, %v6570
      %v6802 = vmax.f32 %v6779, %v6571
      %v6803 = vmax.f32 %v6780, %v6572
      %v6804 = vmax.f32 %v6781, %v6573
      %v6805 = vmax.f32 %v6782, %v6574
      %v6806 = vmax.f32 %v6783, %v6575
      %v6807 = vmax.f32 %v6784, %v6576
      %v6808 = vmax.f32 %v6785, %v6577
      %v6809 = vmax.f32 %v6786, %v6578
      %v6810 = vmax.f32 %v6787, %v6579
      %v6811 = vmax.f32 %v6788, %v6580
      %v6812 = vmax.f32 %v6789, %v6581
      %v6813 = vmax.f32 %v6790, %v6582
      %v6814 = vmax.f32 %v6791, %v6583
      %v6815 = vmax.f32 %v6792, %v6584
      %v6816 = vmax.f32 %v6793, %v6585
      %v6818 = vrot.slane %v6584, 1
      %v6819 = vsel %vm6611, %v6653, %v6818
      %v6820 = vrot.slane %v6585, 1
      %v6821 = vsel %vm6611, %v6818, %v6820
      %v6826 = vmax.f32 %v6794, %v6615
      %v6827 = vmax.f32 %v6795, %v6618
      %v6828 = vmax.f32 %v6796, %v6620
      %v6829 = vmax.f32 %v6797, %v6622
      %v6830 = vmax.f32 %v6798, %v6624
      %v6831 = vmax.f32 %v6799, %v6626
      %v6832 = vmax.f32 %v6800, %v6628
      %v6833 = vmax.f32 %v6801, %v6630
      %v6834 = vmax.f32 %v6802, %v6632
      %v6835 = vmax.f32 %v6803, %v6634
      %v6836 = vmax.f32 %v6804, %v6636
      %v6837 = vmax.f32 %v6805, %v6638
      %v6838 = vmax.f32 %v6806, %v6640
      %v6839 = vmax.f32 %v6807, %v6642
      %v6840 = vmax.f32 %v6808, %v6644
      %v6841 = vmax.f32 %v6809, %v6646
      %v6842 = vmax.f32 %v6810, %v6648
      %v6843 = vmax.f32 %v6811, %v6650
      %v6844 = vmax.f32 %v6812, %v6652
      %v6845 = vmax.f32 %v6813, %v6654
      %v6846 = vmax.f32 %v6814, %v6819
      %v6847 = vmax.f32 %v6815, %v6821
      %v6848 = vmax.f32 %v6816, %v6820
      %v6850 = vrot.slane %v6585, 2
      %v6851 = vsel %vm6702, %v6746, %v6850
      %v6852 = vrot.slane %v6586, 2
      %v6853 = vsel %vm6702, %v6850, %v6852
      %v6857 = vmax.f32 %v6826, %v6706
      %v6858 = vmax.f32 %v6827, %v6709
      %v6859 = vmax.f32 %v6828, %v6711
      %v6860 = vmax.f32 %v6829, %v6713
      %v6861 = vmax.f32 %v6830, %v6715
      %v6862 = vmax.f32 %v6831, %v6717
      %v6863 = vmax.f32 %v6832, %v6719
      %v6864 = vmax.f32 %v6833, %v6721
      %v6865 = vmax.f32 %v6834, %v6723
      %v6866 = vmax.f32 %v6835, %v6725
      %v6867 = vmax.f32 %v6836, %v6727
      %v6868 = vmax.f32 %v6837, %v6729
      %v6869 = vmax.f32 %v6838, %v6731
      %v6870 = vmax.f32 %v6839, %v6733
      %v6871 = vmax.f32 %v6840, %v6735
      %v6872 = vmax.f32 %v6841, %v6737
      %v6873 = vmax.f32 %v6842, %v6739
      %v6874 = vmax.f32 %v6843, %v6741
      %v6875 = vmax.f32 %v6844, %v6743
      %v6876 = vmax.f32 %v6845, %v6745
      %v6877 = vmax.f32 %v6846, %v6747
      %v6878 = vmax.f32 %v6847, %v6851
      %v6879 = vmax.f32 %v6848, %v6853
      %v6880 = vmax.f32 %v6857, %v6565
      %v6881 = vmax.f32 %v6858, %v6566
      %v6882 = vmax.f32 %v6859, %v6567
      %v6883 = vmax.f32 %v6860, %v6568
      %v6884 = vmax.f32 %v6861, %v6569
      %v6885 = vmax.f32 %v6862, %v6570
      %v6886 = vmax.f32 %v6863, %v6571
      %v6887 = vmax.f32 %v6864, %v6572
      %v6888 = vmax.f32 %v6865, %v6573
      %v6889 = vmax.f32 %v6866, %v6574
      %v6890 = vmax.f32 %v6867, %v6575
      %v6891 = vmax.f32 %v6868, %v6576
      %v6892 = vmax.f32 %v6869, %v6577
      %v6893 = vmax.f32 %v6870, %v6578
      %v6894 = vmax.f32 %v6871, %v6579
      %v6895 = vmax.f32 %v6872, %v6580
      %v6896 = vmax.f32 %v6873, %v6581
      %v6897 = vmax.f32 %v6874, %v6582
      %v6898 = vmax.f32 %v6875, %v6583
      %v6899 = vmax.f32 %v6876, %v6584
      %v6900 = vmax.f32 %v6877, %v6585
      %v6901 = vmax.f32 %v6878, %v6586
      %v6902 = vmax.f32 %v6879, %v6587
      %v6904 = vrot.slane %v6586, 1
      %v6905 = vsel %vm6611, %v6820, %v6904
      %v6906 = vrot.slane %v6587, 1
      %v6907 = vsel %vm6611, %v6904, %v6906
      %v6912 = vmax.f32 %v6880, %v6619
      %v6913 = vmax.f32 %v6881, %v6622
      %v6914 = vmax.f32 %v6882, %v6624
      %v6915 = vmax.f32 %v6883, %v6626
      %v6916 = vmax.f32 %v6884, %v6628
      %v6917 = vmax.f32 %v6885, %v6630
      %v6918 = vmax.f32 %v6886, %v6632
      %v6919 = vmax.f32 %v6887, %v6634
      %v6920 = vmax.f32 %v6888, %v6636
      %v6921 = vmax.f32 %v6889, %v6638
      %v6922 = vmax.f32 %v6890, %v6640
      %v6923 = vmax.f32 %v6891, %v6642
      %v6924 = vmax.f32 %v6892, %v6644
      %v6925 = vmax.f32 %v6893, %v6646
      %v6926 = vmax.f32 %v6894, %v6648
      %v6927 = vmax.f32 %v6895, %v6650
      %v6928 = vmax.f32 %v6896, %v6652
      %v6929 = vmax.f32 %v6897, %v6654
      %v6930 = vmax.f32 %v6898, %v6819
      %v6931 = vmax.f32 %v6899, %v6821
      %v6932 = vmax.f32 %v6900, %v6905
      %v6933 = vmax.f32 %v6901, %v6907
      %v6934 = vmax.f32 %v6902, %v6906
      %v6936 = vrot.slane %v6587, 2
      %v6937 = vsel %vm6702, %v6852, %v6936
      %v6938 = vrot.slane %v6588, 2
      %v6939 = vsel %vm6702, %v6936, %v6938
      %v6943 = vmax.f32 %v6912, %v6710
      %v6944 = vmax.f32 %v6913, %v6713
      %v6945 = vmax.f32 %v6914, %v6715
      %v6946 = vmax.f32 %v6915, %v6717
      %v6947 = vmax.f32 %v6916, %v6719
      %v6948 = vmax.f32 %v6917, %v6721
      %v6949 = vmax.f32 %v6918, %v6723
      %v6950 = vmax.f32 %v6919, %v6725
      %v6951 = vmax.f32 %v6920, %v6727
      %v6952 = vmax.f32 %v6921, %v6729
      %v6953 = vmax.f32 %v6922, %v6731
      %v6954 = vmax.f32 %v6923, %v6733
      %v6955 = vmax.f32 %v6924, %v6735
      %v6956 = vmax.f32 %v6925, %v6737
      %v6957 = vmax.f32 %v6926, %v6739
      %v6958 = vmax.f32 %v6927, %v6741
      %v6959 = vmax.f32 %v6928, %v6743
      %v6960 = vmax.f32 %v6929, %v6745
      %v6961 = vmax.f32 %v6930, %v6747
      %v6962 = vmax.f32 %v6931, %v6851
      %v6963 = vmax.f32 %v6932, %v6853
      %v6964 = vmax.f32 %v6933, %v6937
      %v6965 = vmax.f32 %v6934, %v6939
      %v6988 = vrot.slane %v300, 1
      %v6989 = vrot.slane %v301, 1
      %v6990 = vsel %vm6611, %v6988, %v6989
      %v6991 = vrot.slane %v302, 1
      %v6992 = vsel %vm6611, %v6989, %v6991
      %v6993 = vrot.slane %v303, 1
      %v6994 = vsel %vm6611, %v6991, %v6993
      %v6995 = vrot.slane %v304, 1
      %v6996 = vsel %vm6611, %v6993, %v6995
      %v6997 = vrot.slane %v305, 1
      %v6998 = vsel %vm6611, %v6995, %v6997
      %v6999 = vrot.slane %v306, 1
      %v7000 = vsel %vm6611, %v6997, %v6999
      %v7001 = vrot.slane %v307, 1
      %v7002 = vsel %vm6611, %v6999, %v7001
      %v7003 = vrot.slane %v308, 1
      %v7004 = vsel %vm6611, %v7001, %v7003
      %v7005 = vrot.slane %v309, 1
      %v7006 = vsel %vm6611, %v7003, %v7005
      %v7007 = vrot.slane %v310, 1
      %v7008 = vsel %vm6611, %v7005, %v7007
      %v7009 = vrot.slane %v311, 1
      %v7010 = vsel %vm6611, %v7007, %v7009
      %v7011 = vrot.slane %v312, 1
      %v7012 = vsel %vm6611, %v7009, %v7011
      %v7013 = vrot.slane %v313, 1
      %v7014 = vsel %vm6611, %v7011, %v7013
      %v7015 = vrot.slane %v314, 1
      %v7016 = vsel %vm6611, %v7013, %v7015
      %v7017 = vrot.slane %v315, 1
      %v7018 = vsel %vm6611, %v7015, %v7017
      %v7019 = vrot.slane %v316, 1
      %v7020 = vsel %vm6611, %v7017, %v7019
      %v7021 = vrot.slane %v317, 1
      %v7022 = vsel %vm6611, %v7019, %v7021
      %v7023 = vrot.slane %v318, 1
      %v7024 = vsel %vm6611, %v7021, %v7023
      %v7025 = vrot.slane %v319, 1
      %v7026 = vsel %vm6611, %v7023, %v7025
      %v7027 = vrot.slane %v320, 1
      %v7028 = vsel %vm6611, %v7025, %v7027
      %v7029 = vrot.slane %v321, 1
      %v7030 = vsel %vm6611, %v7027, %v7029
      %v7054 = vadd.f32 %v6943, %v6988
      %v7055 = vadd.f32 %v6944, %v6990
      %v7056 = vadd.f32 %v6945, %v6992
      %v7057 = vadd.f32 %v6946, %v6994
      %v7058 = vadd.f32 %v6947, %v6996
      %v7059 = vadd.f32 %v6948, %v6998
      %v7060 = vadd.f32 %v6949, %v7000
      %v7061 = vadd.f32 %v6950, %v7002
      %v7062 = vadd.f32 %v6951, %v7004
      %v7063 = vadd.f32 %v6952, %v7006
      %v7064 = vadd.f32 %v6953, %v7008
      %v7065 = vadd.f32 %v6954, %v7010
      %v7066 = vadd.f32 %v6955, %v7012
      %v7067 = vadd.f32 %v6956, %v7014
      %v7068 = vadd.f32 %v6957, %v7016
      %v7069 = vadd.f32 %v6958, %v7018
      %v7070 = vadd.f32 %v6959, %v7020
      %v7071 = vadd.f32 %v6960, %v7022
      %v7072 = vadd.f32 %v6961, %v7024
      %v7073 = vadd.f32 %v6962, %v7026
      %v7074 = vadd.f32 %v6963, %v7028
      %v7075 = vadd.f32 %v6964, %v7030
      %v7076 = vadd.f32 %v6965, %v7029
      %vm7100 = vcmask 1040384
      %v7101 = vrot.slane %v7054, 7
      %v7102 = vrot.slane %v7055, 7
      %v7103 = vsel %vm7100, %v7101, %v7102
      %v7104 = vrot.slane %v7056, 7
      %v7105 = vsel %vm7100, %v7102, %v7104
      %v7106 = vrot.slane %v7057, 7
      %v7107 = vsel %vm7100, %v7104, %v7106
      %v7108 = vrot.slane %v7058, 7
      %v7109 = vsel %vm7100, %v7106, %v7108
      %v7110 = vrot.slane %v7059, 7
      %v7111 = vsel %vm7100, %v7108, %v7110
      %v7112 = vrot.slane %v7060, 7
      %v7113 = vsel %vm7100, %v7110, %v7112
      %v7114 = vrot.slane %v7061, 7
      %v7115 = vsel %vm7100, %v7112, %v7114
      %v7116 = vrot.slane %v7062, 7
      %v7117 = vsel %vm7100, %v7114, %v7116
      %v7118 = vrot.slane %v7063, 7
      %v7119 = vsel %vm7100, %v7116, %v7118
      %v7120 = vrot.slane %v7064, 7
      %v7121 = vsel %vm7100, %v7118, %v7120
      %v7122 = vrot.slane %v7065, 7
      %v7123 = vsel %vm7100, %v7120, %v7122
      %v7124 = vrot.slane %v7066, 7
      %v7125 = vsel %vm7100, %v7122, %v7124
      %v7126 = vrot.slane %v7067, 7
      %v7127 = vsel %vm7100, %v7124, %v7126
      %v7128 = vrot.slane %v7068, 7
      %v7129 = vsel %vm7100, %v7126, %v7128
      %v7130 = vrot.slane %v7069, 7
      %v7131 = vsel %vm7100, %v7128, %v7130
      %v7132 = vrot.slane %v7070, 7
      %v7133 = vsel %vm7100, %v7130, %v7132
      %v7134 = vrot.slane %v7071, 7
      %v7135 = vsel %vm7100, %v7132, %v7134
      %v7136 = vrot.slane %v7072, 7
      %v7137 = vsel %vm7100, %v7134, %v7136
      %v7138 = vrot.slane %v7073, 7
      %v7139 = vsel %vm7100, %v7136, %v7138
      %v7140 = vrot.slane %v7074, 7
      %v7141 = vsel %vm7100, %v7138, %v7140
      %v7142 = vrot.slane %v7075, 7
      %v7143 = vsel %vm7100, %v7140, %v7142
      %v7144 = vrot.slane %v7076, 7
      %v7145 = vsel %vm7100, %v7142, %v7144
      %v7168 = vsel %vm275, %v7103, 0.0
      %v7169 = vsel %vm276, %v7105, 0.0
      %v7170 = vsel %vm277, %v7107, 0.0
      %v7171 = vsel %vm278, %v7109, 0.0
      %v7172 = vsel %vm279, %v7111, 0.0
      %v7173 = vsel %vm280, %v7113, 0.0
      %v7174 = vsel %vm281, %v7115, 0.0
      %v7175 = vsel %vm282, %v7117, 0.0
      %v7176 = vsel %vm283, %v7119, 0.0
      %v7177 = vsel %vm284, %v7121, 0.0
      %v7178 = vsel %vm285, %v7123, 0.0
      %v7179 = vsel %vm286, %v7125, 0.0
      %v7180 = vsel %vm287, %v7127, 0.0
      %v7181 = vsel %vm288, %v7129, 0.0
      %v7182 = vsel %vm289, %v7131, 0.0
      %v7183 = vsel %vm290, %v7133, 0.0
      %v7184 = vsel %vm291, %v7135, 0.0
      %v7185 = vsel %vm292, %v7137, 0.0
      %v7186 = vsel %vm293, %v7139, 0.0
      %v7187 = vsel %vm294, %v7141, 0.0
      %v7188 = vsel %vm295, %v7143, 0.0
      %v7189 = vsel %vm296, %v7145, 0.0
      %7190 = vst [vmem:[%s251] sm:$0xff] %v7168
      %7191 = vst [vmem:[%s251 + $0x8] sm:$0xff] %v7169
      %7192 = vst [vmem:[%s251 + $0x10] sm:$0xff] %v7170
      %7193 = vst [vmem:[%s251 + $0x18] sm:$0xff] %v7171
      %7194 = vst [vmem:[%s251 + $0x20] sm:$0xff] %v7172
      %7195 = vst [vmem:[%s251 + $0x28] sm:$0xff] %v7173
      %7196 = vst [vmem:[%s251 + $0x30] sm:$0xff] %v7174
      %7197 = vst [vmem:[%s251 + $0x38] sm:$0xff] %v7175
      %7198 = vst [vmem:[%s251 + $0x40] sm:$0xff] %v7176
      %7199 = vst [vmem:[%s251 + $0x48] sm:$0xff] %v7177
      %7200 = vst [vmem:[%s251 + $0x50] sm:$0xff] %v7178
      %7201 = vst [vmem:[%s251 + $0x58] sm:$0xff] %v7179
      %7202 = vst [vmem:[%s251 + $0x60] sm:$0xff] %v7180
      %7203 = vst [vmem:[%s251 + $0x68] sm:$0xff] %v7181
      %7204 = vst [vmem:[%s251 + $0x70] sm:$0xff] %v7182
      %7205 = vst [vmem:[%s251 + $0x78] sm:$0xff] %v7183
      %7206 = vst [vmem:[%s251 + $0x80] sm:$0xff] %v7184
      %7207 = vst [vmem:[%s251 + $0x88] sm:$0xff] %v7185
      %7208 = vst [vmem:[%s251 + $0x90] sm:$0xff] %v7186
      %7209 = vst [vmem:[%s251 + $0x98] sm:$0xff] %v7187
      %7210 = vst [vmem:[%s251 + $0xa0] sm:$0xff] %v7188
      %7211 = vst [vmem:[%s251 + $0xa8] sm:$0xff] %v7189
      %p7212 = scmp.lt.s32.totalorder %s17, 1
      %s7213 = scalar_select %p7212, %s17, 1
      %s7214 = smul.addr %s7213, 22
      %s7215 = smul.addr %s7214, 8
      %s7216 = scalar_lea.vmem %s6, %s7215
      // Predicated region
      $region45: #{forward_impl.1} parent=43 // pred_check
        %p7217 = pneg %p166
      $region46: #{forward_impl.1} parent=43 // pred_check_branch
        %7219 = sbr.rel (%p7217) target = $region48
      $region47: #{forward_impl.1} parent=43 // pred_region
        _
      $region48: #{forward_impl.1} parent=43 // pred_fallthru
        _
    $region44: #{forward_impl.1} parent=5 // pred_fallthru
      _
    %p7220 = scmp.le.s32.totalorder 2, %s12
    // Predicated region
    $region49: #{forward_impl.1} parent=5 // pred_check
      %p7221 = pneg %p7220
    $region50: #{forward_impl.1} parent=5 // pred_check_branch
      %7223 = sbr.rel (%p7221) target = $region52
    $region51: #{forward_impl.1} parent=5 // pred_region
      %s7224 = ssub.s32 %s12, 2
      // Predicated region
      $region53: #{forward_impl.1} parent=51 // pred_check
        %p7225 = pneg %p172
      $region54: #{forward_impl.1} parent=51 // pred_check_branch
        %7227 = sbr.rel (%p7225) target = $region56
      $region55: #{forward_impl.1} parent=51 // pred_region
        %p7228 = scmp.lt.s32.totalorder %s18, 1
        %s7229 = scalar_select %p7228, %s18, 1
        %s7230 = smul.addr %s7229, 22
        %s7231 = smul.addr %s7230, 8
        %s7232 = scalar_lea.vmem %s6, %s7231
      $region56: #{forward_impl.1} parent=51 // pred_fallthru
        _
    $region52: #{forward_impl.1} parent=5 // pred_fallthru
      _
  $region6: #{forward_impl.1} parent=0 // loop_footer
    %s16 = sadd.s32 1, %s12
  $region7: #{forward_impl.1} parent=0 // loop_footer_branch
    %11 = sbr.rel target = $region3
  $region8: #{forward_impl.1} parent=0 // loop_exit
    _

</llo_original>
